<compile_context>
chip_gen: v7x
topology: tpu7x:2x2x1
jax: 0.10.0
libtpu: 0.0.40
codegen_flags: <defaults>
</compile_context>

<pallas_src>
import functools

import jax
import jax.numpy as jnp
from jax import lax
from jax.experimental import pallas as pl
from jax.experimental.pallas import tpu as pltpu

F32 = jnp.float32
BF16 = jnp.bfloat16
_GN_EPS = 1e-5

_RB_KEYS = ('dwp1', 'c1w', 'c1p', 'c2aw', 'c2ap', 'dwp2', 'c2bw', 'c2bp')

_PARALLEL = pltpu.CompilerParams(dimension_semantics=("parallel",))


# ----------------------- host-side constant builders -------------------------

def _interp_matrix(in_size, out_size):
    """PyTorch bilinear (align_corners=False) 1-D interpolation matrix (out, in)."""
    scale = in_size / out_size
    dst = jnp.arange(out_size, dtype=F32)
    src = jnp.maximum((dst + 0.5) * scale - 0.5, 0.0)
    i0 = jnp.clip(jnp.floor(src).astype(jnp.int32), 0, in_size - 1)
    i1 = jnp.minimum(i0 + 1, in_size - 1)
    l1 = src - i0.astype(F32)
    l0 = 1.0 - l1
    return (l0[:, None] * jax.nn.one_hot(i0, in_size, dtype=F32)
            + l1[:, None] * jax.nn.one_hot(i1, in_size, dtype=F32))


def _dw_masks(H, W):
    """(9, H*W) 0/1 boundary masks for the 9 depthwise-3x3 taps (row-major kh, kw)."""
    pos = jnp.arange(H * W, dtype=jnp.int32)
    row = pos // W
    col = pos % W
    rows = []
    for k in range(9):
        dh, dw = k // 3 - 1, k % 3 - 1
        ok = (row + dh >= 0) & (row + dh < H) & (col + dw >= 0) & (col + dw < W)
        rows.append(ok.astype(F32))
    return jnp.stack(rows, axis=0)


def _shuffle_matrices(co):
    """ChannelShuffle(2) as two interleave matrices: out = P1 @ y1 + P2 @ y2."""
    ii = jnp.arange(2 * co)[:, None]
    jj = jnp.arange(co)[None, :]
    return (ii == 2 * jj).astype(F32), (ii == 2 * jj + 1).astype(F32)


def _gn_matrices(C, G):
    """GroupNorm group-aggregation (G, C) and scatter (C, G) 0/1 matrices."""
    g_of_c = jnp.arange(C, dtype=jnp.int32) // (C // G)
    agg = (g_of_c[None, :] == jnp.arange(G, dtype=jnp.int32)[:, None]).astype(F32)
    return agg, agg.T


# ------------------------- in-kernel helper ops ------------------------------

def _dwconv3x3(x, w9, b, masks, W):
    """Depthwise 3x3 conv, stride 1, pad 1, on (C, H*W) with precomputed masks.

    x: (C, HW)  w9: (C, 9) taps (row-major kh, kw)  b: (C, 1)  masks: (9, HW)
    Taps via pltpu.roll (XLU) + VPU FMA; boundary masks are constants (no iota).
    """
    HW = x.shape[1]
    acc = x * w9[:, 4:5]                               # centre tap, mask == 1 everywhere
    for k in range(9):
        if k == 4:
            continue
        dh, dw = k // 3 - 1, k % 3 - 1
        d = dh * W + dw
        shifted = pltpu.roll(x, shift=(-d) % HW, axis=1)
        acc = acc + (shifted * masks[k:k + 1, :]) * w9[:, k:k + 1]
    return acc + b


def _group_norm(x, gamma, beta, agg, scat):
    """GroupNorm over (C, H*W) per sample; gamma/beta are (C, 1) columns.

    agg (G, C) / scat (C, G) are precomputed 0/1 matrices (MXU, not VPU filler).
    """
    C, HW = x.shape
    G = agg.shape[0]
    if G == 1:
        mean = jnp.mean(x)
        xc = x - mean
        var = jnp.mean(xc * xc)
    else:
        inv_n = 1.0 / ((C // G) * HW)
        gsum = jnp.sum(jnp.dot(agg, x, preferred_element_type=F32),
                       axis=1, keepdims=True)
        mean = jnp.dot(scat, gsum, preferred_element_type=F32) * inv_n
        xc = x - mean
        gss = jnp.sum(jnp.dot(agg, xc * xc, preferred_element_type=F32),
                      axis=1, keepdims=True)
        var = jnp.dot(scat, gss, preferred_element_type=F32) * inv_n
    return xc * lax.rsqrt(var + _GN_EPS) * gamma + beta


def _conv_gn_silu(w, x, p, agg, scat):
    """1x1 conv (bf16 MXU matmul, f32 accumulate) + GroupNorm + SiLU.

    w: (Cout, Cin) bf16   x: (Cin, HW) f32   p: (Cout, 3) = [bias | gamma | beta]
    """
    y = jnp.dot(w, x.astype(w.dtype), preferred_element_type=F32) + p[:, 0:1]
    y = _group_norm(y, p[:, 1:2], p[:, 2:3], agg, scat)
    return y * jax.nn.sigmoid(y)


def _rb(x, masks, W, ch, dwp1, c1w, c1p, c2aw, c2ap, dwp2, c2bw, c2bp,
        sh1, sh2, agg_h, scat_h, agg_c, scat_c):
    """One ResidualBottleneck on values: split, 2 branches, concat + ChannelShuffle(2).

    dwp*: (ch, 12) = [9 dw taps | dw bias | GN gamma | GN beta]
    c*w : 1x1 conv weight (Cout, Cin) bf16;  c*p: (Cout, 3) = [bias | gamma | beta]
    sh1/sh2: (2co, co) interleave matrices;  agg/scat: GroupNorm group matrices.
    """
    x1 = x[:ch]
    x2 = x[ch:]

    # branch1: dwconv3x3 -> GN -> ConvBnSiLu
    y1 = _dwconv3x3(x1, dwp1[:, 0:9], dwp1[:, 9:10], masks, W)
    y1 = _group_norm(y1, dwp1[:, 10:11], dwp1[:, 11:12], agg_h, scat_h)
    y1 = _conv_gn_silu(c1w, y1, c1p, agg_c, scat_c)

    # branch2: ConvBnSiLu -> dwconv3x3 -> GN -> ConvBnSiLu
    y2 = _conv_gn_silu(c2aw, x2, c2ap, agg_h, scat_h)
    y2 = _dwconv3x3(y2, dwp2[:, 0:9], dwp2[:, 9:10], masks, W)
    y2 = _group_norm(y2, dwp2[:, 10:11], dwp2[:, 11:12], agg_h, scat_h)
    y2 = _conv_gn_silu(c2bw, y2, c2bp, agg_c, scat_c)

    # concat + ChannelShuffle(2): out[2i] = y1[i], out[2i+1] = y2[i]
    return (jnp.dot(sh1, y1, preferred_element_type=F32)
            + jnp.dot(sh2, y2, preferred_element_type=F32))


# --------------------------- Pallas kernels ----------------------------------

def _conv0_kernel(x_ref, m_ref, s_ref, masks_ref,
                  shA1_ref, shA2_ref, shB1_ref, shB2_ref,
                  aggA_ref, scatA_ref, aggB_ref, scatB_ref,
                  dwp1s_ref, c1ws_ref, c1ps_ref, c2aws_ref, c2aps_ref,
                  dwp2s_ref, c2bws_ref, c2bps_ref,
                  dwp1b_ref, c1wb_ref, c1pb_ref, c2awb_ref, c2apb_ref,
                  dwp2b_ref, c2bwb_ref, c2bpb_ref,
                  o_ref, *, W, ch):
    """Upsample + concat + 4 chained ResidualBottlenecks, one sample per grid step."""
    # bilinear upsample as one (hw_in -> hw_out) matmul, then channel concat.
    xu = jnp.dot(x_ref[...].astype(BF16), m_ref[...], preferred_element_type=F32)
    h = jnp.concatenate([xu, s_ref[...]], axis=0)          # (2*ch, HW)

    masks = masks_ref[...]
    shA1, shA2 = shA1_ref[...], shA2_ref[...]
    shB1, shB2 = shB1_ref[...], shB2_ref[...]
    aggA, scatA = aggA_ref[...], scatA_ref[...]
    aggB, scatB = aggB_ref[...], scatB_ref[...]

    # three identically-shaped RB(in, in); params stacked along a leading L=3 axis.
    for l in range(3):
        h = _rb(h, masks, W, ch,
                dwp1s_ref[l], c1ws_ref[l], c1ps_ref[l],
                c2aws_ref[l], c2aps_ref[l],
                dwp2s_ref[l], c2bws_ref[l], c2bps_ref[l],
                shA1, shA2, aggA, scatA, aggA, scatA)

    # fourth RB(in, in//2)
    h = _rb(h, masks, W, ch,
            dwp1b_ref[...], c1wb_ref[...], c1pb_ref[...],
            c2awb_ref[...], c2apb_ref[...],
            dwp2b_ref[...], c2bwb_ref[...], c2bpb_ref[...],
            shB1, shB2, aggA, scatA, aggB, scatB)

    o_ref[...] = h


def _conv1_kernel(*refs, W, ch, has_scale):
    """Optional TimeMLP tail (x * c, SiLU) fused with the conv1 ResidualBottleneck."""
    if has_scale:
        (x_ref, scale_ref, masks_ref, sh1_ref, sh2_ref,
         agg_h_ref, scat_h_ref, agg_c_ref, scat_c_ref,
         dwp1_ref, c1w_ref, c1p_ref, c2aw_ref, c2ap_ref,
         dwp2_ref, c2bw_ref, c2bp_ref, o_ref) = refs
    else:
        (x_ref, masks_ref, sh1_ref, sh2_ref,
         agg_h_ref, scat_h_ref, agg_c_ref, scat_c_ref,
         dwp1_ref, c1w_ref, c1p_ref, c2aw_ref, c2ap_ref,
         dwp2_ref, c2bw_ref, c2bp_ref, o_ref) = refs

    x = x_ref[...]
    if has_scale:
        x = x * scale_ref[...]            # per-sample (C, 1) scale from the TimeMLP
        x = x * jax.nn.sigmoid(x)         # SiLU

    o_ref[...] = _rb(x, masks_ref[...], W, ch,
                     dwp1_ref[...], c1w_ref[...], c1p_ref[...],
                     c2aw_ref[...], c2ap_ref[...],
                     dwp2_ref[...], c2bw_ref[...], c2bp_ref[...],
                     sh1_ref[...], sh2_ref[...],
                     agg_h_ref[...], scat_h_ref[...],
                     agg_c_ref[...], scat_c_ref[...])


# --------------------------- pallas_call wrappers -----------------------------

def _const_spec(a):
    idx = (0,) * a.ndim
    return pl.BlockSpec(a.shape, lambda n, _i=idx: _i)


def conv0_apply(x_nchw, shortcut_nchw, rb_params):
    """interpolate(bilinear, align_corners=False) + cat + conv0 (4 RBs) in ONE kernel.

    Returns activations in the internal (N, C, H*W) layout with C = in_channels // 2.
    """
    N, C1, h, w = x_nchw.shape
    _, C2, H, W = shortcut_nchw.shape
    HW = H * W
    cin = C1 + C2
    ch = cin // 2                       # RB half-width; also Cout//2 of the first 3 RBs
    coB = cin // 4                      # Cout//2 of the 4th RB (in -> in//2)
    gA = max(1, ch // 8)
    gB = max(1, coB // 8)

    # precomputed constants (hoisted out of the kernel per the review)
    m = jnp.kron(_interp_matrix(h, H), _interp_matrix(w, W)).T.astype(BF16)  # (h*w, HW)
    masks = _dw_masks(H, W)
    shA1, shA2 = _shuffle_matrices(ch)
    shB1, shB2 = _shuffle_matrices(coB)
    aggA, scatA = _gn_matrices(ch, gA)
    aggB, scatB = _gn_matrices(coB, gB)

    stacked = [jnp.stack([rb_params[i][k] for i in range(3)], axis=0) for k in _RB_KEYS]
    rb3 = [rb_params[3][k] for k in _RB_KEYS]

    xf = x_nchw.reshape(N, C1, h * w).astype(F32)
    sf = shortcut_nchw.reshape(N, C2, HW).astype(F32)

    args = [xf, m, sf, masks, shA1, shA2, shB1, shB2,
            aggA, scatA, aggB, scatB] + stacked + rb3
    in_specs = ([pl.BlockSpec((pl.Squeezed(), C1, h * w), lambda n: (n, 0, 0)),
                 _const_spec(m),
                 pl.BlockSpec((pl.Squeezed(), C2, HW), lambda n: (n, 0, 0))]
                + [_const_spec(a) for a in args[3:]])

    return pl.pallas_call(
        functools.partial(_conv0_kernel, W=W, ch=ch),
        out_shape=jax.ShapeDtypeStruct((N, 2 * coB, HW), F32),
        grid=(N,),
        in_specs=in_specs,
        out_specs=pl.BlockSpec((pl.Squeezed(), 2 * coB, HW), lambda n: (n, 0, 0)),
        compiler_params=_PARALLEL,
    )(*args)


def conv1_apply(x, scale, p, H, W):
    """Fused (optional) TimeMLP tail + final ResidualBottleneck; x: (N, C, H*W)."""
    N, C, HW = x.shape
    ch = C // 2
    co = p['c1w'].shape[0]
    gh = max(1, ch // 8)
    gc = max(1, co // 8)

    masks = _dw_masks(H, W)
    sh1, sh2 = _shuffle_matrices(co)
    agg_h, scat_h = _gn_matrices(ch, gh)
    agg_c, scat_c = _gn_matrices(co, gc)

    has_scale = scale is not None
    args = [x]
    in_specs = [pl.BlockSpec((pl.Squeezed(), C, HW), lambda n: (n, 0, 0))]
    if has_scale:
        args.append(scale)                                     # (N, C, 1)
        in_specs.append(pl.BlockSpec((pl.Squeezed(), C, 1), lambda n: (n, 0, 0)))
    consts = [masks, sh1, sh2, agg_h, scat_h, agg_c, scat_c] + [p[k] for k in _RB_KEYS]
    args += consts
    in_specs += [_const_spec(a) for a in consts]

    return pl.pallas_call(
        functools.partial(_conv1_kernel, W=W, ch=ch, has_scale=has_scale),
        out_shape=jax.ShapeDtypeStruct((N, 2 * co, HW), F32),
        grid=(N,),
        in_specs=in_specs,
        out_specs=pl.BlockSpec((pl.Squeezed(), 2 * co, HW), lambda n: (n, 0, 0)),
        compiler_params=_PARALLEL,
    )(*args)


def _time_scale(t, p):
    """TimeMLP up to the per-channel scale: tiny matmuls done in plain XLA.

    Returns c: (N, C, 1) with c = rms_normalize(mlp(t) + 1) over channels.
    """
    h = t.astype(F32) @ p['w1'] + p['b1']           # (N, Hd)
    h = h * jax.nn.sigmoid(h)                        # SiLU
    c = h @ p['w2'].T + p['b2'].T                    # (N, C)
    c = c + 1.0
    c = c * lax.rsqrt(jnp.mean(c * c, axis=1, keepdims=True) + 1e-8)
    return c[:, :, None]


# --------------------------- parameter init ----------------------------------

def _normal(key, shape, scale=0.3):
    return scale * jax.random.normal(key, shape, F32)


def init_cbs(key, cin, cout):
    """1x1 ConvBnSiLu: weight (cout, cin) bf16 and packed (cout, 3) = [bias|gamma|beta]."""
    k = jax.random.split(key, 4)
    w = _normal(k[0], (cout, cin)).astype(BF16)
    packed = jnp.stack([_normal(k[1], (cout,), 0.1),
                        1.0 + _normal(k[2], (cout,), 0.1),
                        _normal(k[3], (cout,), 0.1)], axis=1)
    return w, packed


def init_dw(key, c):
    """Depthwise conv + GN params packed as (c, 12) = [9 taps | bias | gamma | beta]."""
    k = jax.random.split(key, 4)
    return jnp.concatenate([
        _normal(k[0], (c, 9)),
        _normal(k[1], (c, 1), 0.1),
        1.0 + _normal(k[2], (c, 1), 0.1),
        _normal(k[3], (c, 1), 0.1)], axis=1)


def init_rb(key, cin, cout):
    ch, co = cin // 2, cout // 2
    k = jax.random.split(key, 5)
    c1w, c1p = init_cbs(k[1], ch, co)
    c2aw, c2ap = init_cbs(k[2], ch, ch)
    c2bw, c2bp = init_cbs(k[4], ch, co)
    return dict(dwp1=init_dw(k[0], ch), c1w=c1w, c1p=c1p,
                c2aw=c2aw, c2ap=c2ap,
                dwp2=init_dw(k[3], ch), c2bw=c2bw, c2bp=c2bp)


def init_time_mlp(key, emb_dim, hidden_dim, out_dim):
    k = jax.random.split(key, 4)
    return dict(w1=_normal(k[0], (emb_dim, hidden_dim)),
                b1=_normal(k[1], (1, hidden_dim), 0.1),
                w2=_normal(k[2], (out_dim, hidden_dim)),
                b2=_normal(k[3], (out_dim, 1), 0.1))


def init_decoder_block(key, in_channels, out_channels, time_embedding_dim):
    ks = jax.random.split(key, 6)
    conv0 = [init_rb(ks[i], in_channels, in_channels) for i in range(3)]
    conv0.append(init_rb(ks[3], in_channels, in_channels // 2))
    return dict(conv0=conv0,
                time_mlp=init_time_mlp(ks[4], time_embedding_dim,
                                       in_channels, in_channels // 2),
                conv1=init_rb(ks[5], in_channels // 2, out_channels // 2))


# --------------------------- DecoderBlock forward -----------------------------

def decoder_block_forward(params, x, x_shortcut, t=None):
    N, _, Hs, Ws = x_shortcut.shape
    h = conv0_apply(x, x_shortcut, params['conv0'])              # pallas_call #1
    scale = _time_scale(t, params['time_mlp']) if t is not None else None
    h = conv1_apply(h, scale, params['conv1'], Hs, Ws)           # pallas_call #2
    return h.reshape(N, -1, Hs, Ws)                              # back to NCHW


if __name__ == "__main__":
    key = jax.random.PRNGKey(0)
    kx, ks, kt, kp = jax.random.split(key, 4)

    in_channels, out_channels, time_dim = 8, 8, 16
    N = 2
    # x has 4 channels at 8x8; x_shortcut has 4 channels at 16x16 -> cat = 8 = in_channels
    x = jax.random.normal(kx, (N, 4, 8, 8), F32)
    x_shortcut = jax.random.normal(ks, (N, 4, 16, 16), F32)
    t = jax.random.normal(kt, (N, time_dim), F32)

    params = init_decoder_block(kp, in_channels, out_channels, time_dim)
    out = jax.jit(decoder_block_forward)(params, x, x_shortcut, t)
    jax.block_until_ready(out)
    assert out.shape == (N, out_channels // 2, 16, 16), out.shape
    print("KERNEL_OK")
</pallas_src>

<mosaic_0001>
module attributes {stable_mosaic.version = 11 : i64} {
  func.func @_conv0_kernel(%arg0: i32, %arg1: memref<1x4x64xf32, #tpu.memory_space<vmem>>, %arg2: memref<64x256xbf16, #tpu.memory_space<vmem>>, %arg3: memref<1x4x256xf32, #tpu.memory_space<vmem>>, %arg4: memref<9x256xf32, #tpu.memory_space<vmem>>, %arg5: memref<8x4xf32, #tpu.memory_space<vmem>>, %arg6: memref<8x4xf32, #tpu.memory_space<vmem>>, %arg7: memref<4x2xf32, #tpu.memory_space<vmem>>, %arg8: memref<4x2xf32, #tpu.memory_space<vmem>>, %arg9: memref<1x4xf32, #tpu.memory_space<vmem>>, %arg10: memref<4x1xf32, #tpu.memory_space<vmem>>, %arg11: memref<1x2xf32, #tpu.memory_space<vmem>>, %arg12: memref<2x1xf32, #tpu.memory_space<vmem>>, %arg13: memref<3x4x12xf32, #tpu.memory_space<vmem>>, %arg14: memref<3x4x4xbf16, #tpu.memory_space<vmem>>, %arg15: memref<3x4x3xf32, #tpu.memory_space<vmem>>, %arg16: memref<3x4x4xbf16, #tpu.memory_space<vmem>>, %arg17: memref<3x4x3xf32, #tpu.memory_space<vmem>>, %arg18: memref<3x4x12xf32, #tpu.memory_space<vmem>>, %arg19: memref<3x4x4xbf16, #tpu.memory_space<vmem>>, %arg20: memref<3x4x3xf32, #tpu.memory_space<vmem>>, %arg21: memref<4x12xf32, #tpu.memory_space<vmem>>, %arg22: memref<2x4xbf16, #tpu.memory_space<vmem>>, %arg23: memref<2x3xf32, #tpu.memory_space<vmem>>, %arg24: memref<4x4xbf16, #tpu.memory_space<vmem>>, %arg25: memref<4x3xf32, #tpu.memory_space<vmem>>, %arg26: memref<4x12xf32, #tpu.memory_space<vmem>>, %arg27: memref<2x4xbf16, #tpu.memory_space<vmem>>, %arg28: memref<2x3xf32, #tpu.memory_space<vmem>>, %arg29: memref<1x4x256xf32, #tpu.memory_space<vmem>>) attributes {dimension_semantics = [#tpu.dimension_semantics<parallel>], iteration_bounds = array<i64: 2>, scalar_prefetch = 0 : i64, scratch_operands = 0 : i64, tpu.core_type = #tpu.core_type<tc>, window_params = [{transform_indices = @transform_0, window_bounds = array<i64: 1, 4, 64>}, {pipeline_mode = #tpu.pipeline_mode<synchronous>, transform_indices = @transform_1, window_bounds = array<i64: 64, 256>}, {transform_indices = @transform_2, window_bounds = array<i64: 1, 4, 256>}, {pipeline_mode = #tpu.pipeline_mode<synchronous>, transform_indices = @transform_3, window_bounds = array<i64: 9, 256>}, {pipeline_mode = #tpu.pipeline_mode<synchronous>, transform_indices = @transform_4, window_bounds = array<i64: 8, 4>}, {pipeline_mode = #tpu.pipeline_mode<synchronous>, transform_indices = @transform_5, window_bounds = array<i64: 8, 4>}, {pipeline_mode = #tpu.pipeline_mode<synchronous>, transform_indices = @transform_6, window_bounds = array<i64: 4, 2>}, {pipeline_mode = #tpu.pipeline_mode<synchronous>, transform_indices = @transform_7, window_bounds = array<i64: 4, 2>}, {pipeline_mode = #tpu.pipeline_mode<synchronous>, transform_indices = @transform_8, window_bounds = array<i64: 1, 4>}, {pipeline_mode = #tpu.pipeline_mode<synchronous>, transform_indices = @transform_9, window_bounds = array<i64: 4, 1>}, {pipeline_mode = #tpu.pipeline_mode<synchronous>, transform_indices = @transform_10, window_bounds = array<i64: 1, 2>}, {pipeline_mode = #tpu.pipeline_mode<synchronous>, transform_indices = @transform_11, window_bounds = array<i64: 2, 1>}, {pipeline_mode = #tpu.pipeline_mode<synchronous>, transform_indices = @transform_12, window_bounds = array<i64: 3, 4, 12>}, {pipeline_mode = #tpu.pipeline_mode<synchronous>, transform_indices = @transform_13, window_bounds = array<i64: 3, 4, 4>}, {pipeline_mode = #tpu.pipeline_mode<synchronous>, transform_indices = @transform_14, window_bounds = array<i64: 3, 4, 3>}, {pipeline_mode = #tpu.pipeline_mode<synchronous>, transform_indices = @transform_15, window_bounds = array<i64: 3, 4, 4>}, {pipeline_mode = #tpu.pipeline_mode<synchronous>, transform_indices = @transform_16, window_bounds = array<i64: 3, 4, 3>}, {pipeline_mode = #tpu.pipeline_mode<synchronous>, transform_indices = @transform_17, window_bounds = array<i64: 3, 4, 12>}, {pipeline_mode = #tpu.pipeline_mode<synchronous>, transform_indices = @transform_18, window_bounds = array<i64: 3, 4, 4>}, {pipeline_mode = #tpu.pipeline_mode<synchronous>, transform_indices = @transform_19, window_bounds = array<i64: 3, 4, 3>}, {pipeline_mode = #tpu.pipeline_mode<synchronous>, transform_indices = @transform_20, window_bounds = array<i64: 4, 12>}, {pipeline_mode = #tpu.pipeline_mode<synchronous>, transform_indices = @transform_21, window_bounds = array<i64: 2, 4>}, {pipeline_mode = #tpu.pipeline_mode<synchronous>, transform_indices = @transform_22, window_bounds = array<i64: 2, 3>}, {pipeline_mode = #tpu.pipeline_mode<synchronous>, transform_indices = @transform_23, window_bounds = array<i64: 4, 4>}, {pipeline_mode = #tpu.pipeline_mode<synchronous>, transform_indices = @transform_24, window_bounds = array<i64: 4, 3>}, {pipeline_mode = #tpu.pipeline_mode<synchronous>, transform_indices = @transform_25, window_bounds = array<i64: 4, 12>}, {pipeline_mode = #tpu.pipeline_mode<synchronous>, transform_indices = @transform_26, window_bounds = array<i64: 2, 4>}, {pipeline_mode = #tpu.pipeline_mode<synchronous>, transform_indices = @transform_27, window_bounds = array<i64: 2, 3>}, {transform_indices = @transform_28, window_bounds = array<i64: 1, 4, 256>}]} {
    %c0 = arith.constant 0 : index
    %c0_0 = arith.constant 0 : index
    %c0_1 = arith.constant 0 : index
    %0 = vector.load %arg1[%c0, %c0_0, %c0_1] : memref<1x4x64xf32, #tpu.memory_space<vmem>>, vector<1x4x64xf32>
    %1 = vector.shape_cast %0 : vector<1x4x64xf32> to vector<4x64xf32>
    %2 = arith.truncf %1 : vector<4x64xf32> to vector<4x64xbf16>
    %c0_2 = arith.constant 0 : index
    %c0_3 = arith.constant 0 : index
    %3 = vector.load %arg2[%c0_2, %c0_3] : memref<64x256xbf16, #tpu.memory_space<vmem>>, vector<64x256xbf16>
    %cst = arith.constant dense<0.000000e+00> : vector<4x256xf32>
    %4 = tpu.matmul %2, %3, %cst {dimension_numbers = #tpu.dot_dimension_numbers<[1], [0], [0], [1], [0, 0, 1, 1], [], []>} : vector<4x64xbf16>, vector<64x256xbf16>, vector<4x256xf32> -> vector<4x256xf32>
    %c0_4 = arith.constant 0 : index
    %c0_5 = arith.constant 0 : index
    %c0_6 = arith.constant 0 : index
    %5 = vector.load %arg3[%c0_4, %c0_5, %c0_6] : memref<1x4x256xf32, #tpu.memory_space<vmem>>, vector<1x4x256xf32>
    %6 = vector.shape_cast %5 : vector<1x4x256xf32> to vector<4x256xf32>
    %7 = tpu.concatenate %4, %6 in 0 : vector<4x256xf32>, vector<4x256xf32> -> vector<8x256xf32>
    %c0_7 = arith.constant 0 : index
    %c0_8 = arith.constant 0 : index
    %8 = vector.load %arg4[%c0_7, %c0_8] : memref<9x256xf32, #tpu.memory_space<vmem>>, vector<9x256xf32>
    %c0_9 = arith.constant 0 : index
    %c0_10 = arith.constant 0 : index
    %9 = vector.load %arg5[%c0_9, %c0_10] : memref<8x4xf32, #tpu.memory_space<vmem>>, vector<8x4xf32>
    %c0_11 = arith.constant 0 : index
    %c0_12 = arith.constant 0 : index
    %10 = vector.load %arg6[%c0_11, %c0_12] : memref<8x4xf32, #tpu.memory_space<vmem>>, vector<8x4xf32>
    %c0_13 = arith.constant 0 : index
    %c0_14 = arith.constant 0 : index
    %11 = vector.load %arg7[%c0_13, %c0_14] : memref<4x2xf32, #tpu.memory_space<vmem>>, vector<4x2xf32>
    %c0_15 = arith.constant 0 : index
    %c0_16 = arith.constant 0 : index
    %12 = vector.load %arg8[%c0_15, %c0_16] : memref<4x2xf32, #tpu.memory_space<vmem>>, vector<4x2xf32>
    %c0_17 = arith.constant 0 : index
    %c0_18 = arith.constant 0 : index
    %c0_19 = arith.constant 0 : index
    %13 = vector.load %arg13[%c0_17, %c0_18, %c0_19] : memref<3x4x12xf32, #tpu.memory_space<vmem>>, vector<1x4x12xf32>
    %14 = vector.shape_cast %13 : vector<1x4x12xf32> to vector<4x12xf32>
    %c0_20 = arith.constant 0 : index
    %c0_21 = arith.constant 0 : index
    %c0_22 = arith.constant 0 : index
    %15 = vector.load %arg14[%c0_20, %c0_21, %c0_22] : memref<3x4x4xbf16, #tpu.memory_space<vmem>>, vector<1x4x4xbf16>
    %16 = vector.shape_cast %15 : vector<1x4x4xbf16> to vector<4x4xbf16>
    %c0_23 = arith.constant 0 : index
    %c0_24 = arith.constant 0 : index
    %c0_25 = arith.constant 0 : index
    %17 = vector.load %arg15[%c0_23, %c0_24, %c0_25] : memref<3x4x3xf32, #tpu.memory_space<vmem>>, vector<1x4x3xf32>
    %18 = vector.shape_cast %17 : vector<1x4x3xf32> to vector<4x3xf32>
    %c0_26 = arith.constant 0 : index
    %c0_27 = arith.constant 0 : index
    %c0_28 = arith.constant 0 : index
    %19 = vector.load %arg16[%c0_26, %c0_27, %c0_28] : memref<3x4x4xbf16, #tpu.memory_space<vmem>>, vector<1x4x4xbf16>
    %20 = vector.shape_cast %19 : vector<1x4x4xbf16> to vector<4x4xbf16>
    %c0_29 = arith.constant 0 : index
    %c0_30 = arith.constant 0 : index
    %c0_31 = arith.constant 0 : index
    %21 = vector.load %arg17[%c0_29, %c0_30, %c0_31] : memref<3x4x3xf32, #tpu.memory_space<vmem>>, vector<1x4x3xf32>
    %22 = vector.shape_cast %21 : vector<1x4x3xf32> to vector<4x3xf32>
    %c0_32 = arith.constant 0 : index
    %c0_33 = arith.constant 0 : index
    %c0_34 = arith.constant 0 : index
    %23 = vector.load %arg18[%c0_32, %c0_33, %c0_34] : memref<3x4x12xf32, #tpu.memory_space<vmem>>, vector<1x4x12xf32>
    %24 = vector.shape_cast %23 : vector<1x4x12xf32> to vector<4x12xf32>
    %c0_35 = arith.constant 0 : index
    %c0_36 = arith.constant 0 : index
    %c0_37 = arith.constant 0 : index
    %25 = vector.load %arg19[%c0_35, %c0_36, %c0_37] : memref<3x4x4xbf16, #tpu.memory_space<vmem>>, vector<1x4x4xbf16>
    %26 = vector.shape_cast %25 : vector<1x4x4xbf16> to vector<4x4xbf16>
    %c0_38 = arith.constant 0 : index
    %c0_39 = arith.constant 0 : index
    %c0_40 = arith.constant 0 : index
    %27 = vector.load %arg20[%c0_38, %c0_39, %c0_40] : memref<3x4x3xf32, #tpu.memory_space<vmem>>, vector<1x4x3xf32>
    %28 = vector.shape_cast %27 : vector<1x4x3xf32> to vector<4x3xf32>
    %29 = vector.extract_strided_slice %7 {offsets = [0, 0], sizes = [4, 256], strides = [1, 1]} : vector<8x256xf32> to vector<4x256xf32>
    %30 = vector.extract_strided_slice %7 {offsets = [4, 0], sizes = [4, 256], strides = [1, 1]} : vector<8x256xf32> to vector<4x256xf32>
    %31 = vector.extract_strided_slice %14 {offsets = [0, 0], sizes = [4, 9], strides = [1, 1]} : vector<4x12xf32> to vector<4x9xf32>
    %32 = vector.extract_strided_slice %14 {offsets = [0, 9], sizes = [4, 1], strides = [1, 1]} : vector<4x12xf32> to vector<4x1xf32>
    %33 = vector.extract_strided_slice %31 {offsets = [0, 4], sizes = [4, 1], strides = [1, 1]} : vector<4x9xf32> to vector<4x1xf32>
    %34 = vector.broadcast %33 : vector<4x1xf32> to vector<4x256xf32>
    %35 = arith.mulf %29, %34 : vector<4x256xf32>
    %c17_i32 = arith.constant 17 : i32
    %36 = tpu.dynamic_rotate %29 by %c17_i32 dim 1 : vector<4x256xf32>, i32 -> vector<4x256xf32>
    %37 = vector.extract_strided_slice %8 {offsets = [0, 0], sizes = [1, 256], strides = [1, 1]} : vector<9x256xf32> to vector<1x256xf32>
    %38 = vector.broadcast %37 : vector<1x256xf32> to vector<4x256xf32>
    %39 = arith.mulf %36, %38 : vector<4x256xf32>
    %40 = vector.extract_strided_slice %31 {offsets = [0, 0], sizes = [4, 1], strides = [1, 1]} : vector<4x9xf32> to vector<4x1xf32>
    %41 = vector.broadcast %40 : vector<4x1xf32> to vector<4x256xf32>
    %42 = arith.mulf %39, %41 : vector<4x256xf32>
    %43 = arith.addf %35, %42 : vector<4x256xf32>
    %c16_i32 = arith.constant 16 : i32
    %44 = tpu.dynamic_rotate %29 by %c16_i32 dim 1 : vector<4x256xf32>, i32 -> vector<4x256xf32>
    %45 = vector.extract_strided_slice %8 {offsets = [1, 0], sizes = [1, 256], strides = [1, 1]} : vector<9x256xf32> to vector<1x256xf32>
    %46 = vector.broadcast %45 : vector<1x256xf32> to vector<4x256xf32>
    %47 = arith.mulf %44, %46 : vector<4x256xf32>
    %48 = vector.extract_strided_slice %31 {offsets = [0, 1], sizes = [4, 1], strides = [1, 1]} : vector<4x9xf32> to vector<4x1xf32>
    %49 = vector.broadcast %48 : vector<4x1xf32> to vector<4x256xf32>
    %50 = arith.mulf %47, %49 : vector<4x256xf32>
    %51 = arith.addf %43, %50 : vector<4x256xf32>
    %c15_i32 = arith.constant 15 : i32
    %52 = tpu.dynamic_rotate %29 by %c15_i32 dim 1 : vector<4x256xf32>, i32 -> vector<4x256xf32>
    %53 = vector.extract_strided_slice %8 {offsets = [2, 0], sizes = [1, 256], strides = [1, 1]} : vector<9x256xf32> to vector<1x256xf32>
    %54 = vector.broadcast %53 : vector<1x256xf32> to vector<4x256xf32>
    %55 = arith.mulf %52, %54 : vector<4x256xf32>
    %56 = vector.extract_strided_slice %31 {offsets = [0, 2], sizes = [4, 1], strides = [1, 1]} : vector<4x9xf32> to vector<4x1xf32>
    %57 = vector.broadcast %56 : vector<4x1xf32> to vector<4x256xf32>
    %58 = arith.mulf %55, %57 : vector<4x256xf32>
    %59 = arith.addf %51, %58 : vector<4x256xf32>
    %c1_i32 = arith.constant 1 : i32
    %60 = tpu.dynamic_rotate %29 by %c1_i32 dim 1 : vector<4x256xf32>, i32 -> vector<4x256xf32>
    %61 = vector.extract_strided_slice %8 {offsets = [3, 0], sizes = [1, 256], strides = [1, 1]} : vector<9x256xf32> to vector<1x256xf32>
    %62 = vector.broadcast %61 : vector<1x256xf32> to vector<4x256xf32>
    %63 = arith.mulf %60, %62 : vector<4x256xf32>
    %64 = vector.extract_strided_slice %31 {offsets = [0, 3], sizes = [4, 1], strides = [1, 1]} : vector<4x9xf32> to vector<4x1xf32>
    %65 = vector.broadcast %64 : vector<4x1xf32> to vector<4x256xf32>
    %66 = arith.mulf %63, %65 : vector<4x256xf32>
    %67 = arith.addf %59, %66 : vector<4x256xf32>
    %c255_i32 = arith.constant 255 : i32
    %68 = tpu.dynamic_rotate %29 by %c255_i32 dim 1 : vector<4x256xf32>, i32 -> vector<4x256xf32>
    %69 = vector.extract_strided_slice %8 {offsets = [5, 0], sizes = [1, 256], strides = [1, 1]} : vector<9x256xf32> to vector<1x256xf32>
    %70 = vector.broadcast %69 : vector<1x256xf32> to vector<4x256xf32>
    %71 = arith.mulf %68, %70 : vector<4x256xf32>
    %72 = vector.extract_strided_slice %31 {offsets = [0, 5], sizes = [4, 1], strides = [1, 1]} : vector<4x9xf32> to vector<4x1xf32>
    %73 = vector.broadcast %72 : vector<4x1xf32> to vector<4x256xf32>
    %74 = arith.mulf %71, %73 : vector<4x256xf32>
    %75 = arith.addf %67, %74 : vector<4x256xf32>
    %c241_i32 = arith.constant 241 : i32
    %76 = tpu.dynamic_rotate %29 by %c241_i32 dim 1 : vector<4x256xf32>, i32 -> vector<4x256xf32>
    %77 = vector.extract_strided_slice %8 {offsets = [6, 0], sizes = [1, 256], strides = [1, 1]} : vector<9x256xf32> to vector<1x256xf32>
    %78 = vector.broadcast %77 : vector<1x256xf32> to vector<4x256xf32>
    %79 = arith.mulf %76, %78 : vector<4x256xf32>
    %80 = vector.extract_strided_slice %31 {offsets = [0, 6], sizes = [4, 1], strides = [1, 1]} : vector<4x9xf32> to vector<4x1xf32>
    %81 = vector.broadcast %80 : vector<4x1xf32> to vector<4x256xf32>
    %82 = arith.mulf %79, %81 : vector<4x256xf32>
    %83 = arith.addf %75, %82 : vector<4x256xf32>
    %c240_i32 = arith.constant 240 : i32
    %84 = tpu.dynamic_rotate %29 by %c240_i32 dim 1 : vector<4x256xf32>, i32 -> vector<4x256xf32>
    %85 = vector.extract_strided_slice %8 {offsets = [7, 0], sizes = [1, 256], strides = [1, 1]} : vector<9x256xf32> to vector<1x256xf32>
    %86 = vector.broadcast %85 : vector<1x256xf32> to vector<4x256xf32>
    %87 = arith.mulf %84, %86 : vector<4x256xf32>
    %88 = vector.extract_strided_slice %31 {offsets = [0, 7], sizes = [4, 1], strides = [1, 1]} : vector<4x9xf32> to vector<4x1xf32>
    %89 = vector.broadcast %88 : vector<4x1xf32> to vector<4x256xf32>
    %90 = arith.mulf %87, %89 : vector<4x256xf32>
    %91 = arith.addf %83, %90 : vector<4x256xf32>
    %c239_i32 = arith.constant 239 : i32
    %92 = tpu.dynamic_rotate %29 by %c239_i32 dim 1 : vector<4x256xf32>, i32 -> vector<4x256xf32>
    %93 = vector.extract_strided_slice %8 {offsets = [8, 0], sizes = [1, 256], strides = [1, 1]} : vector<9x256xf32> to vector<1x256xf32>
    %94 = vector.broadcast %93 : vector<1x256xf32> to vector<4x256xf32>
    %95 = arith.mulf %92, %94 : vector<4x256xf32>
    %96 = vector.extract_strided_slice %31 {offsets = [0, 8], sizes = [4, 1], strides = [1, 1]} : vector<4x9xf32> to vector<4x1xf32>
    %97 = vector.broadcast %96 : vector<4x1xf32> to vector<4x256xf32>
    %98 = arith.mulf %95, %97 : vector<4x256xf32>
    %99 = arith.addf %91, %98 : vector<4x256xf32>
    %100 = vector.broadcast %32 : vector<4x1xf32> to vector<4x256xf32>
    %101 = arith.addf %99, %100 : vector<4x256xf32>
    %102 = vector.extract_strided_slice %14 {offsets = [0, 10], sizes = [4, 1], strides = [1, 1]} : vector<4x12xf32> to vector<4x1xf32>
    %103 = vector.extract_strided_slice %14 {offsets = [0, 11], sizes = [4, 1], strides = [1, 1]} : vector<4x12xf32> to vector<4x1xf32>
    %104 = vector.shape_cast %101 : vector<4x256xf32> to vector<1x4x256xf32>
    %cst_41 = arith.constant dense<0.000000e+00> : vector<1xf32>
    %105 = vector.multi_reduction <add>, %104, %cst_41 [1, 2] : vector<1x4x256xf32> to vector<1xf32>
    %106 = vector.shape_cast %105 : vector<1xf32> to vector<1x1x1xf32>
    %107 = vector.extract %106[0, 0, 0] : f32 from vector<1x1x1xf32>
    %cst_42 = arith.constant 1.024000e+03 : f32
    %108 = arith.divf %107, %cst_42 : f32
    %109 = vector.broadcast %108 : f32 to vector<4x256xf32>
    %110 = arith.subf %101, %109 : vector<4x256xf32>
    %111 = arith.mulf %110, %110 : vector<4x256xf32>
    %112 = vector.shape_cast %111 : vector<4x256xf32> to vector<1x4x256xf32>
    %cst_43 = arith.constant dense<0.000000e+00> : vector<1xf32>
    %113 = vector.multi_reduction <add>, %112, %cst_43 [1, 2] : vector<1x4x256xf32> to vector<1xf32>
    %114 = vector.shape_cast %113 : vector<1xf32> to vector<1x1x1xf32>
    %115 = vector.extract %114[0, 0, 0] : f32 from vector<1x1x1xf32>
    %cst_44 = arith.constant 1.024000e+03 : f32
    %116 = arith.divf %115, %cst_44 : f32
    %cst_45 = arith.constant 9.99999974E-6 : f32
    %117 = arith.addf %116, %cst_45 : f32
    %118 = math.rsqrt %117 : f32
    %119 = vector.broadcast %118 : f32 to vector<4x256xf32>
    %120 = arith.mulf %110, %119 : vector<4x256xf32>
    %121 = vector.broadcast %102 : vector<4x1xf32> to vector<4x256xf32>
    %122 = arith.mulf %120, %121 : vector<4x256xf32>
    %123 = vector.broadcast %103 : vector<4x1xf32> to vector<4x256xf32>
    %124 = arith.addf %122, %123 : vector<4x256xf32>
    %125 = arith.truncf %124 : vector<4x256xf32> to vector<4x256xbf16>
    %cst_46 = arith.constant dense<0.000000e+00> : vector<4x256xf32>
    %126 = tpu.matmul %16, %125, %cst_46 {dimension_numbers = #tpu.dot_dimension_numbers<[1], [0], [0], [1], [0, 0, 1, 1], [], []>} : vector<4x4xbf16>, vector<4x256xbf16>, vector<4x256xf32> -> vector<4x256xf32>
    %127 = vector.extract_strided_slice %18 {offsets = [0, 0], sizes = [4, 1], strides = [1, 1]} : vector<4x3xf32> to vector<4x1xf32>
    %128 = vector.broadcast %127 : vector<4x1xf32> to vector<4x256xf32>
    %129 = arith.addf %126, %128 : vector<4x256xf32>
    %130 = vector.extract_strided_slice %18 {offsets = [0, 1], sizes = [4, 1], strides = [1, 1]} : vector<4x3xf32> to vector<4x1xf32>
    %131 = vector.extract_strided_slice %18 {offsets = [0, 2], sizes = [4, 1], strides = [1, 1]} : vector<4x3xf32> to vector<4x1xf32>
    %132 = vector.shape_cast %129 : vector<4x256xf32> to vector<1x4x256xf32>
    %cst_47 = arith.constant dense<0.000000e+00> : vector<1xf32>
    %133 = vector.multi_reduction <add>, %132, %cst_47 [1, 2] : vector<1x4x256xf32> to vector<1xf32>
    %134 = vector.shape_cast %133 : vector<1xf32> to vector<1x1x1xf32>
    %135 = vector.extract %134[0, 0, 0] : f32 from vector<1x1x1xf32>
    %cst_48 = arith.constant 1.024000e+03 : f32
    %136 = arith.divf %135, %cst_48 : f32
    %137 = vector.broadcast %136 : f32 to vector<4x256xf32>
    %138 = arith.subf %129, %137 : vector<4x256xf32>
    %139 = arith.mulf %138, %138 : vector<4x256xf32>
    %140 = vector.shape_cast %139 : vector<4x256xf32> to vector<1x4x256xf32>
    %cst_49 = arith.constant dense<0.000000e+00> : vector<1xf32>
    %141 = vector.multi_reduction <add>, %140, %cst_49 [1, 2] : vector<1x4x256xf32> to vector<1xf32>
    %142 = vector.shape_cast %141 : vector<1xf32> to vector<1x1x1xf32>
    %143 = vector.extract %142[0, 0, 0] : f32 from vector<1x1x1xf32>
    %cst_50 = arith.constant 1.024000e+03 : f32
    %144 = arith.divf %143, %cst_50 : f32
    %cst_51 = arith.constant 9.99999974E-6 : f32
    %145 = arith.addf %144, %cst_51 : f32
    %146 = math.rsqrt %145 : f32
    %147 = vector.broadcast %146 : f32 to vector<4x256xf32>
    %148 = arith.mulf %138, %147 : vector<4x256xf32>
    %149 = vector.broadcast %130 : vector<4x1xf32> to vector<4x256xf32>
    %150 = arith.mulf %148, %149 : vector<4x256xf32>
    %151 = vector.broadcast %131 : vector<4x1xf32> to vector<4x256xf32>
    %152 = arith.addf %150, %151 : vector<4x256xf32>
    %153 = arith.negf %152 : vector<4x256xf32>
    %154 = math.exp %153 : vector<4x256xf32>
    %cst_52 = arith.constant 1.000000e+00 : f32
    %155 = vector.broadcast %cst_52 : f32 to vector<4x256xf32>
    %156 = arith.addf %155, %154 : vector<4x256xf32>
    %157 = arith.divf %155, %156 : vector<4x256xf32>
    %158 = arith.mulf %152, %157 : vector<4x256xf32>
    %159 = arith.truncf %30 : vector<4x256xf32> to vector<4x256xbf16>
    %cst_53 = arith.constant dense<0.000000e+00> : vector<4x256xf32>
    %160 = tpu.matmul %20, %159, %cst_53 {dimension_numbers = #tpu.dot_dimension_numbers<[1], [0], [0], [1], [0, 0, 1, 1], [], []>} : vector<4x4xbf16>, vector<4x256xbf16>, vector<4x256xf32> -> vector<4x256xf32>
    %161 = vector.extract_strided_slice %22 {offsets = [0, 0], sizes = [4, 1], strides = [1, 1]} : vector<4x3xf32> to vector<4x1xf32>
    %162 = vector.broadcast %161 : vector<4x1xf32> to vector<4x256xf32>
    %163 = arith.addf %160, %162 : vector<4x256xf32>
    %164 = vector.extract_strided_slice %22 {offsets = [0, 1], sizes = [4, 1], strides = [1, 1]} : vector<4x3xf32> to vector<4x1xf32>
    %165 = vector.extract_strided_slice %22 {offsets = [0, 2], sizes = [4, 1], strides = [1, 1]} : vector<4x3xf32> to vector<4x1xf32>
    %166 = vector.shape_cast %163 : vector<4x256xf32> to vector<1x4x256xf32>
    %cst_54 = arith.constant dense<0.000000e+00> : vector<1xf32>
    %167 = vector.multi_reduction <add>, %166, %cst_54 [1, 2] : vector<1x4x256xf32> to vector<1xf32>
    %168 = vector.shape_cast %167 : vector<1xf32> to vector<1x1x1xf32>
    %169 = vector.extract %168[0, 0, 0] : f32 from vector<1x1x1xf32>
    %cst_55 = arith.constant 1.024000e+03 : f32
    %170 = arith.divf %169, %cst_55 : f32
    %171 = vector.broadcast %170 : f32 to vector<4x256xf32>
    %172 = arith.subf %163, %171 : vector<4x256xf32>
    %173 = arith.mulf %172, %172 : vector<4x256xf32>
    %174 = vector.shape_cast %173 : vector<4x256xf32> to vector<1x4x256xf32>
    %cst_56 = arith.constant dense<0.000000e+00> : vector<1xf32>
    %175 = vector.multi_reduction <add>, %174, %cst_56 [1, 2] : vector<1x4x256xf32> to vector<1xf32>
    %176 = vector.shape_cast %175 : vector<1xf32> to vector<1x1x1xf32>
    %177 = vector.extract %176[0, 0, 0] : f32 from vector<1x1x1xf32>
    %cst_57 = arith.constant 1.024000e+03 : f32
    %178 = arith.divf %177, %cst_57 : f32
    %cst_58 = arith.constant 9.99999974E-6 : f32
    %179 = arith.addf %178, %cst_58 : f32
    %180 = math.rsqrt %179 : f32
    %181 = vector.broadcast %180 : f32 to vector<4x256xf32>
    %182 = arith.mulf %172, %181 : vector<4x256xf32>
    %183 = vector.broadcast %164 : vector<4x1xf32> to vector<4x256xf32>
    %184 = arith.mulf %182, %183 : vector<4x256xf32>
    %185 = vector.broadcast %165 : vector<4x1xf32> to vector<4x256xf32>
    %186 = arith.addf %184, %185 : vector<4x256xf32>
    %187 = arith.negf %186 : vector<4x256xf32>
    %188 = math.exp %187 : vector<4x256xf32>
    %cst_59 = arith.constant 1.000000e+00 : f32
    %189 = vector.broadcast %cst_59 : f32 to vector<4x256xf32>
    %190 = arith.addf %189, %188 : vector<4x256xf32>
    %191 = arith.divf %189, %190 : vector<4x256xf32>
    %192 = arith.mulf %186, %191 : vector<4x256xf32>
    %193 = vector.extract_strided_slice %24 {offsets = [0, 0], sizes = [4, 9], strides = [1, 1]} : vector<4x12xf32> to vector<4x9xf32>
    %194 = vector.extract_strided_slice %24 {offsets = [0, 9], sizes = [4, 1], strides = [1, 1]} : vector<4x12xf32> to vector<4x1xf32>
    %195 = vector.extract_strided_slice %193 {offsets = [0, 4], sizes = [4, 1], strides = [1, 1]} : vector<4x9xf32> to vector<4x1xf32>
    %196 = vector.broadcast %195 : vector<4x1xf32> to vector<4x256xf32>
    %197 = arith.mulf %192, %196 : vector<4x256xf32>
    %c17_i32_60 = arith.constant 17 : i32
    %198 = tpu.dynamic_rotate %192 by %c17_i32_60 dim 1 : vector<4x256xf32>, i32 -> vector<4x256xf32>
    %199 = vector.extract_strided_slice %8 {offsets = [0, 0], sizes = [1, 256], strides = [1, 1]} : vector<9x256xf32> to vector<1x256xf32>
    %200 = vector.broadcast %199 : vector<1x256xf32> to vector<4x256xf32>
    %201 = arith.mulf %198, %200 : vector<4x256xf32>
    %202 = vector.extract_strided_slice %193 {offsets = [0, 0], sizes = [4, 1], strides = [1, 1]} : vector<4x9xf32> to vector<4x1xf32>
    %203 = vector.broadcast %202 : vector<4x1xf32> to vector<4x256xf32>
    %204 = arith.mulf %201, %203 : vector<4x256xf32>
    %205 = arith.addf %197, %204 : vector<4x256xf32>
    %c16_i32_61 = arith.constant 16 : i32
    %206 = tpu.dynamic_rotate %192 by %c16_i32_61 dim 1 : vector<4x256xf32>, i32 -> vector<4x256xf32>
    %207 = vector.extract_strided_slice %8 {offsets = [1, 0], sizes = [1, 256], strides = [1, 1]} : vector<9x256xf32> to vector<1x256xf32>
    %208 = vector.broadcast %207 : vector<1x256xf32> to vector<4x256xf32>
    %209 = arith.mulf %206, %208 : vector<4x256xf32>
    %210 = vector.extract_strided_slice %193 {offsets = [0, 1], sizes = [4, 1], strides = [1, 1]} : vector<4x9xf32> to vector<4x1xf32>
    %211 = vector.broadcast %210 : vector<4x1xf32> to vector<4x256xf32>
    %212 = arith.mulf %209, %211 : vector<4x256xf32>
    %213 = arith.addf %205, %212 : vector<4x256xf32>
    %c15_i32_62 = arith.constant 15 : i32
    %214 = tpu.dynamic_rotate %192 by %c15_i32_62 dim 1 : vector<4x256xf32>, i32 -> vector<4x256xf32>
    %215 = vector.extract_strided_slice %8 {offsets = [2, 0], sizes = [1, 256], strides = [1, 1]} : vector<9x256xf32> to vector<1x256xf32>
    %216 = vector.broadcast %215 : vector<1x256xf32> to vector<4x256xf32>
    %217 = arith.mulf %214, %216 : vector<4x256xf32>
    %218 = vector.extract_strided_slice %193 {offsets = [0, 2], sizes = [4, 1], strides = [1, 1]} : vector<4x9xf32> to vector<4x1xf32>
    %219 = vector.broadcast %218 : vector<4x1xf32> to vector<4x256xf32>
    %220 = arith.mulf %217, %219 : vector<4x256xf32>
    %221 = arith.addf %213, %220 : vector<4x256xf32>
    %c1_i32_63 = arith.constant 1 : i32
    %222 = tpu.dynamic_rotate %192 by %c1_i32_63 dim 1 : vector<4x256xf32>, i32 -> vector<4x256xf32>
    %223 = vector.extract_strided_slice %8 {offsets = [3, 0], sizes = [1, 256], strides = [1, 1]} : vector<9x256xf32> to vector<1x256xf32>
    %224 = vector.broadcast %223 : vector<1x256xf32> to vector<4x256xf32>
    %225 = arith.mulf %222, %224 : vector<4x256xf32>
    %226 = vector.extract_strided_slice %193 {offsets = [0, 3], sizes = [4, 1], strides = [1, 1]} : vector<4x9xf32> to vector<4x1xf32>
    %227 = vector.broadcast %226 : vector<4x1xf32> to vector<4x256xf32>
    %228 = arith.mulf %225, %227 : vector<4x256xf32>
    %229 = arith.addf %221, %228 : vector<4x256xf32>
    %c255_i32_64 = arith.constant 255 : i32
    %230 = tpu.dynamic_rotate %192 by %c255_i32_64 dim 1 : vector<4x256xf32>, i32 -> vector<4x256xf32>
    %231 = vector.extract_strided_slice %8 {offsets = [5, 0], sizes = [1, 256], strides = [1, 1]} : vector<9x256xf32> to vector<1x256xf32>
    %232 = vector.broadcast %231 : vector<1x256xf32> to vector<4x256xf32>
    %233 = arith.mulf %230, %232 : vector<4x256xf32>
    %234 = vector.extract_strided_slice %193 {offsets = [0, 5], sizes = [4, 1], strides = [1, 1]} : vector<4x9xf32> to vector<4x1xf32>
    %235 = vector.broadcast %234 : vector<4x1xf32> to vector<4x256xf32>
    %236 = arith.mulf %233, %235 : vector<4x256xf32>
    %237 = arith.addf %229, %236 : vector<4x256xf32>
    %c241_i32_65 = arith.constant 241 : i32
    %238 = tpu.dynamic_rotate %192 by %c241_i32_65 dim 1 : vector<4x256xf32>, i32 -> vector<4x256xf32>
    %239 = vector.extract_strided_slice %8 {offsets = [6, 0], sizes = [1, 256], strides = [1, 1]} : vector<9x256xf32> to vector<1x256xf32>
    %240 = vector.broadcast %239 : vector<1x256xf32> to vector<4x256xf32>
    %241 = arith.mulf %238, %240 : vector<4x256xf32>
    %242 = vector.extract_strided_slice %193 {offsets = [0, 6], sizes = [4, 1], strides = [1, 1]} : vector<4x9xf32> to vector<4x1xf32>
    %243 = vector.broadcast %242 : vector<4x1xf32> to vector<4x256xf32>
    %244 = arith.mulf %241, %243 : vector<4x256xf32>
    %245 = arith.addf %237, %244 : vector<4x256xf32>
    %c240_i32_66 = arith.constant 240 : i32
    %246 = tpu.dynamic_rotate %192 by %c240_i32_66 dim 1 : vector<4x256xf32>, i32 -> vector<4x256xf32>
    %247 = vector.extract_strided_slice %8 {offsets = [7, 0], sizes = [1, 256], strides = [1, 1]} : vector<9x256xf32> to vector<1x256xf32>
    %248 = vector.broadcast %247 : vector<1x256xf32> to vector<4x256xf32>
    %249 = arith.mulf %246, %248 : vector<4x256xf32>
    %250 = vector.extract_strided_slice %193 {offsets = [0, 7], sizes = [4, 1], strides = [1, 1]} : vector<4x9xf32> to vector<4x1xf32>
    %251 = vector.broadcast %250 : vector<4x1xf32> to vector<4x256xf32>
    %252 = arith.mulf %249, %251 : vector<4x256xf32>
    %253 = arith.addf %245, %252 : vector<4x256xf32>
    %c239_i32_67 = arith.constant 239 : i32
    %254 = tpu.dynamic_rotate %192 by %c239_i32_67 dim 1 : vector<4x256xf32>, i32 -> vector<4x256xf32>
    %255 = vector.extract_strided_slice %8 {offsets = [8, 0], sizes = [1, 256], strides = [1, 1]} : vector<9x256xf32> to vector<1x256xf32>
    %256 = vector.broadcast %255 : vector<1x256xf32> to vector<4x256xf32>
    %257 = arith.mulf %254, %256 : vector<4x256xf32>
    %258 = vector.extract_strided_slice %193 {offsets = [0, 8], sizes = [4, 1], strides = [1, 1]} : vector<4x9xf32> to vector<4x1xf32>
    %259 = vector.broadcast %258 : vector<4x1xf32> to vector<4x256xf32>
    %260 = arith.mulf %257, %259 : vector<4x256xf32>
    %261 = arith.addf %253, %260 : vector<4x256xf32>
    %262 = vector.broadcast %194 : vector<4x1xf32> to vector<4x256xf32>
    %263 = arith.addf %261, %262 : vector<4x256xf32>
    %264 = vector.extract_strided_slice %24 {offsets = [0, 10], sizes = [4, 1], strides = [1, 1]} : vector<4x12xf32> to vector<4x1xf32>
    %265 = vector.extract_strided_slice %24 {offsets = [0, 11], sizes = [4, 1], strides = [1, 1]} : vector<4x12xf32> to vector<4x1xf32>
    %266 = vector.shape_cast %263 : vector<4x256xf32> to vector<1x4x256xf32>
    %cst_68 = arith.constant dense<0.000000e+00> : vector<1xf32>
    %267 = vector.multi_reduction <add>, %266, %cst_68 [1, 2] : vector<1x4x256xf32> to vector<1xf32>
    %268 = vector.shape_cast %267 : vector<1xf32> to vector<1x1x1xf32>
    %269 = vector.extract %268[0, 0, 0] : f32 from vector<1x1x1xf32>
    %cst_69 = arith.constant 1.024000e+03 : f32
    %270 = arith.divf %269, %cst_69 : f32
    %271 = vector.broadcast %270 : f32 to vector<4x256xf32>
    %272 = arith.subf %263, %271 : vector<4x256xf32>
    %273 = arith.mulf %272, %272 : vector<4x256xf32>
    %274 = vector.shape_cast %273 : vector<4x256xf32> to vector<1x4x256xf32>
    %cst_70 = arith.constant dense<0.000000e+00> : vector<1xf32>
    %275 = vector.multi_reduction <add>, %274, %cst_70 [1, 2] : vector<1x4x256xf32> to vector<1xf32>
    %276 = vector.shape_cast %275 : vector<1xf32> to vector<1x1x1xf32>
    %277 = vector.extract %276[0, 0, 0] : f32 from vector<1x1x1xf32>
    %cst_71 = arith.constant 1.024000e+03 : f32
    %278 = arith.divf %277, %cst_71 : f32
    %cst_72 = arith.constant 9.99999974E-6 : f32
    %279 = arith.addf %278, %cst_72 : f32
    %280 = math.rsqrt %279 : f32
    %281 = vector.broadcast %280 : f32 to vector<4x256xf32>
    %282 = arith.mulf %272, %281 : vector<4x256xf32>
    %283 = vector.broadcast %264 : vector<4x1xf32> to vector<4x256xf32>
    %284 = arith.mulf %282, %283 : vector<4x256xf32>
    %285 = vector.broadcast %265 : vector<4x1xf32> to vector<4x256xf32>
    %286 = arith.addf %284, %285 : vector<4x256xf32>
    %287 = arith.truncf %286 : vector<4x256xf32> to vector<4x256xbf16>
    %cst_73 = arith.constant dense<0.000000e+00> : vector<4x256xf32>
    %288 = tpu.matmul %26, %287, %cst_73 {dimension_numbers = #tpu.dot_dimension_numbers<[1], [0], [0], [1], [0, 0, 1, 1], [], []>} : vector<4x4xbf16>, vector<4x256xbf16>, vector<4x256xf32> -> vector<4x256xf32>
    %289 = vector.extract_strided_slice %28 {offsets = [0, 0], sizes = [4, 1], strides = [1, 1]} : vector<4x3xf32> to vector<4x1xf32>
    %290 = vector.broadcast %289 : vector<4x1xf32> to vector<4x256xf32>
    %291 = arith.addf %288, %290 : vector<4x256xf32>
    %292 = vector.extract_strided_slice %28 {offsets = [0, 1], sizes = [4, 1], strides = [1, 1]} : vector<4x3xf32> to vector<4x1xf32>
    %293 = vector.extract_strided_slice %28 {offsets = [0, 2], sizes = [4, 1], strides = [1, 1]} : vector<4x3xf32> to vector<4x1xf32>
    %294 = vector.shape_cast %291 : vector<4x256xf32> to vector<1x4x256xf32>
    %cst_74 = arith.constant dense<0.000000e+00> : vector<1xf32>
    %295 = vector.multi_reduction <add>, %294, %cst_74 [1, 2] : vector<1x4x256xf32> to vector<1xf32>
    %296 = vector.shape_cast %295 : vector<1xf32> to vector<1x1x1xf32>
    %297 = vector.extract %296[0, 0, 0] : f32 from vector<1x1x1xf32>
    %cst_75 = arith.constant 1.024000e+03 : f32
    %298 = arith.divf %297, %cst_75 : f32
    %299 = vector.broadcast %298 : f32 to vector<4x256xf32>
    %300 = arith.subf %291, %299 : vector<4x256xf32>
    %301 = arith.mulf %300, %300 : vector<4x256xf32>
    %302 = vector.shape_cast %301 : vector<4x256xf32> to vector<1x4x256xf32>
    %cst_76 = arith.constant dense<0.000000e+00> : vector<1xf32>
    %303 = vector.multi_reduction <add>, %302, %cst_76 [1, 2] : vector<1x4x256xf32> to vector<1xf32>
    %304 = vector.shape_cast %303 : vector<1xf32> to vector<1x1x1xf32>
    %305 = vector.extract %304[0, 0, 0] : f32 from vector<1x1x1xf32>
    %cst_77 = arith.constant 1.024000e+03 : f32
    %306 = arith.divf %305, %cst_77 : f32
    %cst_78 = arith.constant 9.99999974E-6 : f32
    %307 = arith.addf %306, %cst_78 : f32
    %308 = math.rsqrt %307 : f32
    %309 = vector.broadcast %308 : f32 to vector<4x256xf32>
    %310 = arith.mulf %300, %309 : vector<4x256xf32>
    %311 = vector.broadcast %292 : vector<4x1xf32> to vector<4x256xf32>
    %312 = arith.mulf %310, %311 : vector<4x256xf32>
    %313 = vector.broadcast %293 : vector<4x1xf32> to vector<4x256xf32>
    %314 = arith.addf %312, %313 : vector<4x256xf32>
    %315 = arith.negf %314 : vector<4x256xf32>
    %316 = math.exp %315 : vector<4x256xf32>
    %cst_79 = arith.constant 1.000000e+00 : f32
    %317 = vector.broadcast %cst_79 : f32 to vector<4x256xf32>
    %318 = arith.addf %317, %316 : vector<4x256xf32>
    %319 = arith.divf %317, %318 : vector<4x256xf32>
    %320 = arith.mulf %314, %319 : vector<4x256xf32>
    %cst_80 = arith.constant dense<0.000000e+00> : vector<8x256xf32>
    %321 = tpu.matmul %9, %158, %cst_80 {dimension_numbers = #tpu.dot_dimension_numbers<[1], [0], [0], [1], [0, 0, 1, 1], [], []>} : vector<8x4xf32>, vector<4x256xf32>, vector<8x256xf32> -> vector<8x256xf32>
    %cst_81 = arith.constant dense<0.000000e+00> : vector<8x256xf32>
    %322 = tpu.matmul %10, %320, %cst_81 {dimension_numbers = #tpu.dot_dimension_numbers<[1], [0], [0], [1], [0, 0, 1, 1], [], []>} : vector<8x4xf32>, vector<4x256xf32>, vector<8x256xf32> -> vector<8x256xf32>
    %323 = arith.addf %321, %322 : vector<8x256xf32>
    %c1 = arith.constant 1 : index
    %c0_82 = arith.constant 0 : index
    %c0_83 = arith.constant 0 : index
    %324 = vector.load %arg13[%c1, %c0_82, %c0_83] : memref<3x4x12xf32, #tpu.memory_space<vmem>>, vector<1x4x12xf32>
    %325 = vector.shape_cast %324 : vector<1x4x12xf32> to vector<4x12xf32>
    %c1_84 = arith.constant 1 : index
    %c0_85 = arith.constant 0 : index
    %c0_86 = arith.constant 0 : index
    %326 = vector.load %arg14[%c1_84, %c0_85, %c0_86] : memref<3x4x4xbf16, #tpu.memory_space<vmem>>, vector<1x4x4xbf16>
    %327 = vector.shape_cast %326 : vector<1x4x4xbf16> to vector<4x4xbf16>
    %c1_87 = arith.constant 1 : index
    %c0_88 = arith.constant 0 : index
    %c0_89 = arith.constant 0 : index
    %328 = vector.load %arg15[%c1_87, %c0_88, %c0_89] : memref<3x4x3xf32, #tpu.memory_space<vmem>>, vector<1x4x3xf32>
    %329 = vector.shape_cast %328 : vector<1x4x3xf32> to vector<4x3xf32>
    %c1_90 = arith.constant 1 : index
    %c0_91 = arith.constant 0 : index
    %c0_92 = arith.constant 0 : index
    %330 = vector.load %arg16[%c1_90, %c0_91, %c0_92] : memref<3x4x4xbf16, #tpu.memory_space<vmem>>, vector<1x4x4xbf16>
    %331 = vector.shape_cast %330 : vector<1x4x4xbf16> to vector<4x4xbf16>
    %c1_93 = arith.constant 1 : index
    %c0_94 = arith.constant 0 : index
    %c0_95 = arith.constant 0 : index
    %332 = vector.load %arg17[%c1_93, %c0_94, %c0_95] : memref<3x4x3xf32, #tpu.memory_space<vmem>>, vector<1x4x3xf32>
    %333 = vector.shape_cast %332 : vector<1x4x3xf32> to vector<4x3xf32>
    %c1_96 = arith.constant 1 : index
    %c0_97 = arith.constant 0 : index
    %c0_98 = arith.constant 0 : index
    %334 = vector.load %arg18[%c1_96, %c0_97, %c0_98] : memref<3x4x12xf32, #tpu.memory_space<vmem>>, vector<1x4x12xf32>
    %335 = vector.shape_cast %334 : vector<1x4x12xf32> to vector<4x12xf32>
    %c1_99 = arith.constant 1 : index
    %c0_100 = arith.constant 0 : index
    %c0_101 = arith.constant 0 : index
    %336 = vector.load %arg19[%c1_99, %c0_100, %c0_101] : memref<3x4x4xbf16, #tpu.memory_space<vmem>>, vector<1x4x4xbf16>
    %337 = vector.shape_cast %336 : vector<1x4x4xbf16> to vector<4x4xbf16>
    %c1_102 = arith.constant 1 : index
    %c0_103 = arith.constant 0 : index
    %c0_104 = arith.constant 0 : index
    %338 = vector.load %arg20[%c1_102, %c0_103, %c0_104] : memref<3x4x3xf32, #tpu.memory_space<vmem>>, vector<1x4x3xf32>
    %339 = vector.shape_cast %338 : vector<1x4x3xf32> to vector<4x3xf32>
    %340 = vector.extract_strided_slice %323 {offsets = [0, 0], sizes = [4, 256], strides = [1, 1]} : vector<8x256xf32> to vector<4x256xf32>
    %341 = vector.extract_strided_slice %323 {offsets = [4, 0], sizes = [4, 256], strides = [1, 1]} : vector<8x256xf32> to vector<4x256xf32>
    %342 = vector.extract_strided_slice %325 {offsets = [0, 0], sizes = [4, 9], strides = [1, 1]} : vector<4x12xf32> to vector<4x9xf32>
    %343 = vector.extract_strided_slice %325 {offsets = [0, 9], sizes = [4, 1], strides = [1, 1]} : vector<4x12xf32> to vector<4x1xf32>
    %344 = vector.extract_strided_slice %342 {offsets = [0, 4], sizes = [4, 1], strides = [1, 1]} : vector<4x9xf32> to vector<4x1xf32>
    %345 = vector.broadcast %344 : vector<4x1xf32> to vector<4x256xf32>
    %346 = arith.mulf %340, %345 : vector<4x256xf32>
    %c17_i32_105 = arith.constant 17 : i32
    %347 = tpu.dynamic_rotate %340 by %c17_i32_105 dim 1 : vector<4x256xf32>, i32 -> vector<4x256xf32>
    %348 = vector.extract_strided_slice %8 {offsets = [0, 0], sizes = [1, 256], strides = [1, 1]} : vector<9x256xf32> to vector<1x256xf32>
    %349 = vector.broadcast %348 : vector<1x256xf32> to vector<4x256xf32>
    %350 = arith.mulf %347, %349 : vector<4x256xf32>
    %351 = vector.extract_strided_slice %342 {offsets = [0, 0], sizes = [4, 1], strides = [1, 1]} : vector<4x9xf32> to vector<4x1xf32>
    %352 = vector.broadcast %351 : vector<4x1xf32> to vector<4x256xf32>
    %353 = arith.mulf %350, %352 : vector<4x256xf32>
    %354 = arith.addf %346, %353 : vector<4x256xf32>
    %c16_i32_106 = arith.constant 16 : i32
    %355 = tpu.dynamic_rotate %340 by %c16_i32_106 dim 1 : vector<4x256xf32>, i32 -> vector<4x256xf32>
    %356 = vector.extract_strided_slice %8 {offsets = [1, 0], sizes = [1, 256], strides = [1, 1]} : vector<9x256xf32> to vector<1x256xf32>
    %357 = vector.broadcast %356 : vector<1x256xf32> to vector<4x256xf32>
    %358 = arith.mulf %355, %357 : vector<4x256xf32>
    %359 = vector.extract_strided_slice %342 {offsets = [0, 1], sizes = [4, 1], strides = [1, 1]} : vector<4x9xf32> to vector<4x1xf32>
    %360 = vector.broadcast %359 : vector<4x1xf32> to vector<4x256xf32>
    %361 = arith.mulf %358, %360 : vector<4x256xf32>
    %362 = arith.addf %354, %361 : vector<4x256xf32>
    %c15_i32_107 = arith.constant 15 : i32
    %363 = tpu.dynamic_rotate %340 by %c15_i32_107 dim 1 : vector<4x256xf32>, i32 -> vector<4x256xf32>
    %364 = vector.extract_strided_slice %8 {offsets = [2, 0], sizes = [1, 256], strides = [1, 1]} : vector<9x256xf32> to vector<1x256xf32>
    %365 = vector.broadcast %364 : vector<1x256xf32> to vector<4x256xf32>
    %366 = arith.mulf %363, %365 : vector<4x256xf32>
    %367 = vector.extract_strided_slice %342 {offsets = [0, 2], sizes = [4, 1], strides = [1, 1]} : vector<4x9xf32> to vector<4x1xf32>
    %368 = vector.broadcast %367 : vector<4x1xf32> to vector<4x256xf32>
    %369 = arith.mulf %366, %368 : vector<4x256xf32>
    %370 = arith.addf %362, %369 : vector<4x256xf32>
    %c1_i32_108 = arith.constant 1 : i32
    %371 = tpu.dynamic_rotate %340 by %c1_i32_108 dim 1 : vector<4x256xf32>, i32 -> vector<4x256xf32>
    %372 = vector.extract_strided_slice %8 {offsets = [3, 0], sizes = [1, 256], strides = [1, 1]} : vector<9x256xf32> to vector<1x256xf32>
    %373 = vector.broadcast %372 : vector<1x256xf32> to vector<4x256xf32>
    %374 = arith.mulf %371, %373 : vector<4x256xf32>
    %375 = vector.extract_strided_slice %342 {offsets = [0, 3], sizes = [4, 1], strides = [1, 1]} : vector<4x9xf32> to vector<4x1xf32>
    %376 = vector.broadcast %375 : vector<4x1xf32> to vector<4x256xf32>
    %377 = arith.mulf %374, %376 : vector<4x256xf32>
    %378 = arith.addf %370, %377 : vector<4x256xf32>
    %c255_i32_109 = arith.constant 255 : i32
    %379 = tpu.dynamic_rotate %340 by %c255_i32_109 dim 1 : vector<4x256xf32>, i32 -> vector<4x256xf32>
    %380 = vector.extract_strided_slice %8 {offsets = [5, 0], sizes = [1, 256], strides = [1, 1]} : vector<9x256xf32> to vector<1x256xf32>
    %381 = vector.broadcast %380 : vector<1x256xf32> to vector<4x256xf32>
    %382 = arith.mulf %379, %381 : vector<4x256xf32>
    %383 = vector.extract_strided_slice %342 {offsets = [0, 5], sizes = [4, 1], strides = [1, 1]} : vector<4x9xf32> to vector<4x1xf32>
    %384 = vector.broadcast %383 : vector<4x1xf32> to vector<4x256xf32>
    %385 = arith.mulf %382, %384 : vector<4x256xf32>
    %386 = arith.addf %378, %385 : vector<4x256xf32>
    %c241_i32_110 = arith.constant 241 : i32
    %387 = tpu.dynamic_rotate %340 by %c241_i32_110 dim 1 : vector<4x256xf32>, i32 -> vector<4x256xf32>
    %388 = vector.extract_strided_slice %8 {offsets = [6, 0], sizes = [1, 256], strides = [1, 1]} : vector<9x256xf32> to vector<1x256xf32>
    %389 = vector.broadcast %388 : vector<1x256xf32> to vector<4x256xf32>
    %390 = arith.mulf %387, %389 : vector<4x256xf32>
    %391 = vector.extract_strided_slice %342 {offsets = [0, 6], sizes = [4, 1], strides = [1, 1]} : vector<4x9xf32> to vector<4x1xf32>
    %392 = vector.broadcast %391 : vector<4x1xf32> to vector<4x256xf32>
    %393 = arith.mulf %390, %392 : vector<4x256xf32>
    %394 = arith.addf %386, %393 : vector<4x256xf32>
    %c240_i32_111 = arith.constant 240 : i32
    %395 = tpu.dynamic_rotate %340 by %c240_i32_111 dim 1 : vector<4x256xf32>, i32 -> vector<4x256xf32>
    %396 = vector.extract_strided_slice %8 {offsets = [7, 0], sizes = [1, 256], strides = [1, 1]} : vector<9x256xf32> to vector<1x256xf32>
    %397 = vector.broadcast %396 : vector<1x256xf32> to vector<4x256xf32>
    %398 = arith.mulf %395, %397 : vector<4x256xf32>
    %399 = vector.extract_strided_slice %342 {offsets = [0, 7], sizes = [4, 1], strides = [1, 1]} : vector<4x9xf32> to vector<4x1xf32>
    %400 = vector.broadcast %399 : vector<4x1xf32> to vector<4x256xf32>
    %401 = arith.mulf %398, %400 : vector<4x256xf32>
    %402 = arith.addf %394, %401 : vector<4x256xf32>
    %c239_i32_112 = arith.constant 239 : i32
    %403 = tpu.dynamic_rotate %340 by %c239_i32_112 dim 1 : vector<4x256xf32>, i32 -> vector<4x256xf32>
    %404 = vector.extract_strided_slice %8 {offsets = [8, 0], sizes = [1, 256], strides = [1, 1]} : vector<9x256xf32> to vector<1x256xf32>
    %405 = vector.broadcast %404 : vector<1x256xf32> to vector<4x256xf32>
    %406 = arith.mulf %403, %405 : vector<4x256xf32>
    %407 = vector.extract_strided_slice %342 {offsets = [0, 8], sizes = [4, 1], strides = [1, 1]} : vector<4x9xf32> to vector<4x1xf32>
    %408 = vector.broadcast %407 : vector<4x1xf32> to vector<4x256xf32>
    %409 = arith.mulf %406, %408 : vector<4x256xf32>
    %410 = arith.addf %402, %409 : vector<4x256xf32>
    %411 = vector.broadcast %343 : vector<4x1xf32> to vector<4x256xf32>
    %412 = arith.addf %410, %411 : vector<4x256xf32>
    %413 = vector.extract_strided_slice %325 {offsets = [0, 10], sizes = [4, 1], strides = [1, 1]} : vector<4x12xf32> to vector<4x1xf32>
    %414 = vector.extract_strided_slice %325 {offsets = [0, 11], sizes = [4, 1], strides = [1, 1]} : vector<4x12xf32> to vector<4x1xf32>
    %415 = vector.shape_cast %412 : vector<4x256xf32> to vector<1x4x256xf32>
    %cst_113 = arith.constant dense<0.000000e+00> : vector<1xf32>
    %416 = vector.multi_reduction <add>, %415, %cst_113 [1, 2] : vector<1x4x256xf32> to vector<1xf32>
    %417 = vector.shape_cast %416 : vector<1xf32> to vector<1x1x1xf32>
    %418 = vector.extract %417[0, 0, 0] : f32 from vector<1x1x1xf32>
    %cst_114 = arith.constant 1.024000e+03 : f32
    %419 = arith.divf %418, %cst_114 : f32
    %420 = vector.broadcast %419 : f32 to vector<4x256xf32>
    %421 = arith.subf %412, %420 : vector<4x256xf32>
    %422 = arith.mulf %421, %421 : vector<4x256xf32>
    %423 = vector.shape_cast %422 : vector<4x256xf32> to vector<1x4x256xf32>
    %cst_115 = arith.constant dense<0.000000e+00> : vector<1xf32>
    %424 = vector.multi_reduction <add>, %423, %cst_115 [1, 2] : vector<1x4x256xf32> to vector<1xf32>
    %425 = vector.shape_cast %424 : vector<1xf32> to vector<1x1x1xf32>
    %426 = vector.extract %425[0, 0, 0] : f32 from vector<1x1x1xf32>
    %cst_116 = arith.constant 1.024000e+03 : f32
    %427 = arith.divf %426, %cst_116 : f32
    %cst_117 = arith.constant 9.99999974E-6 : f32
    %428 = arith.addf %427, %cst_117 : f32
    %429 = math.rsqrt %428 : f32
    %430 = vector.broadcast %429 : f32 to vector<4x256xf32>
    %431 = arith.mulf %421, %430 : vector<4x256xf32>
    %432 = vector.broadcast %413 : vector<4x1xf32> to vector<4x256xf32>
    %433 = arith.mulf %431, %432 : vector<4x256xf32>
    %434 = vector.broadcast %414 : vector<4x1xf32> to vector<4x256xf32>
    %435 = arith.addf %433, %434 : vector<4x256xf32>
    %436 = arith.truncf %435 : vector<4x256xf32> to vector<4x256xbf16>
    %cst_118 = arith.constant dense<0.000000e+00> : vector<4x256xf32>
    %437 = tpu.matmul %327, %436, %cst_118 {dimension_numbers = #tpu.dot_dimension_numbers<[1], [0], [0], [1], [0, 0, 1, 1], [], []>} : vector<4x4xbf16>, vector<4x256xbf16>, vector<4x256xf32> -> vector<4x256xf32>
    %438 = vector.extract_strided_slice %329 {offsets = [0, 0], sizes = [4, 1], strides = [1, 1]} : vector<4x3xf32> to vector<4x1xf32>
    %439 = vector.broadcast %438 : vector<4x1xf32> to vector<4x256xf32>
    %440 = arith.addf %437, %439 : vector<4x256xf32>
    %441 = vector.extract_strided_slice %329 {offsets = [0, 1], sizes = [4, 1], strides = [1, 1]} : vector<4x3xf32> to vector<4x1xf32>
    %442 = vector.extract_strided_slice %329 {offsets = [0, 2], sizes = [4, 1], strides = [1, 1]} : vector<4x3xf32> to vector<4x1xf32>
    %443 = vector.shape_cast %440 : vector<4x256xf32> to vector<1x4x256xf32>
    %cst_119 = arith.constant dense<0.000000e+00> : vector<1xf32>
    %444 = vector.multi_reduction <add>, %443, %cst_119 [1, 2] : vector<1x4x256xf32> to vector<1xf32>
    %445 = vector.shape_cast %444 : vector<1xf32> to vector<1x1x1xf32>
    %446 = vector.extract %445[0, 0, 0] : f32 from vector<1x1x1xf32>
    %cst_120 = arith.constant 1.024000e+03 : f32
    %447 = arith.divf %446, %cst_120 : f32
    %448 = vector.broadcast %447 : f32 to vector<4x256xf32>
    %449 = arith.subf %440, %448 : vector<4x256xf32>
    %450 = arith.mulf %449, %449 : vector<4x256xf32>
    %451 = vector.shape_cast %450 : vector<4x256xf32> to vector<1x4x256xf32>
    %cst_121 = arith.constant dense<0.000000e+00> : vector<1xf32>
    %452 = vector.multi_reduction <add>, %451, %cst_121 [1, 2] : vector<1x4x256xf32> to vector<1xf32>
    %453 = vector.shape_cast %452 : vector<1xf32> to vector<1x1x1xf32>
    %454 = vector.extract %453[0, 0, 0] : f32 from vector<1x1x1xf32>
    %cst_122 = arith.constant 1.024000e+03 : f32
    %455 = arith.divf %454, %cst_122 : f32
    %cst_123 = arith.constant 9.99999974E-6 : f32
    %456 = arith.addf %455, %cst_123 : f32
    %457 = math.rsqrt %456 : f32
    %458 = vector.broadcast %457 : f32 to vector<4x256xf32>
    %459 = arith.mulf %449, %458 : vector<4x256xf32>
    %460 = vector.broadcast %441 : vector<4x1xf32> to vector<4x256xf32>
    %461 = arith.mulf %459, %460 : vector<4x256xf32>
    %462 = vector.broadcast %442 : vector<4x1xf32> to vector<4x256xf32>
    %463 = arith.addf %461, %462 : vector<4x256xf32>
    %464 = arith.negf %463 : vector<4x256xf32>
    %465 = math.exp %464 : vector<4x256xf32>
    %cst_124 = arith.constant 1.000000e+00 : f32
    %466 = vector.broadcast %cst_124 : f32 to vector<4x256xf32>
    %467 = arith.addf %466, %465 : vector<4x256xf32>
    %468 = arith.divf %466, %467 : vector<4x256xf32>
    %469 = arith.mulf %463, %468 : vector<4x256xf32>
    %470 = arith.truncf %341 : vector<4x256xf32> to vector<4x256xbf16>
    %cst_125 = arith.constant dense<0.000000e+00> : vector<4x256xf32>
    %471 = tpu.matmul %331, %470, %cst_125 {dimension_numbers = #tpu.dot_dimension_numbers<[1], [0], [0], [1], [0, 0, 1, 1], [], []>} : vector<4x4xbf16>, vector<4x256xbf16>, vector<4x256xf32> -> vector<4x256xf32>
    %472 = vector.extract_strided_slice %333 {offsets = [0, 0], sizes = [4, 1], strides = [1, 1]} : vector<4x3xf32> to vector<4x1xf32>
    %473 = vector.broadcast %472 : vector<4x1xf32> to vector<4x256xf32>
    %474 = arith.addf %471, %473 : vector<4x256xf32>
    %475 = vector.extract_strided_slice %333 {offsets = [0, 1], sizes = [4, 1], strides = [1, 1]} : vector<4x3xf32> to vector<4x1xf32>
    %476 = vector.extract_strided_slice %333 {offsets = [0, 2], sizes = [4, 1], strides = [1, 1]} : vector<4x3xf32> to vector<4x1xf32>
    %477 = vector.shape_cast %474 : vector<4x256xf32> to vector<1x4x256xf32>
    %cst_126 = arith.constant dense<0.000000e+00> : vector<1xf32>
    %478 = vector.multi_reduction <add>, %477, %cst_126 [1, 2] : vector<1x4x256xf32> to vector<1xf32>
    %479 = vector.shape_cast %478 : vector<1xf32> to vector<1x1x1xf32>
    %480 = vector.extract %479[0, 0, 0] : f32 from vector<1x1x1xf32>
    %cst_127 = arith.constant 1.024000e+03 : f32
    %481 = arith.divf %480, %cst_127 : f32
    %482 = vector.broadcast %481 : f32 to vector<4x256xf32>
    %483 = arith.subf %474, %482 : vector<4x256xf32>
    %484 = arith.mulf %483, %483 : vector<4x256xf32>
    %485 = vector.shape_cast %484 : vector<4x256xf32> to vector<1x4x256xf32>
    %cst_128 = arith.constant dense<0.000000e+00> : vector<1xf32>
    %486 = vector.multi_reduction <add>, %485, %cst_128 [1, 2] : vector<1x4x256xf32> to vector<1xf32>
    %487 = vector.shape_cast %486 : vector<1xf32> to vector<1x1x1xf32>
    %488 = vector.extract %487[0, 0, 0] : f32 from vector<1x1x1xf32>
    %cst_129 = arith.constant 1.024000e+03 : f32
    %489 = arith.divf %488, %cst_129 : f32
    %cst_130 = arith.constant 9.99999974E-6 : f32
    %490 = arith.addf %489, %cst_130 : f32
    %491 = math.rsqrt %490 : f32
    %492 = vector.broadcast %491 : f32 to vector<4x256xf32>
    %493 = arith.mulf %483, %492 : vector<4x256xf32>
    %494 = vector.broadcast %475 : vector<4x1xf32> to vector<4x256xf32>
    %495 = arith.mulf %493, %494 : vector<4x256xf32>
    %496 = vector.broadcast %476 : vector<4x1xf32> to vector<4x256xf32>
    %497 = arith.addf %495, %496 : vector<4x256xf32>
    %498 = arith.negf %497 : vector<4x256xf32>
    %499 = math.exp %498 : vector<4x256xf32>
    %cst_131 = arith.constant 1.000000e+00 : f32
    %500 = vector.broadcast %cst_131 : f32 to vector<4x256xf32>
    %501 = arith.addf %500, %499 : vector<4x256xf32>
    %502 = arith.divf %500, %501 : vector<4x256xf32>
    %503 = arith.mulf %497, %502 : vector<4x256xf32>
    %504 = vector.extract_strided_slice %335 {offsets = [0, 0], sizes = [4, 9], strides = [1, 1]} : vector<4x12xf32> to vector<4x9xf32>
    %505 = vector.extract_strided_slice %335 {offsets = [0, 9], sizes = [4, 1], strides = [1, 1]} : vector<4x12xf32> to vector<4x1xf32>
    %506 = vector.extract_strided_slice %504 {offsets = [0, 4], sizes = [4, 1], strides = [1, 1]} : vector<4x9xf32> to vector<4x1xf32>
    %507 = vector.broadcast %506 : vector<4x1xf32> to vector<4x256xf32>
    %508 = arith.mulf %503, %507 : vector<4x256xf32>
    %c17_i32_132 = arith.constant 17 : i32
    %509 = tpu.dynamic_rotate %503 by %c17_i32_132 dim 1 : vector<4x256xf32>, i32 -> vector<4x256xf32>
    %510 = vector.extract_strided_slice %8 {offsets = [0, 0], sizes = [1, 256], strides = [1, 1]} : vector<9x256xf32> to vector<1x256xf32>
    %511 = vector.broadcast %510 : vector<1x256xf32> to vector<4x256xf32>
    %512 = arith.mulf %509, %511 : vector<4x256xf32>
    %513 = vector.extract_strided_slice %504 {offsets = [0, 0], sizes = [4, 1], strides = [1, 1]} : vector<4x9xf32> to vector<4x1xf32>
    %514 = vector.broadcast %513 : vector<4x1xf32> to vector<4x256xf32>
    %515 = arith.mulf %512, %514 : vector<4x256xf32>
    %516 = arith.addf %508, %515 : vector<4x256xf32>
    %c16_i32_133 = arith.constant 16 : i32
    %517 = tpu.dynamic_rotate %503 by %c16_i32_133 dim 1 : vector<4x256xf32>, i32 -> vector<4x256xf32>
    %518 = vector.extract_strided_slice %8 {offsets = [1, 0], sizes = [1, 256], strides = [1, 1]} : vector<9x256xf32> to vector<1x256xf32>
    %519 = vector.broadcast %518 : vector<1x256xf32> to vector<4x256xf32>
    %520 = arith.mulf %517, %519 : vector<4x256xf32>
    %521 = vector.extract_strided_slice %504 {offsets = [0, 1], sizes = [4, 1], strides = [1, 1]} : vector<4x9xf32> to vector<4x1xf32>
    %522 = vector.broadcast %521 : vector<4x1xf32> to vector<4x256xf32>
    %523 = arith.mulf %520, %522 : vector<4x256xf32>
    %524 = arith.addf %516, %523 : vector<4x256xf32>
    %c15_i32_134 = arith.constant 15 : i32
    %525 = tpu.dynamic_rotate %503 by %c15_i32_134 dim 1 : vector<4x256xf32>, i32 -> vector<4x256xf32>
    %526 = vector.extract_strided_slice %8 {offsets = [2, 0], sizes = [1, 256], strides = [1, 1]} : vector<9x256xf32> to vector<1x256xf32>
    %527 = vector.broadcast %526 : vector<1x256xf32> to vector<4x256xf32>
    %528 = arith.mulf %525, %527 : vector<4x256xf32>
    %529 = vector.extract_strided_slice %504 {offsets = [0, 2], sizes = [4, 1], strides = [1, 1]} : vector<4x9xf32> to vector<4x1xf32>
    %530 = vector.broadcast %529 : vector<4x1xf32> to vector<4x256xf32>
    %531 = arith.mulf %528, %530 : vector<4x256xf32>
    %532 = arith.addf %524, %531 : vector<4x256xf32>
    %c1_i32_135 = arith.constant 1 : i32
    %533 = tpu.dynamic_rotate %503 by %c1_i32_135 dim 1 : vector<4x256xf32>, i32 -> vector<4x256xf32>
    %534 = vector.extract_strided_slice %8 {offsets = [3, 0], sizes = [1, 256], strides = [1, 1]} : vector<9x256xf32> to vector<1x256xf32>
    %535 = vector.broadcast %534 : vector<1x256xf32> to vector<4x256xf32>
    %536 = arith.mulf %533, %535 : vector<4x256xf32>
    %537 = vector.extract_strided_slice %504 {offsets = [0, 3], sizes = [4, 1], strides = [1, 1]} : vector<4x9xf32> to vector<4x1xf32>
    %538 = vector.broadcast %537 : vector<4x1xf32> to vector<4x256xf32>
    %539 = arith.mulf %536, %538 : vector<4x256xf32>
    %540 = arith.addf %532, %539 : vector<4x256xf32>
    %c255_i32_136 = arith.constant 255 : i32
    %541 = tpu.dynamic_rotate %503 by %c255_i32_136 dim 1 : vector<4x256xf32>, i32 -> vector<4x256xf32>
    %542 = vector.extract_strided_slice %8 {offsets = [5, 0], sizes = [1, 256], strides = [1, 1]} : vector<9x256xf32> to vector<1x256xf32>
    %543 = vector.broadcast %542 : vector<1x256xf32> to vector<4x256xf32>
    %544 = arith.mulf %541, %543 : vector<4x256xf32>
    %545 = vector.extract_strided_slice %504 {offsets = [0, 5], sizes = [4, 1], strides = [1, 1]} : vector<4x9xf32> to vector<4x1xf32>
    %546 = vector.broadcast %545 : vector<4x1xf32> to vector<4x256xf32>
    %547 = arith.mulf %544, %546 : vector<4x256xf32>
    %548 = arith.addf %540, %547 : vector<4x256xf32>
    %c241_i32_137 = arith.constant 241 : i32
    %549 = tpu.dynamic_rotate %503 by %c241_i32_137 dim 1 : vector<4x256xf32>, i32 -> vector<4x256xf32>
    %550 = vector.extract_strided_slice %8 {offsets = [6, 0], sizes = [1, 256], strides = [1, 1]} : vector<9x256xf32> to vector<1x256xf32>
    %551 = vector.broadcast %550 : vector<1x256xf32> to vector<4x256xf32>
    %552 = arith.mulf %549, %551 : vector<4x256xf32>
    %553 = vector.extract_strided_slice %504 {offsets = [0, 6], sizes = [4, 1], strides = [1, 1]} : vector<4x9xf32> to vector<4x1xf32>
    %554 = vector.broadcast %553 : vector<4x1xf32> to vector<4x256xf32>
    %555 = arith.mulf %552, %554 : vector<4x256xf32>
    %556 = arith.addf %548, %555 : vector<4x256xf32>
    %c240_i32_138 = arith.constant 240 : i32
    %557 = tpu.dynamic_rotate %503 by %c240_i32_138 dim 1 : vector<4x256xf32>, i32 -> vector<4x256xf32>
    %558 = vector.extract_strided_slice %8 {offsets = [7, 0], sizes = [1, 256], strides = [1, 1]} : vector<9x256xf32> to vector<1x256xf32>
    %559 = vector.broadcast %558 : vector<1x256xf32> to vector<4x256xf32>
    %560 = arith.mulf %557, %559 : vector<4x256xf32>
    %561 = vector.extract_strided_slice %504 {offsets = [0, 7], sizes = [4, 1], strides = [1, 1]} : vector<4x9xf32> to vector<4x1xf32>
    %562 = vector.broadcast %561 : vector<4x1xf32> to vector<4x256xf32>
    %563 = arith.mulf %560, %562 : vector<4x256xf32>
    %564 = arith.addf %556, %563 : vector<4x256xf32>
    %c239_i32_139 = arith.constant 239 : i32
    %565 = tpu.dynamic_rotate %503 by %c239_i32_139 dim 1 : vector<4x256xf32>, i32 -> vector<4x256xf32>
    %566 = vector.extract_strided_slice %8 {offsets = [8, 0], sizes = [1, 256], strides = [1, 1]} : vector<9x256xf32> to vector<1x256xf32>
    %567 = vector.broadcast %566 : vector<1x256xf32> to vector<4x256xf32>
    %568 = arith.mulf %565, %567 : vector<4x256xf32>
    %569 = vector.extract_strided_slice %504 {offsets = [0, 8], sizes = [4, 1], strides = [1, 1]} : vector<4x9xf32> to vector<4x1xf32>
    %570 = vector.broadcast %569 : vector<4x1xf32> to vector<4x256xf32>
    %571 = arith.mulf %568, %570 : vector<4x256xf32>
    %572 = arith.addf %564, %571 : vector<4x256xf32>
    %573 = vector.broadcast %505 : vector<4x1xf32> to vector<4x256xf32>
    %574 = arith.addf %572, %573 : vector<4x256xf32>
    %575 = vector.extract_strided_slice %335 {offsets = [0, 10], sizes = [4, 1], strides = [1, 1]} : vector<4x12xf32> to vector<4x1xf32>
    %576 = vector.extract_strided_slice %335 {offsets = [0, 11], sizes = [4, 1], strides = [1, 1]} : vector<4x12xf32> to vector<4x1xf32>
    %577 = vector.shape_cast %574 : vector<4x256xf32> to vector<1x4x256xf32>
    %cst_140 = arith.constant dense<0.000000e+00> : vector<1xf32>
    %578 = vector.multi_reduction <add>, %577, %cst_140 [1, 2] : vector<1x4x256xf32> to vector<1xf32>
    %579 = vector.shape_cast %578 : vector<1xf32> to vector<1x1x1xf32>
    %580 = vector.extract %579[0, 0, 0] : f32 from vector<1x1x1xf32>
    %cst_141 = arith.constant 1.024000e+03 : f32
    %581 = arith.divf %580, %cst_141 : f32
    %582 = vector.broadcast %581 : f32 to vector<4x256xf32>
    %583 = arith.subf %574, %582 : vector<4x256xf32>
    %584 = arith.mulf %583, %583 : vector<4x256xf32>
    %585 = vector.shape_cast %584 : vector<4x256xf32> to vector<1x4x256xf32>
    %cst_142 = arith.constant dense<0.000000e+00> : vector<1xf32>
    %586 = vector.multi_reduction <add>, %585, %cst_142 [1, 2] : vector<1x4x256xf32> to vector<1xf32>
    %587 = vector.shape_cast %586 : vector<1xf32> to vector<1x1x1xf32>
    %588 = vector.extract %587[0, 0, 0] : f32 from vector<1x1x1xf32>
    %cst_143 = arith.constant 1.024000e+03 : f32
    %589 = arith.divf %588, %cst_143 : f32
    %cst_144 = arith.constant 9.99999974E-6 : f32
    %590 = arith.addf %589, %cst_144 : f32
    %591 = math.rsqrt %590 : f32
    %592 = vector.broadcast %591 : f32 to vector<4x256xf32>
    %593 = arith.mulf %583, %592 : vector<4x256xf32>
    %594 = vector.broadcast %575 : vector<4x1xf32> to vector<4x256xf32>
    %595 = arith.mulf %593, %594 : vector<4x256xf32>
    %596 = vector.broadcast %576 : vector<4x1xf32> to vector<4x256xf32>
    %597 = arith.addf %595, %596 : vector<4x256xf32>
    %598 = arith.truncf %597 : vector<4x256xf32> to vector<4x256xbf16>
    %cst_145 = arith.constant dense<0.000000e+00> : vector<4x256xf32>
    %599 = tpu.matmul %337, %598, %cst_145 {dimension_numbers = #tpu.dot_dimension_numbers<[1], [0], [0], [1], [0, 0, 1, 1], [], []>} : vector<4x4xbf16>, vector<4x256xbf16>, vector<4x256xf32> -> vector<4x256xf32>
    %600 = vector.extract_strided_slice %339 {offsets = [0, 0], sizes = [4, 1], strides = [1, 1]} : vector<4x3xf32> to vector<4x1xf32>
    %601 = vector.broadcast %600 : vector<4x1xf32> to vector<4x256xf32>
    %602 = arith.addf %599, %601 : vector<4x256xf32>
    %603 = vector.extract_strided_slice %339 {offsets = [0, 1], sizes = [4, 1], strides = [1, 1]} : vector<4x3xf32> to vector<4x1xf32>
    %604 = vector.extract_strided_slice %339 {offsets = [0, 2], sizes = [4, 1], strides = [1, 1]} : vector<4x3xf32> to vector<4x1xf32>
    %605 = vector.shape_cast %602 : vector<4x256xf32> to vector<1x4x256xf32>
    %cst_146 = arith.constant dense<0.000000e+00> : vector<1xf32>
    %606 = vector.multi_reduction <add>, %605, %cst_146 [1, 2] : vector<1x4x256xf32> to vector<1xf32>
    %607 = vector.shape_cast %606 : vector<1xf32> to vector<1x1x1xf32>
    %608 = vector.extract %607[0, 0, 0] : f32 from vector<1x1x1xf32>
    %cst_147 = arith.constant 1.024000e+03 : f32
    %609 = arith.divf %608, %cst_147 : f32
    %610 = vector.broadcast %609 : f32 to vector<4x256xf32>
    %611 = arith.subf %602, %610 : vector<4x256xf32>
    %612 = arith.mulf %611, %611 : vector<4x256xf32>
    %613 = vector.shape_cast %612 : vector<4x256xf32> to vector<1x4x256xf32>
    %cst_148 = arith.constant dense<0.000000e+00> : vector<1xf32>
    %614 = vector.multi_reduction <add>, %613, %cst_148 [1, 2] : vector<1x4x256xf32> to vector<1xf32>
    %615 = vector.shape_cast %614 : vector<1xf32> to vector<1x1x1xf32>
    %616 = vector.extract %615[0, 0, 0] : f32 from vector<1x1x1xf32>
    %cst_149 = arith.constant 1.024000e+03 : f32
    %617 = arith.divf %616, %cst_149 : f32
    %cst_150 = arith.constant 9.99999974E-6 : f32
    %618 = arith.addf %617, %cst_150 : f32
    %619 = math.rsqrt %618 : f32
    %620 = vector.broadcast %619 : f32 to vector<4x256xf32>
    %621 = arith.mulf %611, %620 : vector<4x256xf32>
    %622 = vector.broadcast %603 : vector<4x1xf32> to vector<4x256xf32>
    %623 = arith.mulf %621, %622 : vector<4x256xf32>
    %624 = vector.broadcast %604 : vector<4x1xf32> to vector<4x256xf32>
    %625 = arith.addf %623, %624 : vector<4x256xf32>
    %626 = arith.negf %625 : vector<4x256xf32>
    %627 = math.exp %626 : vector<4x256xf32>
    %cst_151 = arith.constant 1.000000e+00 : f32
    %628 = vector.broadcast %cst_151 : f32 to vector<4x256xf32>
    %629 = arith.addf %628, %627 : vector<4x256xf32>
    %630 = arith.divf %628, %629 : vector<4x256xf32>
    %631 = arith.mulf %625, %630 : vector<4x256xf32>
    %cst_152 = arith.constant dense<0.000000e+00> : vector<8x256xf32>
    %632 = tpu.matmul %9, %469, %cst_152 {dimension_numbers = #tpu.dot_dimension_numbers<[1], [0], [0], [1], [0, 0, 1, 1], [], []>} : vector<8x4xf32>, vector<4x256xf32>, vector<8x256xf32> -> vector<8x256xf32>
    %cst_153 = arith.constant dense<0.000000e+00> : vector<8x256xf32>
    %633 = tpu.matmul %10, %631, %cst_153 {dimension_numbers = #tpu.dot_dimension_numbers<[1], [0], [0], [1], [0, 0, 1, 1], [], []>} : vector<8x4xf32>, vector<4x256xf32>, vector<8x256xf32> -> vector<8x256xf32>
    %634 = arith.addf %632, %633 : vector<8x256xf32>
    %c2 = arith.constant 2 : index
    %c0_154 = arith.constant 0 : index
    %c0_155 = arith.constant 0 : index
    %635 = vector.load %arg13[%c2, %c0_154, %c0_155] : memref<3x4x12xf32, #tpu.memory_space<vmem>>, vector<1x4x12xf32>
    %636 = vector.shape_cast %635 : vector<1x4x12xf32> to vector<4x12xf32>
    %c2_156 = arith.constant 2 : index
    %c0_157 = arith.constant 0 : index
    %c0_158 = arith.constant 0 : index
    %637 = vector.load %arg14[%c2_156, %c0_157, %c0_158] : memref<3x4x4xbf16, #tpu.memory_space<vmem>>, vector<1x4x4xbf16>
    %638 = vector.shape_cast %637 : vector<1x4x4xbf16> to vector<4x4xbf16>
    %c2_159 = arith.constant 2 : index
    %c0_160 = arith.constant 0 : index
    %c0_161 = arith.constant 0 : index
    %639 = vector.load %arg15[%c2_159, %c0_160, %c0_161] : memref<3x4x3xf32, #tpu.memory_space<vmem>>, vector<1x4x3xf32>
    %640 = vector.shape_cast %639 : vector<1x4x3xf32> to vector<4x3xf32>
    %c2_162 = arith.constant 2 : index
    %c0_163 = arith.constant 0 : index
    %c0_164 = arith.constant 0 : index
    %641 = vector.load %arg16[%c2_162, %c0_163, %c0_164] : memref<3x4x4xbf16, #tpu.memory_space<vmem>>, vector<1x4x4xbf16>
    %642 = vector.shape_cast %641 : vector<1x4x4xbf16> to vector<4x4xbf16>
    %c2_165 = arith.constant 2 : index
    %c0_166 = arith.constant 0 : index
    %c0_167 = arith.constant 0 : index
    %643 = vector.load %arg17[%c2_165, %c0_166, %c0_167] : memref<3x4x3xf32, #tpu.memory_space<vmem>>, vector<1x4x3xf32>
    %644 = vector.shape_cast %643 : vector<1x4x3xf32> to vector<4x3xf32>
    %c2_168 = arith.constant 2 : index
    %c0_169 = arith.constant 0 : index
    %c0_170 = arith.constant 0 : index
    %645 = vector.load %arg18[%c2_168, %c0_169, %c0_170] : memref<3x4x12xf32, #tpu.memory_space<vmem>>, vector<1x4x12xf32>
    %646 = vector.shape_cast %645 : vector<1x4x12xf32> to vector<4x12xf32>
    %c2_171 = arith.constant 2 : index
    %c0_172 = arith.constant 0 : index
    %c0_173 = arith.constant 0 : index
    %647 = vector.load %arg19[%c2_171, %c0_172, %c0_173] : memref<3x4x4xbf16, #tpu.memory_space<vmem>>, vector<1x4x4xbf16>
    %648 = vector.shape_cast %647 : vector<1x4x4xbf16> to vector<4x4xbf16>
    %c2_174 = arith.constant 2 : index
    %c0_175 = arith.constant 0 : index
    %c0_176 = arith.constant 0 : index
    %649 = vector.load %arg20[%c2_174, %c0_175, %c0_176] : memref<3x4x3xf32, #tpu.memory_space<vmem>>, vector<1x4x3xf32>
    %650 = vector.shape_cast %649 : vector<1x4x3xf32> to vector<4x3xf32>
    %651 = vector.extract_strided_slice %634 {offsets = [0, 0], sizes = [4, 256], strides = [1, 1]} : vector<8x256xf32> to vector<4x256xf32>
    %652 = vector.extract_strided_slice %634 {offsets = [4, 0], sizes = [4, 256], strides = [1, 1]} : vector<8x256xf32> to vector<4x256xf32>
    %653 = vector.extract_strided_slice %636 {offsets = [0, 0], sizes = [4, 9], strides = [1, 1]} : vector<4x12xf32> to vector<4x9xf32>
    %654 = vector.extract_strided_slice %636 {offsets = [0, 9], sizes = [4, 1], strides = [1, 1]} : vector<4x12xf32> to vector<4x1xf32>
    %655 = vector.extract_strided_slice %653 {offsets = [0, 4], sizes = [4, 1], strides = [1, 1]} : vector<4x9xf32> to vector<4x1xf32>
    %656 = vector.broadcast %655 : vector<4x1xf32> to vector<4x256xf32>
    %657 = arith.mulf %651, %656 : vector<4x256xf32>
    %c17_i32_177 = arith.constant 17 : i32
    %658 = tpu.dynamic_rotate %651 by %c17_i32_177 dim 1 : vector<4x256xf32>, i32 -> vector<4x256xf32>
    %659 = vector.extract_strided_slice %8 {offsets = [0, 0], sizes = [1, 256], strides = [1, 1]} : vector<9x256xf32> to vector<1x256xf32>
    %660 = vector.broadcast %659 : vector<1x256xf32> to vector<4x256xf32>
    %661 = arith.mulf %658, %660 : vector<4x256xf32>
    %662 = vector.extract_strided_slice %653 {offsets = [0, 0], sizes = [4, 1], strides = [1, 1]} : vector<4x9xf32> to vector<4x1xf32>
    %663 = vector.broadcast %662 : vector<4x1xf32> to vector<4x256xf32>
    %664 = arith.mulf %661, %663 : vector<4x256xf32>
    %665 = arith.addf %657, %664 : vector<4x256xf32>
    %c16_i32_178 = arith.constant 16 : i32
    %666 = tpu.dynamic_rotate %651 by %c16_i32_178 dim 1 : vector<4x256xf32>, i32 -> vector<4x256xf32>
    %667 = vector.extract_strided_slice %8 {offsets = [1, 0], sizes = [1, 256], strides = [1, 1]} : vector<9x256xf32> to vector<1x256xf32>
    %668 = vector.broadcast %667 : vector<1x256xf32> to vector<4x256xf32>
    %669 = arith.mulf %666, %668 : vector<4x256xf32>
    %670 = vector.extract_strided_slice %653 {offsets = [0, 1], sizes = [4, 1], strides = [1, 1]} : vector<4x9xf32> to vector<4x1xf32>
    %671 = vector.broadcast %670 : vector<4x1xf32> to vector<4x256xf32>
    %672 = arith.mulf %669, %671 : vector<4x256xf32>
    %673 = arith.addf %665, %672 : vector<4x256xf32>
    %c15_i32_179 = arith.constant 15 : i32
    %674 = tpu.dynamic_rotate %651 by %c15_i32_179 dim 1 : vector<4x256xf32>, i32 -> vector<4x256xf32>
    %675 = vector.extract_strided_slice %8 {offsets = [2, 0], sizes = [1, 256], strides = [1, 1]} : vector<9x256xf32> to vector<1x256xf32>
    %676 = vector.broadcast %675 : vector<1x256xf32> to vector<4x256xf32>
    %677 = arith.mulf %674, %676 : vector<4x256xf32>
    %678 = vector.extract_strided_slice %653 {offsets = [0, 2], sizes = [4, 1], strides = [1, 1]} : vector<4x9xf32> to vector<4x1xf32>
    %679 = vector.broadcast %678 : vector<4x1xf32> to vector<4x256xf32>
    %680 = arith.mulf %677, %679 : vector<4x256xf32>
    %681 = arith.addf %673, %680 : vector<4x256xf32>
    %c1_i32_180 = arith.constant 1 : i32
    %682 = tpu.dynamic_rotate %651 by %c1_i32_180 dim 1 : vector<4x256xf32>, i32 -> vector<4x256xf32>
    %683 = vector.extract_strided_slice %8 {offsets = [3, 0], sizes = [1, 256], strides = [1, 1]} : vector<9x256xf32> to vector<1x256xf32>
    %684 = vector.broadcast %683 : vector<1x256xf32> to vector<4x256xf32>
    %685 = arith.mulf %682, %684 : vector<4x256xf32>
    %686 = vector.extract_strided_slice %653 {offsets = [0, 3], sizes = [4, 1], strides = [1, 1]} : vector<4x9xf32> to vector<4x1xf32>
    %687 = vector.broadcast %686 : vector<4x1xf32> to vector<4x256xf32>
    %688 = arith.mulf %685, %687 : vector<4x256xf32>
    %689 = arith.addf %681, %688 : vector<4x256xf32>
    %c255_i32_181 = arith.constant 255 : i32
    %690 = tpu.dynamic_rotate %651 by %c255_i32_181 dim 1 : vector<4x256xf32>, i32 -> vector<4x256xf32>
    %691 = vector.extract_strided_slice %8 {offsets = [5, 0], sizes = [1, 256], strides = [1, 1]} : vector<9x256xf32> to vector<1x256xf32>
    %692 = vector.broadcast %691 : vector<1x256xf32> to vector<4x256xf32>
    %693 = arith.mulf %690, %692 : vector<4x256xf32>
    %694 = vector.extract_strided_slice %653 {offsets = [0, 5], sizes = [4, 1], strides = [1, 1]} : vector<4x9xf32> to vector<4x1xf32>
    %695 = vector.broadcast %694 : vector<4x1xf32> to vector<4x256xf32>
    %696 = arith.mulf %693, %695 : vector<4x256xf32>
    %697 = arith.addf %689, %696 : vector<4x256xf32>
    %c241_i32_182 = arith.constant 241 : i32
    %698 = tpu.dynamic_rotate %651 by %c241_i32_182 dim 1 : vector<4x256xf32>, i32 -> vector<4x256xf32>
    %699 = vector.extract_strided_slice %8 {offsets = [6, 0], sizes = [1, 256], strides = [1, 1]} : vector<9x256xf32> to vector<1x256xf32>
    %700 = vector.broadcast %699 : vector<1x256xf32> to vector<4x256xf32>
    %701 = arith.mulf %698, %700 : vector<4x256xf32>
    %702 = vector.extract_strided_slice %653 {offsets = [0, 6], sizes = [4, 1], strides = [1, 1]} : vector<4x9xf32> to vector<4x1xf32>
    %703 = vector.broadcast %702 : vector<4x1xf32> to vector<4x256xf32>
    %704 = arith.mulf %701, %703 : vector<4x256xf32>
    %705 = arith.addf %697, %704 : vector<4x256xf32>
    %c240_i32_183 = arith.constant 240 : i32
    %706 = tpu.dynamic_rotate %651 by %c240_i32_183 dim 1 : vector<4x256xf32>, i32 -> vector<4x256xf32>
    %707 = vector.extract_strided_slice %8 {offsets = [7, 0], sizes = [1, 256], strides = [1, 1]} : vector<9x256xf32> to vector<1x256xf32>
    %708 = vector.broadcast %707 : vector<1x256xf32> to vector<4x256xf32>
    %709 = arith.mulf %706, %708 : vector<4x256xf32>
    %710 = vector.extract_strided_slice %653 {offsets = [0, 7], sizes = [4, 1], strides = [1, 1]} : vector<4x9xf32> to vector<4x1xf32>
    %711 = vector.broadcast %710 : vector<4x1xf32> to vector<4x256xf32>
    %712 = arith.mulf %709, %711 : vector<4x256xf32>
    %713 = arith.addf %705, %712 : vector<4x256xf32>
    %c239_i32_184 = arith.constant 239 : i32
    %714 = tpu.dynamic_rotate %651 by %c239_i32_184 dim 1 : vector<4x256xf32>, i32 -> vector<4x256xf32>
    %715 = vector.extract_strided_slice %8 {offsets = [8, 0], sizes = [1, 256], strides = [1, 1]} : vector<9x256xf32> to vector<1x256xf32>
    %716 = vector.broadcast %715 : vector<1x256xf32> to vector<4x256xf32>
    %717 = arith.mulf %714, %716 : vector<4x256xf32>
    %718 = vector.extract_strided_slice %653 {offsets = [0, 8], sizes = [4, 1], strides = [1, 1]} : vector<4x9xf32> to vector<4x1xf32>
    %719 = vector.broadcast %718 : vector<4x1xf32> to vector<4x256xf32>
    %720 = arith.mulf %717, %719 : vector<4x256xf32>
    %721 = arith.addf %713, %720 : vector<4x256xf32>
    %722 = vector.broadcast %654 : vector<4x1xf32> to vector<4x256xf32>
    %723 = arith.addf %721, %722 : vector<4x256xf32>
    %724 = vector.extract_strided_slice %636 {offsets = [0, 10], sizes = [4, 1], strides = [1, 1]} : vector<4x12xf32> to vector<4x1xf32>
    %725 = vector.extract_strided_slice %636 {offsets = [0, 11], sizes = [4, 1], strides = [1, 1]} : vector<4x12xf32> to vector<4x1xf32>
    %726 = vector.shape_cast %723 : vector<4x256xf32> to vector<1x4x256xf32>
    %cst_185 = arith.constant dense<0.000000e+00> : vector<1xf32>
    %727 = vector.multi_reduction <add>, %726, %cst_185 [1, 2] : vector<1x4x256xf32> to vector<1xf32>
    %728 = vector.shape_cast %727 : vector<1xf32> to vector<1x1x1xf32>
    %729 = vector.extract %728[0, 0, 0] : f32 from vector<1x1x1xf32>
    %cst_186 = arith.constant 1.024000e+03 : f32
    %730 = arith.divf %729, %cst_186 : f32
    %731 = vector.broadcast %730 : f32 to vector<4x256xf32>
    %732 = arith.subf %723, %731 : vector<4x256xf32>
    %733 = arith.mulf %732, %732 : vector<4x256xf32>
    %734 = vector.shape_cast %733 : vector<4x256xf32> to vector<1x4x256xf32>
    %cst_187 = arith.constant dense<0.000000e+00> : vector<1xf32>
    %735 = vector.multi_reduction <add>, %734, %cst_187 [1, 2] : vector<1x4x256xf32> to vector<1xf32>
    %736 = vector.shape_cast %735 : vector<1xf32> to vector<1x1x1xf32>
    %737 = vector.extract %736[0, 0, 0] : f32 from vector<1x1x1xf32>
    %cst_188 = arith.constant 1.024000e+03 : f32
    %738 = arith.divf %737, %cst_188 : f32
    %cst_189 = arith.constant 9.99999974E-6 : f32
    %739 = arith.addf %738, %cst_189 : f32
    %740 = math.rsqrt %739 : f32
    %741 = vector.broadcast %740 : f32 to vector<4x256xf32>
    %742 = arith.mulf %732, %741 : vector<4x256xf32>
    %743 = vector.broadcast %724 : vector<4x1xf32> to vector<4x256xf32>
    %744 = arith.mulf %742, %743 : vector<4x256xf32>
    %745 = vector.broadcast %725 : vector<4x1xf32> to vector<4x256xf32>
    %746 = arith.addf %744, %745 : vector<4x256xf32>
    %747 = arith.truncf %746 : vector<4x256xf32> to vector<4x256xbf16>
    %cst_190 = arith.constant dense<0.000000e+00> : vector<4x256xf32>
    %748 = tpu.matmul %638, %747, %cst_190 {dimension_numbers = #tpu.dot_dimension_numbers<[1], [0], [0], [1], [0, 0, 1, 1], [], []>} : vector<4x4xbf16>, vector<4x256xbf16>, vector<4x256xf32> -> vector<4x256xf32>
    %749 = vector.extract_strided_slice %640 {offsets = [0, 0], sizes = [4, 1], strides = [1, 1]} : vector<4x3xf32> to vector<4x1xf32>
    %750 = vector.broadcast %749 : vector<4x1xf32> to vector<4x256xf32>
    %751 = arith.addf %748, %750 : vector<4x256xf32>
    %752 = vector.extract_strided_slice %640 {offsets = [0, 1], sizes = [4, 1], strides = [1, 1]} : vector<4x3xf32> to vector<4x1xf32>
    %753 = vector.extract_strided_slice %640 {offsets = [0, 2], sizes = [4, 1], strides = [1, 1]} : vector<4x3xf32> to vector<4x1xf32>
    %754 = vector.shape_cast %751 : vector<4x256xf32> to vector<1x4x256xf32>
    %cst_191 = arith.constant dense<0.000000e+00> : vector<1xf32>
    %755 = vector.multi_reduction <add>, %754, %cst_191 [1, 2] : vector<1x4x256xf32> to vector<1xf32>
    %756 = vector.shape_cast %755 : vector<1xf32> to vector<1x1x1xf32>
    %757 = vector.extract %756[0, 0, 0] : f32 from vector<1x1x1xf32>
    %cst_192 = arith.constant 1.024000e+03 : f32
    %758 = arith.divf %757, %cst_192 : f32
    %759 = vector.broadcast %758 : f32 to vector<4x256xf32>
    %760 = arith.subf %751, %759 : vector<4x256xf32>
    %761 = arith.mulf %760, %760 : vector<4x256xf32>
    %762 = vector.shape_cast %761 : vector<4x256xf32> to vector<1x4x256xf32>
    %cst_193 = arith.constant dense<0.000000e+00> : vector<1xf32>
    %763 = vector.multi_reduction <add>, %762, %cst_193 [1, 2] : vector<1x4x256xf32> to vector<1xf32>
    %764 = vector.shape_cast %763 : vector<1xf32> to vector<1x1x1xf32>
    %765 = vector.extract %764[0, 0, 0] : f32 from vector<1x1x1xf32>
    %cst_194 = arith.constant 1.024000e+03 : f32
    %766 = arith.divf %765, %cst_194 : f32
    %cst_195 = arith.constant 9.99999974E-6 : f32
    %767 = arith.addf %766, %cst_195 : f32
    %768 = math.rsqrt %767 : f32
    %769 = vector.broadcast %768 : f32 to vector<4x256xf32>
    %770 = arith.mulf %760, %769 : vector<4x256xf32>
    %771 = vector.broadcast %752 : vector<4x1xf32> to vector<4x256xf32>
    %772 = arith.mulf %770, %771 : vector<4x256xf32>
    %773 = vector.broadcast %753 : vector<4x1xf32> to vector<4x256xf32>
    %774 = arith.addf %772, %773 : vector<4x256xf32>
    %775 = arith.negf %774 : vector<4x256xf32>
    %776 = math.exp %775 : vector<4x256xf32>
    %cst_196 = arith.constant 1.000000e+00 : f32
    %777 = vector.broadcast %cst_196 : f32 to vector<4x256xf32>
    %778 = arith.addf %777, %776 : vector<4x256xf32>
    %779 = arith.divf %777, %778 : vector<4x256xf32>
    %780 = arith.mulf %774, %779 : vector<4x256xf32>
    %781 = arith.truncf %652 : vector<4x256xf32> to vector<4x256xbf16>
    %cst_197 = arith.constant dense<0.000000e+00> : vector<4x256xf32>
    %782 = tpu.matmul %642, %781, %cst_197 {dimension_numbers = #tpu.dot_dimension_numbers<[1], [0], [0], [1], [0, 0, 1, 1], [], []>} : vector<4x4xbf16>, vector<4x256xbf16>, vector<4x256xf32> -> vector<4x256xf32>
    %783 = vector.extract_strided_slice %644 {offsets = [0, 0], sizes = [4, 1], strides = [1, 1]} : vector<4x3xf32> to vector<4x1xf32>
    %784 = vector.broadcast %783 : vector<4x1xf32> to vector<4x256xf32>
    %785 = arith.addf %782, %784 : vector<4x256xf32>
    %786 = vector.extract_strided_slice %644 {offsets = [0, 1], sizes = [4, 1], strides = [1, 1]} : vector<4x3xf32> to vector<4x1xf32>
    %787 = vector.extract_strided_slice %644 {offsets = [0, 2], sizes = [4, 1], strides = [1, 1]} : vector<4x3xf32> to vector<4x1xf32>
    %788 = vector.shape_cast %785 : vector<4x256xf32> to vector<1x4x256xf32>
    %cst_198 = arith.constant dense<0.000000e+00> : vector<1xf32>
    %789 = vector.multi_reduction <add>, %788, %cst_198 [1, 2] : vector<1x4x256xf32> to vector<1xf32>
    %790 = vector.shape_cast %789 : vector<1xf32> to vector<1x1x1xf32>
    %791 = vector.extract %790[0, 0, 0] : f32 from vector<1x1x1xf32>
    %cst_199 = arith.constant 1.024000e+03 : f32
    %792 = arith.divf %791, %cst_199 : f32
    %793 = vector.broadcast %792 : f32 to vector<4x256xf32>
    %794 = arith.subf %785, %793 : vector<4x256xf32>
    %795 = arith.mulf %794, %794 : vector<4x256xf32>
    %796 = vector.shape_cast %795 : vector<4x256xf32> to vector<1x4x256xf32>
    %cst_200 = arith.constant dense<0.000000e+00> : vector<1xf32>
    %797 = vector.multi_reduction <add>, %796, %cst_200 [1, 2] : vector<1x4x256xf32> to vector<1xf32>
    %798 = vector.shape_cast %797 : vector<1xf32> to vector<1x1x1xf32>
    %799 = vector.extract %798[0, 0, 0] : f32 from vector<1x1x1xf32>
    %cst_201 = arith.constant 1.024000e+03 : f32
    %800 = arith.divf %799, %cst_201 : f32
    %cst_202 = arith.constant 9.99999974E-6 : f32
    %801 = arith.addf %800, %cst_202 : f32
    %802 = math.rsqrt %801 : f32
    %803 = vector.broadcast %802 : f32 to vector<4x256xf32>
    %804 = arith.mulf %794, %803 : vector<4x256xf32>
    %805 = vector.broadcast %786 : vector<4x1xf32> to vector<4x256xf32>
    %806 = arith.mulf %804, %805 : vector<4x256xf32>
    %807 = vector.broadcast %787 : vector<4x1xf32> to vector<4x256xf32>
    %808 = arith.addf %806, %807 : vector<4x256xf32>
    %809 = arith.negf %808 : vector<4x256xf32>
    %810 = math.exp %809 : vector<4x256xf32>
    %cst_203 = arith.constant 1.000000e+00 : f32
    %811 = vector.broadcast %cst_203 : f32 to vector<4x256xf32>
    %812 = arith.addf %811, %810 : vector<4x256xf32>
    %813 = arith.divf %811, %812 : vector<4x256xf32>
    %814 = arith.mulf %808, %813 : vector<4x256xf32>
    %815 = vector.extract_strided_slice %646 {offsets = [0, 0], sizes = [4, 9], strides = [1, 1]} : vector<4x12xf32> to vector<4x9xf32>
    %816 = vector.extract_strided_slice %646 {offsets = [0, 9], sizes = [4, 1], strides = [1, 1]} : vector<4x12xf32> to vector<4x1xf32>
    %817 = vector.extract_strided_slice %815 {offsets = [0, 4], sizes = [4, 1], strides = [1, 1]} : vector<4x9xf32> to vector<4x1xf32>
    %818 = vector.broadcast %817 : vector<4x1xf32> to vector<4x256xf32>
    %819 = arith.mulf %814, %818 : vector<4x256xf32>
    %c17_i32_204 = arith.constant 17 : i32
    %820 = tpu.dynamic_rotate %814 by %c17_i32_204 dim 1 : vector<4x256xf32>, i32 -> vector<4x256xf32>
    %821 = vector.extract_strided_slice %8 {offsets = [0, 0], sizes = [1, 256], strides = [1, 1]} : vector<9x256xf32> to vector<1x256xf32>
    %822 = vector.broadcast %821 : vector<1x256xf32> to vector<4x256xf32>
    %823 = arith.mulf %820, %822 : vector<4x256xf32>
    %824 = vector.extract_strided_slice %815 {offsets = [0, 0], sizes = [4, 1], strides = [1, 1]} : vector<4x9xf32> to vector<4x1xf32>
    %825 = vector.broadcast %824 : vector<4x1xf32> to vector<4x256xf32>
    %826 = arith.mulf %823, %825 : vector<4x256xf32>
    %827 = arith.addf %819, %826 : vector<4x256xf32>
    %c16_i32_205 = arith.constant 16 : i32
    %828 = tpu.dynamic_rotate %814 by %c16_i32_205 dim 1 : vector<4x256xf32>, i32 -> vector<4x256xf32>
    %829 = vector.extract_strided_slice %8 {offsets = [1, 0], sizes = [1, 256], strides = [1, 1]} : vector<9x256xf32> to vector<1x256xf32>
    %830 = vector.broadcast %829 : vector<1x256xf32> to vector<4x256xf32>
    %831 = arith.mulf %828, %830 : vector<4x256xf32>
    %832 = vector.extract_strided_slice %815 {offsets = [0, 1], sizes = [4, 1], strides = [1, 1]} : vector<4x9xf32> to vector<4x1xf32>
    %833 = vector.broadcast %832 : vector<4x1xf32> to vector<4x256xf32>
    %834 = arith.mulf %831, %833 : vector<4x256xf32>
    %835 = arith.addf %827, %834 : vector<4x256xf32>
    %c15_i32_206 = arith.constant 15 : i32
    %836 = tpu.dynamic_rotate %814 by %c15_i32_206 dim 1 : vector<4x256xf32>, i32 -> vector<4x256xf32>
    %837 = vector.extract_strided_slice %8 {offsets = [2, 0], sizes = [1, 256], strides = [1, 1]} : vector<9x256xf32> to vector<1x256xf32>
    %838 = vector.broadcast %837 : vector<1x256xf32> to vector<4x256xf32>
    %839 = arith.mulf %836, %838 : vector<4x256xf32>
    %840 = vector.extract_strided_slice %815 {offsets = [0, 2], sizes = [4, 1], strides = [1, 1]} : vector<4x9xf32> to vector<4x1xf32>
    %841 = vector.broadcast %840 : vector<4x1xf32> to vector<4x256xf32>
    %842 = arith.mulf %839, %841 : vector<4x256xf32>
    %843 = arith.addf %835, %842 : vector<4x256xf32>
    %c1_i32_207 = arith.constant 1 : i32
    %844 = tpu.dynamic_rotate %814 by %c1_i32_207 dim 1 : vector<4x256xf32>, i32 -> vector<4x256xf32>
    %845 = vector.extract_strided_slice %8 {offsets = [3, 0], sizes = [1, 256], strides = [1, 1]} : vector<9x256xf32> to vector<1x256xf32>
    %846 = vector.broadcast %845 : vector<1x256xf32> to vector<4x256xf32>
    %847 = arith.mulf %844, %846 : vector<4x256xf32>
    %848 = vector.extract_strided_slice %815 {offsets = [0, 3], sizes = [4, 1], strides = [1, 1]} : vector<4x9xf32> to vector<4x1xf32>
    %849 = vector.broadcast %848 : vector<4x1xf32> to vector<4x256xf32>
    %850 = arith.mulf %847, %849 : vector<4x256xf32>
    %851 = arith.addf %843, %850 : vector<4x256xf32>
    %c255_i32_208 = arith.constant 255 : i32
    %852 = tpu.dynamic_rotate %814 by %c255_i32_208 dim 1 : vector<4x256xf32>, i32 -> vector<4x256xf32>
    %853 = vector.extract_strided_slice %8 {offsets = [5, 0], sizes = [1, 256], strides = [1, 1]} : vector<9x256xf32> to vector<1x256xf32>
    %854 = vector.broadcast %853 : vector<1x256xf32> to vector<4x256xf32>
    %855 = arith.mulf %852, %854 : vector<4x256xf32>
    %856 = vector.extract_strided_slice %815 {offsets = [0, 5], sizes = [4, 1], strides = [1, 1]} : vector<4x9xf32> to vector<4x1xf32>
    %857 = vector.broadcast %856 : vector<4x1xf32> to vector<4x256xf32>
    %858 = arith.mulf %855, %857 : vector<4x256xf32>
    %859 = arith.addf %851, %858 : vector<4x256xf32>
    %c241_i32_209 = arith.constant 241 : i32
    %860 = tpu.dynamic_rotate %814 by %c241_i32_209 dim 1 : vector<4x256xf32>, i32 -> vector<4x256xf32>
    %861 = vector.extract_strided_slice %8 {offsets = [6, 0], sizes = [1, 256], strides = [1, 1]} : vector<9x256xf32> to vector<1x256xf32>
    %862 = vector.broadcast %861 : vector<1x256xf32> to vector<4x256xf32>
    %863 = arith.mulf %860, %862 : vector<4x256xf32>
    %864 = vector.extract_strided_slice %815 {offsets = [0, 6], sizes = [4, 1], strides = [1, 1]} : vector<4x9xf32> to vector<4x1xf32>
    %865 = vector.broadcast %864 : vector<4x1xf32> to vector<4x256xf32>
    %866 = arith.mulf %863, %865 : vector<4x256xf32>
    %867 = arith.addf %859, %866 : vector<4x256xf32>
    %c240_i32_210 = arith.constant 240 : i32
    %868 = tpu.dynamic_rotate %814 by %c240_i32_210 dim 1 : vector<4x256xf32>, i32 -> vector<4x256xf32>
    %869 = vector.extract_strided_slice %8 {offsets = [7, 0], sizes = [1, 256], strides = [1, 1]} : vector<9x256xf32> to vector<1x256xf32>
    %870 = vector.broadcast %869 : vector<1x256xf32> to vector<4x256xf32>
    %871 = arith.mulf %868, %870 : vector<4x256xf32>
    %872 = vector.extract_strided_slice %815 {offsets = [0, 7], sizes = [4, 1], strides = [1, 1]} : vector<4x9xf32> to vector<4x1xf32>
    %873 = vector.broadcast %872 : vector<4x1xf32> to vector<4x256xf32>
    %874 = arith.mulf %871, %873 : vector<4x256xf32>
    %875 = arith.addf %867, %874 : vector<4x256xf32>
    %c239_i32_211 = arith.constant 239 : i32
    %876 = tpu.dynamic_rotate %814 by %c239_i32_211 dim 1 : vector<4x256xf32>, i32 -> vector<4x256xf32>
    %877 = vector.extract_strided_slice %8 {offsets = [8, 0], sizes = [1, 256], strides = [1, 1]} : vector<9x256xf32> to vector<1x256xf32>
    %878 = vector.broadcast %877 : vector<1x256xf32> to vector<4x256xf32>
    %879 = arith.mulf %876, %878 : vector<4x256xf32>
    %880 = vector.extract_strided_slice %815 {offsets = [0, 8], sizes = [4, 1], strides = [1, 1]} : vector<4x9xf32> to vector<4x1xf32>
    %881 = vector.broadcast %880 : vector<4x1xf32> to vector<4x256xf32>
    %882 = arith.mulf %879, %881 : vector<4x256xf32>
    %883 = arith.addf %875, %882 : vector<4x256xf32>
    %884 = vector.broadcast %816 : vector<4x1xf32> to vector<4x256xf32>
    %885 = arith.addf %883, %884 : vector<4x256xf32>
    %886 = vector.extract_strided_slice %646 {offsets = [0, 10], sizes = [4, 1], strides = [1, 1]} : vector<4x12xf32> to vector<4x1xf32>
    %887 = vector.extract_strided_slice %646 {offsets = [0, 11], sizes = [4, 1], strides = [1, 1]} : vector<4x12xf32> to vector<4x1xf32>
    %888 = vector.shape_cast %885 : vector<4x256xf32> to vector<1x4x256xf32>
    %cst_212 = arith.constant dense<0.000000e+00> : vector<1xf32>
    %889 = vector.multi_reduction <add>, %888, %cst_212 [1, 2] : vector<1x4x256xf32> to vector<1xf32>
    %890 = vector.shape_cast %889 : vector<1xf32> to vector<1x1x1xf32>
    %891 = vector.extract %890[0, 0, 0] : f32 from vector<1x1x1xf32>
    %cst_213 = arith.constant 1.024000e+03 : f32
    %892 = arith.divf %891, %cst_213 : f32
    %893 = vector.broadcast %892 : f32 to vector<4x256xf32>
    %894 = arith.subf %885, %893 : vector<4x256xf32>
    %895 = arith.mulf %894, %894 : vector<4x256xf32>
    %896 = vector.shape_cast %895 : vector<4x256xf32> to vector<1x4x256xf32>
    %cst_214 = arith.constant dense<0.000000e+00> : vector<1xf32>
    %897 = vector.multi_reduction <add>, %896, %cst_214 [1, 2] : vector<1x4x256xf32> to vector<1xf32>
    %898 = vector.shape_cast %897 : vector<1xf32> to vector<1x1x1xf32>
    %899 = vector.extract %898[0, 0, 0] : f32 from vector<1x1x1xf32>
    %cst_215 = arith.constant 1.024000e+03 : f32
    %900 = arith.divf %899, %cst_215 : f32
    %cst_216 = arith.constant 9.99999974E-6 : f32
    %901 = arith.addf %900, %cst_216 : f32
    %902 = math.rsqrt %901 : f32
    %903 = vector.broadcast %902 : f32 to vector<4x256xf32>
    %904 = arith.mulf %894, %903 : vector<4x256xf32>
    %905 = vector.broadcast %886 : vector<4x1xf32> to vector<4x256xf32>
    %906 = arith.mulf %904, %905 : vector<4x256xf32>
    %907 = vector.broadcast %887 : vector<4x1xf32> to vector<4x256xf32>
    %908 = arith.addf %906, %907 : vector<4x256xf32>
    %909 = arith.truncf %908 : vector<4x256xf32> to vector<4x256xbf16>
    %cst_217 = arith.constant dense<0.000000e+00> : vector<4x256xf32>
    %910 = tpu.matmul %648, %909, %cst_217 {dimension_numbers = #tpu.dot_dimension_numbers<[1], [0], [0], [1], [0, 0, 1, 1], [], []>} : vector<4x4xbf16>, vector<4x256xbf16>, vector<4x256xf32> -> vector<4x256xf32>
    %911 = vector.extract_strided_slice %650 {offsets = [0, 0], sizes = [4, 1], strides = [1, 1]} : vector<4x3xf32> to vector<4x1xf32>
    %912 = vector.broadcast %911 : vector<4x1xf32> to vector<4x256xf32>
    %913 = arith.addf %910, %912 : vector<4x256xf32>
    %914 = vector.extract_strided_slice %650 {offsets = [0, 1], sizes = [4, 1], strides = [1, 1]} : vector<4x3xf32> to vector<4x1xf32>
    %915 = vector.extract_strided_slice %650 {offsets = [0, 2], sizes = [4, 1], strides = [1, 1]} : vector<4x3xf32> to vector<4x1xf32>
    %916 = vector.shape_cast %913 : vector<4x256xf32> to vector<1x4x256xf32>
    %cst_218 = arith.constant dense<0.000000e+00> : vector<1xf32>
    %917 = vector.multi_reduction <add>, %916, %cst_218 [1, 2] : vector<1x4x256xf32> to vector<1xf32>
    %918 = vector.shape_cast %917 : vector<1xf32> to vector<1x1x1xf32>
    %919 = vector.extract %918[0, 0, 0] : f32 from vector<1x1x1xf32>
    %cst_219 = arith.constant 1.024000e+03 : f32
    %920 = arith.divf %919, %cst_219 : f32
    %921 = vector.broadcast %920 : f32 to vector<4x256xf32>
    %922 = arith.subf %913, %921 : vector<4x256xf32>
    %923 = arith.mulf %922, %922 : vector<4x256xf32>
    %924 = vector.shape_cast %923 : vector<4x256xf32> to vector<1x4x256xf32>
    %cst_220 = arith.constant dense<0.000000e+00> : vector<1xf32>
    %925 = vector.multi_reduction <add>, %924, %cst_220 [1, 2] : vector<1x4x256xf32> to vector<1xf32>
    %926 = vector.shape_cast %925 : vector<1xf32> to vector<1x1x1xf32>
    %927 = vector.extract %926[0, 0, 0] : f32 from vector<1x1x1xf32>
    %cst_221 = arith.constant 1.024000e+03 : f32
    %928 = arith.divf %927, %cst_221 : f32
    %cst_222 = arith.constant 9.99999974E-6 : f32
    %929 = arith.addf %928, %cst_222 : f32
    %930 = math.rsqrt %929 : f32
    %931 = vector.broadcast %930 : f32 to vector<4x256xf32>
    %932 = arith.mulf %922, %931 : vector<4x256xf32>
    %933 = vector.broadcast %914 : vector<4x1xf32> to vector<4x256xf32>
    %934 = arith.mulf %932, %933 : vector<4x256xf32>
    %935 = vector.broadcast %915 : vector<4x1xf32> to vector<4x256xf32>
    %936 = arith.addf %934, %935 : vector<4x256xf32>
    %937 = arith.negf %936 : vector<4x256xf32>
    %938 = math.exp %937 : vector<4x256xf32>
    %cst_223 = arith.constant 1.000000e+00 : f32
    %939 = vector.broadcast %cst_223 : f32 to vector<4x256xf32>
    %940 = arith.addf %939, %938 : vector<4x256xf32>
    %941 = arith.divf %939, %940 : vector<4x256xf32>
    %942 = arith.mulf %936, %941 : vector<4x256xf32>
    %cst_224 = arith.constant dense<0.000000e+00> : vector<8x256xf32>
    %943 = tpu.matmul %9, %780, %cst_224 {dimension_numbers = #tpu.dot_dimension_numbers<[1], [0], [0], [1], [0, 0, 1, 1], [], []>} : vector<8x4xf32>, vector<4x256xf32>, vector<8x256xf32> -> vector<8x256xf32>
    %cst_225 = arith.constant dense<0.000000e+00> : vector<8x256xf32>
    %944 = tpu.matmul %10, %942, %cst_225 {dimension_numbers = #tpu.dot_dimension_numbers<[1], [0], [0], [1], [0, 0, 1, 1], [], []>} : vector<8x4xf32>, vector<4x256xf32>, vector<8x256xf32> -> vector<8x256xf32>
    %945 = arith.addf %943, %944 : vector<8x256xf32>
    %c0_226 = arith.constant 0 : index
    %c0_227 = arith.constant 0 : index
    %946 = vector.load %arg21[%c0_226, %c0_227] : memref<4x12xf32, #tpu.memory_space<vmem>>, vector<4x12xf32>
    %c0_228 = arith.constant 0 : index
    %c0_229 = arith.constant 0 : index
    %947 = vector.load %arg22[%c0_228, %c0_229] : memref<2x4xbf16, #tpu.memory_space<vmem>>, vector<2x4xbf16>
    %c0_230 = arith.constant 0 : index
    %c0_231 = arith.constant 0 : index
    %948 = vector.load %arg23[%c0_230, %c0_231] : memref<2x3xf32, #tpu.memory_space<vmem>>, vector<2x3xf32>
    %c0_232 = arith.constant 0 : index
    %c0_233 = arith.constant 0 : index
    %949 = vector.load %arg24[%c0_232, %c0_233] : memref<4x4xbf16, #tpu.memory_space<vmem>>, vector<4x4xbf16>
    %c0_234 = arith.constant 0 : index
    %c0_235 = arith.constant 0 : index
    %950 = vector.load %arg25[%c0_234, %c0_235] : memref<4x3xf32, #tpu.memory_space<vmem>>, vector<4x3xf32>
    %c0_236 = arith.constant 0 : index
    %c0_237 = arith.constant 0 : index
    %951 = vector.load %arg26[%c0_236, %c0_237] : memref<4x12xf32, #tpu.memory_space<vmem>>, vector<4x12xf32>
    %c0_238 = arith.constant 0 : index
    %c0_239 = arith.constant 0 : index
    %952 = vector.load %arg27[%c0_238, %c0_239] : memref<2x4xbf16, #tpu.memory_space<vmem>>, vector<2x4xbf16>
    %c0_240 = arith.constant 0 : index
    %c0_241 = arith.constant 0 : index
    %953 = vector.load %arg28[%c0_240, %c0_241] : memref<2x3xf32, #tpu.memory_space<vmem>>, vector<2x3xf32>
    %954 = vector.extract_strided_slice %945 {offsets = [0, 0], sizes = [4, 256], strides = [1, 1]} : vector<8x256xf32> to vector<4x256xf32>
    %955 = vector.extract_strided_slice %945 {offsets = [4, 0], sizes = [4, 256], strides = [1, 1]} : vector<8x256xf32> to vector<4x256xf32>
    %956 = vector.extract_strided_slice %946 {offsets = [0, 0], sizes = [4, 9], strides = [1, 1]} : vector<4x12xf32> to vector<4x9xf32>
    %957 = vector.extract_strided_slice %946 {offsets = [0, 9], sizes = [4, 1], strides = [1, 1]} : vector<4x12xf32> to vector<4x1xf32>
    %958 = vector.extract_strided_slice %956 {offsets = [0, 4], sizes = [4, 1], strides = [1, 1]} : vector<4x9xf32> to vector<4x1xf32>
    %959 = vector.broadcast %958 : vector<4x1xf32> to vector<4x256xf32>
    %960 = arith.mulf %954, %959 : vector<4x256xf32>
    %c17_i32_242 = arith.constant 17 : i32
    %961 = tpu.dynamic_rotate %954 by %c17_i32_242 dim 1 : vector<4x256xf32>, i32 -> vector<4x256xf32>
    %962 = vector.extract_strided_slice %8 {offsets = [0, 0], sizes = [1, 256], strides = [1, 1]} : vector<9x256xf32> to vector<1x256xf32>
    %963 = vector.broadcast %962 : vector<1x256xf32> to vector<4x256xf32>
    %964 = arith.mulf %961, %963 : vector<4x256xf32>
    %965 = vector.extract_strided_slice %956 {offsets = [0, 0], sizes = [4, 1], strides = [1, 1]} : vector<4x9xf32> to vector<4x1xf32>
    %966 = vector.broadcast %965 : vector<4x1xf32> to vector<4x256xf32>
    %967 = arith.mulf %964, %966 : vector<4x256xf32>
    %968 = arith.addf %960, %967 : vector<4x256xf32>
    %c16_i32_243 = arith.constant 16 : i32
    %969 = tpu.dynamic_rotate %954 by %c16_i32_243 dim 1 : vector<4x256xf32>, i32 -> vector<4x256xf32>
    %970 = vector.extract_strided_slice %8 {offsets = [1, 0], sizes = [1, 256], strides = [1, 1]} : vector<9x256xf32> to vector<1x256xf32>
    %971 = vector.broadcast %970 : vector<1x256xf32> to vector<4x256xf32>
    %972 = arith.mulf %969, %971 : vector<4x256xf32>
    %973 = vector.extract_strided_slice %956 {offsets = [0, 1], sizes = [4, 1], strides = [1, 1]} : vector<4x9xf32> to vector<4x1xf32>
    %974 = vector.broadcast %973 : vector<4x1xf32> to vector<4x256xf32>
    %975 = arith.mulf %972, %974 : vector<4x256xf32>
    %976 = arith.addf %968, %975 : vector<4x256xf32>
    %c15_i32_244 = arith.constant 15 : i32
    %977 = tpu.dynamic_rotate %954 by %c15_i32_244 dim 1 : vector<4x256xf32>, i32 -> vector<4x256xf32>
    %978 = vector.extract_strided_slice %8 {offsets = [2, 0], sizes = [1, 256], strides = [1, 1]} : vector<9x256xf32> to vector<1x256xf32>
    %979 = vector.broadcast %978 : vector<1x256xf32> to vector<4x256xf32>
    %980 = arith.mulf %977, %979 : vector<4x256xf32>
    %981 = vector.extract_strided_slice %956 {offsets = [0, 2], sizes = [4, 1], strides = [1, 1]} : vector<4x9xf32> to vector<4x1xf32>
    %982 = vector.broadcast %981 : vector<4x1xf32> to vector<4x256xf32>
    %983 = arith.mulf %980, %982 : vector<4x256xf32>
    %984 = arith.addf %976, %983 : vector<4x256xf32>
    %c1_i32_245 = arith.constant 1 : i32
    %985 = tpu.dynamic_rotate %954 by %c1_i32_245 dim 1 : vector<4x256xf32>, i32 -> vector<4x256xf32>
    %986 = vector.extract_strided_slice %8 {offsets = [3, 0], sizes = [1, 256], strides = [1, 1]} : vector<9x256xf32> to vector<1x256xf32>
    %987 = vector.broadcast %986 : vector<1x256xf32> to vector<4x256xf32>
    %988 = arith.mulf %985, %987 : vector<4x256xf32>
    %989 = vector.extract_strided_slice %956 {offsets = [0, 3], sizes = [4, 1], strides = [1, 1]} : vector<4x9xf32> to vector<4x1xf32>
    %990 = vector.broadcast %989 : vector<4x1xf32> to vector<4x256xf32>
    %991 = arith.mulf %988, %990 : vector<4x256xf32>
    %992 = arith.addf %984, %991 : vector<4x256xf32>
    %c255_i32_246 = arith.constant 255 : i32
    %993 = tpu.dynamic_rotate %954 by %c255_i32_246 dim 1 : vector<4x256xf32>, i32 -> vector<4x256xf32>
    %994 = vector.extract_strided_slice %8 {offsets = [5, 0], sizes = [1, 256], strides = [1, 1]} : vector<9x256xf32> to vector<1x256xf32>
    %995 = vector.broadcast %994 : vector<1x256xf32> to vector<4x256xf32>
    %996 = arith.mulf %993, %995 : vector<4x256xf32>
    %997 = vector.extract_strided_slice %956 {offsets = [0, 5], sizes = [4, 1], strides = [1, 1]} : vector<4x9xf32> to vector<4x1xf32>
    %998 = vector.broadcast %997 : vector<4x1xf32> to vector<4x256xf32>
    %999 = arith.mulf %996, %998 : vector<4x256xf32>
    %1000 = arith.addf %992, %999 : vector<4x256xf32>
    %c241_i32_247 = arith.constant 241 : i32
    %1001 = tpu.dynamic_rotate %954 by %c241_i32_247 dim 1 : vector<4x256xf32>, i32 -> vector<4x256xf32>
    %1002 = vector.extract_strided_slice %8 {offsets = [6, 0], sizes = [1, 256], strides = [1, 1]} : vector<9x256xf32> to vector<1x256xf32>
    %1003 = vector.broadcast %1002 : vector<1x256xf32> to vector<4x256xf32>
    %1004 = arith.mulf %1001, %1003 : vector<4x256xf32>
    %1005 = vector.extract_strided_slice %956 {offsets = [0, 6], sizes = [4, 1], strides = [1, 1]} : vector<4x9xf32> to vector<4x1xf32>
    %1006 = vector.broadcast %1005 : vector<4x1xf32> to vector<4x256xf32>
    %1007 = arith.mulf %1004, %1006 : vector<4x256xf32>
    %1008 = arith.addf %1000, %1007 : vector<4x256xf32>
    %c240_i32_248 = arith.constant 240 : i32
    %1009 = tpu.dynamic_rotate %954 by %c240_i32_248 dim 1 : vector<4x256xf32>, i32 -> vector<4x256xf32>
    %1010 = vector.extract_strided_slice %8 {offsets = [7, 0], sizes = [1, 256], strides = [1, 1]} : vector<9x256xf32> to vector<1x256xf32>
    %1011 = vector.broadcast %1010 : vector<1x256xf32> to vector<4x256xf32>
    %1012 = arith.mulf %1009, %1011 : vector<4x256xf32>
    %1013 = vector.extract_strided_slice %956 {offsets = [0, 7], sizes = [4, 1], strides = [1, 1]} : vector<4x9xf32> to vector<4x1xf32>
    %1014 = vector.broadcast %1013 : vector<4x1xf32> to vector<4x256xf32>
    %1015 = arith.mulf %1012, %1014 : vector<4x256xf32>
    %1016 = arith.addf %1008, %1015 : vector<4x256xf32>
    %c239_i32_249 = arith.constant 239 : i32
    %1017 = tpu.dynamic_rotate %954 by %c239_i32_249 dim 1 : vector<4x256xf32>, i32 -> vector<4x256xf32>
    %1018 = vector.extract_strided_slice %8 {offsets = [8, 0], sizes = [1, 256], strides = [1, 1]} : vector<9x256xf32> to vector<1x256xf32>
    %1019 = vector.broadcast %1018 : vector<1x256xf32> to vector<4x256xf32>
    %1020 = arith.mulf %1017, %1019 : vector<4x256xf32>
    %1021 = vector.extract_strided_slice %956 {offsets = [0, 8], sizes = [4, 1], strides = [1, 1]} : vector<4x9xf32> to vector<4x1xf32>
    %1022 = vector.broadcast %1021 : vector<4x1xf32> to vector<4x256xf32>
    %1023 = arith.mulf %1020, %1022 : vector<4x256xf32>
    %1024 = arith.addf %1016, %1023 : vector<4x256xf32>
    %1025 = vector.broadcast %957 : vector<4x1xf32> to vector<4x256xf32>
    %1026 = arith.addf %1024, %1025 : vector<4x256xf32>
    %1027 = vector.extract_strided_slice %946 {offsets = [0, 10], sizes = [4, 1], strides = [1, 1]} : vector<4x12xf32> to vector<4x1xf32>
    %1028 = vector.extract_strided_slice %946 {offsets = [0, 11], sizes = [4, 1], strides = [1, 1]} : vector<4x12xf32> to vector<4x1xf32>
    %1029 = vector.shape_cast %1026 : vector<4x256xf32> to vector<1x4x256xf32>
    %cst_250 = arith.constant dense<0.000000e+00> : vector<1xf32>
    %1030 = vector.multi_reduction <add>, %1029, %cst_250 [1, 2] : vector<1x4x256xf32> to vector<1xf32>
    %1031 = vector.shape_cast %1030 : vector<1xf32> to vector<1x1x1xf32>
    %1032 = vector.extract %1031[0, 0, 0] : f32 from vector<1x1x1xf32>
    %cst_251 = arith.constant 1.024000e+03 : f32
    %1033 = arith.divf %1032, %cst_251 : f32
    %1034 = vector.broadcast %1033 : f32 to vector<4x256xf32>
    %1035 = arith.subf %1026, %1034 : vector<4x256xf32>
    %1036 = arith.mulf %1035, %1035 : vector<4x256xf32>
    %1037 = vector.shape_cast %1036 : vector<4x256xf32> to vector<1x4x256xf32>
    %cst_252 = arith.constant dense<0.000000e+00> : vector<1xf32>
    %1038 = vector.multi_reduction <add>, %1037, %cst_252 [1, 2] : vector<1x4x256xf32> to vector<1xf32>
    %1039 = vector.shape_cast %1038 : vector<1xf32> to vector<1x1x1xf32>
    %1040 = vector.extract %1039[0, 0, 0] : f32 from vector<1x1x1xf32>
    %cst_253 = arith.constant 1.024000e+03 : f32
    %1041 = arith.divf %1040, %cst_253 : f32
    %cst_254 = arith.constant 9.99999974E-6 : f32
    %1042 = arith.addf %1041, %cst_254 : f32
    %1043 = math.rsqrt %1042 : f32
    %1044 = vector.broadcast %1043 : f32 to vector<4x256xf32>
    %1045 = arith.mulf %1035, %1044 : vector<4x256xf32>
    %1046 = vector.broadcast %1027 : vector<4x1xf32> to vector<4x256xf32>
    %1047 = arith.mulf %1045, %1046 : vector<4x256xf32>
    %1048 = vector.broadcast %1028 : vector<4x1xf32> to vector<4x256xf32>
    %1049 = arith.addf %1047, %1048 : vector<4x256xf32>
    %1050 = arith.truncf %1049 : vector<4x256xf32> to vector<4x256xbf16>
    %cst_255 = arith.constant dense<0.000000e+00> : vector<2x256xf32>
    %1051 = tpu.matmul %947, %1050, %cst_255 {dimension_numbers = #tpu.dot_dimension_numbers<[1], [0], [0], [1], [0, 0, 1, 1], [], []>} : vector<2x4xbf16>, vector<4x256xbf16>, vector<2x256xf32> -> vector<2x256xf32>
    %1052 = vector.extract_strided_slice %948 {offsets = [0, 0], sizes = [2, 1], strides = [1, 1]} : vector<2x3xf32> to vector<2x1xf32>
    %1053 = vector.broadcast %1052 : vector<2x1xf32> to vector<2x256xf32>
    %1054 = arith.addf %1051, %1053 : vector<2x256xf32>
    %1055 = vector.extract_strided_slice %948 {offsets = [0, 1], sizes = [2, 1], strides = [1, 1]} : vector<2x3xf32> to vector<2x1xf32>
    %1056 = vector.extract_strided_slice %948 {offsets = [0, 2], sizes = [2, 1], strides = [1, 1]} : vector<2x3xf32> to vector<2x1xf32>
    %1057 = vector.shape_cast %1054 : vector<2x256xf32> to vector<1x2x256xf32>
    %cst_256 = arith.constant dense<0.000000e+00> : vector<1xf32>
    %1058 = vector.multi_reduction <add>, %1057, %cst_256 [1, 2] : vector<1x2x256xf32> to vector<1xf32>
    %1059 = vector.shape_cast %1058 : vector<1xf32> to vector<1x1x1xf32>
    %1060 = vector.extract %1059[0, 0, 0] : f32 from vector<1x1x1xf32>
    %cst_257 = arith.constant 5.120000e+02 : f32
    %1061 = arith.divf %1060, %cst_257 : f32
    %1062 = vector.broadcast %1061 : f32 to vector<2x256xf32>
    %1063 = arith.subf %1054, %1062 : vector<2x256xf32>
    %1064 = arith.mulf %1063, %1063 : vector<2x256xf32>
    %1065 = vector.shape_cast %1064 : vector<2x256xf32> to vector<1x2x256xf32>
    %cst_258 = arith.constant dense<0.000000e+00> : vector<1xf32>
    %1066 = vector.multi_reduction <add>, %1065, %cst_258 [1, 2] : vector<1x2x256xf32> to vector<1xf32>
    %1067 = vector.shape_cast %1066 : vector<1xf32> to vector<1x1x1xf32>
    %1068 = vector.extract %1067[0, 0, 0] : f32 from vector<1x1x1xf32>
    %cst_259 = arith.constant 5.120000e+02 : f32
    %1069 = arith.divf %1068, %cst_259 : f32
    %cst_260 = arith.constant 9.99999974E-6 : f32
    %1070 = arith.addf %1069, %cst_260 : f32
    %1071 = math.rsqrt %1070 : f32
    %1072 = vector.broadcast %1071 : f32 to vector<2x256xf32>
    %1073 = arith.mulf %1063, %1072 : vector<2x256xf32>
    %1074 = vector.broadcast %1055 : vector<2x1xf32> to vector<2x256xf32>
    %1075 = arith.mulf %1073, %1074 : vector<2x256xf32>
    %1076 = vector.broadcast %1056 : vector<2x1xf32> to vector<2x256xf32>
    %1077 = arith.addf %1075, %1076 : vector<2x256xf32>
    %1078 = arith.negf %1077 : vector<2x256xf32>
    %1079 = math.exp %1078 : vector<2x256xf32>
    %cst_261 = arith.constant 1.000000e+00 : f32
    %1080 = vector.broadcast %cst_261 : f32 to vector<2x256xf32>
    %1081 = arith.addf %1080, %1079 : vector<2x256xf32>
    %1082 = arith.divf %1080, %1081 : vector<2x256xf32>
    %1083 = arith.mulf %1077, %1082 : vector<2x256xf32>
    %1084 = arith.truncf %955 : vector<4x256xf32> to vector<4x256xbf16>
    %cst_262 = arith.constant dense<0.000000e+00> : vector<4x256xf32>
    %1085 = tpu.matmul %949, %1084, %cst_262 {dimension_numbers = #tpu.dot_dimension_numbers<[1], [0], [0], [1], [0, 0, 1, 1], [], []>} : vector<4x4xbf16>, vector<4x256xbf16>, vector<4x256xf32> -> vector<4x256xf32>
    %1086 = vector.extract_strided_slice %950 {offsets = [0, 0], sizes = [4, 1], strides = [1, 1]} : vector<4x3xf32> to vector<4x1xf32>
    %1087 = vector.broadcast %1086 : vector<4x1xf32> to vector<4x256xf32>
    %1088 = arith.addf %1085, %1087 : vector<4x256xf32>
    %1089 = vector.extract_strided_slice %950 {offsets = [0, 1], sizes = [4, 1], strides = [1, 1]} : vector<4x3xf32> to vector<4x1xf32>
    %1090 = vector.extract_strided_slice %950 {offsets = [0, 2], sizes = [4, 1], strides = [1, 1]} : vector<4x3xf32> to vector<4x1xf32>
    %1091 = vector.shape_cast %1088 : vector<4x256xf32> to vector<1x4x256xf32>
    %cst_263 = arith.constant dense<0.000000e+00> : vector<1xf32>
    %1092 = vector.multi_reduction <add>, %1091, %cst_263 [1, 2] : vector<1x4x256xf32> to vector<1xf32>
    %1093 = vector.shape_cast %1092 : vector<1xf32> to vector<1x1x1xf32>
    %1094 = vector.extract %1093[0, 0, 0] : f32 from vector<1x1x1xf32>
    %cst_264 = arith.constant 1.024000e+03 : f32
    %1095 = arith.divf %1094, %cst_264 : f32
    %1096 = vector.broadcast %1095 : f32 to vector<4x256xf32>
    %1097 = arith.subf %1088, %1096 : vector<4x256xf32>
    %1098 = arith.mulf %1097, %1097 : vector<4x256xf32>
    %1099 = vector.shape_cast %1098 : vector<4x256xf32> to vector<1x4x256xf32>
    %cst_265 = arith.constant dense<0.000000e+00> : vector<1xf32>
    %1100 = vector.multi_reduction <add>, %1099, %cst_265 [1, 2] : vector<1x4x256xf32> to vector<1xf32>
    %1101 = vector.shape_cast %1100 : vector<1xf32> to vector<1x1x1xf32>
    %1102 = vector.extract %1101[0, 0, 0] : f32 from vector<1x1x1xf32>
    %cst_266 = arith.constant 1.024000e+03 : f32
    %1103 = arith.divf %1102, %cst_266 : f32
    %cst_267 = arith.constant 9.99999974E-6 : f32
    %1104 = arith.addf %1103, %cst_267 : f32
    %1105 = math.rsqrt %1104 : f32
    %1106 = vector.broadcast %1105 : f32 to vector<4x256xf32>
    %1107 = arith.mulf %1097, %1106 : vector<4x256xf32>
    %1108 = vector.broadcast %1089 : vector<4x1xf32> to vector<4x256xf32>
    %1109 = arith.mulf %1107, %1108 : vector<4x256xf32>
    %1110 = vector.broadcast %1090 : vector<4x1xf32> to vector<4x256xf32>
    %1111 = arith.addf %1109, %1110 : vector<4x256xf32>
    %1112 = arith.negf %1111 : vector<4x256xf32>
    %1113 = math.exp %1112 : vector<4x256xf32>
    %cst_268 = arith.constant 1.000000e+00 : f32
    %1114 = vector.broadcast %cst_268 : f32 to vector<4x256xf32>
    %1115 = arith.addf %1114, %1113 : vector<4x256xf32>
    %1116 = arith.divf %1114, %1115 : vector<4x256xf32>
    %1117 = arith.mulf %1111, %1116 : vector<4x256xf32>
    %1118 = vector.extract_strided_slice %951 {offsets = [0, 0], sizes = [4, 9], strides = [1, 1]} : vector<4x12xf32> to vector<4x9xf32>
    %1119 = vector.extract_strided_slice %951 {offsets = [0, 9], sizes = [4, 1], strides = [1, 1]} : vector<4x12xf32> to vector<4x1xf32>
    %1120 = vector.extract_strided_slice %1118 {offsets = [0, 4], sizes = [4, 1], strides = [1, 1]} : vector<4x9xf32> to vector<4x1xf32>
    %1121 = vector.broadcast %1120 : vector<4x1xf32> to vector<4x256xf32>
    %1122 = arith.mulf %1117, %1121 : vector<4x256xf32>
    %c17_i32_269 = arith.constant 17 : i32
    %1123 = tpu.dynamic_rotate %1117 by %c17_i32_269 dim 1 : vector<4x256xf32>, i32 -> vector<4x256xf32>
    %1124 = vector.extract_strided_slice %8 {offsets = [0, 0], sizes = [1, 256], strides = [1, 1]} : vector<9x256xf32> to vector<1x256xf32>
    %1125 = vector.broadcast %1124 : vector<1x256xf32> to vector<4x256xf32>
    %1126 = arith.mulf %1123, %1125 : vector<4x256xf32>
    %1127 = vector.extract_strided_slice %1118 {offsets = [0, 0], sizes = [4, 1], strides = [1, 1]} : vector<4x9xf32> to vector<4x1xf32>
    %1128 = vector.broadcast %1127 : vector<4x1xf32> to vector<4x256xf32>
    %1129 = arith.mulf %1126, %1128 : vector<4x256xf32>
    %1130 = arith.addf %1122, %1129 : vector<4x256xf32>
    %c16_i32_270 = arith.constant 16 : i32
    %1131 = tpu.dynamic_rotate %1117 by %c16_i32_270 dim 1 : vector<4x256xf32>, i32 -> vector<4x256xf32>
    %1132 = vector.extract_strided_slice %8 {offsets = [1, 0], sizes = [1, 256], strides = [1, 1]} : vector<9x256xf32> to vector<1x256xf32>
    %1133 = vector.broadcast %1132 : vector<1x256xf32> to vector<4x256xf32>
    %1134 = arith.mulf %1131, %1133 : vector<4x256xf32>
    %1135 = vector.extract_strided_slice %1118 {offsets = [0, 1], sizes = [4, 1], strides = [1, 1]} : vector<4x9xf32> to vector<4x1xf32>
    %1136 = vector.broadcast %1135 : vector<4x1xf32> to vector<4x256xf32>
    %1137 = arith.mulf %1134, %1136 : vector<4x256xf32>
    %1138 = arith.addf %1130, %1137 : vector<4x256xf32>
    %c15_i32_271 = arith.constant 15 : i32
    %1139 = tpu.dynamic_rotate %1117 by %c15_i32_271 dim 1 : vector<4x256xf32>, i32 -> vector<4x256xf32>
    %1140 = vector.extract_strided_slice %8 {offsets = [2, 0], sizes = [1, 256], strides = [1, 1]} : vector<9x256xf32> to vector<1x256xf32>
    %1141 = vector.broadcast %1140 : vector<1x256xf32> to vector<4x256xf32>
    %1142 = arith.mulf %1139, %1141 : vector<4x256xf32>
    %1143 = vector.extract_strided_slice %1118 {offsets = [0, 2], sizes = [4, 1], strides = [1, 1]} : vector<4x9xf32> to vector<4x1xf32>
    %1144 = vector.broadcast %1143 : vector<4x1xf32> to vector<4x256xf32>
    %1145 = arith.mulf %1142, %1144 : vector<4x256xf32>
    %1146 = arith.addf %1138, %1145 : vector<4x256xf32>
    %c1_i32_272 = arith.constant 1 : i32
    %1147 = tpu.dynamic_rotate %1117 by %c1_i32_272 dim 1 : vector<4x256xf32>, i32 -> vector<4x256xf32>
    %1148 = vector.extract_strided_slice %8 {offsets = [3, 0], sizes = [1, 256], strides = [1, 1]} : vector<9x256xf32> to vector<1x256xf32>
    %1149 = vector.broadcast %1148 : vector<1x256xf32> to vector<4x256xf32>
    %1150 = arith.mulf %1147, %1149 : vector<4x256xf32>
    %1151 = vector.extract_strided_slice %1118 {offsets = [0, 3], sizes = [4, 1], strides = [1, 1]} : vector<4x9xf32> to vector<4x1xf32>
    %1152 = vector.broadcast %1151 : vector<4x1xf32> to vector<4x256xf32>
    %1153 = arith.mulf %1150, %1152 : vector<4x256xf32>
    %1154 = arith.addf %1146, %1153 : vector<4x256xf32>
    %c255_i32_273 = arith.constant 255 : i32
    %1155 = tpu.dynamic_rotate %1117 by %c255_i32_273 dim 1 : vector<4x256xf32>, i32 -> vector<4x256xf32>
    %1156 = vector.extract_strided_slice %8 {offsets = [5, 0], sizes = [1, 256], strides = [1, 1]} : vector<9x256xf32> to vector<1x256xf32>
    %1157 = vector.broadcast %1156 : vector<1x256xf32> to vector<4x256xf32>
    %1158 = arith.mulf %1155, %1157 : vector<4x256xf32>
    %1159 = vector.extract_strided_slice %1118 {offsets = [0, 5], sizes = [4, 1], strides = [1, 1]} : vector<4x9xf32> to vector<4x1xf32>
    %1160 = vector.broadcast %1159 : vector<4x1xf32> to vector<4x256xf32>
    %1161 = arith.mulf %1158, %1160 : vector<4x256xf32>
    %1162 = arith.addf %1154, %1161 : vector<4x256xf32>
    %c241_i32_274 = arith.constant 241 : i32
    %1163 = tpu.dynamic_rotate %1117 by %c241_i32_274 dim 1 : vector<4x256xf32>, i32 -> vector<4x256xf32>
    %1164 = vector.extract_strided_slice %8 {offsets = [6, 0], sizes = [1, 256], strides = [1, 1]} : vector<9x256xf32> to vector<1x256xf32>
    %1165 = vector.broadcast %1164 : vector<1x256xf32> to vector<4x256xf32>
    %1166 = arith.mulf %1163, %1165 : vector<4x256xf32>
    %1167 = vector.extract_strided_slice %1118 {offsets = [0, 6], sizes = [4, 1], strides = [1, 1]} : vector<4x9xf32> to vector<4x1xf32>
    %1168 = vector.broadcast %1167 : vector<4x1xf32> to vector<4x256xf32>
    %1169 = arith.mulf %1166, %1168 : vector<4x256xf32>
    %1170 = arith.addf %1162, %1169 : vector<4x256xf32>
    %c240_i32_275 = arith.constant 240 : i32
    %1171 = tpu.dynamic_rotate %1117 by %c240_i32_275 dim 1 : vector<4x256xf32>, i32 -> vector<4x256xf32>
    %1172 = vector.extract_strided_slice %8 {offsets = [7, 0], sizes = [1, 256], strides = [1, 1]} : vector<9x256xf32> to vector<1x256xf32>
    %1173 = vector.broadcast %1172 : vector<1x256xf32> to vector<4x256xf32>
    %1174 = arith.mulf %1171, %1173 : vector<4x256xf32>
    %1175 = vector.extract_strided_slice %1118 {offsets = [0, 7], sizes = [4, 1], strides = [1, 1]} : vector<4x9xf32> to vector<4x1xf32>
    %1176 = vector.broadcast %1175 : vector<4x1xf32> to vector<4x256xf32>
    %1177 = arith.mulf %1174, %1176 : vector<4x256xf32>
    %1178 = arith.addf %1170, %1177 : vector<4x256xf32>
    %c239_i32_276 = arith.constant 239 : i32
    %1179 = tpu.dynamic_rotate %1117 by %c239_i32_276 dim 1 : vector<4x256xf32>, i32 -> vector<4x256xf32>
    %1180 = vector.extract_strided_slice %8 {offsets = [8, 0], sizes = [1, 256], strides = [1, 1]} : vector<9x256xf32> to vector<1x256xf32>
    %1181 = vector.broadcast %1180 : vector<1x256xf32> to vector<4x256xf32>
    %1182 = arith.mulf %1179, %1181 : vector<4x256xf32>
    %1183 = vector.extract_strided_slice %1118 {offsets = [0, 8], sizes = [4, 1], strides = [1, 1]} : vector<4x9xf32> to vector<4x1xf32>
    %1184 = vector.broadcast %1183 : vector<4x1xf32> to vector<4x256xf32>
    %1185 = arith.mulf %1182, %1184 : vector<4x256xf32>
    %1186 = arith.addf %1178, %1185 : vector<4x256xf32>
    %1187 = vector.broadcast %1119 : vector<4x1xf32> to vector<4x256xf32>
    %1188 = arith.addf %1186, %1187 : vector<4x256xf32>
    %1189 = vector.extract_strided_slice %951 {offsets = [0, 10], sizes = [4, 1], strides = [1, 1]} : vector<4x12xf32> to vector<4x1xf32>
    %1190 = vector.extract_strided_slice %951 {offsets = [0, 11], sizes = [4, 1], strides = [1, 1]} : vector<4x12xf32> to vector<4x1xf32>
    %1191 = vector.shape_cast %1188 : vector<4x256xf32> to vector<1x4x256xf32>
    %cst_277 = arith.constant dense<0.000000e+00> : vector<1xf32>
    %1192 = vector.multi_reduction <add>, %1191, %cst_277 [1, 2] : vector<1x4x256xf32> to vector<1xf32>
    %1193 = vector.shape_cast %1192 : vector<1xf32> to vector<1x1x1xf32>
    %1194 = vector.extract %1193[0, 0, 0] : f32 from vector<1x1x1xf32>
    %cst_278 = arith.constant 1.024000e+03 : f32
    %1195 = arith.divf %1194, %cst_278 : f32
    %1196 = vector.broadcast %1195 : f32 to vector<4x256xf32>
    %1197 = arith.subf %1188, %1196 : vector<4x256xf32>
    %1198 = arith.mulf %1197, %1197 : vector<4x256xf32>
    %1199 = vector.shape_cast %1198 : vector<4x256xf32> to vector<1x4x256xf32>
    %cst_279 = arith.constant dense<0.000000e+00> : vector<1xf32>
    %1200 = vector.multi_reduction <add>, %1199, %cst_279 [1, 2] : vector<1x4x256xf32> to vector<1xf32>
    %1201 = vector.shape_cast %1200 : vector<1xf32> to vector<1x1x1xf32>
    %1202 = vector.extract %1201[0, 0, 0] : f32 from vector<1x1x1xf32>
    %cst_280 = arith.constant 1.024000e+03 : f32
    %1203 = arith.divf %1202, %cst_280 : f32
    %cst_281 = arith.constant 9.99999974E-6 : f32
    %1204 = arith.addf %1203, %cst_281 : f32
    %1205 = math.rsqrt %1204 : f32
    %1206 = vector.broadcast %1205 : f32 to vector<4x256xf32>
    %1207 = arith.mulf %1197, %1206 : vector<4x256xf32>
    %1208 = vector.broadcast %1189 : vector<4x1xf32> to vector<4x256xf32>
    %1209 = arith.mulf %1207, %1208 : vector<4x256xf32>
    %1210 = vector.broadcast %1190 : vector<4x1xf32> to vector<4x256xf32>
    %1211 = arith.addf %1209, %1210 : vector<4x256xf32>
    %1212 = arith.truncf %1211 : vector<4x256xf32> to vector<4x256xbf16>
    %cst_282 = arith.constant dense<0.000000e+00> : vector<2x256xf32>
    %1213 = tpu.matmul %952, %1212, %cst_282 {dimension_numbers = #tpu.dot_dimension_numbers<[1], [0], [0], [1], [0, 0, 1, 1], [], []>} : vector<2x4xbf16>, vector<4x256xbf16>, vector<2x256xf32> -> vector<2x256xf32>
    %1214 = vector.extract_strided_slice %953 {offsets = [0, 0], sizes = [2, 1], strides = [1, 1]} : vector<2x3xf32> to vector<2x1xf32>
    %1215 = vector.broadcast %1214 : vector<2x1xf32> to vector<2x256xf32>
    %1216 = arith.addf %1213, %1215 : vector<2x256xf32>
    %1217 = vector.extract_strided_slice %953 {offsets = [0, 1], sizes = [2, 1], strides = [1, 1]} : vector<2x3xf32> to vector<2x1xf32>
    %1218 = vector.extract_strided_slice %953 {offsets = [0, 2], sizes = [2, 1], strides = [1, 1]} : vector<2x3xf32> to vector<2x1xf32>
    %1219 = vector.shape_cast %1216 : vector<2x256xf32> to vector<1x2x256xf32>
    %cst_283 = arith.constant dense<0.000000e+00> : vector<1xf32>
    %1220 = vector.multi_reduction <add>, %1219, %cst_283 [1, 2] : vector<1x2x256xf32> to vector<1xf32>
    %1221 = vector.shape_cast %1220 : vector<1xf32> to vector<1x1x1xf32>
    %1222 = vector.extract %1221[0, 0, 0] : f32 from vector<1x1x1xf32>
    %cst_284 = arith.constant 5.120000e+02 : f32
    %1223 = arith.divf %1222, %cst_284 : f32
    %1224 = vector.broadcast %1223 : f32 to vector<2x256xf32>
    %1225 = arith.subf %1216, %1224 : vector<2x256xf32>
    %1226 = arith.mulf %1225, %1225 : vector<2x256xf32>
    %1227 = vector.shape_cast %1226 : vector<2x256xf32> to vector<1x2x256xf32>
    %cst_285 = arith.constant dense<0.000000e+00> : vector<1xf32>
    %1228 = vector.multi_reduction <add>, %1227, %cst_285 [1, 2] : vector<1x2x256xf32> to vector<1xf32>
    %1229 = vector.shape_cast %1228 : vector<1xf32> to vector<1x1x1xf32>
    %1230 = vector.extract %1229[0, 0, 0] : f32 from vector<1x1x1xf32>
    %cst_286 = arith.constant 5.120000e+02 : f32
    %1231 = arith.divf %1230, %cst_286 : f32
    %cst_287 = arith.constant 9.99999974E-6 : f32
    %1232 = arith.addf %1231, %cst_287 : f32
    %1233 = math.rsqrt %1232 : f32
    %1234 = vector.broadcast %1233 : f32 to vector<2x256xf32>
    %1235 = arith.mulf %1225, %1234 : vector<2x256xf32>
    %1236 = vector.broadcast %1217 : vector<2x1xf32> to vector<2x256xf32>
    %1237 = arith.mulf %1235, %1236 : vector<2x256xf32>
    %1238 = vector.broadcast %1218 : vector<2x1xf32> to vector<2x256xf32>
    %1239 = arith.addf %1237, %1238 : vector<2x256xf32>
    %1240 = arith.negf %1239 : vector<2x256xf32>
    %1241 = math.exp %1240 : vector<2x256xf32>
    %cst_288 = arith.constant 1.000000e+00 : f32
    %1242 = vector.broadcast %cst_288 : f32 to vector<2x256xf32>
    %1243 = arith.addf %1242, %1241 : vector<2x256xf32>
    %1244 = arith.divf %1242, %1243 : vector<2x256xf32>
    %1245 = arith.mulf %1239, %1244 : vector<2x256xf32>
    %cst_289 = arith.constant dense<0.000000e+00> : vector<4x256xf32>
    %1246 = tpu.matmul %11, %1083, %cst_289 {dimension_numbers = #tpu.dot_dimension_numbers<[1], [0], [0], [1], [0, 0, 1, 1], [], []>} : vector<4x2xf32>, vector<2x256xf32>, vector<4x256xf32> -> vector<4x256xf32>
    %cst_290 = arith.constant dense<0.000000e+00> : vector<4x256xf32>
    %1247 = tpu.matmul %12, %1245, %cst_290 {dimension_numbers = #tpu.dot_dimension_numbers<[1], [0], [0], [1], [0, 0, 1, 1], [], []>} : vector<4x2xf32>, vector<2x256xf32>, vector<4x256xf32> -> vector<4x256xf32>
    %1248 = arith.addf %1246, %1247 : vector<4x256xf32>
    %c0_291 = arith.constant 0 : index
    %c0_292 = arith.constant 0 : index
    %c0_293 = arith.constant 0 : index
    %1249 = vector.load %arg29[%c0_291, %c0_292, %c0_293] : memref<1x4x256xf32, #tpu.memory_space<vmem>>, vector<1x4x256xf32>
    %1250 = vector.shape_cast %1249 : vector<1x4x256xf32> to vector<4x256xf32>
    %1251 = vector.shape_cast %1248 : vector<4x256xf32> to vector<1x4x256xf32>
    tpu.vector_store %arg29[%c0_291, %c0_292, %c0_293], %1251 {strides = array<i32>} : memref<1x4x256xf32, #tpu.memory_space<vmem>>, vector<1x4x256xf32>,
    return
  }
  func.func @transform_0(%arg0: i32) -> (i32, i32, i32) {
    %c0_i32 = arith.constant 0 : i32
    %c0_i32_0 = arith.constant 0 : i32
    %c0_i32_1 = arith.constant 0 : i32
    return %arg0, %c0_i32, %c0_i32_0 : i32, i32, i32
  }
  func.func @transform_1(%arg0: i32) -> (i32, i32) {
    %c0_i32 = arith.constant 0 : i32
    %c0_i32_0 = arith.constant 0 : i32
    %c0_i32_1 = arith.constant 0 : i32
    return %c0_i32, %c0_i32_0 : i32, i32
  }
  func.func @transform_2(%arg0: i32) -> (i32, i32, i32) {
    %c0_i32 = arith.constant 0 : i32
    %c0_i32_0 = arith.constant 0 : i32
    %c0_i32_1 = arith.constant 0 : i32
    return %arg0, %c0_i32, %c0_i32_0 : i32, i32, i32
  }
  func.func @transform_3(%arg0: i32) -> (i32, i32) {
    %c0_i32 = arith.constant 0 : i32
    %c0_i32_0 = arith.constant 0 : i32
    %c0_i32_1 = arith.constant 0 : i32
    return %c0_i32, %c0_i32_0 : i32, i32
  }
  func.func @transform_4(%arg0: i32) -> (i32, i32) {
    %c0_i32 = arith.constant 0 : i32
    %c0_i32_0 = arith.constant 0 : i32
    %c0_i32_1 = arith.constant 0 : i32
    return %c0_i32, %c0_i32_0 : i32, i32
  }
  func.func @transform_5(%arg0: i32) -> (i32, i32) {
    %c0_i32 = arith.constant 0 : i32
    %c0_i32_0 = arith.constant 0 : i32
    %c0_i32_1 = arith.constant 0 : i32
    return %c0_i32, %c0_i32_0 : i32, i32
  }
  func.func @transform_6(%arg0: i32) -> (i32, i32) {
    %c0_i32 = arith.constant 0 : i32
    %c0_i32_0 = arith.constant 0 : i32
    %c0_i32_1 = arith.constant 0 : i32
    return %c0_i32, %c0_i32_0 : i32, i32
  }
  func.func @transform_7(%arg0: i32) -> (i32, i32) {
    %c0_i32 = arith.constant 0 : i32
    %c0_i32_0 = arith.constant 0 : i32
    %c0_i32_1 = arith.constant 0 : i32
    return %c0_i32, %c0_i32_0 : i32, i32
  }
  func.func @transform_8(%arg0: i32) -> (i32, i32) {
    %c0_i32 = arith.constant 0 : i32
    %c0_i32_0 = arith.constant 0 : i32
    %c0_i32_1 = arith.constant 0 : i32
    return %c0_i32, %c0_i32_0 : i32, i32
  }
  func.func @transform_9(%arg0: i32) -> (i32, i32) {
    %c0_i32 = arith.constant 0 : i32
    %c0_i32_0 = arith.constant 0 : i32
    %c0_i32_1 = arith.constant 0 : i32
    return %c0_i32, %c0_i32_0 : i32, i32
  }
  func.func @transform_10(%arg0: i32) -> (i32, i32) {
    %c0_i32 = arith.constant 0 : i32
    %c0_i32_0 = arith.constant 0 : i32
    %c0_i32_1 = arith.constant 0 : i32
    return %c0_i32, %c0_i32_0 : i32, i32
  }
  func.func @transform_11(%arg0: i32) -> (i32, i32) {
    %c0_i32 = arith.constant 0 : i32
    %c0_i32_0 = arith.constant 0 : i32
    %c0_i32_1 = arith.constant 0 : i32
    return %c0_i32, %c0_i32_0 : i32, i32
  }
  func.func @transform_12(%arg0: i32) -> (i32, i32, i32) {
    %c0_i32 = arith.constant 0 : i32
    %c0_i32_0 = arith.constant 0 : i32
    %c0_i32_1 = arith.constant 0 : i32
    %c0_i32_2 = arith.constant 0 : i32
    return %c0_i32, %c0_i32_0, %c0_i32_1 : i32, i32, i32
  }
  func.func @transform_13(%arg0: i32) -> (i32, i32, i32) {
    %c0_i32 = arith.constant 0 : i32
    %c0_i32_0 = arith.constant 0 : i32
    %c0_i32_1 = arith.constant 0 : i32
    %c0_i32_2 = arith.constant 0 : i32
    return %c0_i32, %c0_i32_0, %c0_i32_1 : i32, i32, i32
  }
  func.func @transform_14(%arg0: i32) -> (i32, i32, i32) {
    %c0_i32 = arith.constant 0 : i32
    %c0_i32_0 = arith.constant 0 : i32
    %c0_i32_1 = arith.constant 0 : i32
    %c0_i32_2 = arith.constant 0 : i32
    return %c0_i32, %c0_i32_0, %c0_i32_1 : i32, i32, i32
  }
  func.func @transform_15(%arg0: i32) -> (i32, i32, i32) {
    %c0_i32 = arith.constant 0 : i32
    %c0_i32_0 = arith.constant 0 : i32
    %c0_i32_1 = arith.constant 0 : i32
    %c0_i32_2 = arith.constant 0 : i32
    return %c0_i32, %c0_i32_0, %c0_i32_1 : i32, i32, i32
  }
  func.func @transform_16(%arg0: i32) -> (i32, i32, i32) {
    %c0_i32 = arith.constant 0 : i32
    %c0_i32_0 = arith.constant 0 : i32
    %c0_i32_1 = arith.constant 0 : i32
    %c0_i32_2 = arith.constant 0 : i32
    return %c0_i32, %c0_i32_0, %c0_i32_1 : i32, i32, i32
  }
  func.func @transform_17(%arg0: i32) -> (i32, i32, i32) {
    %c0_i32 = arith.constant 0 : i32
    %c0_i32_0 = arith.constant 0 : i32
    %c0_i32_1 = arith.constant 0 : i32
    %c0_i32_2 = arith.constant 0 : i32
    return %c0_i32, %c0_i32_0, %c0_i32_1 : i32, i32, i32
  }
  func.func @transform_18(%arg0: i32) -> (i32, i32, i32) {
    %c0_i32 = arith.constant 0 : i32
    %c0_i32_0 = arith.constant 0 : i32
    %c0_i32_1 = arith.constant 0 : i32
    %c0_i32_2 = arith.constant 0 : i32
    return %c0_i32, %c0_i32_0, %c0_i32_1 : i32, i32, i32
  }
  func.func @transform_19(%arg0: i32) -> (i32, i32, i32) {
    %c0_i32 = arith.constant 0 : i32
    %c0_i32_0 = arith.constant 0 : i32
    %c0_i32_1 = arith.constant 0 : i32
    %c0_i32_2 = arith.constant 0 : i32
    return %c0_i32, %c0_i32_0, %c0_i32_1 : i32, i32, i32
  }
  func.func @transform_20(%arg0: i32) -> (i32, i32) {
    %c0_i32 = arith.constant 0 : i32
    %c0_i32_0 = arith.constant 0 : i32
    %c0_i32_1 = arith.constant 0 : i32
    return %c0_i32, %c0_i32_0 : i32, i32
  }
  func.func @transform_21(%arg0: i32) -> (i32, i32) {
    %c0_i32 = arith.constant 0 : i32
    %c0_i32_0 = arith.constant 0 : i32
    %c0_i32_1 = arith.constant 0 : i32
    return %c0_i32, %c0_i32_0 : i32, i32
  }
  func.func @transform_22(%arg0: i32) -> (i32, i32) {
    %c0_i32 = arith.constant 0 : i32
    %c0_i32_0 = arith.constant 0 : i32
    %c0_i32_1 = arith.constant 0 : i32
    return %c0_i32, %c0_i32_0 : i32, i32
  }
  func.func @transform_23(%arg0: i32) -> (i32, i32) {
    %c0_i32 = arith.constant 0 : i32
    %c0_i32_0 = arith.constant 0 : i32
    %c0_i32_1 = arith.constant 0 : i32
    return %c0_i32, %c0_i32_0 : i32, i32
  }
  func.func @transform_24(%arg0: i32) -> (i32, i32) {
    %c0_i32 = arith.constant 0 : i32
    %c0_i32_0 = arith.constant 0 : i32
    %c0_i32_1 = arith.constant 0 : i32
    return %c0_i32, %c0_i32_0 : i32, i32
  }
  func.func @transform_25(%arg0: i32) -> (i32, i32) {
    %c0_i32 = arith.constant 0 : i32
    %c0_i32_0 = arith.constant 0 : i32
    %c0_i32_1 = arith.constant 0 : i32
    return %c0_i32, %c0_i32_0 : i32, i32
  }
  func.func @transform_26(%arg0: i32) -> (i32, i32) {
    %c0_i32 = arith.constant 0 : i32
    %c0_i32_0 = arith.constant 0 : i32
    %c0_i32_1 = arith.constant 0 : i32
    return %c0_i32, %c0_i32_0 : i32, i32
  }
  func.func @transform_27(%arg0: i32) -> (i32, i32) {
    %c0_i32 = arith.constant 0 : i32
    %c0_i32_0 = arith.constant 0 : i32
    %c0_i32_1 = arith.constant 0 : i32
    return %c0_i32, %c0_i32_0 : i32, i32
  }
  func.func @transform_28(%arg0: i32) -> (i32, i32, i32) {
    %c0_i32 = arith.constant 0 : i32
    %c0_i32_0 = arith.constant 0 : i32
    %c0_i32_1 = arith.constant 0 : i32
    return %arg0, %c0_i32, %c0_i32_0 : i32, i32, i32
  }
}

module attributes {stable_mosaic.version = 11 : i64} {
  func.func @_conv1_kernel(%arg0: i32, %arg1: memref<1x4x256xf32, #tpu.memory_space<vmem>>, %arg2: memref<1x4x1xf32, #tpu.memory_space<vmem>>, %arg3: memref<9x256xf32, #tpu.memory_space<vmem>>, %arg4: memref<4x2xf32, #tpu.memory_space<vmem>>, %arg5: memref<4x2xf32, #tpu.memory_space<vmem>>, %arg6: memref<1x2xf32, #tpu.memory_space<vmem>>, %arg7: memref<2x1xf32, #tpu.memory_space<vmem>>, %arg8: memref<1x2xf32, #tpu.memory_space<vmem>>, %arg9: memref<2x1xf32, #tpu.memory_space<vmem>>, %arg10: memref<2x12xf32, #tpu.memory_space<vmem>>, %arg11: memref<2x2xbf16, #tpu.memory_space<vmem>>, %arg12: memref<2x3xf32, #tpu.memory_space<vmem>>, %arg13: memref<2x2xbf16, #tpu.memory_space<vmem>>, %arg14: memref<2x3xf32, #tpu.memory_space<vmem>>, %arg15: memref<2x12xf32, #tpu.memory_space<vmem>>, %arg16: memref<2x2xbf16, #tpu.memory_space<vmem>>, %arg17: memref<2x3xf32, #tpu.memory_space<vmem>>, %arg18: memref<1x4x256xf32, #tpu.memory_space<vmem>>) attributes {dimension_semantics = [#tpu.dimension_semantics<parallel>], iteration_bounds = array<i64: 2>, scalar_prefetch = 0 : i64, scratch_operands = 0 : i64, tpu.core_type = #tpu.core_type<tc>, window_params = [{transform_indices = @transform_0, window_bounds = array<i64: 1, 4, 256>}, {transform_indices = @transform_1, window_bounds = array<i64: 1, 4, 1>}, {pipeline_mode = #tpu.pipeline_mode<synchronous>, transform_indices = @transform_2, window_bounds = array<i64: 9, 256>}, {pipeline_mode = #tpu.pipeline_mode<synchronous>, transform_indices = @transform_3, window_bounds = array<i64: 4, 2>}, {pipeline_mode = #tpu.pipeline_mode<synchronous>, transform_indices = @transform_4, window_bounds = array<i64: 4, 2>}, {pipeline_mode = #tpu.pipeline_mode<synchronous>, transform_indices = @transform_5, window_bounds = array<i64: 1, 2>}, {pipeline_mode = #tpu.pipeline_mode<synchronous>, transform_indices = @transform_6, window_bounds = array<i64: 2, 1>}, {pipeline_mode = #tpu.pipeline_mode<synchronous>, transform_indices = @transform_7, window_bounds = array<i64: 1, 2>}, {pipeline_mode = #tpu.pipeline_mode<synchronous>, transform_indices = @transform_8, window_bounds = array<i64: 2, 1>}, {pipeline_mode = #tpu.pipeline_mode<synchronous>, transform_indices = @transform_9, window_bounds = array<i64: 2, 12>}, {pipeline_mode = #tpu.pipeline_mode<synchronous>, transform_indices = @transform_10, window_bounds = array<i64: 2, 2>}, {pipeline_mode = #tpu.pipeline_mode<synchronous>, transform_indices = @transform_11, window_bounds = array<i64: 2, 3>}, {pipeline_mode = #tpu.pipeline_mode<synchronous>, transform_indices = @transform_12, window_bounds = array<i64: 2, 2>}, {pipeline_mode = #tpu.pipeline_mode<synchronous>, transform_indices = @transform_13, window_bounds = array<i64: 2, 3>}, {pipeline_mode = #tpu.pipeline_mode<synchronous>, transform_indices = @transform_14, window_bounds = array<i64: 2, 12>}, {pipeline_mode = #tpu.pipeline_mode<synchronous>, transform_indices = @transform_15, window_bounds = array<i64: 2, 2>}, {pipeline_mode = #tpu.pipeline_mode<synchronous>, transform_indices = @transform_16, window_bounds = array<i64: 2, 3>}, {transform_indices = @transform_17, window_bounds = array<i64: 1, 4, 256>}]} {
    %c0 = arith.constant 0 : index
    %c0_0 = arith.constant 0 : index
    %c0_1 = arith.constant 0 : index
    %0 = vector.load %arg1[%c0, %c0_0, %c0_1] : memref<1x4x256xf32, #tpu.memory_space<vmem>>, vector<1x4x256xf32>
    %1 = vector.shape_cast %0 : vector<1x4x256xf32> to vector<4x256xf32>
    %c0_2 = arith.constant 0 : index
    %c0_3 = arith.constant 0 : index
    %c0_4 = arith.constant 0 : index
    %2 = vector.load %arg2[%c0_2, %c0_3, %c0_4] : memref<1x4x1xf32, #tpu.memory_space<vmem>>, vector<1x4x1xf32>
    %3 = vector.shape_cast %2 : vector<1x4x1xf32> to vector<4x1xf32>
    %4 = vector.broadcast %3 : vector<4x1xf32> to vector<4x256xf32>
    %5 = arith.mulf %1, %4 : vector<4x256xf32>
    %6 = arith.negf %5 : vector<4x256xf32>
    %7 = math.exp %6 : vector<4x256xf32>
    %cst = arith.constant 1.000000e+00 : f32
    %8 = vector.broadcast %cst : f32 to vector<4x256xf32>
    %9 = arith.addf %8, %7 : vector<4x256xf32>
    %10 = arith.divf %8, %9 : vector<4x256xf32>
    %11 = arith.mulf %5, %10 : vector<4x256xf32>
    %c0_5 = arith.constant 0 : index
    %c0_6 = arith.constant 0 : index
    %12 = vector.load %arg3[%c0_5, %c0_6] : memref<9x256xf32, #tpu.memory_space<vmem>>, vector<9x256xf32>
    %c0_7 = arith.constant 0 : index
    %c0_8 = arith.constant 0 : index
    %13 = vector.load %arg10[%c0_7, %c0_8] : memref<2x12xf32, #tpu.memory_space<vmem>>, vector<2x12xf32>
    %c0_9 = arith.constant 0 : index
    %c0_10 = arith.constant 0 : index
    %14 = vector.load %arg11[%c0_9, %c0_10] : memref<2x2xbf16, #tpu.memory_space<vmem>>, vector<2x2xbf16>
    %c0_11 = arith.constant 0 : index
    %c0_12 = arith.constant 0 : index
    %15 = vector.load %arg12[%c0_11, %c0_12] : memref<2x3xf32, #tpu.memory_space<vmem>>, vector<2x3xf32>
    %c0_13 = arith.constant 0 : index
    %c0_14 = arith.constant 0 : index
    %16 = vector.load %arg13[%c0_13, %c0_14] : memref<2x2xbf16, #tpu.memory_space<vmem>>, vector<2x2xbf16>
    %c0_15 = arith.constant 0 : index
    %c0_16 = arith.constant 0 : index
    %17 = vector.load %arg14[%c0_15, %c0_16] : memref<2x3xf32, #tpu.memory_space<vmem>>, vector<2x3xf32>
    %c0_17 = arith.constant 0 : index
    %c0_18 = arith.constant 0 : index
    %18 = vector.load %arg15[%c0_17, %c0_18] : memref<2x12xf32, #tpu.memory_space<vmem>>, vector<2x12xf32>
    %c0_19 = arith.constant 0 : index
    %c0_20 = arith.constant 0 : index
    %19 = vector.load %arg16[%c0_19, %c0_20] : memref<2x2xbf16, #tpu.memory_space<vmem>>, vector<2x2xbf16>
    %c0_21 = arith.constant 0 : index
    %c0_22 = arith.constant 0 : index
    %20 = vector.load %arg17[%c0_21, %c0_22] : memref<2x3xf32, #tpu.memory_space<vmem>>, vector<2x3xf32>
    %c0_23 = arith.constant 0 : index
    %c0_24 = arith.constant 0 : index
    %21 = vector.load %arg4[%c0_23, %c0_24] : memref<4x2xf32, #tpu.memory_space<vmem>>, vector<4x2xf32>
    %c0_25 = arith.constant 0 : index
    %c0_26 = arith.constant 0 : index
    %22 = vector.load %arg5[%c0_25, %c0_26] : memref<4x2xf32, #tpu.memory_space<vmem>>, vector<4x2xf32>
    %23 = vector.extract_strided_slice %11 {offsets = [0, 0], sizes = [2, 256], strides = [1, 1]} : vector<4x256xf32> to vector<2x256xf32>
    %24 = vector.extract_strided_slice %11 {offsets = [2, 0], sizes = [2, 256], strides = [1, 1]} : vector<4x256xf32> to vector<2x256xf32>
    %25 = vector.extract_strided_slice %13 {offsets = [0, 0], sizes = [2, 9], strides = [1, 1]} : vector<2x12xf32> to vector<2x9xf32>
    %26 = vector.extract_strided_slice %13 {offsets = [0, 9], sizes = [2, 1], strides = [1, 1]} : vector<2x12xf32> to vector<2x1xf32>
    %27 = vector.extract_strided_slice %25 {offsets = [0, 4], sizes = [2, 1], strides = [1, 1]} : vector<2x9xf32> to vector<2x1xf32>
    %28 = vector.broadcast %27 : vector<2x1xf32> to vector<2x256xf32>
    %29 = arith.mulf %23, %28 : vector<2x256xf32>
    %c17_i32 = arith.constant 17 : i32
    %30 = tpu.dynamic_rotate %23 by %c17_i32 dim 1 : vector<2x256xf32>, i32 -> vector<2x256xf32>
    %31 = vector.extract_strided_slice %12 {offsets = [0, 0], sizes = [1, 256], strides = [1, 1]} : vector<9x256xf32> to vector<1x256xf32>
    %32 = vector.broadcast %31 : vector<1x256xf32> to vector<2x256xf32>
    %33 = arith.mulf %30, %32 : vector<2x256xf32>
    %34 = vector.extract_strided_slice %25 {offsets = [0, 0], sizes = [2, 1], strides = [1, 1]} : vector<2x9xf32> to vector<2x1xf32>
    %35 = vector.broadcast %34 : vector<2x1xf32> to vector<2x256xf32>
    %36 = arith.mulf %33, %35 : vector<2x256xf32>
    %37 = arith.addf %29, %36 : vector<2x256xf32>
    %c16_i32 = arith.constant 16 : i32
    %38 = tpu.dynamic_rotate %23 by %c16_i32 dim 1 : vector<2x256xf32>, i32 -> vector<2x256xf32>
    %39 = vector.extract_strided_slice %12 {offsets = [1, 0], sizes = [1, 256], strides = [1, 1]} : vector<9x256xf32> to vector<1x256xf32>
    %40 = vector.broadcast %39 : vector<1x256xf32> to vector<2x256xf32>
    %41 = arith.mulf %38, %40 : vector<2x256xf32>
    %42 = vector.extract_strided_slice %25 {offsets = [0, 1], sizes = [2, 1], strides = [1, 1]} : vector<2x9xf32> to vector<2x1xf32>
    %43 = vector.broadcast %42 : vector<2x1xf32> to vector<2x256xf32>
    %44 = arith.mulf %41, %43 : vector<2x256xf32>
    %45 = arith.addf %37, %44 : vector<2x256xf32>
    %c15_i32 = arith.constant 15 : i32
    %46 = tpu.dynamic_rotate %23 by %c15_i32 dim 1 : vector<2x256xf32>, i32 -> vector<2x256xf32>
    %47 = vector.extract_strided_slice %12 {offsets = [2, 0], sizes = [1, 256], strides = [1, 1]} : vector<9x256xf32> to vector<1x256xf32>
    %48 = vector.broadcast %47 : vector<1x256xf32> to vector<2x256xf32>
    %49 = arith.mulf %46, %48 : vector<2x256xf32>
    %50 = vector.extract_strided_slice %25 {offsets = [0, 2], sizes = [2, 1], strides = [1, 1]} : vector<2x9xf32> to vector<2x1xf32>
    %51 = vector.broadcast %50 : vector<2x1xf32> to vector<2x256xf32>
    %52 = arith.mulf %49, %51 : vector<2x256xf32>
    %53 = arith.addf %45, %52 : vector<2x256xf32>
    %c1_i32 = arith.constant 1 : i32
    %54 = tpu.dynamic_rotate %23 by %c1_i32 dim 1 : vector<2x256xf32>, i32 -> vector<2x256xf32>
    %55 = vector.extract_strided_slice %12 {offsets = [3, 0], sizes = [1, 256], strides = [1, 1]} : vector<9x256xf32> to vector<1x256xf32>
    %56 = vector.broadcast %55 : vector<1x256xf32> to vector<2x256xf32>
    %57 = arith.mulf %54, %56 : vector<2x256xf32>
    %58 = vector.extract_strided_slice %25 {offsets = [0, 3], sizes = [2, 1], strides = [1, 1]} : vector<2x9xf32> to vector<2x1xf32>
    %59 = vector.broadcast %58 : vector<2x1xf32> to vector<2x256xf32>
    %60 = arith.mulf %57, %59 : vector<2x256xf32>
    %61 = arith.addf %53, %60 : vector<2x256xf32>
    %c255_i32 = arith.constant 255 : i32
    %62 = tpu.dynamic_rotate %23 by %c255_i32 dim 1 : vector<2x256xf32>, i32 -> vector<2x256xf32>
    %63 = vector.extract_strided_slice %12 {offsets = [5, 0], sizes = [1, 256], strides = [1, 1]} : vector<9x256xf32> to vector<1x256xf32>
    %64 = vector.broadcast %63 : vector<1x256xf32> to vector<2x256xf32>
    %65 = arith.mulf %62, %64 : vector<2x256xf32>
    %66 = vector.extract_strided_slice %25 {offsets = [0, 5], sizes = [2, 1], strides = [1, 1]} : vector<2x9xf32> to vector<2x1xf32>
    %67 = vector.broadcast %66 : vector<2x1xf32> to vector<2x256xf32>
    %68 = arith.mulf %65, %67 : vector<2x256xf32>
    %69 = arith.addf %61, %68 : vector<2x256xf32>
    %c241_i32 = arith.constant 241 : i32
    %70 = tpu.dynamic_rotate %23 by %c241_i32 dim 1 : vector<2x256xf32>, i32 -> vector<2x256xf32>
    %71 = vector.extract_strided_slice %12 {offsets = [6, 0], sizes = [1, 256], strides = [1, 1]} : vector<9x256xf32> to vector<1x256xf32>
    %72 = vector.broadcast %71 : vector<1x256xf32> to vector<2x256xf32>
    %73 = arith.mulf %70, %72 : vector<2x256xf32>
    %74 = vector.extract_strided_slice %25 {offsets = [0, 6], sizes = [2, 1], strides = [1, 1]} : vector<2x9xf32> to vector<2x1xf32>
    %75 = vector.broadcast %74 : vector<2x1xf32> to vector<2x256xf32>
    %76 = arith.mulf %73, %75 : vector<2x256xf32>
    %77 = arith.addf %69, %76 : vector<2x256xf32>
    %c240_i32 = arith.constant 240 : i32
    %78 = tpu.dynamic_rotate %23 by %c240_i32 dim 1 : vector<2x256xf32>, i32 -> vector<2x256xf32>
    %79 = vector.extract_strided_slice %12 {offsets = [7, 0], sizes = [1, 256], strides = [1, 1]} : vector<9x256xf32> to vector<1x256xf32>
    %80 = vector.broadcast %79 : vector<1x256xf32> to vector<2x256xf32>
    %81 = arith.mulf %78, %80 : vector<2x256xf32>
    %82 = vector.extract_strided_slice %25 {offsets = [0, 7], sizes = [2, 1], strides = [1, 1]} : vector<2x9xf32> to vector<2x1xf32>
    %83 = vector.broadcast %82 : vector<2x1xf32> to vector<2x256xf32>
    %84 = arith.mulf %81, %83 : vector<2x256xf32>
    %85 = arith.addf %77, %84 : vector<2x256xf32>
    %c239_i32 = arith.constant 239 : i32
    %86 = tpu.dynamic_rotate %23 by %c239_i32 dim 1 : vector<2x256xf32>, i32 -> vector<2x256xf32>
    %87 = vector.extract_strided_slice %12 {offsets = [8, 0], sizes = [1, 256], strides = [1, 1]} : vector<9x256xf32> to vector<1x256xf32>
    %88 = vector.broadcast %87 : vector<1x256xf32> to vector<2x256xf32>
    %89 = arith.mulf %86, %88 : vector<2x256xf32>
    %90 = vector.extract_strided_slice %25 {offsets = [0, 8], sizes = [2, 1], strides = [1, 1]} : vector<2x9xf32> to vector<2x1xf32>
    %91 = vector.broadcast %90 : vector<2x1xf32> to vector<2x256xf32>
    %92 = arith.mulf %89, %91 : vector<2x256xf32>
    %93 = arith.addf %85, %92 : vector<2x256xf32>
    %94 = vector.broadcast %26 : vector<2x1xf32> to vector<2x256xf32>
    %95 = arith.addf %93, %94 : vector<2x256xf32>
    %96 = vector.extract_strided_slice %13 {offsets = [0, 10], sizes = [2, 1], strides = [1, 1]} : vector<2x12xf32> to vector<2x1xf32>
    %97 = vector.extract_strided_slice %13 {offsets = [0, 11], sizes = [2, 1], strides = [1, 1]} : vector<2x12xf32> to vector<2x1xf32>
    %98 = vector.shape_cast %95 : vector<2x256xf32> to vector<1x2x256xf32>
    %cst_27 = arith.constant dense<0.000000e+00> : vector<1xf32>
    %99 = vector.multi_reduction <add>, %98, %cst_27 [1, 2] : vector<1x2x256xf32> to vector<1xf32>
    %100 = vector.shape_cast %99 : vector<1xf32> to vector<1x1x1xf32>
    %101 = vector.extract %100[0, 0, 0] : f32 from vector<1x1x1xf32>
    %cst_28 = arith.constant 5.120000e+02 : f32
    %102 = arith.divf %101, %cst_28 : f32
    %103 = vector.broadcast %102 : f32 to vector<2x256xf32>
    %104 = arith.subf %95, %103 : vector<2x256xf32>
    %105 = arith.mulf %104, %104 : vector<2x256xf32>
    %106 = vector.shape_cast %105 : vector<2x256xf32> to vector<1x2x256xf32>
    %cst_29 = arith.constant dense<0.000000e+00> : vector<1xf32>
    %107 = vector.multi_reduction <add>, %106, %cst_29 [1, 2] : vector<1x2x256xf32> to vector<1xf32>
    %108 = vector.shape_cast %107 : vector<1xf32> to vector<1x1x1xf32>
    %109 = vector.extract %108[0, 0, 0] : f32 from vector<1x1x1xf32>
    %cst_30 = arith.constant 5.120000e+02 : f32
    %110 = arith.divf %109, %cst_30 : f32
    %cst_31 = arith.constant 9.99999974E-6 : f32
    %111 = arith.addf %110, %cst_31 : f32
    %112 = math.rsqrt %111 : f32
    %113 = vector.broadcast %112 : f32 to vector<2x256xf32>
    %114 = arith.mulf %104, %113 : vector<2x256xf32>
    %115 = vector.broadcast %96 : vector<2x1xf32> to vector<2x256xf32>
    %116 = arith.mulf %114, %115 : vector<2x256xf32>
    %117 = vector.broadcast %97 : vector<2x1xf32> to vector<2x256xf32>
    %118 = arith.addf %116, %117 : vector<2x256xf32>
    %119 = arith.truncf %118 : vector<2x256xf32> to vector<2x256xbf16>
    %cst_32 = arith.constant dense<0.000000e+00> : vector<2x256xf32>
    %120 = tpu.matmul %14, %119, %cst_32 {dimension_numbers = #tpu.dot_dimension_numbers<[1], [0], [0], [1], [0, 0, 1, 1], [], []>} : vector<2x2xbf16>, vector<2x256xbf16>, vector<2x256xf32> -> vector<2x256xf32>
    %121 = vector.extract_strided_slice %15 {offsets = [0, 0], sizes = [2, 1], strides = [1, 1]} : vector<2x3xf32> to vector<2x1xf32>
    %122 = vector.broadcast %121 : vector<2x1xf32> to vector<2x256xf32>
    %123 = arith.addf %120, %122 : vector<2x256xf32>
    %124 = vector.extract_strided_slice %15 {offsets = [0, 1], sizes = [2, 1], strides = [1, 1]} : vector<2x3xf32> to vector<2x1xf32>
    %125 = vector.extract_strided_slice %15 {offsets = [0, 2], sizes = [2, 1], strides = [1, 1]} : vector<2x3xf32> to vector<2x1xf32>
    %126 = vector.shape_cast %123 : vector<2x256xf32> to vector<1x2x256xf32>
    %cst_33 = arith.constant dense<0.000000e+00> : vector<1xf32>
    %127 = vector.multi_reduction <add>, %126, %cst_33 [1, 2] : vector<1x2x256xf32> to vector<1xf32>
    %128 = vector.shape_cast %127 : vector<1xf32> to vector<1x1x1xf32>
    %129 = vector.extract %128[0, 0, 0] : f32 from vector<1x1x1xf32>
    %cst_34 = arith.constant 5.120000e+02 : f32
    %130 = arith.divf %129, %cst_34 : f32
    %131 = vector.broadcast %130 : f32 to vector<2x256xf32>
    %132 = arith.subf %123, %131 : vector<2x256xf32>
    %133 = arith.mulf %132, %132 : vector<2x256xf32>
    %134 = vector.shape_cast %133 : vector<2x256xf32> to vector<1x2x256xf32>
    %cst_35 = arith.constant dense<0.000000e+00> : vector<1xf32>
    %135 = vector.multi_reduction <add>, %134, %cst_35 [1, 2] : vector<1x2x256xf32> to vector<1xf32>
    %136 = vector.shape_cast %135 : vector<1xf32> to vector<1x1x1xf32>
    %137 = vector.extract %136[0, 0, 0] : f32 from vector<1x1x1xf32>
    %cst_36 = arith.constant 5.120000e+02 : f32
    %138 = arith.divf %137, %cst_36 : f32
    %cst_37 = arith.constant 9.99999974E-6 : f32
    %139 = arith.addf %138, %cst_37 : f32
    %140 = math.rsqrt %139 : f32
    %141 = vector.broadcast %140 : f32 to vector<2x256xf32>
    %142 = arith.mulf %132, %141 : vector<2x256xf32>
    %143 = vector.broadcast %124 : vector<2x1xf32> to vector<2x256xf32>
    %144 = arith.mulf %142, %143 : vector<2x256xf32>
    %145 = vector.broadcast %125 : vector<2x1xf32> to vector<2x256xf32>
    %146 = arith.addf %144, %145 : vector<2x256xf32>
    %147 = arith.negf %146 : vector<2x256xf32>
    %148 = math.exp %147 : vector<2x256xf32>
    %cst_38 = arith.constant 1.000000e+00 : f32
    %149 = vector.broadcast %cst_38 : f32 to vector<2x256xf32>
    %150 = arith.addf %149, %148 : vector<2x256xf32>
    %151 = arith.divf %149, %150 : vector<2x256xf32>
    %152 = arith.mulf %146, %151 : vector<2x256xf32>
    %153 = arith.truncf %24 : vector<2x256xf32> to vector<2x256xbf16>
    %cst_39 = arith.constant dense<0.000000e+00> : vector<2x256xf32>
    %154 = tpu.matmul %16, %153, %cst_39 {dimension_numbers = #tpu.dot_dimension_numbers<[1], [0], [0], [1], [0, 0, 1, 1], [], []>} : vector<2x2xbf16>, vector<2x256xbf16>, vector<2x256xf32> -> vector<2x256xf32>
    %155 = vector.extract_strided_slice %17 {offsets = [0, 0], sizes = [2, 1], strides = [1, 1]} : vector<2x3xf32> to vector<2x1xf32>
    %156 = vector.broadcast %155 : vector<2x1xf32> to vector<2x256xf32>
    %157 = arith.addf %154, %156 : vector<2x256xf32>
    %158 = vector.extract_strided_slice %17 {offsets = [0, 1], sizes = [2, 1], strides = [1, 1]} : vector<2x3xf32> to vector<2x1xf32>
    %159 = vector.extract_strided_slice %17 {offsets = [0, 2], sizes = [2, 1], strides = [1, 1]} : vector<2x3xf32> to vector<2x1xf32>
    %160 = vector.shape_cast %157 : vector<2x256xf32> to vector<1x2x256xf32>
    %cst_40 = arith.constant dense<0.000000e+00> : vector<1xf32>
    %161 = vector.multi_reduction <add>, %160, %cst_40 [1, 2] : vector<1x2x256xf32> to vector<1xf32>
    %162 = vector.shape_cast %161 : vector<1xf32> to vector<1x1x1xf32>
    %163 = vector.extract %162[0, 0, 0] : f32 from vector<1x1x1xf32>
    %cst_41 = arith.constant 5.120000e+02 : f32
    %164 = arith.divf %163, %cst_41 : f32
    %165 = vector.broadcast %164 : f32 to vector<2x256xf32>
    %166 = arith.subf %157, %165 : vector<2x256xf32>
    %167 = arith.mulf %166, %166 : vector<2x256xf32>
    %168 = vector.shape_cast %167 : vector<2x256xf32> to vector<1x2x256xf32>
    %cst_42 = arith.constant dense<0.000000e+00> : vector<1xf32>
    %169 = vector.multi_reduction <add>, %168, %cst_42 [1, 2] : vector<1x2x256xf32> to vector<1xf32>
    %170 = vector.shape_cast %169 : vector<1xf32> to vector<1x1x1xf32>
    %171 = vector.extract %170[0, 0, 0] : f32 from vector<1x1x1xf32>
    %cst_43 = arith.constant 5.120000e+02 : f32
    %172 = arith.divf %171, %cst_43 : f32
    %cst_44 = arith.constant 9.99999974E-6 : f32
    %173 = arith.addf %172, %cst_44 : f32
    %174 = math.rsqrt %173 : f32
    %175 = vector.broadcast %174 : f32 to vector<2x256xf32>
    %176 = arith.mulf %166, %175 : vector<2x256xf32>
    %177 = vector.broadcast %158 : vector<2x1xf32> to vector<2x256xf32>
    %178 = arith.mulf %176, %177 : vector<2x256xf32>
    %179 = vector.broadcast %159 : vector<2x1xf32> to vector<2x256xf32>
    %180 = arith.addf %178, %179 : vector<2x256xf32>
    %181 = arith.negf %180 : vector<2x256xf32>
    %182 = math.exp %181 : vector<2x256xf32>
    %cst_45 = arith.constant 1.000000e+00 : f32
    %183 = vector.broadcast %cst_45 : f32 to vector<2x256xf32>
    %184 = arith.addf %183, %182 : vector<2x256xf32>
    %185 = arith.divf %183, %184 : vector<2x256xf32>
    %186 = arith.mulf %180, %185 : vector<2x256xf32>
    %187 = vector.extract_strided_slice %18 {offsets = [0, 0], sizes = [2, 9], strides = [1, 1]} : vector<2x12xf32> to vector<2x9xf32>
    %188 = vector.extract_strided_slice %18 {offsets = [0, 9], sizes = [2, 1], strides = [1, 1]} : vector<2x12xf32> to vector<2x1xf32>
    %189 = vector.extract_strided_slice %187 {offsets = [0, 4], sizes = [2, 1], strides = [1, 1]} : vector<2x9xf32> to vector<2x1xf32>
    %190 = vector.broadcast %189 : vector<2x1xf32> to vector<2x256xf32>
    %191 = arith.mulf %186, %190 : vector<2x256xf32>
    %c17_i32_46 = arith.constant 17 : i32
    %192 = tpu.dynamic_rotate %186 by %c17_i32_46 dim 1 : vector<2x256xf32>, i32 -> vector<2x256xf32>
    %193 = vector.extract_strided_slice %12 {offsets = [0, 0], sizes = [1, 256], strides = [1, 1]} : vector<9x256xf32> to vector<1x256xf32>
    %194 = vector.broadcast %193 : vector<1x256xf32> to vector<2x256xf32>
    %195 = arith.mulf %192, %194 : vector<2x256xf32>
    %196 = vector.extract_strided_slice %187 {offsets = [0, 0], sizes = [2, 1], strides = [1, 1]} : vector<2x9xf32> to vector<2x1xf32>
    %197 = vector.broadcast %196 : vector<2x1xf32> to vector<2x256xf32>
    %198 = arith.mulf %195, %197 : vector<2x256xf32>
    %199 = arith.addf %191, %198 : vector<2x256xf32>
    %c16_i32_47 = arith.constant 16 : i32
    %200 = tpu.dynamic_rotate %186 by %c16_i32_47 dim 1 : vector<2x256xf32>, i32 -> vector<2x256xf32>
    %201 = vector.extract_strided_slice %12 {offsets = [1, 0], sizes = [1, 256], strides = [1, 1]} : vector<9x256xf32> to vector<1x256xf32>
    %202 = vector.broadcast %201 : vector<1x256xf32> to vector<2x256xf32>
    %203 = arith.mulf %200, %202 : vector<2x256xf32>
    %204 = vector.extract_strided_slice %187 {offsets = [0, 1], sizes = [2, 1], strides = [1, 1]} : vector<2x9xf32> to vector<2x1xf32>
    %205 = vector.broadcast %204 : vector<2x1xf32> to vector<2x256xf32>
    %206 = arith.mulf %203, %205 : vector<2x256xf32>
    %207 = arith.addf %199, %206 : vector<2x256xf32>
    %c15_i32_48 = arith.constant 15 : i32
    %208 = tpu.dynamic_rotate %186 by %c15_i32_48 dim 1 : vector<2x256xf32>, i32 -> vector<2x256xf32>
    %209 = vector.extract_strided_slice %12 {offsets = [2, 0], sizes = [1, 256], strides = [1, 1]} : vector<9x256xf32> to vector<1x256xf32>
    %210 = vector.broadcast %209 : vector<1x256xf32> to vector<2x256xf32>
    %211 = arith.mulf %208, %210 : vector<2x256xf32>
    %212 = vector.extract_strided_slice %187 {offsets = [0, 2], sizes = [2, 1], strides = [1, 1]} : vector<2x9xf32> to vector<2x1xf32>
    %213 = vector.broadcast %212 : vector<2x1xf32> to vector<2x256xf32>
    %214 = arith.mulf %211, %213 : vector<2x256xf32>
    %215 = arith.addf %207, %214 : vector<2x256xf32>
    %c1_i32_49 = arith.constant 1 : i32
    %216 = tpu.dynamic_rotate %186 by %c1_i32_49 dim 1 : vector<2x256xf32>, i32 -> vector<2x256xf32>
    %217 = vector.extract_strided_slice %12 {offsets = [3, 0], sizes = [1, 256], strides = [1, 1]} : vector<9x256xf32> to vector<1x256xf32>
    %218 = vector.broadcast %217 : vector<1x256xf32> to vector<2x256xf32>
    %219 = arith.mulf %216, %218 : vector<2x256xf32>
    %220 = vector.extract_strided_slice %187 {offsets = [0, 3], sizes = [2, 1], strides = [1, 1]} : vector<2x9xf32> to vector<2x1xf32>
    %221 = vector.broadcast %220 : vector<2x1xf32> to vector<2x256xf32>
    %222 = arith.mulf %219, %221 : vector<2x256xf32>
    %223 = arith.addf %215, %222 : vector<2x256xf32>
    %c255_i32_50 = arith.constant 255 : i32
    %224 = tpu.dynamic_rotate %186 by %c255_i32_50 dim 1 : vector<2x256xf32>, i32 -> vector<2x256xf32>
    %225 = vector.extract_strided_slice %12 {offsets = [5, 0], sizes = [1, 256], strides = [1, 1]} : vector<9x256xf32> to vector<1x256xf32>
    %226 = vector.broadcast %225 : vector<1x256xf32> to vector<2x256xf32>
    %227 = arith.mulf %224, %226 : vector<2x256xf32>
    %228 = vector.extract_strided_slice %187 {offsets = [0, 5], sizes = [2, 1], strides = [1, 1]} : vector<2x9xf32> to vector<2x1xf32>
    %229 = vector.broadcast %228 : vector<2x1xf32> to vector<2x256xf32>
    %230 = arith.mulf %227, %229 : vector<2x256xf32>
    %231 = arith.addf %223, %230 : vector<2x256xf32>
    %c241_i32_51 = arith.constant 241 : i32
    %232 = tpu.dynamic_rotate %186 by %c241_i32_51 dim 1 : vector<2x256xf32>, i32 -> vector<2x256xf32>
    %233 = vector.extract_strided_slice %12 {offsets = [6, 0], sizes = [1, 256], strides = [1, 1]} : vector<9x256xf32> to vector<1x256xf32>
    %234 = vector.broadcast %233 : vector<1x256xf32> to vector<2x256xf32>
    %235 = arith.mulf %232, %234 : vector<2x256xf32>
    %236 = vector.extract_strided_slice %187 {offsets = [0, 6], sizes = [2, 1], strides = [1, 1]} : vector<2x9xf32> to vector<2x1xf32>
    %237 = vector.broadcast %236 : vector<2x1xf32> to vector<2x256xf32>
    %238 = arith.mulf %235, %237 : vector<2x256xf32>
    %239 = arith.addf %231, %238 : vector<2x256xf32>
    %c240_i32_52 = arith.constant 240 : i32
    %240 = tpu.dynamic_rotate %186 by %c240_i32_52 dim 1 : vector<2x256xf32>, i32 -> vector<2x256xf32>
    %241 = vector.extract_strided_slice %12 {offsets = [7, 0], sizes = [1, 256], strides = [1, 1]} : vector<9x256xf32> to vector<1x256xf32>
    %242 = vector.broadcast %241 : vector<1x256xf32> to vector<2x256xf32>
    %243 = arith.mulf %240, %242 : vector<2x256xf32>
    %244 = vector.extract_strided_slice %187 {offsets = [0, 7], sizes = [2, 1], strides = [1, 1]} : vector<2x9xf32> to vector<2x1xf32>
    %245 = vector.broadcast %244 : vector<2x1xf32> to vector<2x256xf32>
    %246 = arith.mulf %243, %245 : vector<2x256xf32>
    %247 = arith.addf %239, %246 : vector<2x256xf32>
    %c239_i32_53 = arith.constant 239 : i32
    %248 = tpu.dynamic_rotate %186 by %c239_i32_53 dim 1 : vector<2x256xf32>, i32 -> vector<2x256xf32>
    %249 = vector.extract_strided_slice %12 {offsets = [8, 0], sizes = [1, 256], strides = [1, 1]} : vector<9x256xf32> to vector<1x256xf32>
    %250 = vector.broadcast %249 : vector<1x256xf32> to vector<2x256xf32>
    %251 = arith.mulf %248, %250 : vector<2x256xf32>
    %252 = vector.extract_strided_slice %187 {offsets = [0, 8], sizes = [2, 1], strides = [1, 1]} : vector<2x9xf32> to vector<2x1xf32>
    %253 = vector.broadcast %252 : vector<2x1xf32> to vector<2x256xf32>
    %254 = arith.mulf %251, %253 : vector<2x256xf32>
    %255 = arith.addf %247, %254 : vector<2x256xf32>
    %256 = vector.broadcast %188 : vector<2x1xf32> to vector<2x256xf32>
    %257 = arith.addf %255, %256 : vector<2x256xf32>
    %258 = vector.extract_strided_slice %18 {offsets = [0, 10], sizes = [2, 1], strides = [1, 1]} : vector<2x12xf32> to vector<2x1xf32>
    %259 = vector.extract_strided_slice %18 {offsets = [0, 11], sizes = [2, 1], strides = [1, 1]} : vector<2x12xf32> to vector<2x1xf32>
    %260 = vector.shape_cast %257 : vector<2x256xf32> to vector<1x2x256xf32>
    %cst_54 = arith.constant dense<0.000000e+00> : vector<1xf32>
    %261 = vector.multi_reduction <add>, %260, %cst_54 [1, 2] : vector<1x2x256xf32> to vector<1xf32>
    %262 = vector.shape_cast %261 : vector<1xf32> to vector<1x1x1xf32>
    %263 = vector.extract %262[0, 0, 0] : f32 from vector<1x1x1xf32>
    %cst_55 = arith.constant 5.120000e+02 : f32
    %264 = arith.divf %263, %cst_55 : f32
    %265 = vector.broadcast %264 : f32 to vector<2x256xf32>
    %266 = arith.subf %257, %265 : vector<2x256xf32>
    %267 = arith.mulf %266, %266 : vector<2x256xf32>
    %268 = vector.shape_cast %267 : vector<2x256xf32> to vector<1x2x256xf32>
    %cst_56 = arith.constant dense<0.000000e+00> : vector<1xf32>
    %269 = vector.multi_reduction <add>, %268, %cst_56 [1, 2] : vector<1x2x256xf32> to vector<1xf32>
    %270 = vector.shape_cast %269 : vector<1xf32> to vector<1x1x1xf32>
    %271 = vector.extract %270[0, 0, 0] : f32 from vector<1x1x1xf32>
    %cst_57 = arith.constant 5.120000e+02 : f32
    %272 = arith.divf %271, %cst_57 : f32
    %cst_58 = arith.constant 9.99999974E-6 : f32
    %273 = arith.addf %272, %cst_58 : f32
    %274 = math.rsqrt %273 : f32
    %275 = vector.broadcast %274 : f32 to vector<2x256xf32>
    %276 = arith.mulf %266, %275 : vector<2x256xf32>
    %277 = vector.broadcast %258 : vector<2x1xf32> to vector<2x256xf32>
    %278 = arith.mulf %276, %277 : vector<2x256xf32>
    %279 = vector.broadcast %259 : vector<2x1xf32> to vector<2x256xf32>
    %280 = arith.addf %278, %279 : vector<2x256xf32>
    %281 = arith.truncf %280 : vector<2x256xf32> to vector<2x256xbf16>
    %cst_59 = arith.constant dense<0.000000e+00> : vector<2x256xf32>
    %282 = tpu.matmul %19, %281, %cst_59 {dimension_numbers = #tpu.dot_dimension_numbers<[1], [0], [0], [1], [0, 0, 1, 1], [], []>} : vector<2x2xbf16>, vector<2x256xbf16>, vector<2x256xf32> -> vector<2x256xf32>
    %283 = vector.extract_strided_slice %20 {offsets = [0, 0], sizes = [2, 1], strides = [1, 1]} : vector<2x3xf32> to vector<2x1xf32>
    %284 = vector.broadcast %283 : vector<2x1xf32> to vector<2x256xf32>
    %285 = arith.addf %282, %284 : vector<2x256xf32>
    %286 = vector.extract_strided_slice %20 {offsets = [0, 1], sizes = [2, 1], strides = [1, 1]} : vector<2x3xf32> to vector<2x1xf32>
    %287 = vector.extract_strided_slice %20 {offsets = [0, 2], sizes = [2, 1], strides = [1, 1]} : vector<2x3xf32> to vector<2x1xf32>
    %288 = vector.shape_cast %285 : vector<2x256xf32> to vector<1x2x256xf32>
    %cst_60 = arith.constant dense<0.000000e+00> : vector<1xf32>
    %289 = vector.multi_reduction <add>, %288, %cst_60 [1, 2] : vector<1x2x256xf32> to vector<1xf32>
    %290 = vector.shape_cast %289 : vector<1xf32> to vector<1x1x1xf32>
    %291 = vector.extract %290[0, 0, 0] : f32 from vector<1x1x1xf32>
    %cst_61 = arith.constant 5.120000e+02 : f32
    %292 = arith.divf %291, %cst_61 : f32
    %293 = vector.broadcast %292 : f32 to vector<2x256xf32>
    %294 = arith.subf %285, %293 : vector<2x256xf32>
    %295 = arith.mulf %294, %294 : vector<2x256xf32>
    %296 = vector.shape_cast %295 : vector<2x256xf32> to vector<1x2x256xf32>
    %cst_62 = arith.constant dense<0.000000e+00> : vector<1xf32>
    %297 = vector.multi_reduction <add>, %296, %cst_62 [1, 2] : vector<1x2x256xf32> to vector<1xf32>
    %298 = vector.shape_cast %297 : vector<1xf32> to vector<1x1x1xf32>
    %299 = vector.extract %298[0, 0, 0] : f32 from vector<1x1x1xf32>
    %cst_63 = arith.constant 5.120000e+02 : f32
    %300 = arith.divf %299, %cst_63 : f32
    %cst_64 = arith.constant 9.99999974E-6 : f32
    %301 = arith.addf %300, %cst_64 : f32
    %302 = math.rsqrt %301 : f32
    %303 = vector.broadcast %302 : f32 to vector<2x256xf32>
    %304 = arith.mulf %294, %303 : vector<2x256xf32>
    %305 = vector.broadcast %286 : vector<2x1xf32> to vector<2x256xf32>
    %306 = arith.mulf %304, %305 : vector<2x256xf32>
    %307 = vector.broadcast %287 : vector<2x1xf32> to vector<2x256xf32>
    %308 = arith.addf %306, %307 : vector<2x256xf32>
    %309 = arith.negf %308 : vector<2x256xf32>
    %310 = math.exp %309 : vector<2x256xf32>
    %cst_65 = arith.constant 1.000000e+00 : f32
    %311 = vector.broadcast %cst_65 : f32 to vector<2x256xf32>
    %312 = arith.addf %311, %310 : vector<2x256xf32>
    %313 = arith.divf %311, %312 : vector<2x256xf32>
    %314 = arith.mulf %308, %313 : vector<2x256xf32>
    %cst_66 = arith.constant dense<0.000000e+00> : vector<4x256xf32>
    %315 = tpu.matmul %21, %152, %cst_66 {dimension_numbers = #tpu.dot_dimension_numbers<[1], [0], [0], [1], [0, 0, 1, 1], [], []>} : vector<4x2xf32>, vector<2x256xf32>, vector<4x256xf32> -> vector<4x256xf32>
    %cst_67 = arith.constant dense<0.000000e+00> : vector<4x256xf32>
    %316 = tpu.matmul %22, %314, %cst_67 {dimension_numbers = #tpu.dot_dimension_numbers<[1], [0], [0], [1], [0, 0, 1, 1], [], []>} : vector<4x2xf32>, vector<2x256xf32>, vector<4x256xf32> -> vector<4x256xf32>
    %317 = arith.addf %315, %316 : vector<4x256xf32>
    %c0_68 = arith.constant 0 : index
    %c0_69 = arith.constant 0 : index
    %c0_70 = arith.constant 0 : index
    %318 = vector.load %arg18[%c0_68, %c0_69, %c0_70] : memref<1x4x256xf32, #tpu.memory_space<vmem>>, vector<1x4x256xf32>
    %319 = vector.shape_cast %318 : vector<1x4x256xf32> to vector<4x256xf32>
    %320 = vector.shape_cast %317 : vector<4x256xf32> to vector<1x4x256xf32>
    tpu.vector_store %arg18[%c0_68, %c0_69, %c0_70], %320 {strides = array<i32>} : memref<1x4x256xf32, #tpu.memory_space<vmem>>, vector<1x4x256xf32>,
    return
  }
  func.func @transform_0(%arg0: i32) -> (i32, i32, i32) {
    %c0_i32 = arith.constant 0 : i32
    %c0_i32_0 = arith.constant 0 : i32
    %c0_i32_1 = arith.constant 0 : i32
    return %arg0, %c0_i32, %c0_i32_0 : i32, i32, i32
  }
  func.func @transform_1(%arg0: i32) -> (i32, i32, i32) {
    %c0_i32 = arith.constant 0 : i32
    %c0_i32_0 = arith.constant 0 : i32
    %c0_i32_1 = arith.constant 0 : i32
    return %arg0, %c0_i32, %c0_i32_0 : i32, i32, i32
  }
  func.func @transform_2(%arg0: i32) -> (i32, i32) {
    %c0_i32 = arith.constant 0 : i32
    %c0_i32_0 = arith.constant 0 : i32
    %c0_i32_1 = arith.constant 0 : i32
    return %c0_i32, %c0_i32_0 : i32, i32
  }
  func.func @transform_3(%arg0: i32) -> (i32, i32) {
    %c0_i32 = arith.constant 0 : i32
    %c0_i32_0 = arith.constant 0 : i32
    %c0_i32_1 = arith.constant 0 : i32
    return %c0_i32, %c0_i32_0 : i32, i32
  }
  func.func @transform_4(%arg0: i32) -> (i32, i32) {
    %c0_i32 = arith.constant 0 : i32
    %c0_i32_0 = arith.constant 0 : i32
    %c0_i32_1 = arith.constant 0 : i32
    return %c0_i32, %c0_i32_0 : i32, i32
  }
  func.func @transform_5(%arg0: i32) -> (i32, i32) {
    %c0_i32 = arith.constant 0 : i32
    %c0_i32_0 = arith.constant 0 : i32
    %c0_i32_1 = arith.constant 0 : i32
    return %c0_i32, %c0_i32_0 : i32, i32
  }
  func.func @transform_6(%arg0: i32) -> (i32, i32) {
    %c0_i32 = arith.constant 0 : i32
    %c0_i32_0 = arith.constant 0 : i32
    %c0_i32_1 = arith.constant 0 : i32
    return %c0_i32, %c0_i32_0 : i32, i32
  }
  func.func @transform_7(%arg0: i32) -> (i32, i32) {
    %c0_i32 = arith.constant 0 : i32
    %c0_i32_0 = arith.constant 0 : i32
    %c0_i32_1 = arith.constant 0 : i32
    return %c0_i32, %c0_i32_0 : i32, i32
  }
  func.func @transform_8(%arg0: i32) -> (i32, i32) {
    %c0_i32 = arith.constant 0 : i32
    %c0_i32_0 = arith.constant 0 : i32
    %c0_i32_1 = arith.constant 0 : i32
    return %c0_i32, %c0_i32_0 : i32, i32
  }
  func.func @transform_9(%arg0: i32) -> (i32, i32) {
    %c0_i32 = arith.constant 0 : i32
    %c0_i32_0 = arith.constant 0 : i32
    %c0_i32_1 = arith.constant 0 : i32
    return %c0_i32, %c0_i32_0 : i32, i32
  }
  func.func @transform_10(%arg0: i32) -> (i32, i32) {
    %c0_i32 = arith.constant 0 : i32
    %c0_i32_0 = arith.constant 0 : i32
    %c0_i32_1 = arith.constant 0 : i32
    return %c0_i32, %c0_i32_0 : i32, i32
  }
  func.func @transform_11(%arg0: i32) -> (i32, i32) {
    %c0_i32 = arith.constant 0 : i32
    %c0_i32_0 = arith.constant 0 : i32
    %c0_i32_1 = arith.constant 0 : i32
    return %c0_i32, %c0_i32_0 : i32, i32
  }
  func.func @transform_12(%arg0: i32) -> (i32, i32) {
    %c0_i32 = arith.constant 0 : i32
    %c0_i32_0 = arith.constant 0 : i32
    %c0_i32_1 = arith.constant 0 : i32
    return %c0_i32, %c0_i32_0 : i32, i32
  }
  func.func @transform_13(%arg0: i32) -> (i32, i32) {
    %c0_i32 = arith.constant 0 : i32
    %c0_i32_0 = arith.constant 0 : i32
    %c0_i32_1 = arith.constant 0 : i32
    return %c0_i32, %c0_i32_0 : i32, i32
  }
  func.func @transform_14(%arg0: i32) -> (i32, i32) {
    %c0_i32 = arith.constant 0 : i32
    %c0_i32_0 = arith.constant 0 : i32
    %c0_i32_1 = arith.constant 0 : i32
    return %c0_i32, %c0_i32_0 : i32, i32
  }
  func.func @transform_15(%arg0: i32) -> (i32, i32) {
    %c0_i32 = arith.constant 0 : i32
    %c0_i32_0 = arith.constant 0 : i32
    %c0_i32_1 = arith.constant 0 : i32
    return %c0_i32, %c0_i32_0 : i32, i32
  }
  func.func @transform_16(%arg0: i32) -> (i32, i32) {
    %c0_i32 = arith.constant 0 : i32
    %c0_i32_0 = arith.constant 0 : i32
    %c0_i32_1 = arith.constant 0 : i32
    return %c0_i32, %c0_i32_0 : i32, i32
  }
  func.func @transform_17(%arg0: i32) -> (i32, i32, i32) {
    %c0_i32 = arith.constant 0 : i32
    %c0_i32_0 = arith.constant 0 : i32
    %c0_i32_1 = arith.constant 0 : i32
    return %arg0, %c0_i32, %c0_i32_0 : i32, i32, i32
  }
}

</mosaic_0001>

<llo_original>
// kernel: decoder_block_forward.3
$region0: #{decoder_block_forward.3}
  #allocation0 [shape = 'u32[]', space=smem, size = 0x4, offset = 0x4, fixed_abs, tag = 'smem constant byte address 0x4 - core index']
  #allocation1 [shape = 'u32[144,128]{1,0:T(1,128)}', space=vmem, size = 0x12000, scoped, tag = 'internal scratch']
  %s0 = inlined_call_operand.vmem [shape: f32[2,4,256], index: 0, kind: input, shape index: {}]
  %s1 = inlined_call_operand.vmem [shape: f32[2,4,1], index: 1, kind: input, shape index: {}]
  %s2 = inlined_call_operand.vmem [shape: f32[9,256], index: 2, kind: input, shape index: {}]
  %s3 = inlined_call_operand.vmem [shape: f32[4,2], index: 3, kind: input, shape index: {}]
  %s4 = inlined_call_operand.vmem [shape: f32[4,2], index: 4, kind: input, shape index: {}]
  %s5 = inlined_call_operand.vmem [shape: f32[1,2], index: 5, kind: input, shape index: {}, may-alias: {5,7}]
  %s6 = inlined_call_operand.vmem [shape: f32[2,1], index: 6, kind: input, shape index: {}, may-alias: {6,8}]
  %s7 = inlined_call_operand.vmem [shape: f32[1,2], index: 7, kind: input, shape index: {}, may-alias: {5,7}]
  %s8 = inlined_call_operand.vmem [shape: f32[2,1], index: 8, kind: input, shape index: {}, may-alias: {6,8}]
  %s9 = inlined_call_operand.vmem [shape: f32[2,12], index: 9, kind: input, shape index: {}]
  %s10 = inlined_call_operand.vmem [shape: bf16[2,2], index: 10, kind: input, shape index: {}]
  %s11 = inlined_call_operand.vmem [shape: f32[2,3], index: 11, kind: input, shape index: {}]
  %s12 = inlined_call_operand.vmem [shape: bf16[2,2], index: 12, kind: input, shape index: {}]
  %s13 = inlined_call_operand.vmem [shape: f32[2,3], index: 13, kind: input, shape index: {}]
  %s14 = inlined_call_operand.vmem [shape: f32[2,12], index: 14, kind: input, shape index: {}]
  %s15 = inlined_call_operand.vmem [shape: bf16[2,2], index: 15, kind: input, shape index: {}]
  %s16 = inlined_call_operand.vmem [shape: f32[2,3], index: 16, kind: input, shape index: {}]
  %s17 = inlined_call_operand.vmem [shape: f32[2,4,256], index: 17, kind: output, shape index: {}]
  %s18 = sld [smem:[#allocation0]]
  $region101: #{decoder_block_forward.3} parent=0
    _
  %s20 = ssub.s32 1, %s18
  %s21 = scalar_select 0, %s20, %s18
  loop: start=0, step=1, limit=4
  $region2: #{decoder_block_forward.3} parent=0 // loop_pre_header
    _
  $region3: #{decoder_block_forward.3} parent=0 // loop_header
    %s23 = sphi 0, %s27
    %p24 = scmp.ge.s32.totalorder %s23, 4
    %s33 = sphi 0, %s35
    %s36 = sphi 0, %s33
    %s37 = sphi 0, %s36
    %s53 = sphi 0, %s37
    %s59 = sphi 0, %s61
    %s62 = sphi 0, %s59
    %s63 = sphi 0, %s62
    %s79 = sphi 0, %s63
    %s83 = sphi 0, %s83
    %s85 = sphi 0, %s83
    %s86 = sphi 0, %s85
    %s100 = sphi 0, %s86
    %s104 = sphi 0, %s104
    %s106 = sphi 0, %s104
    %s107 = sphi 0, %s106
    %s121 = sphi 0, %s107
    %s125 = sphi 0, %s125
    %s127 = sphi 0, %s125
    %s128 = sphi 0, %s127
    %s142 = sphi 0, %s128
    %s146 = sphi 0, %s146
    %s148 = sphi 0, %s146
    %s149 = sphi 0, %s148
    %s163 = sphi 0, %s149
    %s167 = sphi 0, %s167
    %s169 = sphi 0, %s167
    %s170 = sphi 0, %s169
    %s184 = sphi 0, %s170
    %s188 = sphi 0, %s188
    %s190 = sphi 0, %s188
    %s191 = sphi 0, %s190
    %s205 = sphi 0, %s191
    %s209 = sphi 0, %s209
    %s211 = sphi 0, %s209
    %s212 = sphi 0, %s211
    %s226 = sphi 0, %s212
    %s230 = sphi 0, %s230
    %s232 = sphi 0, %s230
    %s233 = sphi 0, %s232
    %s247 = sphi 0, %s233
    %s251 = sphi 0, %s251
    %s253 = sphi 0, %s251
    %s254 = sphi 0, %s253
    %s268 = sphi 0, %s254
    %s272 = sphi 0, %s272
    %s274 = sphi 0, %s272
    %s275 = sphi 0, %s274
    %s289 = sphi 0, %s275
    %s293 = sphi 0, %s293
    %s295 = sphi 0, %s293
    %s296 = sphi 0, %s295
    %s310 = sphi 0, %s296
    %s314 = sphi 0, %s314
    %s316 = sphi 0, %s314
    %s317 = sphi 0, %s316
    %s331 = sphi 0, %s317
    %s335 = sphi 0, %s335
    %s337 = sphi 0, %s335
    %s338 = sphi 0, %s337
    %s352 = sphi 0, %s338
    %s356 = sphi 0, %s356
    %s358 = sphi 0, %s356
    %s359 = sphi 0, %s358
    %s373 = sphi 0, %s359
    %s377 = sphi 0, %s377
    %s379 = sphi 0, %s377
    %s380 = sphi 0, %s379
    %s394 = sphi 0, %s380
    %s400 = sphi 0, %s402
    %s403 = sphi 0, %s400
    %s404 = sphi 0, %s403
    %s420 = sphi 0, %s404
  $region4: #{decoder_block_forward.3} parent=0 // loop_header_branch
    %26 = sbr.rel (%p24) target = $region8
  $region5: #{decoder_block_forward.3} parent=0 // loop_body
    %s28 = ssub.s32 %s23, 1
    %s29 = ssub.s32 %s23, 2
    %s30 = sadd.s32 %s23, 1
    %s31 = ssub.s32 %s23, %s30
    %p32 = scmp.eq.s32.totalorder %s31, 0
    %s34 = sadd.s32 %s33, 1
    %s35 = scalar_select %p32, %s33, %s34
    %p38 = pneg %p32
    %p39 = scmp.eq.s32.totalorder %s23, 1
    %p40 = por %p38, %p39
    %p41 = scmp.ne.s32.totalorder %s33, %s36
    %p42 = scmp.eq.s32.totalorder %s23, 0
    %p43 = por %p41, %p42
    %p44 = scmp.ne.s32.totalorder %s33, %s36
    %p45 = scmp.eq.s32.totalorder %s28, 1
    %p46 = por %p44, %p45
    %p47 = scmp.ne.s32.totalorder %s36, %s37
    %p48 = scmp.eq.s32.totalorder %s28, 0
    %p49 = por %p47, %p48
    %p50 = scmp.ne.s32.totalorder %s36, %s37
    %p51 = scmp.eq.s32.totalorder %s29, 1
    %p52 = por %p50, %p51
    %p54 = scmp.ne.s32.totalorder %s37, %s53
    %p55 = scmp.eq.s32.totalorder %s29, 0
    %p56 = por %p54, %p55
    %s57 = ssub.s32 %s23, %s30
    %p58 = scmp.eq.s32.totalorder %s57, 0
    %s60 = sadd.s32 %s59, 1
    %s61 = scalar_select %p58, %s59, %s60
    %p64 = pneg %p58
    %p65 = scmp.eq.s32.totalorder %s23, 1
    %p66 = por %p64, %p65
    %p67 = scmp.ne.s32.totalorder %s59, %s62
    %p68 = scmp.eq.s32.totalorder %s23, 0
    %p69 = por %p67, %p68
    %p70 = scmp.ne.s32.totalorder %s59, %s62
    %p71 = scmp.eq.s32.totalorder %s28, 1
    %p72 = por %p70, %p71
    %p73 = scmp.ne.s32.totalorder %s62, %s63
    %p74 = scmp.eq.s32.totalorder %s28, 0
    %p75 = por %p73, %p74
    %p76 = scmp.ne.s32.totalorder %s62, %s63
    %p77 = scmp.eq.s32.totalorder %s29, 1
    %p78 = por %p76, %p77
    %p80 = scmp.ne.s32.totalorder %s63, %s79
    %p81 = scmp.eq.s32.totalorder %s29, 0
    %p82 = por %p80, %p81
    %s84 = sadd.s32 %s83, 1
    %p87 = scmp.eq.s32.totalorder %s23, 1
    %p88 = scmp.ne.s32.totalorder %s83, %s85
    %p89 = scmp.eq.s32.totalorder %s23, 0
    %p90 = por %p88, %p89
    %p91 = scmp.ne.s32.totalorder %s83, %s85
    %p92 = scmp.eq.s32.totalorder %s28, 1
    %p93 = por %p91, %p92
    %p94 = scmp.ne.s32.totalorder %s85, %s86
    %p95 = scmp.eq.s32.totalorder %s28, 0
    %p96 = por %p94, %p95
    %p97 = scmp.ne.s32.totalorder %s85, %s86
    %p98 = scmp.eq.s32.totalorder %s29, 1
    %p99 = por %p97, %p98
    %p101 = scmp.ne.s32.totalorder %s86, %s100
    %p102 = scmp.eq.s32.totalorder %s29, 0
    %p103 = por %p101, %p102
    %s105 = sadd.s32 %s104, 1
    %p108 = scmp.eq.s32.totalorder %s23, 1
    %p109 = scmp.ne.s32.totalorder %s104, %s106
    %p110 = scmp.eq.s32.totalorder %s23, 0
    %p111 = por %p109, %p110
    %p112 = scmp.ne.s32.totalorder %s104, %s106
    %p113 = scmp.eq.s32.totalorder %s28, 1
    %p114 = por %p112, %p113
    %p115 = scmp.ne.s32.totalorder %s106, %s107
    %p116 = scmp.eq.s32.totalorder %s28, 0
    %p117 = por %p115, %p116
    %p118 = scmp.ne.s32.totalorder %s106, %s107
    %p119 = scmp.eq.s32.totalorder %s29, 1
    %p120 = por %p118, %p119
    %p122 = scmp.ne.s32.totalorder %s107, %s121
    %p123 = scmp.eq.s32.totalorder %s29, 0
    %p124 = por %p122, %p123
    %s126 = sadd.s32 %s125, 1
    %p129 = scmp.eq.s32.totalorder %s23, 1
    %p130 = scmp.ne.s32.totalorder %s125, %s127
    %p131 = scmp.eq.s32.totalorder %s23, 0
    %p132 = por %p130, %p131
    %p133 = scmp.ne.s32.totalorder %s125, %s127
    %p134 = scmp.eq.s32.totalorder %s28, 1
    %p135 = por %p133, %p134
    %p136 = scmp.ne.s32.totalorder %s127, %s128
    %p137 = scmp.eq.s32.totalorder %s28, 0
    %p138 = por %p136, %p137
    %p139 = scmp.ne.s32.totalorder %s127, %s128
    %p140 = scmp.eq.s32.totalorder %s29, 1
    %p141 = por %p139, %p140
    %p143 = scmp.ne.s32.totalorder %s128, %s142
    %p144 = scmp.eq.s32.totalorder %s29, 0
    %p145 = por %p143, %p144
    %s147 = sadd.s32 %s146, 1
    %p150 = scmp.eq.s32.totalorder %s23, 1
    %p151 = scmp.ne.s32.totalorder %s146, %s148
    %p152 = scmp.eq.s32.totalorder %s23, 0
    %p153 = por %p151, %p152
    %p154 = scmp.ne.s32.totalorder %s146, %s148
    %p155 = scmp.eq.s32.totalorder %s28, 1
    %p156 = por %p154, %p155
    %p157 = scmp.ne.s32.totalorder %s148, %s149
    %p158 = scmp.eq.s32.totalorder %s28, 0
    %p159 = por %p157, %p158
    %p160 = scmp.ne.s32.totalorder %s148, %s149
    %p161 = scmp.eq.s32.totalorder %s29, 1
    %p162 = por %p160, %p161
    %p164 = scmp.ne.s32.totalorder %s149, %s163
    %p165 = scmp.eq.s32.totalorder %s29, 0
    %p166 = por %p164, %p165
    %s168 = sadd.s32 %s167, 1
    %p171 = scmp.eq.s32.totalorder %s23, 1
    %p172 = scmp.ne.s32.totalorder %s167, %s169
    %p173 = scmp.eq.s32.totalorder %s23, 0
    %p174 = por %p172, %p173
    %p175 = scmp.ne.s32.totalorder %s167, %s169
    %p176 = scmp.eq.s32.totalorder %s28, 1
    %p177 = por %p175, %p176
    %p178 = scmp.ne.s32.totalorder %s169, %s170
    %p179 = scmp.eq.s32.totalorder %s28, 0
    %p180 = por %p178, %p179
    %p181 = scmp.ne.s32.totalorder %s169, %s170
    %p182 = scmp.eq.s32.totalorder %s29, 1
    %p183 = por %p181, %p182
    %p185 = scmp.ne.s32.totalorder %s170, %s184
    %p186 = scmp.eq.s32.totalorder %s29, 0
    %p187 = por %p185, %p186
    %s189 = sadd.s32 %s188, 1
    %p192 = scmp.eq.s32.totalorder %s23, 1
    %p193 = scmp.ne.s32.totalorder %s188, %s190
    %p194 = scmp.eq.s32.totalorder %s23, 0
    %p195 = por %p193, %p194
    %p196 = scmp.ne.s32.totalorder %s188, %s190
    %p197 = scmp.eq.s32.totalorder %s28, 1
    %p198 = por %p196, %p197
    %p199 = scmp.ne.s32.totalorder %s190, %s191
    %p200 = scmp.eq.s32.totalorder %s28, 0
    %p201 = por %p199, %p200
    %p202 = scmp.ne.s32.totalorder %s190, %s191
    %p203 = scmp.eq.s32.totalorder %s29, 1
    %p204 = por %p202, %p203
    %p206 = scmp.ne.s32.totalorder %s191, %s205
    %p207 = scmp.eq.s32.totalorder %s29, 0
    %p208 = por %p206, %p207
    %s210 = sadd.s32 %s209, 1
    %p213 = scmp.eq.s32.totalorder %s23, 1
    %p214 = scmp.ne.s32.totalorder %s209, %s211
    %p215 = scmp.eq.s32.totalorder %s23, 0
    %p216 = por %p214, %p215
    %p217 = scmp.ne.s32.totalorder %s209, %s211
    %p218 = scmp.eq.s32.totalorder %s28, 1
    %p219 = por %p217, %p218
    %p220 = scmp.ne.s32.totalorder %s211, %s212
    %p221 = scmp.eq.s32.totalorder %s28, 0
    %p222 = por %p220, %p221
    %p223 = scmp.ne.s32.totalorder %s211, %s212
    %p224 = scmp.eq.s32.totalorder %s29, 1
    %p225 = por %p223, %p224
    %p227 = scmp.ne.s32.totalorder %s212, %s226
    %p228 = scmp.eq.s32.totalorder %s29, 0
    %p229 = por %p227, %p228
    %s231 = sadd.s32 %s230, 1
    %p234 = scmp.eq.s32.totalorder %s23, 1
    %p235 = scmp.ne.s32.totalorder %s230, %s232
    %p236 = scmp.eq.s32.totalorder %s23, 0
    %p237 = por %p235, %p236
    %p238 = scmp.ne.s32.totalorder %s230, %s232
    %p239 = scmp.eq.s32.totalorder %s28, 1
    %p240 = por %p238, %p239
    %p241 = scmp.ne.s32.totalorder %s232, %s233
    %p242 = scmp.eq.s32.totalorder %s28, 0
    %p243 = por %p241, %p242
    %p244 = scmp.ne.s32.totalorder %s232, %s233
    %p245 = scmp.eq.s32.totalorder %s29, 1
    %p246 = por %p244, %p245
    %p248 = scmp.ne.s32.totalorder %s233, %s247
    %p249 = scmp.eq.s32.totalorder %s29, 0
    %p250 = por %p248, %p249
    %s252 = sadd.s32 %s251, 1
    %p255 = scmp.eq.s32.totalorder %s23, 1
    %p256 = scmp.ne.s32.totalorder %s251, %s253
    %p257 = scmp.eq.s32.totalorder %s23, 0
    %p258 = por %p256, %p257
    %p259 = scmp.ne.s32.totalorder %s251, %s253
    %p260 = scmp.eq.s32.totalorder %s28, 1
    %p261 = por %p259, %p260
    %p262 = scmp.ne.s32.totalorder %s253, %s254
    %p263 = scmp.eq.s32.totalorder %s28, 0
    %p264 = por %p262, %p263
    %p265 = scmp.ne.s32.totalorder %s253, %s254
    %p266 = scmp.eq.s32.totalorder %s29, 1
    %p267 = por %p265, %p266
    %p269 = scmp.ne.s32.totalorder %s254, %s268
    %p270 = scmp.eq.s32.totalorder %s29, 0
    %p271 = por %p269, %p270
    %s273 = sadd.s32 %s272, 1
    %p276 = scmp.eq.s32.totalorder %s23, 1
    %p277 = scmp.ne.s32.totalorder %s272, %s274
    %p278 = scmp.eq.s32.totalorder %s23, 0
    %p279 = por %p277, %p278
    %p280 = scmp.ne.s32.totalorder %s272, %s274
    %p281 = scmp.eq.s32.totalorder %s28, 1
    %p282 = por %p280, %p281
    %p283 = scmp.ne.s32.totalorder %s274, %s275
    %p284 = scmp.eq.s32.totalorder %s28, 0
    %p285 = por %p283, %p284
    %p286 = scmp.ne.s32.totalorder %s274, %s275
    %p287 = scmp.eq.s32.totalorder %s29, 1
    %p288 = por %p286, %p287
    %p290 = scmp.ne.s32.totalorder %s275, %s289
    %p291 = scmp.eq.s32.totalorder %s29, 0
    %p292 = por %p290, %p291
    %s294 = sadd.s32 %s293, 1
    %p297 = scmp.eq.s32.totalorder %s23, 1
    %p298 = scmp.ne.s32.totalorder %s293, %s295
    %p299 = scmp.eq.s32.totalorder %s23, 0
    %p300 = por %p298, %p299
    %p301 = scmp.ne.s32.totalorder %s293, %s295
    %p302 = scmp.eq.s32.totalorder %s28, 1
    %p303 = por %p301, %p302
    %p304 = scmp.ne.s32.totalorder %s295, %s296
    %p305 = scmp.eq.s32.totalorder %s28, 0
    %p306 = por %p304, %p305
    %p307 = scmp.ne.s32.totalorder %s295, %s296
    %p308 = scmp.eq.s32.totalorder %s29, 1
    %p309 = por %p307, %p308
    %p311 = scmp.ne.s32.totalorder %s296, %s310
    %p312 = scmp.eq.s32.totalorder %s29, 0
    %p313 = por %p311, %p312
    %s315 = sadd.s32 %s314, 1
    %p318 = scmp.eq.s32.totalorder %s23, 1
    %p319 = scmp.ne.s32.totalorder %s314, %s316
    %p320 = scmp.eq.s32.totalorder %s23, 0
    %p321 = por %p319, %p320
    %p322 = scmp.ne.s32.totalorder %s314, %s316
    %p323 = scmp.eq.s32.totalorder %s28, 1
    %p324 = por %p322, %p323
    %p325 = scmp.ne.s32.totalorder %s316, %s317
    %p326 = scmp.eq.s32.totalorder %s28, 0
    %p327 = por %p325, %p326
    %p328 = scmp.ne.s32.totalorder %s316, %s317
    %p329 = scmp.eq.s32.totalorder %s29, 1
    %p330 = por %p328, %p329
    %p332 = scmp.ne.s32.totalorder %s317, %s331
    %p333 = scmp.eq.s32.totalorder %s29, 0
    %p334 = por %p332, %p333
    %s336 = sadd.s32 %s335, 1
    %p339 = scmp.eq.s32.totalorder %s23, 1
    %p340 = scmp.ne.s32.totalorder %s335, %s337
    %p341 = scmp.eq.s32.totalorder %s23, 0
    %p342 = por %p340, %p341
    %p343 = scmp.ne.s32.totalorder %s335, %s337
    %p344 = scmp.eq.s32.totalorder %s28, 1
    %p345 = por %p343, %p344
    %p346 = scmp.ne.s32.totalorder %s337, %s338
    %p347 = scmp.eq.s32.totalorder %s28, 0
    %p348 = por %p346, %p347
    %p349 = scmp.ne.s32.totalorder %s337, %s338
    %p350 = scmp.eq.s32.totalorder %s29, 1
    %p351 = por %p349, %p350
    %p353 = scmp.ne.s32.totalorder %s338, %s352
    %p354 = scmp.eq.s32.totalorder %s29, 0
    %p355 = por %p353, %p354
    %s357 = sadd.s32 %s356, 1
    %p360 = scmp.eq.s32.totalorder %s23, 1
    %p361 = scmp.ne.s32.totalorder %s356, %s358
    %p362 = scmp.eq.s32.totalorder %s23, 0
    %p363 = por %p361, %p362
    %p364 = scmp.ne.s32.totalorder %s356, %s358
    %p365 = scmp.eq.s32.totalorder %s28, 1
    %p366 = por %p364, %p365
    %p367 = scmp.ne.s32.totalorder %s358, %s359
    %p368 = scmp.eq.s32.totalorder %s28, 0
    %p369 = por %p367, %p368
    %p370 = scmp.ne.s32.totalorder %s358, %s359
    %p371 = scmp.eq.s32.totalorder %s29, 1
    %p372 = por %p370, %p371
    %p374 = scmp.ne.s32.totalorder %s359, %s373
    %p375 = scmp.eq.s32.totalorder %s29, 0
    %p376 = por %p374, %p375
    %s378 = sadd.s32 %s377, 1
    %p381 = scmp.eq.s32.totalorder %s23, 1
    %p382 = scmp.ne.s32.totalorder %s377, %s379
    %p383 = scmp.eq.s32.totalorder %s23, 0
    %p384 = por %p382, %p383
    %p385 = scmp.ne.s32.totalorder %s377, %s379
    %p386 = scmp.eq.s32.totalorder %s28, 1
    %p387 = por %p385, %p386
    %p388 = scmp.ne.s32.totalorder %s379, %s380
    %p389 = scmp.eq.s32.totalorder %s28, 0
    %p390 = por %p388, %p389
    %p391 = scmp.ne.s32.totalorder %s379, %s380
    %p392 = scmp.eq.s32.totalorder %s29, 1
    %p393 = por %p391, %p392
    %p395 = scmp.ne.s32.totalorder %s380, %s394
    %p396 = scmp.eq.s32.totalorder %s29, 0
    %p397 = por %p395, %p396
    %s398 = ssub.s32 %s23, %s30
    %p399 = scmp.eq.s32.totalorder %s398, 0
    %s401 = sadd.s32 %s400, 1
    %s402 = scalar_select %p399, %s400, %s401
    %p405 = pneg %p399
    %p406 = scmp.eq.s32.totalorder %s23, 1
    %p407 = por %p405, %p406
    %p408 = scmp.ne.s32.totalorder %s400, %s403
    %p409 = scmp.eq.s32.totalorder %s23, 0
    %p410 = por %p408, %p409
    %p411 = scmp.ne.s32.totalorder %s400, %s403
    %p412 = scmp.eq.s32.totalorder %s28, 1
    %p413 = por %p411, %p412
    %p414 = scmp.ne.s32.totalorder %s403, %s404
    %p415 = scmp.eq.s32.totalorder %s28, 0
    %p416 = por %p414, %p415
    %p417 = scmp.ne.s32.totalorder %s403, %s404
    %p418 = scmp.eq.s32.totalorder %s29, 1
    %p419 = por %p417, %p418
    %p421 = scmp.ne.s32.totalorder %s404, %s420
    %p422 = scmp.eq.s32.totalorder %s29, 0
    %p423 = por %p421, %p422
    %p424 = scmp.le.s32.totalorder 1, %s23
    %p425 = scmp.lt.s32.totalorder %s23, 3
    %p426 = pnand %p424, %p425
    %p427 = pneg %p426
    // Predicated region
    $region9: #{decoder_block_forward.3} parent=5 // pred_check
      _
    $region10: #{decoder_block_forward.3} parent=5 // pred_check_branch
      %429 = sbr.rel (%p426) target = $region12
    $region11: #{decoder_block_forward.3} parent=5 // pred_region
      %s430 = ssub.s32 %s23, 1
      // Predicated region
      $region13: #{decoder_block_forward.3} parent=11 // pred_check
        %p431 = pneg %p96
      $region14: #{decoder_block_forward.3} parent=11 // pred_check_branch
        %433 = sbr.rel (%p431) target = $region16
      $region15: #{decoder_block_forward.3} parent=11 // pred_region
        _
      $region16: #{decoder_block_forward.3} parent=11 // pred_fallthru
        _
      // Predicated region
      $region17: #{decoder_block_forward.3} parent=11 // pred_check
        %p434 = pneg %p117
      $region18: #{decoder_block_forward.3} parent=11 // pred_check_branch
        %436 = sbr.rel (%p434) target = $region20
      $region19: #{decoder_block_forward.3} parent=11 // pred_region
        _
      $region20: #{decoder_block_forward.3} parent=11 // pred_fallthru
        _
      // Predicated region
      $region21: #{decoder_block_forward.3} parent=11 // pred_check
        %p437 = pneg %p138
      $region22: #{decoder_block_forward.3} parent=11 // pred_check_branch
        %439 = sbr.rel (%p437) target = $region24
      $region23: #{decoder_block_forward.3} parent=11 // pred_region
        _
      $region24: #{decoder_block_forward.3} parent=11 // pred_fallthru
        _
      // Predicated region
      $region25: #{decoder_block_forward.3} parent=11 // pred_check
        %p440 = pneg %p159
      $region26: #{decoder_block_forward.3} parent=11 // pred_check_branch
        %442 = sbr.rel (%p440) target = $region28
      $region27: #{decoder_block_forward.3} parent=11 // pred_region
        _
      $region28: #{decoder_block_forward.3} parent=11 // pred_fallthru
        _
      // Predicated region
      $region29: #{decoder_block_forward.3} parent=11 // pred_check
        %p443 = pneg %p180
      $region30: #{decoder_block_forward.3} parent=11 // pred_check_branch
        %445 = sbr.rel (%p443) target = $region32
      $region31: #{decoder_block_forward.3} parent=11 // pred_region
        _
      $region32: #{decoder_block_forward.3} parent=11 // pred_fallthru
        _
      // Predicated region
      $region33: #{decoder_block_forward.3} parent=11 // pred_check
        %p446 = pneg %p201
      $region34: #{decoder_block_forward.3} parent=11 // pred_check_branch
        %448 = sbr.rel (%p446) target = $region36
      $region35: #{decoder_block_forward.3} parent=11 // pred_region
        _
      $region36: #{decoder_block_forward.3} parent=11 // pred_fallthru
        _
      // Predicated region
      $region37: #{decoder_block_forward.3} parent=11 // pred_check
        %p449 = pneg %p222
      $region38: #{decoder_block_forward.3} parent=11 // pred_check_branch
        %451 = sbr.rel (%p449) target = $region40
      $region39: #{decoder_block_forward.3} parent=11 // pred_region
        _
      $region40: #{decoder_block_forward.3} parent=11 // pred_fallthru
        _
      // Predicated region
      $region41: #{decoder_block_forward.3} parent=11 // pred_check
        %p452 = pneg %p243
      $region42: #{decoder_block_forward.3} parent=11 // pred_check_branch
        %454 = sbr.rel (%p452) target = $region44
      $region43: #{decoder_block_forward.3} parent=11 // pred_region
        _
      $region44: #{decoder_block_forward.3} parent=11 // pred_fallthru
        _
      // Predicated region
      $region45: #{decoder_block_forward.3} parent=11 // pred_check
        %p455 = pneg %p264
      $region46: #{decoder_block_forward.3} parent=11 // pred_check_branch
        %457 = sbr.rel (%p455) target = $region48
      $region47: #{decoder_block_forward.3} parent=11 // pred_region
        _
      $region48: #{decoder_block_forward.3} parent=11 // pred_fallthru
        _
      // Predicated region
      $region49: #{decoder_block_forward.3} parent=11 // pred_check
        %p458 = pneg %p285
      $region50: #{decoder_block_forward.3} parent=11 // pred_check_branch
        %460 = sbr.rel (%p458) target = $region52
      $region51: #{decoder_block_forward.3} parent=11 // pred_region
        _
      $region52: #{decoder_block_forward.3} parent=11 // pred_fallthru
        _
      // Predicated region
      $region53: #{decoder_block_forward.3} parent=11 // pred_check
        %p461 = pneg %p306
      $region54: #{decoder_block_forward.3} parent=11 // pred_check_branch
        %463 = sbr.rel (%p461) target = $region56
      $region55: #{decoder_block_forward.3} parent=11 // pred_region
        _
      $region56: #{decoder_block_forward.3} parent=11 // pred_fallthru
        _
      // Predicated region
      $region57: #{decoder_block_forward.3} parent=11 // pred_check
        %p464 = pneg %p327
      $region58: #{decoder_block_forward.3} parent=11 // pred_check_branch
        %466 = sbr.rel (%p464) target = $region60
      $region59: #{decoder_block_forward.3} parent=11 // pred_region
        _
      $region60: #{decoder_block_forward.3} parent=11 // pred_fallthru
        _
      // Predicated region
      $region61: #{decoder_block_forward.3} parent=11 // pred_check
        %p467 = pneg %p348
      $region62: #{decoder_block_forward.3} parent=11 // pred_check_branch
        %469 = sbr.rel (%p467) target = $region64
      $region63: #{decoder_block_forward.3} parent=11 // pred_region
        _
      $region64: #{decoder_block_forward.3} parent=11 // pred_fallthru
        _
      // Predicated region
      $region65: #{decoder_block_forward.3} parent=11 // pred_check
        %p470 = pneg %p369
      $region66: #{decoder_block_forward.3} parent=11 // pred_check_branch
        %472 = sbr.rel (%p470) target = $region68
      $region67: #{decoder_block_forward.3} parent=11 // pred_region
        _
      $region68: #{decoder_block_forward.3} parent=11 // pred_fallthru
        _
      // Predicated region
      $region69: #{decoder_block_forward.3} parent=11 // pred_check
        %p473 = pneg %p390
      $region70: #{decoder_block_forward.3} parent=11 // pred_check_branch
        %475 = sbr.rel (%p473) target = $region72
      $region71: #{decoder_block_forward.3} parent=11 // pred_region
        _
      $region72: #{decoder_block_forward.3} parent=11 // pred_fallthru
        _
    $region12: #{decoder_block_forward.3} parent=5 // pred_fallthru
      _
    %p476 = scmp.lt.s32.totalorder %s23, 2
    // Predicated region
    $region73: #{decoder_block_forward.3} parent=5 // pred_check
      %p477 = pneg %p476
    $region74: #{decoder_block_forward.3} parent=5 // pred_check_branch
      %479 = sbr.rel (%p477) target = $region76
    $region75: #{decoder_block_forward.3} parent=5 // pred_region
      // Predicated region
      $region77: #{decoder_block_forward.3} parent=75 // pred_check
        %p480 = pneg %p43
      $region78: #{decoder_block_forward.3} parent=75 // pred_check_branch
        %482 = sbr.rel (%p480) target = $region80
      $region79: #{decoder_block_forward.3} parent=75 // pred_region
        %p483 = scmp.lt.s32.totalorder %s23, 1
        %s484 = scalar_select %p483, %s23, 1
        %s485 = smul.addr %s484, 2
        %s486 = smul.addr %s485, 4
        %s487 = scalar_lea.vmem %s0, %s486
      $region80: #{decoder_block_forward.3} parent=75 // pred_fallthru
        _
      // Predicated region
      $region81: #{decoder_block_forward.3} parent=75 // pred_check
        %p488 = pneg %p69
      $region82: #{decoder_block_forward.3} parent=75 // pred_check_branch
        %490 = sbr.rel (%p488) target = $region84
      $region83: #{decoder_block_forward.3} parent=75 // pred_region
        %p491 = scmp.lt.s32.totalorder %s23, 1
        %s492 = scalar_select %p491, %s23, 1
        %s493 = smul.addr %s492, 4
        %s494 = scalar_lea.vmem %s1, %s493
      $region84: #{decoder_block_forward.3} parent=75 // pred_fallthru
        _
    $region76: #{decoder_block_forward.3} parent=5 // pred_fallthru
      _
    %p495 = scmp.le.s32.totalorder 1, %s23
    %p496 = scmp.lt.s32.totalorder %s23, 3
    %p497 = pnand %p495, %p496
    %p498 = pneg %p497
    // Predicated region
    $region85: #{decoder_block_forward.3} parent=5 // pred_check
      _
    $region86: #{decoder_block_forward.3} parent=5 // pred_check_branch
      %500 = sbr.rel (%p497) target = $region88
    $region87: #{decoder_block_forward.3} parent=5 // pred_region
      %s501 = ssub.s32 %s23, 1
      %p502 = scmp.lt.s32.totalorder %s28, 1
      %s503 = scalar_select %p502, %s28, 1
      %s504 = smul.addr %s503, 2
      %s505 = smul.addr %s504, 4
      %s506 = scalar_lea.vmem %s0, %s505
      %p507 = pneg %p49
      %p508 = pneg %p46
      %p509 = scmp.lt.s32.totalorder %s28, 1
      %s510 = scalar_select %p509, %s28, 1
      %s511 = smul.addr %s510, 4
      %s512 = scalar_lea.vmem %s1, %s511
      %p513 = pneg %p75
      %p514 = pneg %p72
      %p515 = pneg %p96
      %p516 = pneg %p93
      %p517 = pneg %p117
      %p518 = pneg %p114
      %p519 = pneg %p138
      %p520 = pneg %p135
      %p521 = pneg %p159
      %p522 = pneg %p156
      %p523 = pneg %p180
      %p524 = pneg %p177
      %p525 = pneg %p201
      %p526 = pneg %p198
      %p527 = pneg %p222
      %p528 = pneg %p219
      %p529 = pneg %p243
      %p530 = pneg %p240
      %p531 = pneg %p264
      %p532 = pneg %p261
      %p533 = pneg %p285
      %p534 = pneg %p282
      %p535 = pneg %p306
      %p536 = pneg %p303
      %p537 = pneg %p327
      %p538 = pneg %p324
      %p539 = pneg %p348
      %p540 = pneg %p345
      %p541 = pneg %p369
      %p542 = pneg %p366
      %p543 = pneg %p390
      %p544 = pneg %p387
      %p545 = pneg %p416
      %p546 = pneg %p413
      %p547 = scmp.lt.s32.totalorder %s28, 1
      %s548 = scalar_select %p547, %s28, 1
      %s549 = smul.addr %s548, 2
      %s550 = smul.addr %s549, 4
      %s551 = scalar_lea.vmem %s17, %s550
      %p552 = scmp.lt.s32.totalorder %s28, 1
      %s553 = scalar_select %p552, %s28, 1
      %s554 = smul.addr %s553, 2
      %s555 = smul.addr %s554, 4
      %s556 = scalar_lea.vmem %s0, %s555
      %p557 = scmp.lt.s32.totalorder %s28, 1
      %s558 = scalar_select %p557, %s28, 1
      %s559 = smul.addr %s558, 4
      %s560 = scalar_lea.vmem %s1, %s559
      %p561 = scmp.lt.s32.totalorder %s28, 1
      %s562 = scalar_select %p561, %s28, 1
      %s563 = smul.addr %s562, 2
      %s564 = smul.addr %s563, 4
      %s565 = scalar_lea.vmem %s17, %s564
      %v567 = vld [vmem:[%s556] sm:$0xff]
      %v568 = vld [vmem:[%s560] sm:$0xf]
      %570 = vset.pattern.permute.xlu0 0
      %571 = vperm.xlu0 %570, %v568
      %v572 = vpop.permute.xlu0 %571
      %v574 = vunpack.c.l.s4 839922192
      %v575 = vunpack.c.0.s8 %v574
      %v576 = vlaneseq
      %v577 = vshrl.u32 %v576, 7
      %v578 = vsub.s32 %v575, %v577
      %v579 = vrot.slane %v572, %v578
      %v581 = vmul.f32 %v567, %v579
      %v582 = vxor.u32 %v581, 2147483648
      %v583 = vmul.f32 %v582, 1.442695
      %v584 = vpow.pop %v583
      %v585 = vadd.f32 %v584, 1.0
      %v586 = vrcp.pop %v585
      %v587 = vmul.f32 1.0, %v586
      %v588 = vmul.f32 %v581, %v587
      %v589 = vld [vmem:[%s2] sm:$0xff]
      %v590 = vld [vmem:[%s2 + $0x8] sm:$0xff]
      %v591 = vld [vmem:[%s2 + $0x10] sm:$0x1]
      %v592 = vld [vmem:[%s2 + $0x18] sm:$0x1]
      %v593 = vld [vmem:[%s9] sm:$0x3]
      %v594 = vld [vmem:[%s10] sm:$0x1]
      %v595 = vld [vmem:[%s11] sm:$0x3]
      %v596 = vld [vmem:[%s12] sm:$0x1]
      %v597 = vld [vmem:[%s13] sm:$0x3]
      %v598 = vld [vmem:[%s14] sm:$0x3]
      %v599 = vld [vmem:[%s15] sm:$0x1]
      %v600 = vld [vmem:[%s16] sm:$0x3]
      %v601 = vld [vmem:[%s3] sm:$0xf]
      %v602 = vld [vmem:[%s4] sm:$0xf]
      %604 = vset.pattern.permute.xlu0 4
      %605 = vperm.xlu0 %604, %v593
      %v606 = vpop.permute.xlu0 %605
      %v608 = vunpack.c.l.s4 839922192
      %v609 = vunpack.c.0.s8 %v608
      %v610 = vlaneseq
      %v611 = vshrl.u32 %v610, 7
      %v612 = vsub.s32 %v609, %v611
      %v613 = vrot.slane %v606, %v612
      %v615 = vmul.f32 %v588, %v613
      %v617 = vcombine.high %v588, %v588
      %619 = vrot.lane.b32.xlu0 %v588, 17
      %v620 = vpop.permute.xlu0 %619
      %621 = vrot.lane.b32.xlu0 %v617, 17
      %v622 = vpop.permute.xlu0 %621
      %v623 = vlaneseq
      %v624 = vand.u32 %v623, 127
      %vm625 = vcmp.lt.s32.totalorder %v624, 17
      %v626 = vsel %vm625, %v620, %v622
      %v627 = vsel %vm625, %v622, %v620
      %v628 = vlaneseq
      %v629 = vshrl.u32 %v628, 7
      %v630 = vsub.s32 0, %v629
      %v631 = vrot.slane %v589, %v630
      %v632 = vlaneseq
      %v633 = vshrl.u32 %v632, 7
      %v634 = vsub.s32 0, %v633
      %v635 = vrot.slane %v590, %v634
      %v636 = vmul.f32 %v627, %v631
      %v637 = vmul.f32 %v626, %v635
      %638 = vset.pattern.permute.xlu0 0
      %639 = vperm.xlu0 %638, %v593
      %v640 = vpop.permute.xlu0 %639
      %v642 = vmul.f32 %v636, %v640
      %v643 = vmul.f32 %v637, %v640
      %v646 = vcombine.low %v642, %v643
      %v648 = vadd.f32 %v615, %v646
      %649 = vrot.lane.b32.xlu0 %v588, 16
      %v650 = vpop.permute.xlu0 %649
      %651 = vrot.lane.b32.xlu0 %v617, 16
      %v652 = vpop.permute.xlu0 %651
      %vm653 = vcmp.lt.s32.totalorder %v624, 16
      %v654 = vsel %vm653, %v650, %v652
      %v655 = vsel %vm653, %v652, %v650
      %v656 = vlaneseq
      %v657 = vshrl.u32 %v656, 7
      %v658 = vsub.s32 1, %v657
      %v659 = vrot.slane %v589, %v658
      %v660 = vlaneseq
      %v661 = vshrl.u32 %v660, 7
      %v662 = vsub.s32 1, %v661
      %v663 = vrot.slane %v590, %v662
      %v664 = vmul.f32 %v655, %v659
      %v665 = vmul.f32 %v654, %v663
      %666 = vset.pattern.permute.xlu0 1
      %667 = vperm.xlu0 %666, %v593
      %v668 = vpop.permute.xlu0 %667
      %v670 = vmul.f32 %v664, %v668
      %v671 = vmul.f32 %v665, %v668
      %v674 = vcombine.low %v670, %v671
      %v676 = vadd.f32 %v648, %v674
      %677 = vrot.lane.b32.xlu0 %v588, 15
      %v678 = vpop.permute.xlu0 %677
      %679 = vrot.lane.b32.xlu0 %v617, 15
      %v680 = vpop.permute.xlu0 %679
      %vm681 = vcmp.lt.s32.totalorder %v624, 15
      %v682 = vsel %vm681, %v678, %v680
      %v683 = vsel %vm681, %v680, %v678
      %v684 = vlaneseq
      %v685 = vshrl.u32 %v684, 7
      %v686 = vsub.s32 2, %v685
      %v687 = vrot.slane %v589, %v686
      %v688 = vlaneseq
      %v689 = vshrl.u32 %v688, 7
      %v690 = vsub.s32 2, %v689
      %v691 = vrot.slane %v590, %v690
      %v692 = vmul.f32 %v683, %v687
      %v693 = vmul.f32 %v682, %v691
      %694 = vset.pattern.permute.xlu0 2
      %695 = vperm.xlu0 %694, %v593
      %v696 = vpop.permute.xlu0 %695
      %v698 = vmul.f32 %v692, %v696
      %v699 = vmul.f32 %v693, %v696
      %v702 = vcombine.low %v698, %v699
      %v704 = vadd.f32 %v676, %v702
      %705 = vrot.lane.b32.xlu0 %v588, 1
      %v706 = vpop.permute.xlu0 %705
      %707 = vrot.lane.b32.xlu0 %v617, 1
      %v708 = vpop.permute.xlu0 %707
      %vm709 = vcmp.lt.s32.totalorder %v624, 1
      %v710 = vsel %vm709, %v706, %v708
      %v711 = vsel %vm709, %v708, %v706
      %v712 = vlaneseq
      %v713 = vshrl.u32 %v712, 7
      %v714 = vsub.s32 3, %v713
      %v715 = vrot.slane %v589, %v714
      %v716 = vlaneseq
      %v717 = vshrl.u32 %v716, 7
      %v718 = vsub.s32 3, %v717
      %v719 = vrot.slane %v590, %v718
      %v720 = vmul.f32 %v711, %v715
      %v721 = vmul.f32 %v710, %v719
      %722 = vset.pattern.permute.xlu0 3
      %723 = vperm.xlu0 %722, %v593
      %v724 = vpop.permute.xlu0 %723
      %v726 = vmul.f32 %v720, %v724
      %v727 = vmul.f32 %v721, %v724
      %v730 = vcombine.low %v726, %v727
      %v732 = vadd.f32 %v704, %v730
      %733 = vrot.lane.b32.xlu0 %v588, 127
      %v734 = vpop.permute.xlu0 %733
      %735 = vrot.lane.b32.xlu0 %v617, 127
      %v736 = vpop.permute.xlu0 %735
      %vm737 = vcmp.lt.s32.totalorder %v624, 127
      %v738 = vsel %vm737, %v734, %v736
      %v739 = vsel %vm737, %v736, %v734
      %v740 = vlaneseq
      %v741 = vshrl.u32 %v740, 7
      %v742 = vsub.s32 5, %v741
      %v743 = vrot.slane %v589, %v742
      %v744 = vlaneseq
      %v745 = vshrl.u32 %v744, 7
      %v746 = vsub.s32 5, %v745
      %v747 = vrot.slane %v590, %v746
      %v748 = vmul.f32 %v738, %v743
      %v749 = vmul.f32 %v739, %v747
      %750 = vset.pattern.permute.xlu0 5
      %751 = vperm.xlu0 %750, %v593
      %v752 = vpop.permute.xlu0 %751
      %v754 = vmul.f32 %v748, %v752
      %v755 = vmul.f32 %v749, %v752
      %v758 = vcombine.low %v754, %v755
      %v760 = vadd.f32 %v732, %v758
      %761 = vrot.lane.b32.xlu0 %v588, 113
      %v762 = vpop.permute.xlu0 %761
      %763 = vrot.lane.b32.xlu0 %v617, 113
      %v764 = vpop.permute.xlu0 %763
      %vm765 = vcmp.lt.s32.totalorder %v624, 113
      %v766 = vsel %vm765, %v762, %v764
      %v767 = vsel %vm765, %v764, %v762
      %v768 = vlaneseq
      %v769 = vshrl.u32 %v768, 7
      %v770 = vsub.s32 6, %v769
      %v771 = vrot.slane %v589, %v770
      %v772 = vlaneseq
      %v773 = vshrl.u32 %v772, 7
      %v774 = vsub.s32 6, %v773
      %v775 = vrot.slane %v590, %v774
      %v776 = vmul.f32 %v766, %v771
      %v777 = vmul.f32 %v767, %v775
      %778 = vset.pattern.permute.xlu0 6
      %779 = vperm.xlu0 %778, %v593
      %v780 = vpop.permute.xlu0 %779
      %v782 = vmul.f32 %v776, %v780
      %v783 = vmul.f32 %v777, %v780
      %v786 = vcombine.low %v782, %v783
      %v788 = vadd.f32 %v760, %v786
      %789 = vrot.lane.b32.xlu0 %v588, 112
      %v790 = vpop.permute.xlu0 %789
      %791 = vrot.lane.b32.xlu0 %v617, 112
      %v792 = vpop.permute.xlu0 %791
      %vm793 = vcmp.lt.s32.totalorder %v624, 112
      %v794 = vsel %vm793, %v790, %v792
      %v795 = vsel %vm793, %v792, %v790
      %v796 = vlaneseq
      %v797 = vshrl.u32 %v796, 7
      %v798 = vsub.s32 7, %v797
      %v799 = vrot.slane %v589, %v798
      %v800 = vlaneseq
      %v801 = vshrl.u32 %v800, 7
      %v802 = vsub.s32 7, %v801
      %v803 = vrot.slane %v590, %v802
      %v804 = vmul.f32 %v794, %v799
      %v805 = vmul.f32 %v795, %v803
      %806 = vset.pattern.permute.xlu0 7
      %807 = vperm.xlu0 %806, %v593
      %v808 = vpop.permute.xlu0 %807
      %v810 = vmul.f32 %v804, %v808
      %v811 = vmul.f32 %v805, %v808
      %v814 = vcombine.low %v810, %v811
      %v816 = vadd.f32 %v788, %v814
      %817 = vrot.lane.b32.xlu0 %v588, 111
      %v818 = vpop.permute.xlu0 %817
      %819 = vrot.lane.b32.xlu0 %v617, 111
      %v820 = vpop.permute.xlu0 %819
      %vm821 = vcmp.lt.s32.totalorder %v624, 111
      %v822 = vsel %vm821, %v818, %v820
      %v823 = vsel %vm821, %v820, %v818
      %v824 = vlaneseq
      %v825 = vshrl.u32 %v824, 7
      %v826 = vsub.s32 0, %v825
      %v827 = vrot.slane %v591, %v826
      %v828 = vlaneseq
      %v829 = vshrl.u32 %v828, 7
      %v830 = vsub.s32 0, %v829
      %v831 = vrot.slane %v592, %v830
      %v832 = vmul.f32 %v822, %v827
      %v833 = vmul.f32 %v823, %v831
      %834 = vset.pattern.permute.xlu0 8
      %835 = vperm.xlu0 %834, %v593
      %v836 = vpop.permute.xlu0 %835
      %v838 = vmul.f32 %v832, %v836
      %v839 = vmul.f32 %v833, %v836
      %v842 = vcombine.low %v838, %v839
      %v844 = vadd.f32 %v816, %v842
      %845 = vset.pattern.permute.xlu0 9
      %846 = vperm.xlu0 %845, %v593
      %v847 = vpop.permute.xlu0 %846
      %v849 = vunpack.c.l.s4 839922192
      %v850 = vunpack.c.0.s8 %v849
      %v851 = vlaneseq
      %v852 = vshrl.u32 %v851, 7
      %v853 = vsub.s32 %v850, %v852
      %v854 = vrot.slane %v847, %v853
      %v856 = vadd.f32 %v844, %v854
      %v858 = vcombine.high %v856, %v856
      %vm860 = vcmask 1041408
      %v861 = vsel %vm860, %v856, 0.0
      %v862 = vsel %vm860, %v858, 0.0
      %v863 = vadd.f32 %v861, %v862
      %864 = vadd.xlane.f32.xlu0 %v863
      %v865 = vpop.xlane.xlu0 %864
      %v866 = vrot.slane %v865, 4
      %v867 = vadd.f32 %v865, %v866
      %v868 = vrot.slane %v867, 2
      %v869 = vadd.f32 %v867, %v868
      %v870 = vrot.slane %v869, 1
      %v871 = vadd.f32 %v869, %v870
      %s872 = vtos %v871
      %v873 = vrcp.pop 512.0
      %s874 = vtos %v873
      %s875 = smul.f32 %s872, %s874
      %v876 = vstv %s875
      %v877 = vsub.f32 %v856, %v876
      %v878 = vmul.f32 %v877, %v877
      %v880 = vcombine.high %v878, %v878
      %v882 = vsel %vm860, %v878, 0.0
      %v883 = vsel %vm860, %v880, 0.0
      %v884 = vadd.f32 %v882, %v883
      %885 = vadd.xlane.f32.xlu0 %v884
      %v886 = vpop.xlane.xlu0 %885
      %v887 = vrot.slane %v886, 4
      %v888 = vadd.f32 %v886, %v887
      %v889 = vrot.slane %v888, 2
      %v890 = vadd.f32 %v888, %v889
      %v891 = vrot.slane %v890, 1
      %v892 = vadd.f32 %v890, %v891
      %s893 = vtos %v892
      %v894 = vrcp.pop 512.0
      %s895 = vtos %v894
      %s896 = smul.f32 %s893, %s895
      %s897 = sadd.f32 %s896, 1e-05
      %v898 = vstv %s897
      %v899 = vrsqrt.pop %v898
      %s900 = vtos %v899
      %v901 = vstv %s900
      %v902 = vmul.f32 %v877, %v901
      %903 = vset.pattern.permute.xlu0 10
      %904 = vperm.xlu0 %903, %v593
      %v905 = vpop.permute.xlu0 %904
      %v907 = vunpack.c.l.s4 839922192
      %v908 = vunpack.c.0.s8 %v907
      %v909 = vlaneseq
      %v910 = vshrl.u32 %v909, 7
      %v911 = vsub.s32 %v908, %v910
      %v912 = vrot.slane %v905, %v911
      %v914 = vmul.f32 %v902, %v912
      %915 = vset.pattern.permute.xlu0 11
      %916 = vperm.xlu0 %915, %v593
      %v917 = vpop.permute.xlu0 %916
      %v919 = vunpack.c.l.s4 839922192
      %v920 = vunpack.c.0.s8 %v919
      %v921 = vlaneseq
      %v922 = vshrl.u32 %v921, 7
      %v923 = vsub.s32 %v920, %v922
      %v924 = vrot.slane %v917, %v923
      %v926 = vadd.f32 %v914, %v924
      %v928 = vcombine.high %v926, %v926
      %v930 = vpack.c.bf16 %v926, %v926
      %v931 = vpack.c.bf16 %v928, %v928
      %933 = vset.pattern.permute.xlu0 0
      %934 = vperm.xlu0 %933, %v595
      %v935 = vpop.permute.xlu0 %934
      %vm937 = vcmask 15360
      %v939 = vsel %vm937, %v594, 0
      %vm941 = vcmask 1040384
      %v943 = vsel %vm941, %v930, 0
      %v946 = vsel %vm941, %v931, 0
      %948 = vmatprep.subr.bf16.mxu0 %v946
      %949 = vmatpush1.bf16.msra.mxu0 %v943
      %950 = vmatprep.subr.bf16.mxu0 0
      %951 = vmatpush1.bf16.msra.mxu0 0
      %952 = vmatprep.subr.bf16.mxu0 0
      %953 = vmatpush1.bf16.msra.mxu0 0
      %954 = vmatprep.subr.bf16.mxu0 0
      %955 = vmatpush1.bf16.msra.mxu0 0
      %956 = vmatprep.subr.bf16.mxu0 0
      %957 = vmatpush1.bf16.msra.mxu0 0
      %958 = vmatprep.subr.bf16.mxu0 0
      %959 = vmatpush1.bf16.msra.mxu0 0
      %960 = vmatprep.subr.bf16.mxu0 0
      %961 = vmatpush1.bf16.msra.mxu0 0
      %962 = vmatprep.subr.bf16.mxu0 0
      %963 = vmatpush1.bf16.msra.mxu0 0
      %964 = vmatprep.subr.bf16.mxu0 0
      %965 = vmatpush1.bf16.msra.mxu0 0
      %966 = vmatprep.subr.bf16.mxu0 0
      %967 = vmatpush1.bf16.msra.mxu0 0
      %968 = vmatprep.subr.bf16.mxu0 0
      %969 = vmatpush1.bf16.msra.mxu0 0
      %970 = vmatprep.subr.bf16.mxu0 0
      %971 = vmatpush1.bf16.msra.mxu0 0
      %972 = vmatprep.subr.bf16.mxu0 0
      %973 = vmatpush1.bf16.msra.mxu0 0
      %974 = vmatprep.subr.bf16.mxu0 0
      %975 = vmatpush1.bf16.msra.mxu0 0
      %976 = vmatprep.subr.bf16.mxu0 0
      %977 = vmatpush1.bf16.msra.mxu0 0
      %978 = vmatprep.subr.bf16.mxu0 0
      %979 = vmatpush1.bf16.msra.mxu0 0
      %980 = vmatprep.mubr.bf16.mxu0 0
      %981 = vmatmul.mubr.bf16.gmra.mrb[0].mxu0 %v939
      %v982 = vpop.f32.mrb[0].mxu0
      %v983 = vadd.f32 %v935, %v982
      %v984 = vpop.f32.mrb[0].mxu0
      %v985 = vadd.f32 %v935, %v984
      %v986 = vpop.f32.mrb[0].mxu0
      %v987 = vpop.f32.mrb[0].mxu0
      %988 = vdwg.mxu0
      %v989 = vsel %vm860, %v983, 0.0
      %v990 = vsel %vm860, %v985, 0.0
      %v991 = vadd.f32 %v989, %v990
      %992 = vadd.xlane.f32.xlu0 %v991
      %v993 = vpop.xlane.xlu0 %992
      %v994 = vrot.slane %v993, 4
      %v995 = vadd.f32 %v993, %v994
      %v996 = vrot.slane %v995, 2
      %v997 = vadd.f32 %v995, %v996
      %v998 = vrot.slane %v997, 1
      %v999 = vadd.f32 %v997, %v998
      %s1000 = vtos %v999
      %v1001 = vrcp.pop 512.0
      %s1002 = vtos %v1001
      %s1003 = smul.f32 %s1000, %s1002
      %v1004 = vstv %s1003
      %v1005 = vsub.f32 %v983, %v1004
      %v1006 = vsub.f32 %v985, %v1004
      %v1007 = vmul.f32 %v1005, %v1005
      %v1008 = vmul.f32 %v1006, %v1006
      %v1009 = vsel %vm860, %v1007, 0.0
      %v1010 = vsel %vm860, %v1008, 0.0
      %v1011 = vadd.f32 %v1009, %v1010
      %1012 = vadd.xlane.f32.xlu0 %v1011
      %v1013 = vpop.xlane.xlu0 %1012
      %v1014 = vrot.slane %v1013, 4
      %v1015 = vadd.f32 %v1013, %v1014
      %v1016 = vrot.slane %v1015, 2
      %v1017 = vadd.f32 %v1015, %v1016
      %v1018 = vrot.slane %v1017, 1
      %v1019 = vadd.f32 %v1017, %v1018
      %s1020 = vtos %v1019
      %v1021 = vrcp.pop 512.0
      %s1022 = vtos %v1021
      %s1023 = smul.f32 %s1020, %s1022
      %s1024 = sadd.f32 %s1023, 1e-05
      %v1025 = vstv %s1024
      %v1026 = vrsqrt.pop %v1025
      %s1027 = vtos %v1026
      %v1028 = vstv %s1027
      %v1029 = vmul.f32 %v1005, %v1028
      %v1030 = vmul.f32 %v1006, %v1028
      %1031 = vset.pattern.permute.xlu0 1
      %1032 = vperm.xlu0 %1031, %v595
      %v1033 = vpop.permute.xlu0 %1032
      %v1035 = vmul.f32 %v1029, %v1033
      %v1036 = vmul.f32 %v1030, %v1033
      %1037 = vset.pattern.permute.xlu0 2
      %1038 = vperm.xlu0 %1037, %v595
      %v1039 = vpop.permute.xlu0 %1038
      %v1041 = vadd.f32 %v1035, %v1039
      %v1042 = vadd.f32 %v1036, %v1039
      %v1043 = vxor.u32 %v1041, 2147483648
      %v1044 = vxor.u32 %v1042, 2147483648
      %v1045 = vmul.f32 %v1043, 1.442695
      %v1046 = vpow.pop %v1045
      %v1047 = vmul.f32 %v1044, 1.442695
      %v1048 = vpow.pop %v1047
      %v1049 = vadd.f32 %v1046, 1.0
      %v1050 = vadd.f32 %v1048, 1.0
      %v1051 = vrcp.pop %v1049
      %v1052 = vmul.f32 1.0, %v1051
      %v1053 = vrcp.pop %v1050
      %v1054 = vmul.f32 1.0, %v1053
      %v1055 = vmul.f32 %v1041, %v1052
      %v1056 = vmul.f32 %v1042, %v1054
      %v1057 = vpack.c.bf16 %v588, %v588
      %v1058 = vpack.c.bf16 %v617, %v617
      %1060 = vset.pattern.permute.xlu0 0
      %1061 = vperm.xlu0 %1060, %v597
      %v1062 = vpop.permute.xlu0 %1061
      %v1066 = vrot.slane %v1057, 1
      %v1067 = vrot.slane %v1058, 1
      %v1069 = vsel %vm937, %v596, 0
      %v1072 = vsel %vm941, %v1066, 0
      %v1075 = vsel %vm941, %v1067, 0
      %1077 = vmatprep.subr.bf16.mxu0 %v1075
      %1078 = vmatpush1.bf16.msra.mxu0 %v1072
      %1079 = vmatprep.subr.bf16.mxu0 0
      %1080 = vmatpush1.bf16.msra.mxu0 0
      %1081 = vmatprep.subr.bf16.mxu0 0
      %1082 = vmatpush1.bf16.msra.mxu0 0
      %1083 = vmatprep.subr.bf16.mxu0 0
      %1084 = vmatpush1.bf16.msra.mxu0 0
      %1085 = vmatprep.subr.bf16.mxu0 0
      %1086 = vmatpush1.bf16.msra.mxu0 0
      %1087 = vmatprep.subr.bf16.mxu0 0
      %1088 = vmatpush1.bf16.msra.mxu0 0
      %1089 = vmatprep.subr.bf16.mxu0 0
      %1090 = vmatpush1.bf16.msra.mxu0 0
      %1091 = vmatprep.subr.bf16.mxu0 0
      %1092 = vmatpush1.bf16.msra.mxu0 0
      %1093 = vmatprep.subr.bf16.mxu0 0
      %1094 = vmatpush1.bf16.msra.mxu0 0
      %1095 = vmatprep.subr.bf16.mxu0 0
      %1096 = vmatpush1.bf16.msra.mxu0 0
      %1097 = vmatprep.subr.bf16.mxu0 0
      %1098 = vmatpush1.bf16.msra.mxu0 0
      %1099 = vmatprep.subr.bf16.mxu0 0
      %1100 = vmatpush1.bf16.msra.mxu0 0
      %1101 = vmatprep.subr.bf16.mxu0 0
      %1102 = vmatpush1.bf16.msra.mxu0 0
      %1103 = vmatprep.subr.bf16.mxu0 0
      %1104 = vmatpush1.bf16.msra.mxu0 0
      %1105 = vmatprep.subr.bf16.mxu0 0
      %1106 = vmatpush1.bf16.msra.mxu0 0
      %1107 = vmatprep.subr.bf16.mxu0 0
      %1108 = vmatpush1.bf16.msra.mxu0 0
      %1109 = vmatprep.mubr.bf16.mxu0 0
      %1110 = vmatmul.mubr.bf16.gmra.mrb[0].mxu0 %v1069
      %v1111 = vpop.f32.mrb[0].mxu0
      %v1112 = vadd.f32 %v1062, %v1111
      %v1113 = vpop.f32.mrb[0].mxu0
      %v1114 = vadd.f32 %v1062, %v1113
      %v1115 = vpop.f32.mrb[0].mxu0
      %v1116 = vpop.f32.mrb[0].mxu0
      %1117 = vdwg.mxu0
      %v1118 = vsel %vm860, %v1112, 0.0
      %v1119 = vsel %vm860, %v1114, 0.0
      %v1120 = vadd.f32 %v1118, %v1119
      %1121 = vadd.xlane.f32.xlu0 %v1120
      %v1122 = vpop.xlane.xlu0 %1121
      %v1123 = vrot.slane %v1122, 4
      %v1124 = vadd.f32 %v1122, %v1123
      %v1125 = vrot.slane %v1124, 2
      %v1126 = vadd.f32 %v1124, %v1125
      %v1127 = vrot.slane %v1126, 1
      %v1128 = vadd.f32 %v1126, %v1127
      %s1129 = vtos %v1128
      %v1130 = vrcp.pop 512.0
      %s1131 = vtos %v1130
      %s1132 = smul.f32 %s1129, %s1131
      %v1133 = vstv %s1132
      %v1134 = vsub.f32 %v1112, %v1133
      %v1135 = vsub.f32 %v1114, %v1133
      %v1136 = vmul.f32 %v1134, %v1134
      %v1137 = vmul.f32 %v1135, %v1135
      %v1138 = vsel %vm860, %v1136, 0.0
      %v1139 = vsel %vm860, %v1137, 0.0
      %v1140 = vadd.f32 %v1138, %v1139
      %1141 = vadd.xlane.f32.xlu0 %v1140
      %v1142 = vpop.xlane.xlu0 %1141
      %v1143 = vrot.slane %v1142, 4
      %v1144 = vadd.f32 %v1142, %v1143
      %v1145 = vrot.slane %v1144, 2
      %v1146 = vadd.f32 %v1144, %v1145
      %v1147 = vrot.slane %v1146, 1
      %v1148 = vadd.f32 %v1146, %v1147
      %s1149 = vtos %v1148
      %v1150 = vrcp.pop 512.0
      %s1151 = vtos %v1150
      %s1152 = smul.f32 %s1149, %s1151
      %s1153 = sadd.f32 %s1152, 1e-05
      %v1154 = vstv %s1153
      %v1155 = vrsqrt.pop %v1154
      %s1156 = vtos %v1155
      %v1157 = vstv %s1156
      %v1158 = vmul.f32 %v1134, %v1157
      %v1159 = vmul.f32 %v1135, %v1157
      %1160 = vset.pattern.permute.xlu0 1
      %1161 = vperm.xlu0 %1160, %v597
      %v1162 = vpop.permute.xlu0 %1161
      %v1164 = vmul.f32 %v1158, %v1162
      %v1165 = vmul.f32 %v1159, %v1162
      %1166 = vset.pattern.permute.xlu0 2
      %1167 = vperm.xlu0 %1166, %v597
      %v1168 = vpop.permute.xlu0 %1167
      %v1170 = vadd.f32 %v1164, %v1168
      %v1171 = vadd.f32 %v1165, %v1168
      %v1172 = vxor.u32 %v1170, 2147483648
      %v1173 = vxor.u32 %v1171, 2147483648
      %v1174 = vmul.f32 %v1172, 1.442695
      %v1175 = vpow.pop %v1174
      %v1176 = vmul.f32 %v1173, 1.442695
      %v1177 = vpow.pop %v1176
      %v1178 = vadd.f32 %v1175, 1.0
      %v1179 = vadd.f32 %v1177, 1.0
      %v1180 = vrcp.pop %v1178
      %v1181 = vmul.f32 1.0, %v1180
      %v1182 = vrcp.pop %v1179
      %v1183 = vmul.f32 1.0, %v1182
      %v1184 = vmul.f32 %v1170, %v1181
      %v1185 = vmul.f32 %v1171, %v1183
      %1187 = vset.pattern.permute.xlu0 4
      %1188 = vperm.xlu0 %1187, %v598
      %v1189 = vpop.permute.xlu0 %1188
      %v1191 = vmul.f32 %v1184, %v1189
      %v1192 = vmul.f32 %v1185, %v1189
      %1193 = vrot.lane.b32.xlu0 %v1184, 17
      %v1194 = vpop.permute.xlu0 %1193
      %1195 = vrot.lane.b32.xlu0 %v1185, 17
      %v1196 = vpop.permute.xlu0 %1195
      %v1197 = vsel %vm625, %v1194, %v1196
      %v1198 = vsel %vm625, %v1196, %v1194
      %v1199 = vmul.f32 %v1198, %v631
      %v1200 = vmul.f32 %v1197, %v635
      %1201 = vset.pattern.permute.xlu0 0
      %1202 = vperm.xlu0 %1201, %v598
      %v1203 = vpop.permute.xlu0 %1202
      %v1205 = vmul.f32 %v1199, %v1203
      %v1206 = vmul.f32 %v1200, %v1203
      %v1207 = vadd.f32 %v1191, %v1205
      %v1208 = vadd.f32 %v1192, %v1206
      %1209 = vrot.lane.b32.xlu0 %v1184, 16
      %v1210 = vpop.permute.xlu0 %1209
      %1211 = vrot.lane.b32.xlu0 %v1185, 16
      %v1212 = vpop.permute.xlu0 %1211
      %v1213 = vsel %vm653, %v1210, %v1212
      %v1214 = vsel %vm653, %v1212, %v1210
      %v1215 = vmul.f32 %v1214, %v659
      %v1216 = vmul.f32 %v1213, %v663
      %1217 = vset.pattern.permute.xlu0 1
      %1218 = vperm.xlu0 %1217, %v598
      %v1219 = vpop.permute.xlu0 %1218
      %v1221 = vmul.f32 %v1215, %v1219
      %v1222 = vmul.f32 %v1216, %v1219
      %v1223 = vadd.f32 %v1207, %v1221
      %v1224 = vadd.f32 %v1208, %v1222
      %1225 = vrot.lane.b32.xlu0 %v1184, 15
      %v1226 = vpop.permute.xlu0 %1225
      %1227 = vrot.lane.b32.xlu0 %v1185, 15
      %v1228 = vpop.permute.xlu0 %1227
      %v1229 = vsel %vm681, %v1226, %v1228
      %v1230 = vsel %vm681, %v1228, %v1226
      %v1231 = vmul.f32 %v1230, %v687
      %v1232 = vmul.f32 %v1229, %v691
      %1233 = vset.pattern.permute.xlu0 2
      %1234 = vperm.xlu0 %1233, %v598
      %v1235 = vpop.permute.xlu0 %1234
      %v1237 = vmul.f32 %v1231, %v1235
      %v1238 = vmul.f32 %v1232, %v1235
      %v1239 = vadd.f32 %v1223, %v1237
      %v1240 = vadd.f32 %v1224, %v1238
      %1241 = vrot.lane.b32.xlu0 %v1184, 1
      %v1242 = vpop.permute.xlu0 %1241
      %1243 = vrot.lane.b32.xlu0 %v1185, 1
      %v1244 = vpop.permute.xlu0 %1243
      %v1245 = vsel %vm709, %v1242, %v1244
      %v1246 = vsel %vm709, %v1244, %v1242
      %v1247 = vmul.f32 %v1246, %v715
      %v1248 = vmul.f32 %v1245, %v719
      %1249 = vset.pattern.permute.xlu0 3
      %1250 = vperm.xlu0 %1249, %v598
      %v1251 = vpop.permute.xlu0 %1250
      %v1253 = vmul.f32 %v1247, %v1251
      %v1254 = vmul.f32 %v1248, %v1251
      %v1255 = vadd.f32 %v1239, %v1253
      %v1256 = vadd.f32 %v1240, %v1254
      %1257 = vrot.lane.b32.xlu0 %v1184, 127
      %v1258 = vpop.permute.xlu0 %1257
      %1259 = vrot.lane.b32.xlu0 %v1185, 127
      %v1260 = vpop.permute.xlu0 %1259
      %v1261 = vsel %vm737, %v1258, %v1260
      %v1262 = vsel %vm737, %v1260, %v1258
      %v1263 = vmul.f32 %v1261, %v743
      %v1264 = vmul.f32 %v1262, %v747
      %1265 = vset.pattern.permute.xlu0 5
      %1266 = vperm.xlu0 %1265, %v598
      %v1267 = vpop.permute.xlu0 %1266
      %v1269 = vmul.f32 %v1263, %v1267
      %v1270 = vmul.f32 %v1264, %v1267
      %v1271 = vadd.f32 %v1255, %v1269
      %v1272 = vadd.f32 %v1256, %v1270
      %1273 = vrot.lane.b32.xlu0 %v1184, 113
      %v1274 = vpop.permute.xlu0 %1273
      %1275 = vrot.lane.b32.xlu0 %v1185, 113
      %v1276 = vpop.permute.xlu0 %1275
      %v1277 = vsel %vm765, %v1274, %v1276
      %v1278 = vsel %vm765, %v1276, %v1274
      %v1279 = vmul.f32 %v1277, %v771
      %v1280 = vmul.f32 %v1278, %v775
      %1281 = vset.pattern.permute.xlu0 6
      %1282 = vperm.xlu0 %1281, %v598
      %v1283 = vpop.permute.xlu0 %1282
      %v1285 = vmul.f32 %v1279, %v1283
      %v1286 = vmul.f32 %v1280, %v1283
      %v1287 = vadd.f32 %v1271, %v1285
      %v1288 = vadd.f32 %v1272, %v1286
      %1289 = vrot.lane.b32.xlu0 %v1184, 112
      %v1290 = vpop.permute.xlu0 %1289
      %1291 = vrot.lane.b32.xlu0 %v1185, 112
      %v1292 = vpop.permute.xlu0 %1291
      %v1293 = vsel %vm793, %v1290, %v1292
      %v1294 = vsel %vm793, %v1292, %v1290
      %v1295 = vmul.f32 %v1293, %v799
      %v1296 = vmul.f32 %v1294, %v803
      %1297 = vset.pattern.permute.xlu0 7
      %1298 = vperm.xlu0 %1297, %v598
      %v1299 = vpop.permute.xlu0 %1298
      %v1301 = vmul.f32 %v1295, %v1299
      %v1302 = vmul.f32 %v1296, %v1299
      %v1303 = vadd.f32 %v1287, %v1301
      %v1304 = vadd.f32 %v1288, %v1302
      %1305 = vrot.lane.b32.xlu0 %v1184, 111
      %v1306 = vpop.permute.xlu0 %1305
      %1307 = vrot.lane.b32.xlu0 %v1185, 111
      %v1308 = vpop.permute.xlu0 %1307
      %v1309 = vsel %vm821, %v1306, %v1308
      %v1310 = vsel %vm821, %v1308, %v1306
      %v1311 = vmul.f32 %v1309, %v827
      %v1312 = vmul.f32 %v1310, %v831
      %1313 = vset.pattern.permute.xlu0 8
      %1314 = vperm.xlu0 %1313, %v598
      %v1315 = vpop.permute.xlu0 %1314
      %v1317 = vmul.f32 %v1311, %v1315
      %v1318 = vmul.f32 %v1312, %v1315
      %v1319 = vadd.f32 %v1303, %v1317
      %v1320 = vadd.f32 %v1304, %v1318
      %1321 = vset.pattern.permute.xlu0 9
      %1322 = vperm.xlu0 %1321, %v598
      %v1323 = vpop.permute.xlu0 %1322
      %v1325 = vadd.f32 %v1319, %v1323
      %v1326 = vadd.f32 %v1320, %v1323
      %v1327 = vsel %vm860, %v1325, 0.0
      %v1328 = vsel %vm860, %v1326, 0.0
      %v1329 = vadd.f32 %v1327, %v1328
      %1330 = vadd.xlane.f32.xlu0 %v1329
      %v1331 = vpop.xlane.xlu0 %1330
      %v1332 = vrot.slane %v1331, 4
      %v1333 = vadd.f32 %v1331, %v1332
      %v1334 = vrot.slane %v1333, 2
      %v1335 = vadd.f32 %v1333, %v1334
      %v1336 = vrot.slane %v1335, 1
      %v1337 = vadd.f32 %v1335, %v1336
      %s1338 = vtos %v1337
      %v1339 = vrcp.pop 512.0
      %s1340 = vtos %v1339
      %s1341 = smul.f32 %s1338, %s1340
      %v1342 = vstv %s1341
      %v1343 = vsub.f32 %v1325, %v1342
      %v1344 = vsub.f32 %v1326, %v1342
      %v1345 = vmul.f32 %v1343, %v1343
      %v1346 = vmul.f32 %v1344, %v1344
      %v1347 = vsel %vm860, %v1345, 0.0
      %v1348 = vsel %vm860, %v1346, 0.0
      %v1349 = vadd.f32 %v1347, %v1348
      %1350 = vadd.xlane.f32.xlu0 %v1349
      %v1351 = vpop.xlane.xlu0 %1350
      %v1352 = vrot.slane %v1351, 4
      %v1353 = vadd.f32 %v1351, %v1352
      %v1354 = vrot.slane %v1353, 2
      %v1355 = vadd.f32 %v1353, %v1354
      %v1356 = vrot.slane %v1355, 1
      %v1357 = vadd.f32 %v1355, %v1356
      %s1358 = vtos %v1357
      %v1359 = vrcp.pop 512.0
      %s1360 = vtos %v1359
      %s1361 = smul.f32 %s1358, %s1360
      %s1362 = sadd.f32 %s1361, 1e-05
      %v1363 = vstv %s1362
      %v1364 = vrsqrt.pop %v1363
      %s1365 = vtos %v1364
      %v1366 = vstv %s1365
      %v1367 = vmul.f32 %v1343, %v1366
      %v1368 = vmul.f32 %v1344, %v1366
      %1369 = vset.pattern.permute.xlu0 10
      %1370 = vperm.xlu0 %1369, %v598
      %v1371 = vpop.permute.xlu0 %1370
      %v1373 = vmul.f32 %v1367, %v1371
      %v1374 = vmul.f32 %v1368, %v1371
      %1375 = vset.pattern.permute.xlu0 11
      %1376 = vperm.xlu0 %1375, %v598
      %v1377 = vpop.permute.xlu0 %1376
      %v1379 = vadd.f32 %v1373, %v1377
      %v1380 = vadd.f32 %v1374, %v1377
      %v1381 = vpack.c.bf16 %v1379, %v1379
      %v1382 = vpack.c.bf16 %v1380, %v1380
      %1384 = vset.pattern.permute.xlu0 0
      %1385 = vperm.xlu0 %1384, %v600
      %v1386 = vpop.permute.xlu0 %1385
      %v1389 = vsel %vm937, %v599, 0
      %v1392 = vsel %vm941, %v1381, 0
      %v1395 = vsel %vm941, %v1382, 0
      %1397 = vmatprep.subr.bf16.mxu0 %v1395
      %1398 = vmatpush1.bf16.msra.mxu0 %v1392
      %1399 = vmatprep.subr.bf16.mxu0 0
      %1400 = vmatpush1.bf16.msra.mxu0 0
      %1401 = vmatprep.subr.bf16.mxu0 0
      %1402 = vmatpush1.bf16.msra.mxu0 0
      %1403 = vmatprep.subr.bf16.mxu0 0
      %1404 = vmatpush1.bf16.msra.mxu0 0
      %1405 = vmatprep.subr.bf16.mxu0 0
      %1406 = vmatpush1.bf16.msra.mxu0 0
      %1407 = vmatprep.subr.bf16.mxu0 0
      %1408 = vmatpush1.bf16.msra.mxu0 0
      %1409 = vmatprep.subr.bf16.mxu0 0
      %1410 = vmatpush1.bf16.msra.mxu0 0
      %1411 = vmatprep.subr.bf16.mxu0 0
      %1412 = vmatpush1.bf16.msra.mxu0 0
      %1413 = vmatprep.subr.bf16.mxu0 0
      %1414 = vmatpush1.bf16.msra.mxu0 0
      %1415 = vmatprep.subr.bf16.mxu0 0
      %1416 = vmatpush1.bf16.msra.mxu0 0
      %1417 = vmatprep.subr.bf16.mxu0 0
      %1418 = vmatpush1.bf16.msra.mxu0 0
      %1419 = vmatprep.subr.bf16.mxu0 0
      %1420 = vmatpush1.bf16.msra.mxu0 0
      %1421 = vmatprep.subr.bf16.mxu0 0
      %1422 = vmatpush1.bf16.msra.mxu0 0
      %1423 = vmatprep.subr.bf16.mxu0 0
      %1424 = vmatpush1.bf16.msra.mxu0 0
      %1425 = vmatprep.subr.bf16.mxu0 0
      %1426 = vmatpush1.bf16.msra.mxu0 0
      %1427 = vmatprep.subr.bf16.mxu0 0
      %1428 = vmatpush1.bf16.msra.mxu0 0
      %1429 = vmatprep.mubr.bf16.mxu0 0
      %1430 = vmatmul.mubr.bf16.gmra.mrb[0].mxu0 %v1389
      %v1431 = vpop.f32.mrb[0].mxu0
      %v1432 = vadd.f32 %v1386, %v1431
      %v1433 = vpop.f32.mrb[0].mxu0
      %v1434 = vadd.f32 %v1386, %v1433
      %v1435 = vpop.f32.mrb[0].mxu0
      %v1436 = vpop.f32.mrb[0].mxu0
      %1437 = vdwg.mxu0
      %v1438 = vsel %vm860, %v1432, 0.0
      %v1439 = vsel %vm860, %v1434, 0.0
      %v1440 = vadd.f32 %v1438, %v1439
      %1441 = vadd.xlane.f32.xlu0 %v1440
      %v1442 = vpop.xlane.xlu0 %1441
      %v1443 = vrot.slane %v1442, 4
      %v1444 = vadd.f32 %v1442, %v1443
      %v1445 = vrot.slane %v1444, 2
      %v1446 = vadd.f32 %v1444, %v1445
      %v1447 = vrot.slane %v1446, 1
      %v1448 = vadd.f32 %v1446, %v1447
      %s1449 = vtos %v1448
      %v1450 = vrcp.pop 512.0
      %s1451 = vtos %v1450
      %s1452 = smul.f32 %s1449, %s1451
      %v1453 = vstv %s1452
      %v1454 = vsub.f32 %v1432, %v1453
      %v1455 = vsub.f32 %v1434, %v1453
      %v1456 = vmul.f32 %v1454, %v1454
      %v1457 = vmul.f32 %v1455, %v1455
      %v1458 = vsel %vm860, %v1456, 0.0
      %v1459 = vsel %vm860, %v1457, 0.0
      %v1460 = vadd.f32 %v1458, %v1459
      %1461 = vadd.xlane.f32.xlu0 %v1460
      %v1462 = vpop.xlane.xlu0 %1461
      %v1463 = vrot.slane %v1462, 4
      %v1464 = vadd.f32 %v1462, %v1463
      %v1465 = vrot.slane %v1464, 2
      %v1466 = vadd.f32 %v1464, %v1465
      %v1467 = vrot.slane %v1466, 1
      %v1468 = vadd.f32 %v1466, %v1467
      %s1469 = vtos %v1468
      %v1470 = vrcp.pop 512.0
      %s1471 = vtos %v1470
      %s1472 = smul.f32 %s1469, %s1471
      %s1473 = sadd.f32 %s1472, 1e-05
      %v1474 = vstv %s1473
      %v1475 = vrsqrt.pop %v1474
      %s1476 = vtos %v1475
      %v1477 = vstv %s1476
      %v1478 = vmul.f32 %v1454, %v1477
      %v1479 = vmul.f32 %v1455, %v1477
      %1480 = vset.pattern.permute.xlu0 1
      %1481 = vperm.xlu0 %1480, %v600
      %v1482 = vpop.permute.xlu0 %1481
      %v1484 = vmul.f32 %v1478, %v1482
      %v1485 = vmul.f32 %v1479, %v1482
      %1486 = vset.pattern.permute.xlu0 2
      %1487 = vperm.xlu0 %1486, %v600
      %v1488 = vpop.permute.xlu0 %1487
      %v1490 = vadd.f32 %v1484, %v1488
      %v1491 = vadd.f32 %v1485, %v1488
      %v1492 = vxor.u32 %v1490, 2147483648
      %v1493 = vxor.u32 %v1491, 2147483648
      %v1494 = vmul.f32 %v1492, 1.442695
      %v1495 = vpow.pop %v1494
      %v1496 = vmul.f32 %v1493, 1.442695
      %v1497 = vpow.pop %v1496
      %v1498 = vadd.f32 %v1495, 1.0
      %v1499 = vadd.f32 %v1497, 1.0
      %v1500 = vrcp.pop %v1498
      %v1501 = vmul.f32 1.0, %v1500
      %v1502 = vrcp.pop %v1499
      %v1503 = vmul.f32 1.0, %v1502
      %v1504 = vmul.f32 %v1490, %v1501
      %v1505 = vmul.f32 %v1491, %v1503
      %v1507 = vsel %vm937, %v602, 0
      %v1510 = vsel %vm860, %v1504, 0
      %v1513 = vsel %vm860, %v1505, 0
      %1515 = vmatprep.subr.mxu0 %v1513
      %1516 = vmatpush1.msra.mxu0 %v1510
      %1517 = vmatprep.subr.mxu0 0.0
      %1518 = vmatpush1.msra.mxu0 0.0
      %1519 = vmatprep.subr.mxu0 0.0
      %1520 = vmatpush1.msra.mxu0 0.0
      %1521 = vmatprep.subr.mxu0 0.0
      %1522 = vmatpush1.msra.mxu0 0.0
      %1523 = vmatprep.subr.mxu0 0.0
      %1524 = vmatpush1.msra.mxu0 0.0
      %1525 = vmatprep.subr.mxu0 0.0
      %1526 = vmatpush1.msra.mxu0 0.0
      %1527 = vmatprep.subr.mxu0 0.0
      %1528 = vmatpush1.msra.mxu0 0.0
      %1529 = vmatprep.subr.mxu0 0.0
      %1530 = vmatpush1.msra.mxu0 0.0
      %1531 = vmatprep.subr.mxu0 0.0
      %1532 = vmatpush1.msra.mxu0 0.0
      %1533 = vmatprep.subr.mxu0 0.0
      %1534 = vmatpush1.msra.mxu0 0.0
      %1535 = vmatprep.subr.mxu0 0.0
      %1536 = vmatpush1.msra.mxu0 0.0
      %1537 = vmatprep.subr.mxu0 0.0
      %1538 = vmatpush1.msra.mxu0 0.0
      %1539 = vmatprep.subr.mxu0 0.0
      %1540 = vmatpush1.msra.mxu0 0.0
      %1541 = vmatprep.subr.mxu0 0.0
      %1542 = vmatpush1.msra.mxu0 0.0
      %1543 = vmatprep.subr.mxu0 0.0
      %1544 = vmatpush1.msra.mxu0 0.0
      %1545 = vmatprep.subr.mxu0 0.0
      %1546 = vmatpush1.msra.mxu0 0.0
      %1547 = vmatprep.subr.mxu0 0.0
      %1548 = vmatpush1.msra.mxu0 0.0
      %1549 = vmatprep.subr.mxu0 0.0
      %1550 = vmatpush1.msra.mxu0 0.0
      %1551 = vmatprep.subr.mxu0 0.0
      %1552 = vmatpush1.msra.mxu0 0.0
      %1553 = vmatprep.subr.mxu0 0.0
      %1554 = vmatpush1.msra.mxu0 0.0
      %1555 = vmatprep.subr.mxu0 0.0
      %1556 = vmatpush1.msra.mxu0 0.0
      %1557 = vmatprep.subr.mxu0 0.0
      %1558 = vmatpush1.msra.mxu0 0.0
      %1559 = vmatprep.subr.mxu0 0.0
      %1560 = vmatpush1.msra.mxu0 0.0
      %1561 = vmatprep.subr.mxu0 0.0
      %1562 = vmatpush1.msra.mxu0 0.0
      %1563 = vmatprep.subr.mxu0 0.0
      %1564 = vmatpush1.msra.mxu0 0.0
      %1565 = vmatprep.subr.mxu0 0.0
      %1566 = vmatpush1.msra.mxu0 0.0
      %1567 = vmatprep.subr.mxu0 0.0
      %1568 = vmatpush1.msra.mxu0 0.0
      %1569 = vmatprep.subr.mxu0 0.0
      %1570 = vmatpush1.msra.mxu0 0.0
      %1571 = vmatprep.subr.mxu0 0.0
      %1572 = vmatpush1.msra.mxu0 0.0
      %1573 = vmatprep.subr.mxu0 0.0
      %1574 = vmatpush1.msra.mxu0 0.0
      %1575 = vmatprep.subr.mxu0 0.0
      %1576 = vmatpush1.msra.mxu0 0.0
      %1577 = vmatprep.subr.mxu0 0.0
      %1578 = vmatpush1.msra.mxu0 0.0
      %1579 = vmatprep.mubr.f32.mxu0 0.0
      %1580 = vmatmul.mubr.f32.gmra.mrb[0].mxu0 %v1507
      %v1581 = vpop.f32.mrb[0].mxu0
      %v1582 = vadd.f32 0.0, %v1581
      %v1583 = vpop.f32.mrb[0].mxu0
      %v1584 = vadd.f32 0.0, %v1583
      %1585 = vdwg.mxu0
      %v1587 = vsel %vm937, %v601, 0
      %v1590 = vsel %vm860, %v1055, 0
      %v1593 = vsel %vm860, %v1056, 0
      %1595 = vmatprep.subr.mxu0 %v1593
      %1596 = vmatpush1.msra.mxu0 %v1590
      %1597 = vmatprep.subr.mxu0 0.0
      %1598 = vmatpush1.msra.mxu0 0.0
      %1599 = vmatprep.subr.mxu0 0.0
      %1600 = vmatpush1.msra.mxu0 0.0
      %1601 = vmatprep.subr.mxu0 0.0
      %1602 = vmatpush1.msra.mxu0 0.0
      %1603 = vmatprep.subr.mxu0 0.0
      %1604 = vmatpush1.msra.mxu0 0.0
      %1605 = vmatprep.subr.mxu0 0.0
      %1606 = vmatpush1.msra.mxu0 0.0
      %1607 = vmatprep.subr.mxu0 0.0
      %1608 = vmatpush1.msra.mxu0 0.0
      %1609 = vmatprep.subr.mxu0 0.0
      %1610 = vmatpush1.msra.mxu0 0.0
      %1611 = vmatprep.subr.mxu0 0.0
      %1612 = vmatpush1.msra.mxu0 0.0
      %1613 = vmatprep.subr.mxu0 0.0
      %1614 = vmatpush1.msra.mxu0 0.0
      %1615 = vmatprep.subr.mxu0 0.0
      %1616 = vmatpush1.msra.mxu0 0.0
      %1617 = vmatprep.subr.mxu0 0.0
      %1618 = vmatpush1.msra.mxu0 0.0
      %1619 = vmatprep.subr.mxu0 0.0
      %1620 = vmatpush1.msra.mxu0 0.0
      %1621 = vmatprep.subr.mxu0 0.0
      %1622 = vmatpush1.msra.mxu0 0.0
      %1623 = vmatprep.subr.mxu0 0.0
      %1624 = vmatpush1.msra.mxu0 0.0
      %1625 = vmatprep.subr.mxu0 0.0
      %1626 = vmatpush1.msra.mxu0 0.0
      %1627 = vmatprep.subr.mxu0 0.0
      %1628 = vmatpush1.msra.mxu0 0.0
      %1629 = vmatprep.subr.mxu0 0.0
      %1630 = vmatpush1.msra.mxu0 0.0
      %1631 = vmatprep.subr.mxu0 0.0
      %1632 = vmatpush1.msra.mxu0 0.0
      %1633 = vmatprep.subr.mxu0 0.0
      %1634 = vmatpush1.msra.mxu0 0.0
      %1635 = vmatprep.subr.mxu0 0.0
      %1636 = vmatpush1.msra.mxu0 0.0
      %1637 = vmatprep.subr.mxu0 0.0
      %1638 = vmatpush1.msra.mxu0 0.0
      %1639 = vmatprep.subr.mxu0 0.0
      %1640 = vmatpush1.msra.mxu0 0.0
      %1641 = vmatprep.subr.mxu0 0.0
      %1642 = vmatpush1.msra.mxu0 0.0
      %1643 = vmatprep.subr.mxu0 0.0
      %1644 = vmatpush1.msra.mxu0 0.0
      %1645 = vmatprep.subr.mxu0 0.0
      %1646 = vmatpush1.msra.mxu0 0.0
      %1647 = vmatprep.subr.mxu0 0.0
      %1648 = vmatpush1.msra.mxu0 0.0
      %1649 = vmatprep.subr.mxu0 0.0
      %1650 = vmatpush1.msra.mxu0 0.0
      %1651 = vmatprep.subr.mxu0 0.0
      %1652 = vmatpush1.msra.mxu0 0.0
      %1653 = vmatprep.subr.mxu0 0.0
      %1654 = vmatpush1.msra.mxu0 0.0
      %1655 = vmatprep.subr.mxu0 0.0
      %1656 = vmatpush1.msra.mxu0 0.0
      %1657 = vmatprep.subr.mxu0 0.0
      %1658 = vmatpush1.msra.mxu0 0.0
      %1659 = vmatprep.mubr.f32.mxu0 0.0
      %1660 = vmatmul.mubr.f32.gmra.mrb[0].mxu0 %v1587
      %v1661 = vpop.f32.mrb[0].mxu0
      %v1662 = vadd.f32 %v1582, %v1661
      %v1663 = vpop.f32.mrb[0].mxu0
      %v1664 = vadd.f32 %v1584, %v1663
      %1665 = vdwg.mxu0
      %v1668 = vcombine.low %v1662, %v1664
      %1670 = vst [vmem:[%s565] sm:$0xff] %v1668
      %p1671 = scmp.lt.s32.totalorder %s28, 1
      %s1672 = scalar_select %p1671, %s28, 1
      %s1673 = smul.addr %s1672, 2
      %s1674 = smul.addr %s1673, 4
      %s1675 = scalar_lea.vmem %s17, %s1674
      // Predicated region
      $region89: #{decoder_block_forward.3} parent=87 // pred_check
        %p1676 = pneg %p413
      $region90: #{decoder_block_forward.3} parent=87 // pred_check_branch
        %1678 = sbr.rel (%p1676) target = $region92
      $region91: #{decoder_block_forward.3} parent=87 // pred_region
        _
      $region92: #{decoder_block_forward.3} parent=87 // pred_fallthru
        _
    $region88: #{decoder_block_forward.3} parent=5 // pred_fallthru
      _
    %p1679 = scmp.le.s32.totalorder 2, %s23
    // Predicated region
    $region93: #{decoder_block_forward.3} parent=5 // pred_check
      %p1680 = pneg %p1679
    $region94: #{decoder_block_forward.3} parent=5 // pred_check_branch
      %1682 = sbr.rel (%p1680) target = $region96
    $region95: #{decoder_block_forward.3} parent=5 // pred_region
      %s1683 = ssub.s32 %s23, 2
      // Predicated region
      $region97: #{decoder_block_forward.3} parent=95 // pred_check
        %p1684 = pneg %p419
      $region98: #{decoder_block_forward.3} parent=95 // pred_check_branch
        %1686 = sbr.rel (%p1684) target = $region100
      $region99: #{decoder_block_forward.3} parent=95 // pred_region
        %p1687 = scmp.lt.s32.totalorder %s29, 1
        %s1688 = scalar_select %p1687, %s29, 1
        %s1689 = smul.addr %s1688, 2
        %s1690 = smul.addr %s1689, 4
        %s1691 = scalar_lea.vmem %s17, %s1690
      $region100: #{decoder_block_forward.3} parent=95 // pred_fallthru
        _
    $region96: #{decoder_block_forward.3} parent=5 // pred_fallthru
      _
  $region6: #{decoder_block_forward.3} parent=0 // loop_footer
    %s27 = sadd.s32 1, %s23
  $region7: #{decoder_block_forward.3} parent=0 // loop_footer_branch
    %22 = sbr.rel target = $region3
  $region8: #{decoder_block_forward.3} parent=0 // loop_exit
    _

// kernel: decoder_block_forward.2
$region0: #{decoder_block_forward.2}
  #allocation0 [shape = 'u32[]', space=smem, size = 0x4, offset = 0x4, fixed_abs, tag = 'smem constant byte address 0x4 - core index']
  #allocation1 [shape = 'u32[144,128]{1,0:T(1,128)}', space=vmem, size = 0x12000, scoped, tag = 'internal scratch']
  %s0 = inlined_call_operand.vmem [shape: f32[2,4,64], index: 0, kind: input, shape index: {}]
  %s1 = inlined_call_operand.vmem [shape: bf16[64,256], index: 1, kind: input, shape index: {}]
  %s2 = inlined_call_operand.vmem [shape: f32[2,4,256], index: 2, kind: input, shape index: {}]
  %s3 = inlined_call_operand.vmem [shape: f32[9,256], index: 3, kind: input, shape index: {}]
  %s4 = inlined_call_operand.vmem [shape: f32[8,4], index: 4, kind: input, shape index: {}]
  %s5 = inlined_call_operand.vmem [shape: f32[8,4], index: 5, kind: input, shape index: {}]
  %s6 = inlined_call_operand.vmem [shape: f32[4,2], index: 6, kind: input, shape index: {}]
  %s7 = inlined_call_operand.vmem [shape: f32[4,2], index: 7, kind: input, shape index: {}]
  %s8 = inlined_call_operand.vmem [shape: f32[1,4], index: 8, kind: input, shape index: {}]
  %s9 = inlined_call_operand.vmem [shape: f32[4,1], index: 9, kind: input, shape index: {}]
  %s10 = inlined_call_operand.vmem [shape: f32[1,2], index: 10, kind: input, shape index: {}]
  %s11 = inlined_call_operand.vmem [shape: f32[2,1], index: 11, kind: input, shape index: {}]
  %s12 = inlined_call_operand.vmem [shape: f32[3,4,12], index: 12, kind: input, shape index: {}]
  %s13 = inlined_call_operand.vmem [shape: bf16[3,4,4], index: 13, kind: input, shape index: {}]
  %s14 = inlined_call_operand.vmem [shape: f32[3,4,3], index: 14, kind: input, shape index: {}]
  %s15 = inlined_call_operand.vmem [shape: bf16[3,4,4], index: 15, kind: input, shape index: {}]
  %s16 = inlined_call_operand.vmem [shape: f32[3,4,3], index: 16, kind: input, shape index: {}]
  %s17 = inlined_call_operand.vmem [shape: f32[3,4,12], index: 17, kind: input, shape index: {}]
  %s18 = inlined_call_operand.vmem [shape: bf16[3,4,4], index: 18, kind: input, shape index: {}]
  %s19 = inlined_call_operand.vmem [shape: f32[3,4,3], index: 19, kind: input, shape index: {}]
  %s20 = inlined_call_operand.vmem [shape: f32[4,12], index: 20, kind: input, shape index: {}]
  %s21 = inlined_call_operand.vmem [shape: bf16[2,4], index: 21, kind: input, shape index: {}]
  %s22 = inlined_call_operand.vmem [shape: f32[2,3], index: 22, kind: input, shape index: {}]
  %s23 = inlined_call_operand.vmem [shape: bf16[4,4], index: 23, kind: input, shape index: {}]
  %s24 = inlined_call_operand.vmem [shape: f32[4,3], index: 24, kind: input, shape index: {}]
  %s25 = inlined_call_operand.vmem [shape: f32[4,12], index: 25, kind: input, shape index: {}]
  %s26 = inlined_call_operand.vmem [shape: bf16[2,4], index: 26, kind: input, shape index: {}]
  %s27 = inlined_call_operand.vmem [shape: f32[2,3], index: 27, kind: input, shape index: {}]
  %s28 = inlined_call_operand.vmem [shape: f32[2,4,256], index: 28, kind: output, shape index: {}]
  %s29 = sld [smem:[#allocation0]]
  $region145: #{decoder_block_forward.2} parent=0
    _
  %s31 = ssub.s32 1, %s29
  %s32 = scalar_select 0, %s31, %s29
  loop: start=0, step=1, limit=4
  $region2: #{decoder_block_forward.2} parent=0 // loop_pre_header
    _
  $region3: #{decoder_block_forward.2} parent=0 // loop_header
    %s34 = sphi 0, %s38
    %p35 = scmp.ge.s32.totalorder %s34, 4
    %s44 = sphi 0, %s46
    %s47 = sphi 0, %s44
    %s48 = sphi 0, %s47
    %s64 = sphi 0, %s48
    %s68 = sphi 0, %s68
    %s70 = sphi 0, %s68
    %s71 = sphi 0, %s70
    %s85 = sphi 0, %s71
    %s91 = sphi 0, %s93
    %s94 = sphi 0, %s91
    %s95 = sphi 0, %s94
    %s111 = sphi 0, %s95
    %s115 = sphi 0, %s115
    %s117 = sphi 0, %s115
    %s118 = sphi 0, %s117
    %s132 = sphi 0, %s118
    %s136 = sphi 0, %s136
    %s138 = sphi 0, %s136
    %s139 = sphi 0, %s138
    %s153 = sphi 0, %s139
    %s157 = sphi 0, %s157
    %s159 = sphi 0, %s157
    %s160 = sphi 0, %s159
    %s174 = sphi 0, %s160
    %s178 = sphi 0, %s178
    %s180 = sphi 0, %s178
    %s181 = sphi 0, %s180
    %s195 = sphi 0, %s181
    %s199 = sphi 0, %s199
    %s201 = sphi 0, %s199
    %s202 = sphi 0, %s201
    %s216 = sphi 0, %s202
    %s220 = sphi 0, %s220
    %s222 = sphi 0, %s220
    %s223 = sphi 0, %s222
    %s237 = sphi 0, %s223
    %s241 = sphi 0, %s241
    %s243 = sphi 0, %s241
    %s244 = sphi 0, %s243
    %s258 = sphi 0, %s244
    %s262 = sphi 0, %s262
    %s264 = sphi 0, %s262
    %s265 = sphi 0, %s264
    %s279 = sphi 0, %s265
    %s283 = sphi 0, %s283
    %s285 = sphi 0, %s283
    %s286 = sphi 0, %s285
    %s300 = sphi 0, %s286
    %s304 = sphi 0, %s304
    %s306 = sphi 0, %s304
    %s307 = sphi 0, %s306
    %s321 = sphi 0, %s307
    %s325 = sphi 0, %s325
    %s327 = sphi 0, %s325
    %s328 = sphi 0, %s327
    %s342 = sphi 0, %s328
    %s346 = sphi 0, %s346
    %s348 = sphi 0, %s346
    %s349 = sphi 0, %s348
    %s363 = sphi 0, %s349
    %s367 = sphi 0, %s367
    %s369 = sphi 0, %s367
    %s370 = sphi 0, %s369
    %s384 = sphi 0, %s370
    %s388 = sphi 0, %s388
    %s390 = sphi 0, %s388
    %s391 = sphi 0, %s390
    %s405 = sphi 0, %s391
    %s409 = sphi 0, %s409
    %s411 = sphi 0, %s409
    %s412 = sphi 0, %s411
    %s426 = sphi 0, %s412
    %s430 = sphi 0, %s430
    %s432 = sphi 0, %s430
    %s433 = sphi 0, %s432
    %s447 = sphi 0, %s433
    %s451 = sphi 0, %s451
    %s453 = sphi 0, %s451
    %s454 = sphi 0, %s453
    %s468 = sphi 0, %s454
    %s472 = sphi 0, %s472
    %s474 = sphi 0, %s472
    %s475 = sphi 0, %s474
    %s489 = sphi 0, %s475
    %s493 = sphi 0, %s493
    %s495 = sphi 0, %s493
    %s496 = sphi 0, %s495
    %s510 = sphi 0, %s496
    %s514 = sphi 0, %s514
    %s516 = sphi 0, %s514
    %s517 = sphi 0, %s516
    %s531 = sphi 0, %s517
    %s535 = sphi 0, %s535
    %s537 = sphi 0, %s535
    %s538 = sphi 0, %s537
    %s552 = sphi 0, %s538
    %s556 = sphi 0, %s556
    %s558 = sphi 0, %s556
    %s559 = sphi 0, %s558
    %s573 = sphi 0, %s559
    %s577 = sphi 0, %s577
    %s579 = sphi 0, %s577
    %s580 = sphi 0, %s579
    %s594 = sphi 0, %s580
    %s598 = sphi 0, %s598
    %s600 = sphi 0, %s598
    %s601 = sphi 0, %s600
    %s615 = sphi 0, %s601
    %s619 = sphi 0, %s619
    %s621 = sphi 0, %s619
    %s622 = sphi 0, %s621
    %s636 = sphi 0, %s622
    %s642 = sphi 0, %s644
    %s645 = sphi 0, %s642
    %s646 = sphi 0, %s645
    %s662 = sphi 0, %s646
  $region4: #{decoder_block_forward.2} parent=0 // loop_header_branch
    %37 = sbr.rel (%p35) target = $region8
  $region5: #{decoder_block_forward.2} parent=0 // loop_body
    %s39 = ssub.s32 %s34, 1
    %s40 = ssub.s32 %s34, 2
    %s41 = sadd.s32 %s34, 1
    %s42 = ssub.s32 %s34, %s41
    %p43 = scmp.eq.s32.totalorder %s42, 0
    %s45 = sadd.s32 %s44, 1
    %s46 = scalar_select %p43, %s44, %s45
    %p49 = pneg %p43
    %p50 = scmp.eq.s32.totalorder %s34, 1
    %p51 = por %p49, %p50
    %p52 = scmp.ne.s32.totalorder %s44, %s47
    %p53 = scmp.eq.s32.totalorder %s34, 0
    %p54 = por %p52, %p53
    %p55 = scmp.ne.s32.totalorder %s44, %s47
    %p56 = scmp.eq.s32.totalorder %s39, 1
    %p57 = por %p55, %p56
    %p58 = scmp.ne.s32.totalorder %s47, %s48
    %p59 = scmp.eq.s32.totalorder %s39, 0
    %p60 = por %p58, %p59
    %p61 = scmp.ne.s32.totalorder %s47, %s48
    %p62 = scmp.eq.s32.totalorder %s40, 1
    %p63 = por %p61, %p62
    %p65 = scmp.ne.s32.totalorder %s48, %s64
    %p66 = scmp.eq.s32.totalorder %s40, 0
    %p67 = por %p65, %p66
    %s69 = sadd.s32 %s68, 1
    %p72 = scmp.eq.s32.totalorder %s34, 1
    %p73 = scmp.ne.s32.totalorder %s68, %s70
    %p74 = scmp.eq.s32.totalorder %s34, 0
    %p75 = por %p73, %p74
    %p76 = scmp.ne.s32.totalorder %s68, %s70
    %p77 = scmp.eq.s32.totalorder %s39, 1
    %p78 = por %p76, %p77
    %p79 = scmp.ne.s32.totalorder %s70, %s71
    %p80 = scmp.eq.s32.totalorder %s39, 0
    %p81 = por %p79, %p80
    %p82 = scmp.ne.s32.totalorder %s70, %s71
    %p83 = scmp.eq.s32.totalorder %s40, 1
    %p84 = por %p82, %p83
    %p86 = scmp.ne.s32.totalorder %s71, %s85
    %p87 = scmp.eq.s32.totalorder %s40, 0
    %p88 = por %p86, %p87
    %s89 = ssub.s32 %s34, %s41
    %p90 = scmp.eq.s32.totalorder %s89, 0
    %s92 = sadd.s32 %s91, 1
    %s93 = scalar_select %p90, %s91, %s92
    %p96 = pneg %p90
    %p97 = scmp.eq.s32.totalorder %s34, 1
    %p98 = por %p96, %p97
    %p99 = scmp.ne.s32.totalorder %s91, %s94
    %p100 = scmp.eq.s32.totalorder %s34, 0
    %p101 = por %p99, %p100
    %p102 = scmp.ne.s32.totalorder %s91, %s94
    %p103 = scmp.eq.s32.totalorder %s39, 1
    %p104 = por %p102, %p103
    %p105 = scmp.ne.s32.totalorder %s94, %s95
    %p106 = scmp.eq.s32.totalorder %s39, 0
    %p107 = por %p105, %p106
    %p108 = scmp.ne.s32.totalorder %s94, %s95
    %p109 = scmp.eq.s32.totalorder %s40, 1
    %p110 = por %p108, %p109
    %p112 = scmp.ne.s32.totalorder %s95, %s111
    %p113 = scmp.eq.s32.totalorder %s40, 0
    %p114 = por %p112, %p113
    %s116 = sadd.s32 %s115, 1
    %p119 = scmp.eq.s32.totalorder %s34, 1
    %p120 = scmp.ne.s32.totalorder %s115, %s117
    %p121 = scmp.eq.s32.totalorder %s34, 0
    %p122 = por %p120, %p121
    %p123 = scmp.ne.s32.totalorder %s115, %s117
    %p124 = scmp.eq.s32.totalorder %s39, 1
    %p125 = por %p123, %p124
    %p126 = scmp.ne.s32.totalorder %s117, %s118
    %p127 = scmp.eq.s32.totalorder %s39, 0
    %p128 = por %p126, %p127
    %p129 = scmp.ne.s32.totalorder %s117, %s118
    %p130 = scmp.eq.s32.totalorder %s40, 1
    %p131 = por %p129, %p130
    %p133 = scmp.ne.s32.totalorder %s118, %s132
    %p134 = scmp.eq.s32.totalorder %s40, 0
    %p135 = por %p133, %p134
    %s137 = sadd.s32 %s136, 1
    %p140 = scmp.eq.s32.totalorder %s34, 1
    %p141 = scmp.ne.s32.totalorder %s136, %s138
    %p142 = scmp.eq.s32.totalorder %s34, 0
    %p143 = por %p141, %p142
    %p144 = scmp.ne.s32.totalorder %s136, %s138
    %p145 = scmp.eq.s32.totalorder %s39, 1
    %p146 = por %p144, %p145
    %p147 = scmp.ne.s32.totalorder %s138, %s139
    %p148 = scmp.eq.s32.totalorder %s39, 0
    %p149 = por %p147, %p148
    %p150 = scmp.ne.s32.totalorder %s138, %s139
    %p151 = scmp.eq.s32.totalorder %s40, 1
    %p152 = por %p150, %p151
    %p154 = scmp.ne.s32.totalorder %s139, %s153
    %p155 = scmp.eq.s32.totalorder %s40, 0
    %p156 = por %p154, %p155
    %s158 = sadd.s32 %s157, 1
    %p161 = scmp.eq.s32.totalorder %s34, 1
    %p162 = scmp.ne.s32.totalorder %s157, %s159
    %p163 = scmp.eq.s32.totalorder %s34, 0
    %p164 = por %p162, %p163
    %p165 = scmp.ne.s32.totalorder %s157, %s159
    %p166 = scmp.eq.s32.totalorder %s39, 1
    %p167 = por %p165, %p166
    %p168 = scmp.ne.s32.totalorder %s159, %s160
    %p169 = scmp.eq.s32.totalorder %s39, 0
    %p170 = por %p168, %p169
    %p171 = scmp.ne.s32.totalorder %s159, %s160
    %p172 = scmp.eq.s32.totalorder %s40, 1
    %p173 = por %p171, %p172
    %p175 = scmp.ne.s32.totalorder %s160, %s174
    %p176 = scmp.eq.s32.totalorder %s40, 0
    %p177 = por %p175, %p176
    %s179 = sadd.s32 %s178, 1
    %p182 = scmp.eq.s32.totalorder %s34, 1
    %p183 = scmp.ne.s32.totalorder %s178, %s180
    %p184 = scmp.eq.s32.totalorder %s34, 0
    %p185 = por %p183, %p184
    %p186 = scmp.ne.s32.totalorder %s178, %s180
    %p187 = scmp.eq.s32.totalorder %s39, 1
    %p188 = por %p186, %p187
    %p189 = scmp.ne.s32.totalorder %s180, %s181
    %p190 = scmp.eq.s32.totalorder %s39, 0
    %p191 = por %p189, %p190
    %p192 = scmp.ne.s32.totalorder %s180, %s181
    %p193 = scmp.eq.s32.totalorder %s40, 1
    %p194 = por %p192, %p193
    %p196 = scmp.ne.s32.totalorder %s181, %s195
    %p197 = scmp.eq.s32.totalorder %s40, 0
    %p198 = por %p196, %p197
    %s200 = sadd.s32 %s199, 1
    %p203 = scmp.eq.s32.totalorder %s34, 1
    %p204 = scmp.ne.s32.totalorder %s199, %s201
    %p205 = scmp.eq.s32.totalorder %s34, 0
    %p206 = por %p204, %p205
    %p207 = scmp.ne.s32.totalorder %s199, %s201
    %p208 = scmp.eq.s32.totalorder %s39, 1
    %p209 = por %p207, %p208
    %p210 = scmp.ne.s32.totalorder %s201, %s202
    %p211 = scmp.eq.s32.totalorder %s39, 0
    %p212 = por %p210, %p211
    %p213 = scmp.ne.s32.totalorder %s201, %s202
    %p214 = scmp.eq.s32.totalorder %s40, 1
    %p215 = por %p213, %p214
    %p217 = scmp.ne.s32.totalorder %s202, %s216
    %p218 = scmp.eq.s32.totalorder %s40, 0
    %p219 = por %p217, %p218
    %s221 = sadd.s32 %s220, 1
    %p224 = scmp.eq.s32.totalorder %s34, 1
    %p225 = scmp.ne.s32.totalorder %s220, %s222
    %p226 = scmp.eq.s32.totalorder %s34, 0
    %p227 = por %p225, %p226
    %p228 = scmp.ne.s32.totalorder %s220, %s222
    %p229 = scmp.eq.s32.totalorder %s39, 1
    %p230 = por %p228, %p229
    %p231 = scmp.ne.s32.totalorder %s222, %s223
    %p232 = scmp.eq.s32.totalorder %s39, 0
    %p233 = por %p231, %p232
    %p234 = scmp.ne.s32.totalorder %s222, %s223
    %p235 = scmp.eq.s32.totalorder %s40, 1
    %p236 = por %p234, %p235
    %p238 = scmp.ne.s32.totalorder %s223, %s237
    %p239 = scmp.eq.s32.totalorder %s40, 0
    %p240 = por %p238, %p239
    %s242 = sadd.s32 %s241, 1
    %p245 = scmp.eq.s32.totalorder %s34, 1
    %p246 = scmp.ne.s32.totalorder %s241, %s243
    %p247 = scmp.eq.s32.totalorder %s34, 0
    %p248 = por %p246, %p247
    %p249 = scmp.ne.s32.totalorder %s241, %s243
    %p250 = scmp.eq.s32.totalorder %s39, 1
    %p251 = por %p249, %p250
    %p252 = scmp.ne.s32.totalorder %s243, %s244
    %p253 = scmp.eq.s32.totalorder %s39, 0
    %p254 = por %p252, %p253
    %p255 = scmp.ne.s32.totalorder %s243, %s244
    %p256 = scmp.eq.s32.totalorder %s40, 1
    %p257 = por %p255, %p256
    %p259 = scmp.ne.s32.totalorder %s244, %s258
    %p260 = scmp.eq.s32.totalorder %s40, 0
    %p261 = por %p259, %p260
    %s263 = sadd.s32 %s262, 1
    %p266 = scmp.eq.s32.totalorder %s34, 1
    %p267 = scmp.ne.s32.totalorder %s262, %s264
    %p268 = scmp.eq.s32.totalorder %s34, 0
    %p269 = por %p267, %p268
    %p270 = scmp.ne.s32.totalorder %s262, %s264
    %p271 = scmp.eq.s32.totalorder %s39, 1
    %p272 = por %p270, %p271
    %p273 = scmp.ne.s32.totalorder %s264, %s265
    %p274 = scmp.eq.s32.totalorder %s39, 0
    %p275 = por %p273, %p274
    %p276 = scmp.ne.s32.totalorder %s264, %s265
    %p277 = scmp.eq.s32.totalorder %s40, 1
    %p278 = por %p276, %p277
    %p280 = scmp.ne.s32.totalorder %s265, %s279
    %p281 = scmp.eq.s32.totalorder %s40, 0
    %p282 = por %p280, %p281
    %s284 = sadd.s32 %s283, 1
    %p287 = scmp.eq.s32.totalorder %s34, 1
    %p288 = scmp.ne.s32.totalorder %s283, %s285
    %p289 = scmp.eq.s32.totalorder %s34, 0
    %p290 = por %p288, %p289
    %p291 = scmp.ne.s32.totalorder %s283, %s285
    %p292 = scmp.eq.s32.totalorder %s39, 1
    %p293 = por %p291, %p292
    %p294 = scmp.ne.s32.totalorder %s285, %s286
    %p295 = scmp.eq.s32.totalorder %s39, 0
    %p296 = por %p294, %p295
    %p297 = scmp.ne.s32.totalorder %s285, %s286
    %p298 = scmp.eq.s32.totalorder %s40, 1
    %p299 = por %p297, %p298
    %p301 = scmp.ne.s32.totalorder %s286, %s300
    %p302 = scmp.eq.s32.totalorder %s40, 0
    %p303 = por %p301, %p302
    %s305 = sadd.s32 %s304, 1
    %p308 = scmp.eq.s32.totalorder %s34, 1
    %p309 = scmp.ne.s32.totalorder %s304, %s306
    %p310 = scmp.eq.s32.totalorder %s34, 0
    %p311 = por %p309, %p310
    %p312 = scmp.ne.s32.totalorder %s304, %s306
    %p313 = scmp.eq.s32.totalorder %s39, 1
    %p314 = por %p312, %p313
    %p315 = scmp.ne.s32.totalorder %s306, %s307
    %p316 = scmp.eq.s32.totalorder %s39, 0
    %p317 = por %p315, %p316
    %p318 = scmp.ne.s32.totalorder %s306, %s307
    %p319 = scmp.eq.s32.totalorder %s40, 1
    %p320 = por %p318, %p319
    %p322 = scmp.ne.s32.totalorder %s307, %s321
    %p323 = scmp.eq.s32.totalorder %s40, 0
    %p324 = por %p322, %p323
    %s326 = sadd.s32 %s325, 1
    %p329 = scmp.eq.s32.totalorder %s34, 1
    %p330 = scmp.ne.s32.totalorder %s325, %s327
    %p331 = scmp.eq.s32.totalorder %s34, 0
    %p332 = por %p330, %p331
    %p333 = scmp.ne.s32.totalorder %s325, %s327
    %p334 = scmp.eq.s32.totalorder %s39, 1
    %p335 = por %p333, %p334
    %p336 = scmp.ne.s32.totalorder %s327, %s328
    %p337 = scmp.eq.s32.totalorder %s39, 0
    %p338 = por %p336, %p337
    %p339 = scmp.ne.s32.totalorder %s327, %s328
    %p340 = scmp.eq.s32.totalorder %s40, 1
    %p341 = por %p339, %p340
    %p343 = scmp.ne.s32.totalorder %s328, %s342
    %p344 = scmp.eq.s32.totalorder %s40, 0
    %p345 = por %p343, %p344
    %s347 = sadd.s32 %s346, 1
    %p350 = scmp.eq.s32.totalorder %s34, 1
    %p351 = scmp.ne.s32.totalorder %s346, %s348
    %p352 = scmp.eq.s32.totalorder %s34, 0
    %p353 = por %p351, %p352
    %p354 = scmp.ne.s32.totalorder %s346, %s348
    %p355 = scmp.eq.s32.totalorder %s39, 1
    %p356 = por %p354, %p355
    %p357 = scmp.ne.s32.totalorder %s348, %s349
    %p358 = scmp.eq.s32.totalorder %s39, 0
    %p359 = por %p357, %p358
    %p360 = scmp.ne.s32.totalorder %s348, %s349
    %p361 = scmp.eq.s32.totalorder %s40, 1
    %p362 = por %p360, %p361
    %p364 = scmp.ne.s32.totalorder %s349, %s363
    %p365 = scmp.eq.s32.totalorder %s40, 0
    %p366 = por %p364, %p365
    %s368 = sadd.s32 %s367, 1
    %p371 = scmp.eq.s32.totalorder %s34, 1
    %p372 = scmp.ne.s32.totalorder %s367, %s369
    %p373 = scmp.eq.s32.totalorder %s34, 0
    %p374 = por %p372, %p373
    %p375 = scmp.ne.s32.totalorder %s367, %s369
    %p376 = scmp.eq.s32.totalorder %s39, 1
    %p377 = por %p375, %p376
    %p378 = scmp.ne.s32.totalorder %s369, %s370
    %p379 = scmp.eq.s32.totalorder %s39, 0
    %p380 = por %p378, %p379
    %p381 = scmp.ne.s32.totalorder %s369, %s370
    %p382 = scmp.eq.s32.totalorder %s40, 1
    %p383 = por %p381, %p382
    %p385 = scmp.ne.s32.totalorder %s370, %s384
    %p386 = scmp.eq.s32.totalorder %s40, 0
    %p387 = por %p385, %p386
    %s389 = sadd.s32 %s388, 1
    %p392 = scmp.eq.s32.totalorder %s34, 1
    %p393 = scmp.ne.s32.totalorder %s388, %s390
    %p394 = scmp.eq.s32.totalorder %s34, 0
    %p395 = por %p393, %p394
    %p396 = scmp.ne.s32.totalorder %s388, %s390
    %p397 = scmp.eq.s32.totalorder %s39, 1
    %p398 = por %p396, %p397
    %p399 = scmp.ne.s32.totalorder %s390, %s391
    %p400 = scmp.eq.s32.totalorder %s39, 0
    %p401 = por %p399, %p400
    %p402 = scmp.ne.s32.totalorder %s390, %s391
    %p403 = scmp.eq.s32.totalorder %s40, 1
    %p404 = por %p402, %p403
    %p406 = scmp.ne.s32.totalorder %s391, %s405
    %p407 = scmp.eq.s32.totalorder %s40, 0
    %p408 = por %p406, %p407
    %s410 = sadd.s32 %s409, 1
    %p413 = scmp.eq.s32.totalorder %s34, 1
    %p414 = scmp.ne.s32.totalorder %s409, %s411
    %p415 = scmp.eq.s32.totalorder %s34, 0
    %p416 = por %p414, %p415
    %p417 = scmp.ne.s32.totalorder %s409, %s411
    %p418 = scmp.eq.s32.totalorder %s39, 1
    %p419 = por %p417, %p418
    %p420 = scmp.ne.s32.totalorder %s411, %s412
    %p421 = scmp.eq.s32.totalorder %s39, 0
    %p422 = por %p420, %p421
    %p423 = scmp.ne.s32.totalorder %s411, %s412
    %p424 = scmp.eq.s32.totalorder %s40, 1
    %p425 = por %p423, %p424
    %p427 = scmp.ne.s32.totalorder %s412, %s426
    %p428 = scmp.eq.s32.totalorder %s40, 0
    %p429 = por %p427, %p428
    %s431 = sadd.s32 %s430, 1
    %p434 = scmp.eq.s32.totalorder %s34, 1
    %p435 = scmp.ne.s32.totalorder %s430, %s432
    %p436 = scmp.eq.s32.totalorder %s34, 0
    %p437 = por %p435, %p436
    %p438 = scmp.ne.s32.totalorder %s430, %s432
    %p439 = scmp.eq.s32.totalorder %s39, 1
    %p440 = por %p438, %p439
    %p441 = scmp.ne.s32.totalorder %s432, %s433
    %p442 = scmp.eq.s32.totalorder %s39, 0
    %p443 = por %p441, %p442
    %p444 = scmp.ne.s32.totalorder %s432, %s433
    %p445 = scmp.eq.s32.totalorder %s40, 1
    %p446 = por %p444, %p445
    %p448 = scmp.ne.s32.totalorder %s433, %s447
    %p449 = scmp.eq.s32.totalorder %s40, 0
    %p450 = por %p448, %p449
    %s452 = sadd.s32 %s451, 1
    %p455 = scmp.eq.s32.totalorder %s34, 1
    %p456 = scmp.ne.s32.totalorder %s451, %s453
    %p457 = scmp.eq.s32.totalorder %s34, 0
    %p458 = por %p456, %p457
    %p459 = scmp.ne.s32.totalorder %s451, %s453
    %p460 = scmp.eq.s32.totalorder %s39, 1
    %p461 = por %p459, %p460
    %p462 = scmp.ne.s32.totalorder %s453, %s454
    %p463 = scmp.eq.s32.totalorder %s39, 0
    %p464 = por %p462, %p463
    %p465 = scmp.ne.s32.totalorder %s453, %s454
    %p466 = scmp.eq.s32.totalorder %s40, 1
    %p467 = por %p465, %p466
    %p469 = scmp.ne.s32.totalorder %s454, %s468
    %p470 = scmp.eq.s32.totalorder %s40, 0
    %p471 = por %p469, %p470
    %s473 = sadd.s32 %s472, 1
    %p476 = scmp.eq.s32.totalorder %s34, 1
    %p477 = scmp.ne.s32.totalorder %s472, %s474
    %p478 = scmp.eq.s32.totalorder %s34, 0
    %p479 = por %p477, %p478
    %p480 = scmp.ne.s32.totalorder %s472, %s474
    %p481 = scmp.eq.s32.totalorder %s39, 1
    %p482 = por %p480, %p481
    %p483 = scmp.ne.s32.totalorder %s474, %s475
    %p484 = scmp.eq.s32.totalorder %s39, 0
    %p485 = por %p483, %p484
    %p486 = scmp.ne.s32.totalorder %s474, %s475
    %p487 = scmp.eq.s32.totalorder %s40, 1
    %p488 = por %p486, %p487
    %p490 = scmp.ne.s32.totalorder %s475, %s489
    %p491 = scmp.eq.s32.totalorder %s40, 0
    %p492 = por %p490, %p491
    %s494 = sadd.s32 %s493, 1
    %p497 = scmp.eq.s32.totalorder %s34, 1
    %p498 = scmp.ne.s32.totalorder %s493, %s495
    %p499 = scmp.eq.s32.totalorder %s34, 0
    %p500 = por %p498, %p499
    %p501 = scmp.ne.s32.totalorder %s493, %s495
    %p502 = scmp.eq.s32.totalorder %s39, 1
    %p503 = por %p501, %p502
    %p504 = scmp.ne.s32.totalorder %s495, %s496
    %p505 = scmp.eq.s32.totalorder %s39, 0
    %p506 = por %p504, %p505
    %p507 = scmp.ne.s32.totalorder %s495, %s496
    %p508 = scmp.eq.s32.totalorder %s40, 1
    %p509 = por %p507, %p508
    %p511 = scmp.ne.s32.totalorder %s496, %s510
    %p512 = scmp.eq.s32.totalorder %s40, 0
    %p513 = por %p511, %p512
    %s515 = sadd.s32 %s514, 1
    %p518 = scmp.eq.s32.totalorder %s34, 1
    %p519 = scmp.ne.s32.totalorder %s514, %s516
    %p520 = scmp.eq.s32.totalorder %s34, 0
    %p521 = por %p519, %p520
    %p522 = scmp.ne.s32.totalorder %s514, %s516
    %p523 = scmp.eq.s32.totalorder %s39, 1
    %p524 = por %p522, %p523
    %p525 = scmp.ne.s32.totalorder %s516, %s517
    %p526 = scmp.eq.s32.totalorder %s39, 0
    %p527 = por %p525, %p526
    %p528 = scmp.ne.s32.totalorder %s516, %s517
    %p529 = scmp.eq.s32.totalorder %s40, 1
    %p530 = por %p528, %p529
    %p532 = scmp.ne.s32.totalorder %s517, %s531
    %p533 = scmp.eq.s32.totalorder %s40, 0
    %p534 = por %p532, %p533
    %s536 = sadd.s32 %s535, 1
    %p539 = scmp.eq.s32.totalorder %s34, 1
    %p540 = scmp.ne.s32.totalorder %s535, %s537
    %p541 = scmp.eq.s32.totalorder %s34, 0
    %p542 = por %p540, %p541
    %p543 = scmp.ne.s32.totalorder %s535, %s537
    %p544 = scmp.eq.s32.totalorder %s39, 1
    %p545 = por %p543, %p544
    %p546 = scmp.ne.s32.totalorder %s537, %s538
    %p547 = scmp.eq.s32.totalorder %s39, 0
    %p548 = por %p546, %p547
    %p549 = scmp.ne.s32.totalorder %s537, %s538
    %p550 = scmp.eq.s32.totalorder %s40, 1
    %p551 = por %p549, %p550
    %p553 = scmp.ne.s32.totalorder %s538, %s552
    %p554 = scmp.eq.s32.totalorder %s40, 0
    %p555 = por %p553, %p554
    %s557 = sadd.s32 %s556, 1
    %p560 = scmp.eq.s32.totalorder %s34, 1
    %p561 = scmp.ne.s32.totalorder %s556, %s558
    %p562 = scmp.eq.s32.totalorder %s34, 0
    %p563 = por %p561, %p562
    %p564 = scmp.ne.s32.totalorder %s556, %s558
    %p565 = scmp.eq.s32.totalorder %s39, 1
    %p566 = por %p564, %p565
    %p567 = scmp.ne.s32.totalorder %s558, %s559
    %p568 = scmp.eq.s32.totalorder %s39, 0
    %p569 = por %p567, %p568
    %p570 = scmp.ne.s32.totalorder %s558, %s559
    %p571 = scmp.eq.s32.totalorder %s40, 1
    %p572 = por %p570, %p571
    %p574 = scmp.ne.s32.totalorder %s559, %s573
    %p575 = scmp.eq.s32.totalorder %s40, 0
    %p576 = por %p574, %p575
    %s578 = sadd.s32 %s577, 1
    %p581 = scmp.eq.s32.totalorder %s34, 1
    %p582 = scmp.ne.s32.totalorder %s577, %s579
    %p583 = scmp.eq.s32.totalorder %s34, 0
    %p584 = por %p582, %p583
    %p585 = scmp.ne.s32.totalorder %s577, %s579
    %p586 = scmp.eq.s32.totalorder %s39, 1
    %p587 = por %p585, %p586
    %p588 = scmp.ne.s32.totalorder %s579, %s580
    %p589 = scmp.eq.s32.totalorder %s39, 0
    %p590 = por %p588, %p589
    %p591 = scmp.ne.s32.totalorder %s579, %s580
    %p592 = scmp.eq.s32.totalorder %s40, 1
    %p593 = por %p591, %p592
    %p595 = scmp.ne.s32.totalorder %s580, %s594
    %p596 = scmp.eq.s32.totalorder %s40, 0
    %p597 = por %p595, %p596
    %s599 = sadd.s32 %s598, 1
    %p602 = scmp.eq.s32.totalorder %s34, 1
    %p603 = scmp.ne.s32.totalorder %s598, %s600
    %p604 = scmp.eq.s32.totalorder %s34, 0
    %p605 = por %p603, %p604
    %p606 = scmp.ne.s32.totalorder %s598, %s600
    %p607 = scmp.eq.s32.totalorder %s39, 1
    %p608 = por %p606, %p607
    %p609 = scmp.ne.s32.totalorder %s600, %s601
    %p610 = scmp.eq.s32.totalorder %s39, 0
    %p611 = por %p609, %p610
    %p612 = scmp.ne.s32.totalorder %s600, %s601
    %p613 = scmp.eq.s32.totalorder %s40, 1
    %p614 = por %p612, %p613
    %p616 = scmp.ne.s32.totalorder %s601, %s615
    %p617 = scmp.eq.s32.totalorder %s40, 0
    %p618 = por %p616, %p617
    %s620 = sadd.s32 %s619, 1
    %p623 = scmp.eq.s32.totalorder %s34, 1
    %p624 = scmp.ne.s32.totalorder %s619, %s621
    %p625 = scmp.eq.s32.totalorder %s34, 0
    %p626 = por %p624, %p625
    %p627 = scmp.ne.s32.totalorder %s619, %s621
    %p628 = scmp.eq.s32.totalorder %s39, 1
    %p629 = por %p627, %p628
    %p630 = scmp.ne.s32.totalorder %s621, %s622
    %p631 = scmp.eq.s32.totalorder %s39, 0
    %p632 = por %p630, %p631
    %p633 = scmp.ne.s32.totalorder %s621, %s622
    %p634 = scmp.eq.s32.totalorder %s40, 1
    %p635 = por %p633, %p634
    %p637 = scmp.ne.s32.totalorder %s622, %s636
    %p638 = scmp.eq.s32.totalorder %s40, 0
    %p639 = por %p637, %p638
    %s640 = ssub.s32 %s34, %s41
    %p641 = scmp.eq.s32.totalorder %s640, 0
    %s643 = sadd.s32 %s642, 1
    %s644 = scalar_select %p641, %s642, %s643
    %p647 = pneg %p641
    %p648 = scmp.eq.s32.totalorder %s34, 1
    %p649 = por %p647, %p648
    %p650 = scmp.ne.s32.totalorder %s642, %s645
    %p651 = scmp.eq.s32.totalorder %s34, 0
    %p652 = por %p650, %p651
    %p653 = scmp.ne.s32.totalorder %s642, %s645
    %p654 = scmp.eq.s32.totalorder %s39, 1
    %p655 = por %p653, %p654
    %p656 = scmp.ne.s32.totalorder %s645, %s646
    %p657 = scmp.eq.s32.totalorder %s39, 0
    %p658 = por %p656, %p657
    %p659 = scmp.ne.s32.totalorder %s645, %s646
    %p660 = scmp.eq.s32.totalorder %s40, 1
    %p661 = por %p659, %p660
    %p663 = scmp.ne.s32.totalorder %s646, %s662
    %p664 = scmp.eq.s32.totalorder %s40, 0
    %p665 = por %p663, %p664
    %p666 = scmp.le.s32.totalorder 1, %s34
    %p667 = scmp.lt.s32.totalorder %s34, 3
    %p668 = pnand %p666, %p667
    %p669 = pneg %p668
    // Predicated region
    $region9: #{decoder_block_forward.2} parent=5 // pred_check
      _
    $region10: #{decoder_block_forward.2} parent=5 // pred_check_branch
      %671 = sbr.rel (%p668) target = $region12
    $region11: #{decoder_block_forward.2} parent=5 // pred_region
      %s672 = ssub.s32 %s34, 1
      // Predicated region
      $region13: #{decoder_block_forward.2} parent=11 // pred_check
        %p673 = pneg %p81
      $region14: #{decoder_block_forward.2} parent=11 // pred_check_branch
        %675 = sbr.rel (%p673) target = $region16
      $region15: #{decoder_block_forward.2} parent=11 // pred_region
        _
      $region16: #{decoder_block_forward.2} parent=11 // pred_fallthru
        _
      // Predicated region
      $region17: #{decoder_block_forward.2} parent=11 // pred_check
        %p676 = pneg %p128
      $region18: #{decoder_block_forward.2} parent=11 // pred_check_branch
        %678 = sbr.rel (%p676) target = $region20
      $region19: #{decoder_block_forward.2} parent=11 // pred_region
        _
      $region20: #{decoder_block_forward.2} parent=11 // pred_fallthru
        _
      // Predicated region
      $region21: #{decoder_block_forward.2} parent=11 // pred_check
        %p679 = pneg %p149
      $region22: #{decoder_block_forward.2} parent=11 // pred_check_branch
        %681 = sbr.rel (%p679) target = $region24
      $region23: #{decoder_block_forward.2} parent=11 // pred_region
        _
      $region24: #{decoder_block_forward.2} parent=11 // pred_fallthru
        _
      // Predicated region
      $region25: #{decoder_block_forward.2} parent=11 // pred_check
        %p682 = pneg %p170
      $region26: #{decoder_block_forward.2} parent=11 // pred_check_branch
        %684 = sbr.rel (%p682) target = $region28
      $region27: #{decoder_block_forward.2} parent=11 // pred_region
        _
      $region28: #{decoder_block_forward.2} parent=11 // pred_fallthru
        _
      // Predicated region
      $region29: #{decoder_block_forward.2} parent=11 // pred_check
        %p685 = pneg %p191
      $region30: #{decoder_block_forward.2} parent=11 // pred_check_branch
        %687 = sbr.rel (%p685) target = $region32
      $region31: #{decoder_block_forward.2} parent=11 // pred_region
        _
      $region32: #{decoder_block_forward.2} parent=11 // pred_fallthru
        _
      // Predicated region
      $region33: #{decoder_block_forward.2} parent=11 // pred_check
        %p688 = pneg %p212
      $region34: #{decoder_block_forward.2} parent=11 // pred_check_branch
        %690 = sbr.rel (%p688) target = $region36
      $region35: #{decoder_block_forward.2} parent=11 // pred_region
        _
      $region36: #{decoder_block_forward.2} parent=11 // pred_fallthru
        _
      // Predicated region
      $region37: #{decoder_block_forward.2} parent=11 // pred_check
        %p691 = pneg %p233
      $region38: #{decoder_block_forward.2} parent=11 // pred_check_branch
        %693 = sbr.rel (%p691) target = $region40
      $region39: #{decoder_block_forward.2} parent=11 // pred_region
        _
      $region40: #{decoder_block_forward.2} parent=11 // pred_fallthru
        _
      // Predicated region
      $region41: #{decoder_block_forward.2} parent=11 // pred_check
        %p694 = pneg %p254
      $region42: #{decoder_block_forward.2} parent=11 // pred_check_branch
        %696 = sbr.rel (%p694) target = $region44
      $region43: #{decoder_block_forward.2} parent=11 // pred_region
        _
      $region44: #{decoder_block_forward.2} parent=11 // pred_fallthru
        _
      // Predicated region
      $region45: #{decoder_block_forward.2} parent=11 // pred_check
        %p697 = pneg %p275
      $region46: #{decoder_block_forward.2} parent=11 // pred_check_branch
        %699 = sbr.rel (%p697) target = $region48
      $region47: #{decoder_block_forward.2} parent=11 // pred_region
        _
      $region48: #{decoder_block_forward.2} parent=11 // pred_fallthru
        _
      // Predicated region
      $region49: #{decoder_block_forward.2} parent=11 // pred_check
        %p700 = pneg %p296
      $region50: #{decoder_block_forward.2} parent=11 // pred_check_branch
        %702 = sbr.rel (%p700) target = $region52
      $region51: #{decoder_block_forward.2} parent=11 // pred_region
        _
      $region52: #{decoder_block_forward.2} parent=11 // pred_fallthru
        _
      // Predicated region
      $region53: #{decoder_block_forward.2} parent=11 // pred_check
        %p703 = pneg %p317
      $region54: #{decoder_block_forward.2} parent=11 // pred_check_branch
        %705 = sbr.rel (%p703) target = $region56
      $region55: #{decoder_block_forward.2} parent=11 // pred_region
        _
      $region56: #{decoder_block_forward.2} parent=11 // pred_fallthru
        _
      // Predicated region
      $region57: #{decoder_block_forward.2} parent=11 // pred_check
        %p706 = pneg %p338
      $region58: #{decoder_block_forward.2} parent=11 // pred_check_branch
        %708 = sbr.rel (%p706) target = $region60
      $region59: #{decoder_block_forward.2} parent=11 // pred_region
        _
      $region60: #{decoder_block_forward.2} parent=11 // pred_fallthru
        _
      // Predicated region
      $region61: #{decoder_block_forward.2} parent=11 // pred_check
        %p709 = pneg %p359
      $region62: #{decoder_block_forward.2} parent=11 // pred_check_branch
        %711 = sbr.rel (%p709) target = $region64
      $region63: #{decoder_block_forward.2} parent=11 // pred_region
        _
      $region64: #{decoder_block_forward.2} parent=11 // pred_fallthru
        _
      // Predicated region
      $region65: #{decoder_block_forward.2} parent=11 // pred_check
        %p712 = pneg %p380
      $region66: #{decoder_block_forward.2} parent=11 // pred_check_branch
        %714 = sbr.rel (%p712) target = $region68
      $region67: #{decoder_block_forward.2} parent=11 // pred_region
        _
      $region68: #{decoder_block_forward.2} parent=11 // pred_fallthru
        _
      // Predicated region
      $region69: #{decoder_block_forward.2} parent=11 // pred_check
        %p715 = pneg %p401
      $region70: #{decoder_block_forward.2} parent=11 // pred_check_branch
        %717 = sbr.rel (%p715) target = $region72
      $region71: #{decoder_block_forward.2} parent=11 // pred_region
        _
      $region72: #{decoder_block_forward.2} parent=11 // pred_fallthru
        _
      // Predicated region
      $region73: #{decoder_block_forward.2} parent=11 // pred_check
        %p718 = pneg %p422
      $region74: #{decoder_block_forward.2} parent=11 // pred_check_branch
        %720 = sbr.rel (%p718) target = $region76
      $region75: #{decoder_block_forward.2} parent=11 // pred_region
        _
      $region76: #{decoder_block_forward.2} parent=11 // pred_fallthru
        _
      // Predicated region
      $region77: #{decoder_block_forward.2} parent=11 // pred_check
        %p721 = pneg %p443
      $region78: #{decoder_block_forward.2} parent=11 // pred_check_branch
        %723 = sbr.rel (%p721) target = $region80
      $region79: #{decoder_block_forward.2} parent=11 // pred_region
        _
      $region80: #{decoder_block_forward.2} parent=11 // pred_fallthru
        _
      // Predicated region
      $region81: #{decoder_block_forward.2} parent=11 // pred_check
        %p724 = pneg %p464
      $region82: #{decoder_block_forward.2} parent=11 // pred_check_branch
        %726 = sbr.rel (%p724) target = $region84
      $region83: #{decoder_block_forward.2} parent=11 // pred_region
        _
      $region84: #{decoder_block_forward.2} parent=11 // pred_fallthru
        _
      // Predicated region
      $region85: #{decoder_block_forward.2} parent=11 // pred_check
        %p727 = pneg %p485
      $region86: #{decoder_block_forward.2} parent=11 // pred_check_branch
        %729 = sbr.rel (%p727) target = $region88
      $region87: #{decoder_block_forward.2} parent=11 // pred_region
        _
      $region88: #{decoder_block_forward.2} parent=11 // pred_fallthru
        _
      // Predicated region
      $region89: #{decoder_block_forward.2} parent=11 // pred_check
        %p730 = pneg %p506
      $region90: #{decoder_block_forward.2} parent=11 // pred_check_branch
        %732 = sbr.rel (%p730) target = $region92
      $region91: #{decoder_block_forward.2} parent=11 // pred_region
        _
      $region92: #{decoder_block_forward.2} parent=11 // pred_fallthru
        _
      // Predicated region
      $region93: #{decoder_block_forward.2} parent=11 // pred_check
        %p733 = pneg %p527
      $region94: #{decoder_block_forward.2} parent=11 // pred_check_branch
        %735 = sbr.rel (%p733) target = $region96
      $region95: #{decoder_block_forward.2} parent=11 // pred_region
        _
      $region96: #{decoder_block_forward.2} parent=11 // pred_fallthru
        _
      // Predicated region
      $region97: #{decoder_block_forward.2} parent=11 // pred_check
        %p736 = pneg %p548
      $region98: #{decoder_block_forward.2} parent=11 // pred_check_branch
        %738 = sbr.rel (%p736) target = $region100
      $region99: #{decoder_block_forward.2} parent=11 // pred_region
        _
      $region100: #{decoder_block_forward.2} parent=11 // pred_fallthru
        _
      // Predicated region
      $region101: #{decoder_block_forward.2} parent=11 // pred_check
        %p739 = pneg %p569
      $region102: #{decoder_block_forward.2} parent=11 // pred_check_branch
        %741 = sbr.rel (%p739) target = $region104
      $region103: #{decoder_block_forward.2} parent=11 // pred_region
        _
      $region104: #{decoder_block_forward.2} parent=11 // pred_fallthru
        _
      // Predicated region
      $region105: #{decoder_block_forward.2} parent=11 // pred_check
        %p742 = pneg %p590
      $region106: #{decoder_block_forward.2} parent=11 // pred_check_branch
        %744 = sbr.rel (%p742) target = $region108
      $region107: #{decoder_block_forward.2} parent=11 // pred_region
        _
      $region108: #{decoder_block_forward.2} parent=11 // pred_fallthru
        _
      // Predicated region
      $region109: #{decoder_block_forward.2} parent=11 // pred_check
        %p745 = pneg %p611
      $region110: #{decoder_block_forward.2} parent=11 // pred_check_branch
        %747 = sbr.rel (%p745) target = $region112
      $region111: #{decoder_block_forward.2} parent=11 // pred_region
        _
      $region112: #{decoder_block_forward.2} parent=11 // pred_fallthru
        _
      // Predicated region
      $region113: #{decoder_block_forward.2} parent=11 // pred_check
        %p748 = pneg %p632
      $region114: #{decoder_block_forward.2} parent=11 // pred_check_branch
        %750 = sbr.rel (%p748) target = $region116
      $region115: #{decoder_block_forward.2} parent=11 // pred_region
        _
      $region116: #{decoder_block_forward.2} parent=11 // pred_fallthru
        _
    $region12: #{decoder_block_forward.2} parent=5 // pred_fallthru
      _
    %p751 = scmp.lt.s32.totalorder %s34, 2
    // Predicated region
    $region117: #{decoder_block_forward.2} parent=5 // pred_check
      %p752 = pneg %p751
    $region118: #{decoder_block_forward.2} parent=5 // pred_check_branch
      %754 = sbr.rel (%p752) target = $region120
    $region119: #{decoder_block_forward.2} parent=5 // pred_region
      // Predicated region
      $region121: #{decoder_block_forward.2} parent=119 // pred_check
        %p755 = pneg %p54
      $region122: #{decoder_block_forward.2} parent=119 // pred_check_branch
        %757 = sbr.rel (%p755) target = $region124
      $region123: #{decoder_block_forward.2} parent=119 // pred_region
        %p758 = scmp.lt.s32.totalorder %s34, 1
        %s759 = scalar_select %p758, %s34, 1
        %s760 = smul.addr %s759, 4
        %s761 = scalar_lea.vmem %s0, %s760
      $region124: #{decoder_block_forward.2} parent=119 // pred_fallthru
        _
      // Predicated region
      $region125: #{decoder_block_forward.2} parent=119 // pred_check
        %p762 = pneg %p101
      $region126: #{decoder_block_forward.2} parent=119 // pred_check_branch
        %764 = sbr.rel (%p762) target = $region128
      $region127: #{decoder_block_forward.2} parent=119 // pred_region
        %p765 = scmp.lt.s32.totalorder %s34, 1
        %s766 = scalar_select %p765, %s34, 1
        %s767 = smul.addr %s766, 2
        %s768 = smul.addr %s767, 4
        %s769 = scalar_lea.vmem %s2, %s768
      $region128: #{decoder_block_forward.2} parent=119 // pred_fallthru
        _
    $region120: #{decoder_block_forward.2} parent=5 // pred_fallthru
      _
    %p770 = scmp.le.s32.totalorder 1, %s34
    %p771 = scmp.lt.s32.totalorder %s34, 3
    %p772 = pnand %p770, %p771
    %p773 = pneg %p772
    // Predicated region
    $region129: #{decoder_block_forward.2} parent=5 // pred_check
      _
    $region130: #{decoder_block_forward.2} parent=5 // pred_check_branch
      %775 = sbr.rel (%p772) target = $region132
    $region131: #{decoder_block_forward.2} parent=5 // pred_region
      %s776 = ssub.s32 %s34, 1
      %p777 = scmp.lt.s32.totalorder %s39, 1
      %s778 = scalar_select %p777, %s39, 1
      %s779 = smul.addr %s778, 4
      %s780 = scalar_lea.vmem %s0, %s779
      %p781 = pneg %p60
      %p782 = pneg %p57
      %p783 = pneg %p81
      %p784 = pneg %p78
      %p785 = scmp.lt.s32.totalorder %s39, 1
      %s786 = scalar_select %p785, %s39, 1
      %s787 = smul.addr %s786, 2
      %s788 = smul.addr %s787, 4
      %s789 = scalar_lea.vmem %s2, %s788
      %p790 = pneg %p107
      %p791 = pneg %p104
      %p792 = pneg %p128
      %p793 = pneg %p125
      %p794 = pneg %p149
      %p795 = pneg %p146
      %p796 = pneg %p170
      %p797 = pneg %p167
      %p798 = pneg %p191
      %p799 = pneg %p188
      %p800 = pneg %p212
      %p801 = pneg %p209
      %p802 = pneg %p233
      %p803 = pneg %p230
      %p804 = pneg %p254
      %p805 = pneg %p251
      %p806 = pneg %p275
      %p807 = pneg %p272
      %p808 = pneg %p296
      %p809 = pneg %p293
      %p810 = pneg %p317
      %p811 = pneg %p314
      %p812 = pneg %p338
      %p813 = pneg %p335
      %p814 = pneg %p359
      %p815 = pneg %p356
      %p816 = pneg %p380
      %p817 = pneg %p377
      %p818 = pneg %p401
      %p819 = pneg %p398
      %p820 = pneg %p422
      %p821 = pneg %p419
      %p822 = pneg %p443
      %p823 = pneg %p440
      %p824 = pneg %p464
      %p825 = pneg %p461
      %p826 = pneg %p485
      %p827 = pneg %p482
      %p828 = pneg %p506
      %p829 = pneg %p503
      %p830 = pneg %p527
      %p831 = pneg %p524
      %p832 = pneg %p548
      %p833 = pneg %p545
      %p834 = pneg %p569
      %p835 = pneg %p566
      %p836 = pneg %p590
      %p837 = pneg %p587
      %p838 = pneg %p611
      %p839 = pneg %p608
      %p840 = pneg %p632
      %p841 = pneg %p629
      %p842 = pneg %p658
      %p843 = pneg %p655
      %p844 = scmp.lt.s32.totalorder %s39, 1
      %s845 = scalar_select %p844, %s39, 1
      %s846 = smul.addr %s845, 2
      %s847 = smul.addr %s846, 4
      %s848 = scalar_lea.vmem %s28, %s847
      %p849 = scmp.lt.s32.totalorder %s39, 1
      %s850 = scalar_select %p849, %s39, 1
      %s851 = smul.addr %s850, 4
      %s852 = scalar_lea.vmem %s0, %s851
      %p853 = scmp.lt.s32.totalorder %s39, 1
      %s854 = scalar_select %p853, %s39, 1
      %s855 = smul.addr %s854, 2
      %s856 = smul.addr %s855, 4
      %s857 = scalar_lea.vmem %s2, %s856
      %p858 = scmp.lt.s32.totalorder %s39, 1
      %s859 = scalar_select %p858, %s39, 1
      %s860 = smul.addr %s859, 2
      %s861 = smul.addr %s860, 4
      %s862 = scalar_lea.vmem %s28, %s861
      %v864 = vld [vmem:[%s852] sm:$0xf]
      %v865 = vpack.c.bf16 %v864, %v864
      %v866 = vld [vmem:[%s1] sm:$0xff]
      %v867 = vld [vmem:[%s1 + $0x8] sm:$0xff]
      %v868 = vld [vmem:[%s1 + $0x10] sm:$0xff]
      %v869 = vld [vmem:[%s1 + $0x18] sm:$0xff]
      %v870 = vld [vmem:[%s1 + $0x20] sm:$0xff]
      %v871 = vld [vmem:[%s1 + $0x28] sm:$0xff]
      %v872 = vld [vmem:[%s1 + $0x30] sm:$0xff]
      %v873 = vld [vmem:[%s1 + $0x38] sm:$0xff]
      %v882 = vunpack.c.l.b16 %v866
      %v883 = vunpack.c.h.b16 %v866
      %v884 = vunpack.c.l.b16 %v867
      %v885 = vunpack.c.h.b16 %v867
      %v886 = vunpack.c.l.b16 %v868
      %v887 = vunpack.c.h.b16 %v868
      %v888 = vunpack.c.l.b16 %v869
      %v889 = vunpack.c.h.b16 %v869
      %v890 = vunpack.c.l.b16 %v870
      %v891 = vunpack.c.h.b16 %v870
      %v892 = vunpack.c.l.b16 %v871
      %v893 = vunpack.c.h.b16 %v871
      %v894 = vunpack.c.l.b16 %v872
      %v895 = vunpack.c.h.b16 %v872
      %v896 = vunpack.c.l.b16 %v873
      %v897 = vunpack.c.h.b16 %v873
      %v898 = vpack.c.b16 %v884, %v882
      %v899 = vpack.c.b16 %v885, %v883
      %v900 = vpack.c.b16 %v888, %v886
      %v901 = vpack.c.b16 %v889, %v887
      %v902 = vpack.c.b16 %v892, %v890
      %v903 = vpack.c.b16 %v893, %v891
      %v904 = vpack.c.b16 %v896, %v894
      %v905 = vpack.c.b16 %v897, %v895
      %vm914 = vcmask 523264
      %v916 = vsel %vm914, %v865, 0
      %918 = vmatprep.subr.bf16.mxu0 %v899
      %919 = vmatpush1.bf16.msra.mxu0 %v898
      %920 = vmatprep.subr.bf16.mxu0 %v901
      %921 = vmatpush1.bf16.msra.mxu0 %v900
      %922 = vmatprep.subr.bf16.mxu0 %v903
      %923 = vmatpush1.bf16.msra.mxu0 %v902
      %924 = vmatprep.subr.bf16.mxu0 %v905
      %925 = vmatpush1.bf16.msra.mxu0 %v904
      %926 = vmatprep.subr.bf16.mxu0 0
      %927 = vmatpush1.bf16.msra.mxu0 0
      %928 = vmatprep.subr.bf16.mxu0 0
      %929 = vmatpush1.bf16.msra.mxu0 0
      %930 = vmatprep.subr.bf16.mxu0 0
      %931 = vmatpush1.bf16.msra.mxu0 0
      %932 = vmatprep.subr.bf16.mxu0 0
      %933 = vmatpush1.bf16.msra.mxu0 0
      %934 = vmatprep.subr.bf16.mxu0 0
      %935 = vmatpush1.bf16.msra.mxu0 0
      %936 = vmatprep.subr.bf16.mxu0 0
      %937 = vmatpush1.bf16.msra.mxu0 0
      %938 = vmatprep.subr.bf16.mxu0 0
      %939 = vmatpush1.bf16.msra.mxu0 0
      %940 = vmatprep.subr.bf16.mxu0 0
      %941 = vmatpush1.bf16.msra.mxu0 0
      %942 = vmatprep.subr.bf16.mxu0 0
      %943 = vmatpush1.bf16.msra.mxu0 0
      %944 = vmatprep.subr.bf16.mxu0 0
      %945 = vmatpush1.bf16.msra.mxu0 0
      %946 = vmatprep.subr.bf16.mxu0 0
      %947 = vmatpush1.bf16.msra.mxu0 0
      %948 = vmatprep.subr.bf16.mxu0 0
      %949 = vmatpush1.bf16.msra.mxu0 0
      %950 = vmatprep.mubr.bf16.mxu0 0
      %951 = vmatmul.mubr.bf16.gmra.mrb[0].mxu0 %v916
      %v952 = vpop.f32.mrb[0].mxu0
      %v953 = vadd.f32 0.0, %v952
      %v954 = vpop.f32.mrb[0].mxu0
      %v955 = vadd.f32 0.0, %v954
      %v956 = vpop.f32.mrb[0].mxu0
      %v957 = vpop.f32.mrb[0].mxu0
      %958 = vdwg.mxu0
      %v959 = vld [vmem:[%s857] sm:$0xff]
      %v961 = vcombine.low %v959, %v959
      %vm963 = vcmask 1043456
      %v964 = vsel %vm963, %v953, %v961
      %v965 = vsel %vm963, %v955, %v959
      %v966 = vld [vmem:[%s3] sm:$0xff]
      %v967 = vld [vmem:[%s3 + $0x8] sm:$0xff]
      %v968 = vld [vmem:[%s3 + $0x10] sm:$0x1]
      %v969 = vld [vmem:[%s3 + $0x18] sm:$0x1]
      %v970 = vld [vmem:[%s4] sm:$0xff]
      %v971 = vld [vmem:[%s5] sm:$0xff]
      %v972 = vld [vmem:[%s6] sm:$0xf]
      %v973 = vld [vmem:[%s7] sm:$0xf]
      %v974 = vld [vmem:[%s12] sm:$0xf]
      %v975 = vld [vmem:[%s13] sm:$0x3]
      %v976 = vld [vmem:[%s14] sm:$0xf]
      %v977 = vld [vmem:[%s15] sm:$0x3]
      %v978 = vld [vmem:[%s16] sm:$0xf]
      %v979 = vld [vmem:[%s17] sm:$0xf]
      %v980 = vld [vmem:[%s18] sm:$0x3]
      %v981 = vld [vmem:[%s19] sm:$0xf]
      %983 = vset.pattern.permute.xlu0 4
      %984 = vperm.xlu0 %983, %v974
      %v985 = vpop.permute.xlu0 %984
      %v987 = vmul.f32 %v964, %v985
      %v988 = vmul.f32 %v965, %v985
      %989 = vrot.lane.b32.xlu0 %v964, 17
      %v990 = vpop.permute.xlu0 %989
      %991 = vrot.lane.b32.xlu0 %v965, 17
      %v992 = vpop.permute.xlu0 %991
      %v993 = vlaneseq
      %v994 = vand.u32 %v993, 127
      %vm995 = vcmp.lt.s32.totalorder %v994, 17
      %v996 = vsel %vm995, %v990, %v992
      %v997 = vsel %vm995, %v992, %v990
      %v998 = vlaneseq
      %v999 = vshrl.u32 %v998, 7
      %v1000 = vsub.s32 0, %v999
      %v1001 = vrot.slane %v966, %v1000
      %v1002 = vlaneseq
      %v1003 = vshrl.u32 %v1002, 7
      %v1004 = vsub.s32 0, %v1003
      %v1005 = vrot.slane %v967, %v1004
      %v1006 = vmul.f32 %v997, %v1001
      %v1007 = vmul.f32 %v996, %v1005
      %1008 = vset.pattern.permute.xlu0 0
      %1009 = vperm.xlu0 %1008, %v974
      %v1010 = vpop.permute.xlu0 %1009
      %v1012 = vmul.f32 %v1006, %v1010
      %v1013 = vmul.f32 %v1007, %v1010
      %v1014 = vadd.f32 %v987, %v1012
      %v1015 = vadd.f32 %v988, %v1013
      %1016 = vrot.lane.b32.xlu0 %v964, 16
      %v1017 = vpop.permute.xlu0 %1016
      %1018 = vrot.lane.b32.xlu0 %v965, 16
      %v1019 = vpop.permute.xlu0 %1018
      %vm1020 = vcmp.lt.s32.totalorder %v994, 16
      %v1021 = vsel %vm1020, %v1017, %v1019
      %v1022 = vsel %vm1020, %v1019, %v1017
      %v1023 = vlaneseq
      %v1024 = vshrl.u32 %v1023, 7
      %v1025 = vsub.s32 1, %v1024
      %v1026 = vrot.slane %v966, %v1025
      %v1027 = vlaneseq
      %v1028 = vshrl.u32 %v1027, 7
      %v1029 = vsub.s32 1, %v1028
      %v1030 = vrot.slane %v967, %v1029
      %v1031 = vmul.f32 %v1022, %v1026
      %v1032 = vmul.f32 %v1021, %v1030
      %1033 = vset.pattern.permute.xlu0 1
      %1034 = vperm.xlu0 %1033, %v974
      %v1035 = vpop.permute.xlu0 %1034
      %v1037 = vmul.f32 %v1031, %v1035
      %v1038 = vmul.f32 %v1032, %v1035
      %v1039 = vadd.f32 %v1014, %v1037
      %v1040 = vadd.f32 %v1015, %v1038
      %1041 = vrot.lane.b32.xlu0 %v964, 15
      %v1042 = vpop.permute.xlu0 %1041
      %1043 = vrot.lane.b32.xlu0 %v965, 15
      %v1044 = vpop.permute.xlu0 %1043
      %vm1045 = vcmp.lt.s32.totalorder %v994, 15
      %v1046 = vsel %vm1045, %v1042, %v1044
      %v1047 = vsel %vm1045, %v1044, %v1042
      %v1048 = vlaneseq
      %v1049 = vshrl.u32 %v1048, 7
      %v1050 = vsub.s32 2, %v1049
      %v1051 = vrot.slane %v966, %v1050
      %v1052 = vlaneseq
      %v1053 = vshrl.u32 %v1052, 7
      %v1054 = vsub.s32 2, %v1053
      %v1055 = vrot.slane %v967, %v1054
      %v1056 = vmul.f32 %v1047, %v1051
      %v1057 = vmul.f32 %v1046, %v1055
      %1058 = vset.pattern.permute.xlu0 2
      %1059 = vperm.xlu0 %1058, %v974
      %v1060 = vpop.permute.xlu0 %1059
      %v1062 = vmul.f32 %v1056, %v1060
      %v1063 = vmul.f32 %v1057, %v1060
      %v1064 = vadd.f32 %v1039, %v1062
      %v1065 = vadd.f32 %v1040, %v1063
      %1066 = vrot.lane.b32.xlu0 %v964, 1
      %v1067 = vpop.permute.xlu0 %1066
      %1068 = vrot.lane.b32.xlu0 %v965, 1
      %v1069 = vpop.permute.xlu0 %1068
      %vm1070 = vcmp.lt.s32.totalorder %v994, 1
      %v1071 = vsel %vm1070, %v1067, %v1069
      %v1072 = vsel %vm1070, %v1069, %v1067
      %v1073 = vlaneseq
      %v1074 = vshrl.u32 %v1073, 7
      %v1075 = vsub.s32 3, %v1074
      %v1076 = vrot.slane %v966, %v1075
      %v1077 = vlaneseq
      %v1078 = vshrl.u32 %v1077, 7
      %v1079 = vsub.s32 3, %v1078
      %v1080 = vrot.slane %v967, %v1079
      %v1081 = vmul.f32 %v1072, %v1076
      %v1082 = vmul.f32 %v1071, %v1080
      %1083 = vset.pattern.permute.xlu0 3
      %1084 = vperm.xlu0 %1083, %v974
      %v1085 = vpop.permute.xlu0 %1084
      %v1087 = vmul.f32 %v1081, %v1085
      %v1088 = vmul.f32 %v1082, %v1085
      %v1089 = vadd.f32 %v1064, %v1087
      %v1090 = vadd.f32 %v1065, %v1088
      %1091 = vrot.lane.b32.xlu0 %v964, 127
      %v1092 = vpop.permute.xlu0 %1091
      %1093 = vrot.lane.b32.xlu0 %v965, 127
      %v1094 = vpop.permute.xlu0 %1093
      %vm1095 = vcmp.lt.s32.totalorder %v994, 127
      %v1096 = vsel %vm1095, %v1092, %v1094
      %v1097 = vsel %vm1095, %v1094, %v1092
      %v1098 = vlaneseq
      %v1099 = vshrl.u32 %v1098, 7
      %v1100 = vsub.s32 5, %v1099
      %v1101 = vrot.slane %v966, %v1100
      %v1102 = vlaneseq
      %v1103 = vshrl.u32 %v1102, 7
      %v1104 = vsub.s32 5, %v1103
      %v1105 = vrot.slane %v967, %v1104
      %v1106 = vmul.f32 %v1096, %v1101
      %v1107 = vmul.f32 %v1097, %v1105
      %1108 = vset.pattern.permute.xlu0 5
      %1109 = vperm.xlu0 %1108, %v974
      %v1110 = vpop.permute.xlu0 %1109
      %v1112 = vmul.f32 %v1106, %v1110
      %v1113 = vmul.f32 %v1107, %v1110
      %v1114 = vadd.f32 %v1089, %v1112
      %v1115 = vadd.f32 %v1090, %v1113
      %1116 = vrot.lane.b32.xlu0 %v964, 113
      %v1117 = vpop.permute.xlu0 %1116
      %1118 = vrot.lane.b32.xlu0 %v965, 113
      %v1119 = vpop.permute.xlu0 %1118
      %vm1120 = vcmp.lt.s32.totalorder %v994, 113
      %v1121 = vsel %vm1120, %v1117, %v1119
      %v1122 = vsel %vm1120, %v1119, %v1117
      %v1123 = vlaneseq
      %v1124 = vshrl.u32 %v1123, 7
      %v1125 = vsub.s32 6, %v1124
      %v1126 = vrot.slane %v966, %v1125
      %v1127 = vlaneseq
      %v1128 = vshrl.u32 %v1127, 7
      %v1129 = vsub.s32 6, %v1128
      %v1130 = vrot.slane %v967, %v1129
      %v1131 = vmul.f32 %v1121, %v1126
      %v1132 = vmul.f32 %v1122, %v1130
      %1133 = vset.pattern.permute.xlu0 6
      %1134 = vperm.xlu0 %1133, %v974
      %v1135 = vpop.permute.xlu0 %1134
      %v1137 = vmul.f32 %v1131, %v1135
      %v1138 = vmul.f32 %v1132, %v1135
      %v1139 = vadd.f32 %v1114, %v1137
      %v1140 = vadd.f32 %v1115, %v1138
      %1141 = vrot.lane.b32.xlu0 %v964, 112
      %v1142 = vpop.permute.xlu0 %1141
      %1143 = vrot.lane.b32.xlu0 %v965, 112
      %v1144 = vpop.permute.xlu0 %1143
      %vm1145 = vcmp.lt.s32.totalorder %v994, 112
      %v1146 = vsel %vm1145, %v1142, %v1144
      %v1147 = vsel %vm1145, %v1144, %v1142
      %v1148 = vlaneseq
      %v1149 = vshrl.u32 %v1148, 7
      %v1150 = vsub.s32 7, %v1149
      %v1151 = vrot.slane %v966, %v1150
      %v1152 = vlaneseq
      %v1153 = vshrl.u32 %v1152, 7
      %v1154 = vsub.s32 7, %v1153
      %v1155 = vrot.slane %v967, %v1154
      %v1156 = vmul.f32 %v1146, %v1151
      %v1157 = vmul.f32 %v1147, %v1155
      %1158 = vset.pattern.permute.xlu0 7
      %1159 = vperm.xlu0 %1158, %v974
      %v1160 = vpop.permute.xlu0 %1159
      %v1162 = vmul.f32 %v1156, %v1160
      %v1163 = vmul.f32 %v1157, %v1160
      %v1164 = vadd.f32 %v1139, %v1162
      %v1165 = vadd.f32 %v1140, %v1163
      %1166 = vrot.lane.b32.xlu0 %v964, 111
      %v1167 = vpop.permute.xlu0 %1166
      %1168 = vrot.lane.b32.xlu0 %v965, 111
      %v1169 = vpop.permute.xlu0 %1168
      %vm1170 = vcmp.lt.s32.totalorder %v994, 111
      %v1171 = vsel %vm1170, %v1167, %v1169
      %v1172 = vsel %vm1170, %v1169, %v1167
      %v1173 = vlaneseq
      %v1174 = vshrl.u32 %v1173, 7
      %v1175 = vsub.s32 0, %v1174
      %v1176 = vrot.slane %v968, %v1175
      %v1177 = vlaneseq
      %v1178 = vshrl.u32 %v1177, 7
      %v1179 = vsub.s32 0, %v1178
      %v1180 = vrot.slane %v969, %v1179
      %v1181 = vmul.f32 %v1171, %v1176
      %v1182 = vmul.f32 %v1172, %v1180
      %1183 = vset.pattern.permute.xlu0 8
      %1184 = vperm.xlu0 %1183, %v974
      %v1185 = vpop.permute.xlu0 %1184
      %v1187 = vmul.f32 %v1181, %v1185
      %v1188 = vmul.f32 %v1182, %v1185
      %v1189 = vadd.f32 %v1164, %v1187
      %v1190 = vadd.f32 %v1165, %v1188
      %1191 = vset.pattern.permute.xlu0 9
      %1192 = vperm.xlu0 %1191, %v974
      %v1193 = vpop.permute.xlu0 %1192
      %v1195 = vadd.f32 %v1189, %v1193
      %v1196 = vadd.f32 %v1190, %v1193
      %v1197 = vsel %vm963, %v1195, 0.0
      %v1198 = vsel %vm963, %v1196, 0.0
      %v1199 = vadd.f32 %v1197, %v1198
      %1200 = vadd.xlane.f32.xlu0 %v1199
      %v1201 = vpop.xlane.xlu0 %1200
      %v1202 = vrot.slane %v1201, 4
      %v1203 = vadd.f32 %v1201, %v1202
      %v1204 = vrot.slane %v1203, 2
      %v1205 = vadd.f32 %v1203, %v1204
      %v1206 = vrot.slane %v1205, 1
      %v1207 = vadd.f32 %v1205, %v1206
      %s1208 = vtos %v1207
      %v1209 = vrcp.pop 1024.0
      %s1210 = vtos %v1209
      %s1211 = smul.f32 %s1208, %s1210
      %v1212 = vstv %s1211
      %v1213 = vsub.f32 %v1195, %v1212
      %v1214 = vsub.f32 %v1196, %v1212
      %v1215 = vmul.f32 %v1213, %v1213
      %v1216 = vmul.f32 %v1214, %v1214
      %v1217 = vsel %vm963, %v1215, 0.0
      %v1218 = vsel %vm963, %v1216, 0.0
      %v1219 = vadd.f32 %v1217, %v1218
      %1220 = vadd.xlane.f32.xlu0 %v1219
      %v1221 = vpop.xlane.xlu0 %1220
      %v1222 = vrot.slane %v1221, 4
      %v1223 = vadd.f32 %v1221, %v1222
      %v1224 = vrot.slane %v1223, 2
      %v1225 = vadd.f32 %v1223, %v1224
      %v1226 = vrot.slane %v1225, 1
      %v1227 = vadd.f32 %v1225, %v1226
      %s1228 = vtos %v1227
      %v1229 = vrcp.pop 1024.0
      %s1230 = vtos %v1229
      %s1231 = smul.f32 %s1228, %s1230
      %s1232 = sadd.f32 %s1231, 1e-05
      %v1233 = vstv %s1232
      %v1234 = vrsqrt.pop %v1233
      %s1235 = vtos %v1234
      %v1236 = vstv %s1235
      %v1237 = vmul.f32 %v1213, %v1236
      %v1238 = vmul.f32 %v1214, %v1236
      %1239 = vset.pattern.permute.xlu0 10
      %1240 = vperm.xlu0 %1239, %v974
      %v1241 = vpop.permute.xlu0 %1240
      %v1243 = vmul.f32 %v1237, %v1241
      %v1244 = vmul.f32 %v1238, %v1241
      %1245 = vset.pattern.permute.xlu0 11
      %1246 = vperm.xlu0 %1245, %v974
      %v1247 = vpop.permute.xlu0 %1246
      %v1249 = vadd.f32 %v1243, %v1247
      %v1250 = vadd.f32 %v1244, %v1247
      %v1251 = vpack.c.bf16 %v1249, %v1249
      %v1252 = vpack.c.bf16 %v1250, %v1250
      %1254 = vset.pattern.permute.xlu0 0
      %1255 = vperm.xlu0 %1254, %v976
      %v1256 = vpop.permute.xlu0 %1255
      %vm1258 = vcmask 31744
      %v1260 = vsel %vm1258, %v975, 0
      %vm1262 = vcmask 1041408
      %v1264 = vsel %vm1262, %v1251, 0
      %v1267 = vsel %vm1262, %v1252, 0
      %1269 = vmatprep.subr.bf16.mxu0 %v1267
      %1270 = vmatpush1.bf16.msra.mxu0 %v1264
      %1271 = vmatprep.subr.bf16.mxu0 0
      %1272 = vmatpush1.bf16.msra.mxu0 0
      %1273 = vmatprep.subr.bf16.mxu0 0
      %1274 = vmatpush1.bf16.msra.mxu0 0
      %1275 = vmatprep.subr.bf16.mxu0 0
      %1276 = vmatpush1.bf16.msra.mxu0 0
      %1277 = vmatprep.subr.bf16.mxu0 0
      %1278 = vmatpush1.bf16.msra.mxu0 0
      %1279 = vmatprep.subr.bf16.mxu0 0
      %1280 = vmatpush1.bf16.msra.mxu0 0
      %1281 = vmatprep.subr.bf16.mxu0 0
      %1282 = vmatpush1.bf16.msra.mxu0 0
      %1283 = vmatprep.subr.bf16.mxu0 0
      %1284 = vmatpush1.bf16.msra.mxu0 0
      %1285 = vmatprep.subr.bf16.mxu0 0
      %1286 = vmatpush1.bf16.msra.mxu0 0
      %1287 = vmatprep.subr.bf16.mxu0 0
      %1288 = vmatpush1.bf16.msra.mxu0 0
      %1289 = vmatprep.subr.bf16.mxu0 0
      %1290 = vmatpush1.bf16.msra.mxu0 0
      %1291 = vmatprep.subr.bf16.mxu0 0
      %1292 = vmatpush1.bf16.msra.mxu0 0
      %1293 = vmatprep.subr.bf16.mxu0 0
      %1294 = vmatpush1.bf16.msra.mxu0 0
      %1295 = vmatprep.subr.bf16.mxu0 0
      %1296 = vmatpush1.bf16.msra.mxu0 0
      %1297 = vmatprep.subr.bf16.mxu0 0
      %1298 = vmatpush1.bf16.msra.mxu0 0
      %1299 = vmatprep.subr.bf16.mxu0 0
      %1300 = vmatpush1.bf16.msra.mxu0 0
      %1301 = vmatprep.mubr.bf16.mxu0 0
      %1302 = vmatmul.mubr.bf16.gmra.mrb[0].mxu0 %v1260
      %v1303 = vpop.f32.mrb[0].mxu0
      %v1304 = vadd.f32 %v1256, %v1303
      %v1305 = vpop.f32.mrb[0].mxu0
      %v1306 = vadd.f32 %v1256, %v1305
      %v1307 = vpop.f32.mrb[0].mxu0
      %v1308 = vpop.f32.mrb[0].mxu0
      %1309 = vdwg.mxu0
      %v1310 = vsel %vm963, %v1304, 0.0
      %v1311 = vsel %vm963, %v1306, 0.0
      %v1312 = vadd.f32 %v1310, %v1311
      %1313 = vadd.xlane.f32.xlu0 %v1312
      %v1314 = vpop.xlane.xlu0 %1313
      %v1315 = vrot.slane %v1314, 4
      %v1316 = vadd.f32 %v1314, %v1315
      %v1317 = vrot.slane %v1316, 2
      %v1318 = vadd.f32 %v1316, %v1317
      %v1319 = vrot.slane %v1318, 1
      %v1320 = vadd.f32 %v1318, %v1319
      %s1321 = vtos %v1320
      %v1322 = vrcp.pop 1024.0
      %s1323 = vtos %v1322
      %s1324 = smul.f32 %s1321, %s1323
      %v1325 = vstv %s1324
      %v1326 = vsub.f32 %v1304, %v1325
      %v1327 = vsub.f32 %v1306, %v1325
      %v1328 = vmul.f32 %v1326, %v1326
      %v1329 = vmul.f32 %v1327, %v1327
      %v1330 = vsel %vm963, %v1328, 0.0
      %v1331 = vsel %vm963, %v1329, 0.0
      %v1332 = vadd.f32 %v1330, %v1331
      %1333 = vadd.xlane.f32.xlu0 %v1332
      %v1334 = vpop.xlane.xlu0 %1333
      %v1335 = vrot.slane %v1334, 4
      %v1336 = vadd.f32 %v1334, %v1335
      %v1337 = vrot.slane %v1336, 2
      %v1338 = vadd.f32 %v1336, %v1337
      %v1339 = vrot.slane %v1338, 1
      %v1340 = vadd.f32 %v1338, %v1339
      %s1341 = vtos %v1340
      %v1342 = vrcp.pop 1024.0
      %s1343 = vtos %v1342
      %s1344 = smul.f32 %s1341, %s1343
      %s1345 = sadd.f32 %s1344, 1e-05
      %v1346 = vstv %s1345
      %v1347 = vrsqrt.pop %v1346
      %s1348 = vtos %v1347
      %v1349 = vstv %s1348
      %v1350 = vmul.f32 %v1326, %v1349
      %v1351 = vmul.f32 %v1327, %v1349
      %1352 = vset.pattern.permute.xlu0 1
      %1353 = vperm.xlu0 %1352, %v976
      %v1354 = vpop.permute.xlu0 %1353
      %v1356 = vmul.f32 %v1350, %v1354
      %v1357 = vmul.f32 %v1351, %v1354
      %1358 = vset.pattern.permute.xlu0 2
      %1359 = vperm.xlu0 %1358, %v976
      %v1360 = vpop.permute.xlu0 %1359
      %v1362 = vadd.f32 %v1356, %v1360
      %v1363 = vadd.f32 %v1357, %v1360
      %v1364 = vxor.u32 %v1362, 2147483648
      %v1365 = vxor.u32 %v1363, 2147483648
      %v1366 = vmul.f32 %v1364, 1.442695
      %v1367 = vpow.pop %v1366
      %v1368 = vmul.f32 %v1365, 1.442695
      %v1369 = vpow.pop %v1368
      %v1370 = vadd.f32 %v1367, 1.0
      %v1371 = vadd.f32 %v1369, 1.0
      %v1372 = vrcp.pop %v1370
      %v1373 = vmul.f32 1.0, %v1372
      %v1374 = vrcp.pop %v1371
      %v1375 = vmul.f32 1.0, %v1374
      %v1376 = vmul.f32 %v1362, %v1373
      %v1377 = vmul.f32 %v1363, %v1375
      %v1378 = vpack.c.bf16 %v964, %v964
      %v1379 = vpack.c.bf16 %v965, %v965
      %1381 = vset.pattern.permute.xlu0 0
      %1382 = vperm.xlu0 %1381, %v978
      %v1383 = vpop.permute.xlu0 %1382
      %v1387 = vrot.slane %v1378, 2
      %v1388 = vrot.slane %v1379, 2
      %v1390 = vsel %vm1258, %v977, 0
      %v1393 = vsel %vm1262, %v1387, 0
      %v1396 = vsel %vm1262, %v1388, 0
      %1398 = vmatprep.subr.bf16.mxu0 %v1396
      %1399 = vmatpush1.bf16.msra.mxu0 %v1393
      %1400 = vmatprep.subr.bf16.mxu0 0
      %1401 = vmatpush1.bf16.msra.mxu0 0
      %1402 = vmatprep.subr.bf16.mxu0 0
      %1403 = vmatpush1.bf16.msra.mxu0 0
      %1404 = vmatprep.subr.bf16.mxu0 0
      %1405 = vmatpush1.bf16.msra.mxu0 0
      %1406 = vmatprep.subr.bf16.mxu0 0
      %1407 = vmatpush1.bf16.msra.mxu0 0
      %1408 = vmatprep.subr.bf16.mxu0 0
      %1409 = vmatpush1.bf16.msra.mxu0 0
      %1410 = vmatprep.subr.bf16.mxu0 0
      %1411 = vmatpush1.bf16.msra.mxu0 0
      %1412 = vmatprep.subr.bf16.mxu0 0
      %1413 = vmatpush1.bf16.msra.mxu0 0
      %1414 = vmatprep.subr.bf16.mxu0 0
      %1415 = vmatpush1.bf16.msra.mxu0 0
      %1416 = vmatprep.subr.bf16.mxu0 0
      %1417 = vmatpush1.bf16.msra.mxu0 0
      %1418 = vmatprep.subr.bf16.mxu0 0
      %1419 = vmatpush1.bf16.msra.mxu0 0
      %1420 = vmatprep.subr.bf16.mxu0 0
      %1421 = vmatpush1.bf16.msra.mxu0 0
      %1422 = vmatprep.subr.bf16.mxu0 0
      %1423 = vmatpush1.bf16.msra.mxu0 0
      %1424 = vmatprep.subr.bf16.mxu0 0
      %1425 = vmatpush1.bf16.msra.mxu0 0
      %1426 = vmatprep.subr.bf16.mxu0 0
      %1427 = vmatpush1.bf16.msra.mxu0 0
      %1428 = vmatprep.subr.bf16.mxu0 0
      %1429 = vmatpush1.bf16.msra.mxu0 0
      %1430 = vmatprep.mubr.bf16.mxu0 0
      %1431 = vmatmul.mubr.bf16.gmra.mrb[0].mxu0 %v1390
      %v1432 = vpop.f32.mrb[0].mxu0
      %v1433 = vadd.f32 %v1383, %v1432
      %v1434 = vpop.f32.mrb[0].mxu0
      %v1435 = vadd.f32 %v1383, %v1434
      %v1436 = vpop.f32.mrb[0].mxu0
      %v1437 = vpop.f32.mrb[0].mxu0
      %1438 = vdwg.mxu0
      %v1439 = vsel %vm963, %v1433, 0.0
      %v1440 = vsel %vm963, %v1435, 0.0
      %v1441 = vadd.f32 %v1439, %v1440
      %1442 = vadd.xlane.f32.xlu0 %v1441
      %v1443 = vpop.xlane.xlu0 %1442
      %v1444 = vrot.slane %v1443, 4
      %v1445 = vadd.f32 %v1443, %v1444
      %v1446 = vrot.slane %v1445, 2
      %v1447 = vadd.f32 %v1445, %v1446
      %v1448 = vrot.slane %v1447, 1
      %v1449 = vadd.f32 %v1447, %v1448
      %s1450 = vtos %v1449
      %v1451 = vrcp.pop 1024.0
      %s1452 = vtos %v1451
      %s1453 = smul.f32 %s1450, %s1452
      %v1454 = vstv %s1453
      %v1455 = vsub.f32 %v1433, %v1454
      %v1456 = vsub.f32 %v1435, %v1454
      %v1457 = vmul.f32 %v1455, %v1455
      %v1458 = vmul.f32 %v1456, %v1456
      %v1459 = vsel %vm963, %v1457, 0.0
      %v1460 = vsel %vm963, %v1458, 0.0
      %v1461 = vadd.f32 %v1459, %v1460
      %1462 = vadd.xlane.f32.xlu0 %v1461
      %v1463 = vpop.xlane.xlu0 %1462
      %v1464 = vrot.slane %v1463, 4
      %v1465 = vadd.f32 %v1463, %v1464
      %v1466 = vrot.slane %v1465, 2
      %v1467 = vadd.f32 %v1465, %v1466
      %v1468 = vrot.slane %v1467, 1
      %v1469 = vadd.f32 %v1467, %v1468
      %s1470 = vtos %v1469
      %v1471 = vrcp.pop 1024.0
      %s1472 = vtos %v1471
      %s1473 = smul.f32 %s1470, %s1472
      %s1474 = sadd.f32 %s1473, 1e-05
      %v1475 = vstv %s1474
      %v1476 = vrsqrt.pop %v1475
      %s1477 = vtos %v1476
      %v1478 = vstv %s1477
      %v1479 = vmul.f32 %v1455, %v1478
      %v1480 = vmul.f32 %v1456, %v1478
      %1481 = vset.pattern.permute.xlu0 1
      %1482 = vperm.xlu0 %1481, %v978
      %v1483 = vpop.permute.xlu0 %1482
      %v1485 = vmul.f32 %v1479, %v1483
      %v1486 = vmul.f32 %v1480, %v1483
      %1487 = vset.pattern.permute.xlu0 2
      %1488 = vperm.xlu0 %1487, %v978
      %v1489 = vpop.permute.xlu0 %1488
      %v1491 = vadd.f32 %v1485, %v1489
      %v1492 = vadd.f32 %v1486, %v1489
      %v1493 = vxor.u32 %v1491, 2147483648
      %v1494 = vxor.u32 %v1492, 2147483648
      %v1495 = vmul.f32 %v1493, 1.442695
      %v1496 = vpow.pop %v1495
      %v1497 = vmul.f32 %v1494, 1.442695
      %v1498 = vpow.pop %v1497
      %v1499 = vadd.f32 %v1496, 1.0
      %v1500 = vadd.f32 %v1498, 1.0
      %v1501 = vrcp.pop %v1499
      %v1502 = vmul.f32 1.0, %v1501
      %v1503 = vrcp.pop %v1500
      %v1504 = vmul.f32 1.0, %v1503
      %v1505 = vmul.f32 %v1491, %v1502
      %v1506 = vmul.f32 %v1492, %v1504
      %1508 = vset.pattern.permute.xlu0 4
      %1509 = vperm.xlu0 %1508, %v979
      %v1510 = vpop.permute.xlu0 %1509
      %v1512 = vmul.f32 %v1505, %v1510
      %v1513 = vmul.f32 %v1506, %v1510
      %1514 = vrot.lane.b32.xlu0 %v1505, 17
      %v1515 = vpop.permute.xlu0 %1514
      %1516 = vrot.lane.b32.xlu0 %v1506, 17
      %v1517 = vpop.permute.xlu0 %1516
      %v1518 = vsel %vm995, %v1515, %v1517
      %v1519 = vsel %vm995, %v1517, %v1515
      %v1520 = vmul.f32 %v1519, %v1001
      %v1521 = vmul.f32 %v1518, %v1005
      %1522 = vset.pattern.permute.xlu0 0
      %1523 = vperm.xlu0 %1522, %v979
      %v1524 = vpop.permute.xlu0 %1523
      %v1526 = vmul.f32 %v1520, %v1524
      %v1527 = vmul.f32 %v1521, %v1524
      %v1528 = vadd.f32 %v1512, %v1526
      %v1529 = vadd.f32 %v1513, %v1527
      %1530 = vrot.lane.b32.xlu0 %v1505, 16
      %v1531 = vpop.permute.xlu0 %1530
      %1532 = vrot.lane.b32.xlu0 %v1506, 16
      %v1533 = vpop.permute.xlu0 %1532
      %v1534 = vsel %vm1020, %v1531, %v1533
      %v1535 = vsel %vm1020, %v1533, %v1531
      %v1536 = vmul.f32 %v1535, %v1026
      %v1537 = vmul.f32 %v1534, %v1030
      %1538 = vset.pattern.permute.xlu0 1
      %1539 = vperm.xlu0 %1538, %v979
      %v1540 = vpop.permute.xlu0 %1539
      %v1542 = vmul.f32 %v1536, %v1540
      %v1543 = vmul.f32 %v1537, %v1540
      %v1544 = vadd.f32 %v1528, %v1542
      %v1545 = vadd.f32 %v1529, %v1543
      %1546 = vrot.lane.b32.xlu0 %v1505, 15
      %v1547 = vpop.permute.xlu0 %1546
      %1548 = vrot.lane.b32.xlu0 %v1506, 15
      %v1549 = vpop.permute.xlu0 %1548
      %v1550 = vsel %vm1045, %v1547, %v1549
      %v1551 = vsel %vm1045, %v1549, %v1547
      %v1552 = vmul.f32 %v1551, %v1051
      %v1553 = vmul.f32 %v1550, %v1055
      %1554 = vset.pattern.permute.xlu0 2
      %1555 = vperm.xlu0 %1554, %v979
      %v1556 = vpop.permute.xlu0 %1555
      %v1558 = vmul.f32 %v1552, %v1556
      %v1559 = vmul.f32 %v1553, %v1556
      %v1560 = vadd.f32 %v1544, %v1558
      %v1561 = vadd.f32 %v1545, %v1559
      %1562 = vrot.lane.b32.xlu0 %v1505, 1
      %v1563 = vpop.permute.xlu0 %1562
      %1564 = vrot.lane.b32.xlu0 %v1506, 1
      %v1565 = vpop.permute.xlu0 %1564
      %v1566 = vsel %vm1070, %v1563, %v1565
      %v1567 = vsel %vm1070, %v1565, %v1563
      %v1568 = vmul.f32 %v1567, %v1076
      %v1569 = vmul.f32 %v1566, %v1080
      %1570 = vset.pattern.permute.xlu0 3
      %1571 = vperm.xlu0 %1570, %v979
      %v1572 = vpop.permute.xlu0 %1571
      %v1574 = vmul.f32 %v1568, %v1572
      %v1575 = vmul.f32 %v1569, %v1572
      %v1576 = vadd.f32 %v1560, %v1574
      %v1577 = vadd.f32 %v1561, %v1575
      %1578 = vrot.lane.b32.xlu0 %v1505, 127
      %v1579 = vpop.permute.xlu0 %1578
      %1580 = vrot.lane.b32.xlu0 %v1506, 127
      %v1581 = vpop.permute.xlu0 %1580
      %v1582 = vsel %vm1095, %v1579, %v1581
      %v1583 = vsel %vm1095, %v1581, %v1579
      %v1584 = vmul.f32 %v1582, %v1101
      %v1585 = vmul.f32 %v1583, %v1105
      %1586 = vset.pattern.permute.xlu0 5
      %1587 = vperm.xlu0 %1586, %v979
      %v1588 = vpop.permute.xlu0 %1587
      %v1590 = vmul.f32 %v1584, %v1588
      %v1591 = vmul.f32 %v1585, %v1588
      %v1592 = vadd.f32 %v1576, %v1590
      %v1593 = vadd.f32 %v1577, %v1591
      %1594 = vrot.lane.b32.xlu0 %v1505, 113
      %v1595 = vpop.permute.xlu0 %1594
      %1596 = vrot.lane.b32.xlu0 %v1506, 113
      %v1597 = vpop.permute.xlu0 %1596
      %v1598 = vsel %vm1120, %v1595, %v1597
      %v1599 = vsel %vm1120, %v1597, %v1595
      %v1600 = vmul.f32 %v1598, %v1126
      %v1601 = vmul.f32 %v1599, %v1130
      %1602 = vset.pattern.permute.xlu0 6
      %1603 = vperm.xlu0 %1602, %v979
      %v1604 = vpop.permute.xlu0 %1603
      %v1606 = vmul.f32 %v1600, %v1604
      %v1607 = vmul.f32 %v1601, %v1604
      %v1608 = vadd.f32 %v1592, %v1606
      %v1609 = vadd.f32 %v1593, %v1607
      %1610 = vrot.lane.b32.xlu0 %v1505, 112
      %v1611 = vpop.permute.xlu0 %1610
      %1612 = vrot.lane.b32.xlu0 %v1506, 112
      %v1613 = vpop.permute.xlu0 %1612
      %v1614 = vsel %vm1145, %v1611, %v1613
      %v1615 = vsel %vm1145, %v1613, %v1611
      %v1616 = vmul.f32 %v1614, %v1151
      %v1617 = vmul.f32 %v1615, %v1155
      %1618 = vset.pattern.permute.xlu0 7
      %1619 = vperm.xlu0 %1618, %v979
      %v1620 = vpop.permute.xlu0 %1619
      %v1622 = vmul.f32 %v1616, %v1620
      %v1623 = vmul.f32 %v1617, %v1620
      %v1624 = vadd.f32 %v1608, %v1622
      %v1625 = vadd.f32 %v1609, %v1623
      %1626 = vrot.lane.b32.xlu0 %v1505, 111
      %v1627 = vpop.permute.xlu0 %1626
      %1628 = vrot.lane.b32.xlu0 %v1506, 111
      %v1629 = vpop.permute.xlu0 %1628
      %v1630 = vsel %vm1170, %v1627, %v1629
      %v1631 = vsel %vm1170, %v1629, %v1627
      %v1632 = vmul.f32 %v1630, %v1176
      %v1633 = vmul.f32 %v1631, %v1180
      %1634 = vset.pattern.permute.xlu0 8
      %1635 = vperm.xlu0 %1634, %v979
      %v1636 = vpop.permute.xlu0 %1635
      %v1638 = vmul.f32 %v1632, %v1636
      %v1639 = vmul.f32 %v1633, %v1636
      %v1640 = vadd.f32 %v1624, %v1638
      %v1641 = vadd.f32 %v1625, %v1639
      %1642 = vset.pattern.permute.xlu0 9
      %1643 = vperm.xlu0 %1642, %v979
      %v1644 = vpop.permute.xlu0 %1643
      %v1646 = vadd.f32 %v1640, %v1644
      %v1647 = vadd.f32 %v1641, %v1644
      %v1648 = vsel %vm963, %v1646, 0.0
      %v1649 = vsel %vm963, %v1647, 0.0
      %v1650 = vadd.f32 %v1648, %v1649
      %1651 = vadd.xlane.f32.xlu0 %v1650
      %v1652 = vpop.xlane.xlu0 %1651
      %v1653 = vrot.slane %v1652, 4
      %v1654 = vadd.f32 %v1652, %v1653
      %v1655 = vrot.slane %v1654, 2
      %v1656 = vadd.f32 %v1654, %v1655
      %v1657 = vrot.slane %v1656, 1
      %v1658 = vadd.f32 %v1656, %v1657
      %s1659 = vtos %v1658
      %v1660 = vrcp.pop 1024.0
      %s1661 = vtos %v1660
      %s1662 = smul.f32 %s1659, %s1661
      %v1663 = vstv %s1662
      %v1664 = vsub.f32 %v1646, %v1663
      %v1665 = vsub.f32 %v1647, %v1663
      %v1666 = vmul.f32 %v1664, %v1664
      %v1667 = vmul.f32 %v1665, %v1665
      %v1668 = vsel %vm963, %v1666, 0.0
      %v1669 = vsel %vm963, %v1667, 0.0
      %v1670 = vadd.f32 %v1668, %v1669
      %1671 = vadd.xlane.f32.xlu0 %v1670
      %v1672 = vpop.xlane.xlu0 %1671
      %v1673 = vrot.slane %v1672, 4
      %v1674 = vadd.f32 %v1672, %v1673
      %v1675 = vrot.slane %v1674, 2
      %v1676 = vadd.f32 %v1674, %v1675
      %v1677 = vrot.slane %v1676, 1
      %v1678 = vadd.f32 %v1676, %v1677
      %s1679 = vtos %v1678
      %v1680 = vrcp.pop 1024.0
      %s1681 = vtos %v1680
      %s1682 = smul.f32 %s1679, %s1681
      %s1683 = sadd.f32 %s1682, 1e-05
      %v1684 = vstv %s1683
      %v1685 = vrsqrt.pop %v1684
      %s1686 = vtos %v1685
      %v1687 = vstv %s1686
      %v1688 = vmul.f32 %v1664, %v1687
      %v1689 = vmul.f32 %v1665, %v1687
      %1690 = vset.pattern.permute.xlu0 10
      %1691 = vperm.xlu0 %1690, %v979
      %v1692 = vpop.permute.xlu0 %1691
      %v1694 = vmul.f32 %v1688, %v1692
      %v1695 = vmul.f32 %v1689, %v1692
      %1696 = vset.pattern.permute.xlu0 11
      %1697 = vperm.xlu0 %1696, %v979
      %v1698 = vpop.permute.xlu0 %1697
      %v1700 = vadd.f32 %v1694, %v1698
      %v1701 = vadd.f32 %v1695, %v1698
      %v1702 = vpack.c.bf16 %v1700, %v1700
      %v1703 = vpack.c.bf16 %v1701, %v1701
      %1705 = vset.pattern.permute.xlu0 0
      %1706 = vperm.xlu0 %1705, %v981
      %v1707 = vpop.permute.xlu0 %1706
      %v1710 = vsel %vm1258, %v980, 0
      %v1713 = vsel %vm1262, %v1702, 0
      %v1716 = vsel %vm1262, %v1703, 0
      %1718 = vmatprep.subr.bf16.mxu0 %v1716
      %1719 = vmatpush1.bf16.msra.mxu0 %v1713
      %1720 = vmatprep.subr.bf16.mxu0 0
      %1721 = vmatpush1.bf16.msra.mxu0 0
      %1722 = vmatprep.subr.bf16.mxu0 0
      %1723 = vmatpush1.bf16.msra.mxu0 0
      %1724 = vmatprep.subr.bf16.mxu0 0
      %1725 = vmatpush1.bf16.msra.mxu0 0
      %1726 = vmatprep.subr.bf16.mxu0 0
      %1727 = vmatpush1.bf16.msra.mxu0 0
      %1728 = vmatprep.subr.bf16.mxu0 0
      %1729 = vmatpush1.bf16.msra.mxu0 0
      %1730 = vmatprep.subr.bf16.mxu0 0
      %1731 = vmatpush1.bf16.msra.mxu0 0
      %1732 = vmatprep.subr.bf16.mxu0 0
      %1733 = vmatpush1.bf16.msra.mxu0 0
      %1734 = vmatprep.subr.bf16.mxu0 0
      %1735 = vmatpush1.bf16.msra.mxu0 0
      %1736 = vmatprep.subr.bf16.mxu0 0
      %1737 = vmatpush1.bf16.msra.mxu0 0
      %1738 = vmatprep.subr.bf16.mxu0 0
      %1739 = vmatpush1.bf16.msra.mxu0 0
      %1740 = vmatprep.subr.bf16.mxu0 0
      %1741 = vmatpush1.bf16.msra.mxu0 0
      %1742 = vmatprep.subr.bf16.mxu0 0
      %1743 = vmatpush1.bf16.msra.mxu0 0
      %1744 = vmatprep.subr.bf16.mxu0 0
      %1745 = vmatpush1.bf16.msra.mxu0 0
      %1746 = vmatprep.subr.bf16.mxu0 0
      %1747 = vmatpush1.bf16.msra.mxu0 0
      %1748 = vmatprep.subr.bf16.mxu0 0
      %1749 = vmatpush1.bf16.msra.mxu0 0
      %1750 = vmatprep.mubr.bf16.mxu0 0
      %1751 = vmatmul.mubr.bf16.gmra.mrb[0].mxu0 %v1710
      %v1752 = vpop.f32.mrb[0].mxu0
      %v1753 = vadd.f32 %v1707, %v1752
      %v1754 = vpop.f32.mrb[0].mxu0
      %v1755 = vadd.f32 %v1707, %v1754
      %v1756 = vpop.f32.mrb[0].mxu0
      %v1757 = vpop.f32.mrb[0].mxu0
      %1758 = vdwg.mxu0
      %v1759 = vsel %vm963, %v1753, 0.0
      %v1760 = vsel %vm963, %v1755, 0.0
      %v1761 = vadd.f32 %v1759, %v1760
      %1762 = vadd.xlane.f32.xlu0 %v1761
      %v1763 = vpop.xlane.xlu0 %1762
      %v1764 = vrot.slane %v1763, 4
      %v1765 = vadd.f32 %v1763, %v1764
      %v1766 = vrot.slane %v1765, 2
      %v1767 = vadd.f32 %v1765, %v1766
      %v1768 = vrot.slane %v1767, 1
      %v1769 = vadd.f32 %v1767, %v1768
      %s1770 = vtos %v1769
      %v1771 = vrcp.pop 1024.0
      %s1772 = vtos %v1771
      %s1773 = smul.f32 %s1770, %s1772
      %v1774 = vstv %s1773
      %v1775 = vsub.f32 %v1753, %v1774
      %v1776 = vsub.f32 %v1755, %v1774
      %v1777 = vmul.f32 %v1775, %v1775
      %v1778 = vmul.f32 %v1776, %v1776
      %v1779 = vsel %vm963, %v1777, 0.0
      %v1780 = vsel %vm963, %v1778, 0.0
      %v1781 = vadd.f32 %v1779, %v1780
      %1782 = vadd.xlane.f32.xlu0 %v1781
      %v1783 = vpop.xlane.xlu0 %1782
      %v1784 = vrot.slane %v1783, 4
      %v1785 = vadd.f32 %v1783, %v1784
      %v1786 = vrot.slane %v1785, 2
      %v1787 = vadd.f32 %v1785, %v1786
      %v1788 = vrot.slane %v1787, 1
      %v1789 = vadd.f32 %v1787, %v1788
      %s1790 = vtos %v1789
      %v1791 = vrcp.pop 1024.0
      %s1792 = vtos %v1791
      %s1793 = smul.f32 %s1790, %s1792
      %s1794 = sadd.f32 %s1793, 1e-05
      %v1795 = vstv %s1794
      %v1796 = vrsqrt.pop %v1795
      %s1797 = vtos %v1796
      %v1798 = vstv %s1797
      %v1799 = vmul.f32 %v1775, %v1798
      %v1800 = vmul.f32 %v1776, %v1798
      %1801 = vset.pattern.permute.xlu0 1
      %1802 = vperm.xlu0 %1801, %v981
      %v1803 = vpop.permute.xlu0 %1802
      %v1805 = vmul.f32 %v1799, %v1803
      %v1806 = vmul.f32 %v1800, %v1803
      %1807 = vset.pattern.permute.xlu0 2
      %1808 = vperm.xlu0 %1807, %v981
      %v1809 = vpop.permute.xlu0 %1808
      %v1811 = vadd.f32 %v1805, %v1809
      %v1812 = vadd.f32 %v1806, %v1809
      %v1813 = vxor.u32 %v1811, 2147483648
      %v1814 = vxor.u32 %v1812, 2147483648
      %v1815 = vmul.f32 %v1813, 1.442695
      %v1816 = vpow.pop %v1815
      %v1817 = vmul.f32 %v1814, 1.442695
      %v1818 = vpow.pop %v1817
      %v1819 = vadd.f32 %v1816, 1.0
      %v1820 = vadd.f32 %v1818, 1.0
      %v1821 = vrcp.pop %v1819
      %v1822 = vmul.f32 1.0, %v1821
      %v1823 = vrcp.pop %v1820
      %v1824 = vmul.f32 1.0, %v1823
      %v1825 = vmul.f32 %v1811, %v1822
      %v1826 = vmul.f32 %v1812, %v1824
      %v1828 = vsel %vm1258, %v971, 0
      %v1831 = vsel %vm963, %v1825, 0
      %v1834 = vsel %vm963, %v1826, 0
      %1836 = vmatprep.subr.mxu0 %v1834
      %1837 = vmatpush1.msra.mxu0 %v1831
      %1838 = vmatprep.subr.mxu0 0.0
      %1839 = vmatpush1.msra.mxu0 0.0
      %1840 = vmatprep.subr.mxu0 0.0
      %1841 = vmatpush1.msra.mxu0 0.0
      %1842 = vmatprep.subr.mxu0 0.0
      %1843 = vmatpush1.msra.mxu0 0.0
      %1844 = vmatprep.subr.mxu0 0.0
      %1845 = vmatpush1.msra.mxu0 0.0
      %1846 = vmatprep.subr.mxu0 0.0
      %1847 = vmatpush1.msra.mxu0 0.0
      %1848 = vmatprep.subr.mxu0 0.0
      %1849 = vmatpush1.msra.mxu0 0.0
      %1850 = vmatprep.subr.mxu0 0.0
      %1851 = vmatpush1.msra.mxu0 0.0
      %1852 = vmatprep.subr.mxu0 0.0
      %1853 = vmatpush1.msra.mxu0 0.0
      %1854 = vmatprep.subr.mxu0 0.0
      %1855 = vmatpush1.msra.mxu0 0.0
      %1856 = vmatprep.subr.mxu0 0.0
      %1857 = vmatpush1.msra.mxu0 0.0
      %1858 = vmatprep.subr.mxu0 0.0
      %1859 = vmatpush1.msra.mxu0 0.0
      %1860 = vmatprep.subr.mxu0 0.0
      %1861 = vmatpush1.msra.mxu0 0.0
      %1862 = vmatprep.subr.mxu0 0.0
      %1863 = vmatpush1.msra.mxu0 0.0
      %1864 = vmatprep.subr.mxu0 0.0
      %1865 = vmatpush1.msra.mxu0 0.0
      %1866 = vmatprep.subr.mxu0 0.0
      %1867 = vmatpush1.msra.mxu0 0.0
      %1868 = vmatprep.subr.mxu0 0.0
      %1869 = vmatpush1.msra.mxu0 0.0
      %1870 = vmatprep.subr.mxu0 0.0
      %1871 = vmatpush1.msra.mxu0 0.0
      %1872 = vmatprep.subr.mxu0 0.0
      %1873 = vmatpush1.msra.mxu0 0.0
      %1874 = vmatprep.subr.mxu0 0.0
      %1875 = vmatpush1.msra.mxu0 0.0
      %1876 = vmatprep.subr.mxu0 0.0
      %1877 = vmatpush1.msra.mxu0 0.0
      %1878 = vmatprep.subr.mxu0 0.0
      %1879 = vmatpush1.msra.mxu0 0.0
      %1880 = vmatprep.subr.mxu0 0.0
      %1881 = vmatpush1.msra.mxu0 0.0
      %1882 = vmatprep.subr.mxu0 0.0
      %1883 = vmatpush1.msra.mxu0 0.0
      %1884 = vmatprep.subr.mxu0 0.0
      %1885 = vmatpush1.msra.mxu0 0.0
      %1886 = vmatprep.subr.mxu0 0.0
      %1887 = vmatpush1.msra.mxu0 0.0
      %1888 = vmatprep.subr.mxu0 0.0
      %1889 = vmatpush1.msra.mxu0 0.0
      %1890 = vmatprep.subr.mxu0 0.0
      %1891 = vmatpush1.msra.mxu0 0.0
      %1892 = vmatprep.subr.mxu0 0.0
      %1893 = vmatpush1.msra.mxu0 0.0
      %1894 = vmatprep.subr.mxu0 0.0
      %1895 = vmatpush1.msra.mxu0 0.0
      %1896 = vmatprep.subr.mxu0 0.0
      %1897 = vmatpush1.msra.mxu0 0.0
      %1898 = vmatprep.subr.mxu0 0.0
      %1899 = vmatpush1.msra.mxu0 0.0
      %1900 = vmatprep.mubr.f32.mxu0 0.0
      %1901 = vmatmul.mubr.f32.gmra.mrb[0].mxu0 %v1828
      %v1902 = vpop.f32.mrb[0].mxu0
      %v1903 = vadd.f32 0.0, %v1902
      %v1904 = vpop.f32.mrb[0].mxu0
      %v1905 = vadd.f32 0.0, %v1904
      %1906 = vdwg.mxu0
      %v1908 = vsel %vm1258, %v970, 0
      %v1911 = vsel %vm963, %v1376, 0
      %v1914 = vsel %vm963, %v1377, 0
      %1916 = vmatprep.subr.mxu0 %v1914
      %1917 = vmatpush1.msra.mxu0 %v1911
      %1918 = vmatprep.subr.mxu0 0.0
      %1919 = vmatpush1.msra.mxu0 0.0
      %1920 = vmatprep.subr.mxu0 0.0
      %1921 = vmatpush1.msra.mxu0 0.0
      %1922 = vmatprep.subr.mxu0 0.0
      %1923 = vmatpush1.msra.mxu0 0.0
      %1924 = vmatprep.subr.mxu0 0.0
      %1925 = vmatpush1.msra.mxu0 0.0
      %1926 = vmatprep.subr.mxu0 0.0
      %1927 = vmatpush1.msra.mxu0 0.0
      %1928 = vmatprep.subr.mxu0 0.0
      %1929 = vmatpush1.msra.mxu0 0.0
      %1930 = vmatprep.subr.mxu0 0.0
      %1931 = vmatpush1.msra.mxu0 0.0
      %1932 = vmatprep.subr.mxu0 0.0
      %1933 = vmatpush1.msra.mxu0 0.0
      %1934 = vmatprep.subr.mxu0 0.0
      %1935 = vmatpush1.msra.mxu0 0.0
      %1936 = vmatprep.subr.mxu0 0.0
      %1937 = vmatpush1.msra.mxu0 0.0
      %1938 = vmatprep.subr.mxu0 0.0
      %1939 = vmatpush1.msra.mxu0 0.0
      %1940 = vmatprep.subr.mxu0 0.0
      %1941 = vmatpush1.msra.mxu0 0.0
      %1942 = vmatprep.subr.mxu0 0.0
      %1943 = vmatpush1.msra.mxu0 0.0
      %1944 = vmatprep.subr.mxu0 0.0
      %1945 = vmatpush1.msra.mxu0 0.0
      %1946 = vmatprep.subr.mxu0 0.0
      %1947 = vmatpush1.msra.mxu0 0.0
      %1948 = vmatprep.subr.mxu0 0.0
      %1949 = vmatpush1.msra.mxu0 0.0
      %1950 = vmatprep.subr.mxu0 0.0
      %1951 = vmatpush1.msra.mxu0 0.0
      %1952 = vmatprep.subr.mxu0 0.0
      %1953 = vmatpush1.msra.mxu0 0.0
      %1954 = vmatprep.subr.mxu0 0.0
      %1955 = vmatpush1.msra.mxu0 0.0
      %1956 = vmatprep.subr.mxu0 0.0
      %1957 = vmatpush1.msra.mxu0 0.0
      %1958 = vmatprep.subr.mxu0 0.0
      %1959 = vmatpush1.msra.mxu0 0.0
      %1960 = vmatprep.subr.mxu0 0.0
      %1961 = vmatpush1.msra.mxu0 0.0
      %1962 = vmatprep.subr.mxu0 0.0
      %1963 = vmatpush1.msra.mxu0 0.0
      %1964 = vmatprep.subr.mxu0 0.0
      %1965 = vmatpush1.msra.mxu0 0.0
      %1966 = vmatprep.subr.mxu0 0.0
      %1967 = vmatpush1.msra.mxu0 0.0
      %1968 = vmatprep.subr.mxu0 0.0
      %1969 = vmatpush1.msra.mxu0 0.0
      %1970 = vmatprep.subr.mxu0 0.0
      %1971 = vmatpush1.msra.mxu0 0.0
      %1972 = vmatprep.subr.mxu0 0.0
      %1973 = vmatpush1.msra.mxu0 0.0
      %1974 = vmatprep.subr.mxu0 0.0
      %1975 = vmatpush1.msra.mxu0 0.0
      %1976 = vmatprep.subr.mxu0 0.0
      %1977 = vmatpush1.msra.mxu0 0.0
      %1978 = vmatprep.subr.mxu0 0.0
      %1979 = vmatpush1.msra.mxu0 0.0
      %1980 = vmatprep.mubr.f32.mxu0 0.0
      %1981 = vmatmul.mubr.f32.gmra.mrb[0].mxu0 %v1908
      %v1982 = vpop.f32.mrb[0].mxu0
      %v1983 = vadd.f32 %v1903, %v1982
      %v1984 = vpop.f32.mrb[0].mxu0
      %v1985 = vadd.f32 %v1905, %v1984
      %1986 = vdwg.mxu0
      %s1987 = scalar_lea.vmem %s12, 4
      %v1988 = vld [vmem:[%s1987] sm:$0xf]
      %s1989 = scalar_lea.vmem %s13, 2
      %v1990 = vld [vmem:[%s1989] sm:$0x3]
      %s1991 = scalar_lea.vmem %s14, 4
      %v1992 = vld [vmem:[%s1991] sm:$0xf]
      %s1993 = scalar_lea.vmem %s15, 2
      %v1994 = vld [vmem:[%s1993] sm:$0x3]
      %s1995 = scalar_lea.vmem %s16, 4
      %v1996 = vld [vmem:[%s1995] sm:$0xf]
      %s1997 = scalar_lea.vmem %s17, 4
      %v1998 = vld [vmem:[%s1997] sm:$0xf]
      %s1999 = scalar_lea.vmem %s18, 2
      %v2000 = vld [vmem:[%s1999] sm:$0x3]
      %s2001 = scalar_lea.vmem %s19, 4
      %v2002 = vld [vmem:[%s2001] sm:$0xf]
      %2004 = vset.pattern.permute.xlu0 4
      %2005 = vperm.xlu0 %2004, %v1988
      %v2006 = vpop.permute.xlu0 %2005
      %v2008 = vmul.f32 %v1983, %v2006
      %v2009 = vmul.f32 %v1985, %v2006
      %2010 = vrot.lane.b32.xlu0 %v1983, 17
      %v2011 = vpop.permute.xlu0 %2010
      %2012 = vrot.lane.b32.xlu0 %v1985, 17
      %v2013 = vpop.permute.xlu0 %2012
      %v2014 = vsel %vm995, %v2011, %v2013
      %v2015 = vsel %vm995, %v2013, %v2011
      %v2016 = vmul.f32 %v2015, %v1001
      %v2017 = vmul.f32 %v2014, %v1005
      %2018 = vset.pattern.permute.xlu0 0
      %2019 = vperm.xlu0 %2018, %v1988
      %v2020 = vpop.permute.xlu0 %2019
      %v2022 = vmul.f32 %v2016, %v2020
      %v2023 = vmul.f32 %v2017, %v2020
      %v2024 = vadd.f32 %v2008, %v2022
      %v2025 = vadd.f32 %v2009, %v2023
      %2026 = vrot.lane.b32.xlu0 %v1983, 16
      %v2027 = vpop.permute.xlu0 %2026
      %2028 = vrot.lane.b32.xlu0 %v1985, 16
      %v2029 = vpop.permute.xlu0 %2028
      %v2030 = vsel %vm1020, %v2027, %v2029
      %v2031 = vsel %vm1020, %v2029, %v2027
      %v2032 = vmul.f32 %v2031, %v1026
      %v2033 = vmul.f32 %v2030, %v1030
      %2034 = vset.pattern.permute.xlu0 1
      %2035 = vperm.xlu0 %2034, %v1988
      %v2036 = vpop.permute.xlu0 %2035
      %v2038 = vmul.f32 %v2032, %v2036
      %v2039 = vmul.f32 %v2033, %v2036
      %v2040 = vadd.f32 %v2024, %v2038
      %v2041 = vadd.f32 %v2025, %v2039
      %2042 = vrot.lane.b32.xlu0 %v1983, 15
      %v2043 = vpop.permute.xlu0 %2042
      %2044 = vrot.lane.b32.xlu0 %v1985, 15
      %v2045 = vpop.permute.xlu0 %2044
      %v2046 = vsel %vm1045, %v2043, %v2045
      %v2047 = vsel %vm1045, %v2045, %v2043
      %v2048 = vmul.f32 %v2047, %v1051
      %v2049 = vmul.f32 %v2046, %v1055
      %2050 = vset.pattern.permute.xlu0 2
      %2051 = vperm.xlu0 %2050, %v1988
      %v2052 = vpop.permute.xlu0 %2051
      %v2054 = vmul.f32 %v2048, %v2052
      %v2055 = vmul.f32 %v2049, %v2052
      %v2056 = vadd.f32 %v2040, %v2054
      %v2057 = vadd.f32 %v2041, %v2055
      %2058 = vrot.lane.b32.xlu0 %v1983, 1
      %v2059 = vpop.permute.xlu0 %2058
      %2060 = vrot.lane.b32.xlu0 %v1985, 1
      %v2061 = vpop.permute.xlu0 %2060
      %v2062 = vsel %vm1070, %v2059, %v2061
      %v2063 = vsel %vm1070, %v2061, %v2059
      %v2064 = vmul.f32 %v2063, %v1076
      %v2065 = vmul.f32 %v2062, %v1080
      %2066 = vset.pattern.permute.xlu0 3
      %2067 = vperm.xlu0 %2066, %v1988
      %v2068 = vpop.permute.xlu0 %2067
      %v2070 = vmul.f32 %v2064, %v2068
      %v2071 = vmul.f32 %v2065, %v2068
      %v2072 = vadd.f32 %v2056, %v2070
      %v2073 = vadd.f32 %v2057, %v2071
      %2074 = vrot.lane.b32.xlu0 %v1983, 127
      %v2075 = vpop.permute.xlu0 %2074
      %2076 = vrot.lane.b32.xlu0 %v1985, 127
      %v2077 = vpop.permute.xlu0 %2076
      %v2078 = vsel %vm1095, %v2075, %v2077
      %v2079 = vsel %vm1095, %v2077, %v2075
      %v2080 = vmul.f32 %v2078, %v1101
      %v2081 = vmul.f32 %v2079, %v1105
      %2082 = vset.pattern.permute.xlu0 5
      %2083 = vperm.xlu0 %2082, %v1988
      %v2084 = vpop.permute.xlu0 %2083
      %v2086 = vmul.f32 %v2080, %v2084
      %v2087 = vmul.f32 %v2081, %v2084
      %v2088 = vadd.f32 %v2072, %v2086
      %v2089 = vadd.f32 %v2073, %v2087
      %2090 = vrot.lane.b32.xlu0 %v1983, 113
      %v2091 = vpop.permute.xlu0 %2090
      %2092 = vrot.lane.b32.xlu0 %v1985, 113
      %v2093 = vpop.permute.xlu0 %2092
      %v2094 = vsel %vm1120, %v2091, %v2093
      %v2095 = vsel %vm1120, %v2093, %v2091
      %v2096 = vmul.f32 %v2094, %v1126
      %v2097 = vmul.f32 %v2095, %v1130
      %2098 = vset.pattern.permute.xlu0 6
      %2099 = vperm.xlu0 %2098, %v1988
      %v2100 = vpop.permute.xlu0 %2099
      %v2102 = vmul.f32 %v2096, %v2100
      %v2103 = vmul.f32 %v2097, %v2100
      %v2104 = vadd.f32 %v2088, %v2102
      %v2105 = vadd.f32 %v2089, %v2103
      %2106 = vrot.lane.b32.xlu0 %v1983, 112
      %v2107 = vpop.permute.xlu0 %2106
      %2108 = vrot.lane.b32.xlu0 %v1985, 112
      %v2109 = vpop.permute.xlu0 %2108
      %v2110 = vsel %vm1145, %v2107, %v2109
      %v2111 = vsel %vm1145, %v2109, %v2107
      %v2112 = vmul.f32 %v2110, %v1151
      %v2113 = vmul.f32 %v2111, %v1155
      %2114 = vset.pattern.permute.xlu0 7
      %2115 = vperm.xlu0 %2114, %v1988
      %v2116 = vpop.permute.xlu0 %2115
      %v2118 = vmul.f32 %v2112, %v2116
      %v2119 = vmul.f32 %v2113, %v2116
      %v2120 = vadd.f32 %v2104, %v2118
      %v2121 = vadd.f32 %v2105, %v2119
      %2122 = vrot.lane.b32.xlu0 %v1983, 111
      %v2123 = vpop.permute.xlu0 %2122
      %2124 = vrot.lane.b32.xlu0 %v1985, 111
      %v2125 = vpop.permute.xlu0 %2124
      %v2126 = vsel %vm1170, %v2123, %v2125
      %v2127 = vsel %vm1170, %v2125, %v2123
      %v2128 = vmul.f32 %v2126, %v1176
      %v2129 = vmul.f32 %v2127, %v1180
      %2130 = vset.pattern.permute.xlu0 8
      %2131 = vperm.xlu0 %2130, %v1988
      %v2132 = vpop.permute.xlu0 %2131
      %v2134 = vmul.f32 %v2128, %v2132
      %v2135 = vmul.f32 %v2129, %v2132
      %v2136 = vadd.f32 %v2120, %v2134
      %v2137 = vadd.f32 %v2121, %v2135
      %2138 = vset.pattern.permute.xlu0 9
      %2139 = vperm.xlu0 %2138, %v1988
      %v2140 = vpop.permute.xlu0 %2139
      %v2142 = vadd.f32 %v2136, %v2140
      %v2143 = vadd.f32 %v2137, %v2140
      %v2144 = vsel %vm963, %v2142, 0.0
      %v2145 = vsel %vm963, %v2143, 0.0
      %v2146 = vadd.f32 %v2144, %v2145
      %2147 = vadd.xlane.f32.xlu0 %v2146
      %v2148 = vpop.xlane.xlu0 %2147
      %v2149 = vrot.slane %v2148, 4
      %v2150 = vadd.f32 %v2148, %v2149
      %v2151 = vrot.slane %v2150, 2
      %v2152 = vadd.f32 %v2150, %v2151
      %v2153 = vrot.slane %v2152, 1
      %v2154 = vadd.f32 %v2152, %v2153
      %s2155 = vtos %v2154
      %v2156 = vrcp.pop 1024.0
      %s2157 = vtos %v2156
      %s2158 = smul.f32 %s2155, %s2157
      %v2159 = vstv %s2158
      %v2160 = vsub.f32 %v2142, %v2159
      %v2161 = vsub.f32 %v2143, %v2159
      %v2162 = vmul.f32 %v2160, %v2160
      %v2163 = vmul.f32 %v2161, %v2161
      %v2164 = vsel %vm963, %v2162, 0.0
      %v2165 = vsel %vm963, %v2163, 0.0
      %v2166 = vadd.f32 %v2164, %v2165
      %2167 = vadd.xlane.f32.xlu0 %v2166
      %v2168 = vpop.xlane.xlu0 %2167
      %v2169 = vrot.slane %v2168, 4
      %v2170 = vadd.f32 %v2168, %v2169
      %v2171 = vrot.slane %v2170, 2
      %v2172 = vadd.f32 %v2170, %v2171
      %v2173 = vrot.slane %v2172, 1
      %v2174 = vadd.f32 %v2172, %v2173
      %s2175 = vtos %v2174
      %v2176 = vrcp.pop 1024.0
      %s2177 = vtos %v2176
      %s2178 = smul.f32 %s2175, %s2177
      %s2179 = sadd.f32 %s2178, 1e-05
      %v2180 = vstv %s2179
      %v2181 = vrsqrt.pop %v2180
      %s2182 = vtos %v2181
      %v2183 = vstv %s2182
      %v2184 = vmul.f32 %v2160, %v2183
      %v2185 = vmul.f32 %v2161, %v2183
      %2186 = vset.pattern.permute.xlu0 10
      %2187 = vperm.xlu0 %2186, %v1988
      %v2188 = vpop.permute.xlu0 %2187
      %v2190 = vmul.f32 %v2184, %v2188
      %v2191 = vmul.f32 %v2185, %v2188
      %2192 = vset.pattern.permute.xlu0 11
      %2193 = vperm.xlu0 %2192, %v1988
      %v2194 = vpop.permute.xlu0 %2193
      %v2196 = vadd.f32 %v2190, %v2194
      %v2197 = vadd.f32 %v2191, %v2194
      %v2198 = vpack.c.bf16 %v2196, %v2196
      %v2199 = vpack.c.bf16 %v2197, %v2197
      %2201 = vset.pattern.permute.xlu0 0
      %2202 = vperm.xlu0 %2201, %v1992
      %v2203 = vpop.permute.xlu0 %2202
      %v2206 = vsel %vm1258, %v1990, 0
      %v2209 = vsel %vm1262, %v2198, 0
      %v2212 = vsel %vm1262, %v2199, 0
      %2214 = vmatprep.subr.bf16.mxu0 %v2212
      %2215 = vmatpush1.bf16.msra.mxu0 %v2209
      %2216 = vmatprep.subr.bf16.mxu0 0
      %2217 = vmatpush1.bf16.msra.mxu0 0
      %2218 = vmatprep.subr.bf16.mxu0 0
      %2219 = vmatpush1.bf16.msra.mxu0 0
      %2220 = vmatprep.subr.bf16.mxu0 0
      %2221 = vmatpush1.bf16.msra.mxu0 0
      %2222 = vmatprep.subr.bf16.mxu0 0
      %2223 = vmatpush1.bf16.msra.mxu0 0
      %2224 = vmatprep.subr.bf16.mxu0 0
      %2225 = vmatpush1.bf16.msra.mxu0 0
      %2226 = vmatprep.subr.bf16.mxu0 0
      %2227 = vmatpush1.bf16.msra.mxu0 0
      %2228 = vmatprep.subr.bf16.mxu0 0
      %2229 = vmatpush1.bf16.msra.mxu0 0
      %2230 = vmatprep.subr.bf16.mxu0 0
      %2231 = vmatpush1.bf16.msra.mxu0 0
      %2232 = vmatprep.subr.bf16.mxu0 0
      %2233 = vmatpush1.bf16.msra.mxu0 0
      %2234 = vmatprep.subr.bf16.mxu0 0
      %2235 = vmatpush1.bf16.msra.mxu0 0
      %2236 = vmatprep.subr.bf16.mxu0 0
      %2237 = vmatpush1.bf16.msra.mxu0 0
      %2238 = vmatprep.subr.bf16.mxu0 0
      %2239 = vmatpush1.bf16.msra.mxu0 0
      %2240 = vmatprep.subr.bf16.mxu0 0
      %2241 = vmatpush1.bf16.msra.mxu0 0
      %2242 = vmatprep.subr.bf16.mxu0 0
      %2243 = vmatpush1.bf16.msra.mxu0 0
      %2244 = vmatprep.subr.bf16.mxu0 0
      %2245 = vmatpush1.bf16.msra.mxu0 0
      %2246 = vmatprep.mubr.bf16.mxu0 0
      %2247 = vmatmul.mubr.bf16.gmra.mrb[0].mxu0 %v2206
      %v2248 = vpop.f32.mrb[0].mxu0
      %v2249 = vadd.f32 %v2203, %v2248
      %v2250 = vpop.f32.mrb[0].mxu0
      %v2251 = vadd.f32 %v2203, %v2250
      %v2252 = vpop.f32.mrb[0].mxu0
      %v2253 = vpop.f32.mrb[0].mxu0
      %2254 = vdwg.mxu0
      %v2255 = vsel %vm963, %v2249, 0.0
      %v2256 = vsel %vm963, %v2251, 0.0
      %v2257 = vadd.f32 %v2255, %v2256
      %2258 = vadd.xlane.f32.xlu0 %v2257
      %v2259 = vpop.xlane.xlu0 %2258
      %v2260 = vrot.slane %v2259, 4
      %v2261 = vadd.f32 %v2259, %v2260
      %v2262 = vrot.slane %v2261, 2
      %v2263 = vadd.f32 %v2261, %v2262
      %v2264 = vrot.slane %v2263, 1
      %v2265 = vadd.f32 %v2263, %v2264
      %s2266 = vtos %v2265
      %v2267 = vrcp.pop 1024.0
      %s2268 = vtos %v2267
      %s2269 = smul.f32 %s2266, %s2268
      %v2270 = vstv %s2269
      %v2271 = vsub.f32 %v2249, %v2270
      %v2272 = vsub.f32 %v2251, %v2270
      %v2273 = vmul.f32 %v2271, %v2271
      %v2274 = vmul.f32 %v2272, %v2272
      %v2275 = vsel %vm963, %v2273, 0.0
      %v2276 = vsel %vm963, %v2274, 0.0
      %v2277 = vadd.f32 %v2275, %v2276
      %2278 = vadd.xlane.f32.xlu0 %v2277
      %v2279 = vpop.xlane.xlu0 %2278
      %v2280 = vrot.slane %v2279, 4
      %v2281 = vadd.f32 %v2279, %v2280
      %v2282 = vrot.slane %v2281, 2
      %v2283 = vadd.f32 %v2281, %v2282
      %v2284 = vrot.slane %v2283, 1
      %v2285 = vadd.f32 %v2283, %v2284
      %s2286 = vtos %v2285
      %v2287 = vrcp.pop 1024.0
      %s2288 = vtos %v2287
      %s2289 = smul.f32 %s2286, %s2288
      %s2290 = sadd.f32 %s2289, 1e-05
      %v2291 = vstv %s2290
      %v2292 = vrsqrt.pop %v2291
      %s2293 = vtos %v2292
      %v2294 = vstv %s2293
      %v2295 = vmul.f32 %v2271, %v2294
      %v2296 = vmul.f32 %v2272, %v2294
      %2297 = vset.pattern.permute.xlu0 1
      %2298 = vperm.xlu0 %2297, %v1992
      %v2299 = vpop.permute.xlu0 %2298
      %v2301 = vmul.f32 %v2295, %v2299
      %v2302 = vmul.f32 %v2296, %v2299
      %2303 = vset.pattern.permute.xlu0 2
      %2304 = vperm.xlu0 %2303, %v1992
      %v2305 = vpop.permute.xlu0 %2304
      %v2307 = vadd.f32 %v2301, %v2305
      %v2308 = vadd.f32 %v2302, %v2305
      %v2309 = vxor.u32 %v2307, 2147483648
      %v2310 = vxor.u32 %v2308, 2147483648
      %v2311 = vmul.f32 %v2309, 1.442695
      %v2312 = vpow.pop %v2311
      %v2313 = vmul.f32 %v2310, 1.442695
      %v2314 = vpow.pop %v2313
      %v2315 = vadd.f32 %v2312, 1.0
      %v2316 = vadd.f32 %v2314, 1.0
      %v2317 = vrcp.pop %v2315
      %v2318 = vmul.f32 1.0, %v2317
      %v2319 = vrcp.pop %v2316
      %v2320 = vmul.f32 1.0, %v2319
      %v2321 = vmul.f32 %v2307, %v2318
      %v2322 = vmul.f32 %v2308, %v2320
      %v2323 = vpack.c.bf16 %v1983, %v1983
      %v2324 = vpack.c.bf16 %v1985, %v1985
      %2326 = vset.pattern.permute.xlu0 0
      %2327 = vperm.xlu0 %2326, %v1996
      %v2328 = vpop.permute.xlu0 %2327
      %v2332 = vrot.slane %v2323, 2
      %v2333 = vrot.slane %v2324, 2
      %v2335 = vsel %vm1258, %v1994, 0
      %v2338 = vsel %vm1262, %v2332, 0
      %v2341 = vsel %vm1262, %v2333, 0
      %2343 = vmatprep.subr.bf16.mxu0 %v2341
      %2344 = vmatpush1.bf16.msra.mxu0 %v2338
      %2345 = vmatprep.subr.bf16.mxu0 0
      %2346 = vmatpush1.bf16.msra.mxu0 0
      %2347 = vmatprep.subr.bf16.mxu0 0
      %2348 = vmatpush1.bf16.msra.mxu0 0
      %2349 = vmatprep.subr.bf16.mxu0 0
      %2350 = vmatpush1.bf16.msra.mxu0 0
      %2351 = vmatprep.subr.bf16.mxu0 0
      %2352 = vmatpush1.bf16.msra.mxu0 0
      %2353 = vmatprep.subr.bf16.mxu0 0
      %2354 = vmatpush1.bf16.msra.mxu0 0
      %2355 = vmatprep.subr.bf16.mxu0 0
      %2356 = vmatpush1.bf16.msra.mxu0 0
      %2357 = vmatprep.subr.bf16.mxu0 0
      %2358 = vmatpush1.bf16.msra.mxu0 0
      %2359 = vmatprep.subr.bf16.mxu0 0
      %2360 = vmatpush1.bf16.msra.mxu0 0
      %2361 = vmatprep.subr.bf16.mxu0 0
      %2362 = vmatpush1.bf16.msra.mxu0 0
      %2363 = vmatprep.subr.bf16.mxu0 0
      %2364 = vmatpush1.bf16.msra.mxu0 0
      %2365 = vmatprep.subr.bf16.mxu0 0
      %2366 = vmatpush1.bf16.msra.mxu0 0
      %2367 = vmatprep.subr.bf16.mxu0 0
      %2368 = vmatpush1.bf16.msra.mxu0 0
      %2369 = vmatprep.subr.bf16.mxu0 0
      %2370 = vmatpush1.bf16.msra.mxu0 0
      %2371 = vmatprep.subr.bf16.mxu0 0
      %2372 = vmatpush1.bf16.msra.mxu0 0
      %2373 = vmatprep.subr.bf16.mxu0 0
      %2374 = vmatpush1.bf16.msra.mxu0 0
      %2375 = vmatprep.mubr.bf16.mxu0 0
      %2376 = vmatmul.mubr.bf16.gmra.mrb[0].mxu0 %v2335
      %v2377 = vpop.f32.mrb[0].mxu0
      %v2378 = vadd.f32 %v2328, %v2377
      %v2379 = vpop.f32.mrb[0].mxu0
      %v2380 = vadd.f32 %v2328, %v2379
      %v2381 = vpop.f32.mrb[0].mxu0
      %v2382 = vpop.f32.mrb[0].mxu0
      %2383 = vdwg.mxu0
      %v2384 = vsel %vm963, %v2378, 0.0
      %v2385 = vsel %vm963, %v2380, 0.0
      %v2386 = vadd.f32 %v2384, %v2385
      %2387 = vadd.xlane.f32.xlu0 %v2386
      %v2388 = vpop.xlane.xlu0 %2387
      %v2389 = vrot.slane %v2388, 4
      %v2390 = vadd.f32 %v2388, %v2389
      %v2391 = vrot.slane %v2390, 2
      %v2392 = vadd.f32 %v2390, %v2391
      %v2393 = vrot.slane %v2392, 1
      %v2394 = vadd.f32 %v2392, %v2393
      %s2395 = vtos %v2394
      %v2396 = vrcp.pop 1024.0
      %s2397 = vtos %v2396
      %s2398 = smul.f32 %s2395, %s2397
      %v2399 = vstv %s2398
      %v2400 = vsub.f32 %v2378, %v2399
      %v2401 = vsub.f32 %v2380, %v2399
      %v2402 = vmul.f32 %v2400, %v2400
      %v2403 = vmul.f32 %v2401, %v2401
      %v2404 = vsel %vm963, %v2402, 0.0
      %v2405 = vsel %vm963, %v2403, 0.0
      %v2406 = vadd.f32 %v2404, %v2405
      %2407 = vadd.xlane.f32.xlu0 %v2406
      %v2408 = vpop.xlane.xlu0 %2407
      %v2409 = vrot.slane %v2408, 4
      %v2410 = vadd.f32 %v2408, %v2409
      %v2411 = vrot.slane %v2410, 2
      %v2412 = vadd.f32 %v2410, %v2411
      %v2413 = vrot.slane %v2412, 1
      %v2414 = vadd.f32 %v2412, %v2413
      %s2415 = vtos %v2414
      %v2416 = vrcp.pop 1024.0
      %s2417 = vtos %v2416
      %s2418 = smul.f32 %s2415, %s2417
      %s2419 = sadd.f32 %s2418, 1e-05
      %v2420 = vstv %s2419
      %v2421 = vrsqrt.pop %v2420
      %s2422 = vtos %v2421
      %v2423 = vstv %s2422
      %v2424 = vmul.f32 %v2400, %v2423
      %v2425 = vmul.f32 %v2401, %v2423
      %2426 = vset.pattern.permute.xlu0 1
      %2427 = vperm.xlu0 %2426, %v1996
      %v2428 = vpop.permute.xlu0 %2427
      %v2430 = vmul.f32 %v2424, %v2428
      %v2431 = vmul.f32 %v2425, %v2428
      %2432 = vset.pattern.permute.xlu0 2
      %2433 = vperm.xlu0 %2432, %v1996
      %v2434 = vpop.permute.xlu0 %2433
      %v2436 = vadd.f32 %v2430, %v2434
      %v2437 = vadd.f32 %v2431, %v2434
      %v2438 = vxor.u32 %v2436, 2147483648
      %v2439 = vxor.u32 %v2437, 2147483648
      %v2440 = vmul.f32 %v2438, 1.442695
      %v2441 = vpow.pop %v2440
      %v2442 = vmul.f32 %v2439, 1.442695
      %v2443 = vpow.pop %v2442
      %v2444 = vadd.f32 %v2441, 1.0
      %v2445 = vadd.f32 %v2443, 1.0
      %v2446 = vrcp.pop %v2444
      %v2447 = vmul.f32 1.0, %v2446
      %v2448 = vrcp.pop %v2445
      %v2449 = vmul.f32 1.0, %v2448
      %v2450 = vmul.f32 %v2436, %v2447
      %v2451 = vmul.f32 %v2437, %v2449
      %2453 = vset.pattern.permute.xlu0 4
      %2454 = vperm.xlu0 %2453, %v1998
      %v2455 = vpop.permute.xlu0 %2454
      %v2457 = vmul.f32 %v2450, %v2455
      %v2458 = vmul.f32 %v2451, %v2455
      %2459 = vrot.lane.b32.xlu0 %v2450, 17
      %v2460 = vpop.permute.xlu0 %2459
      %2461 = vrot.lane.b32.xlu0 %v2451, 17
      %v2462 = vpop.permute.xlu0 %2461
      %v2463 = vsel %vm995, %v2460, %v2462
      %v2464 = vsel %vm995, %v2462, %v2460
      %v2465 = vmul.f32 %v2464, %v1001
      %v2466 = vmul.f32 %v2463, %v1005
      %2467 = vset.pattern.permute.xlu0 0
      %2468 = vperm.xlu0 %2467, %v1998
      %v2469 = vpop.permute.xlu0 %2468
      %v2471 = vmul.f32 %v2465, %v2469
      %v2472 = vmul.f32 %v2466, %v2469
      %v2473 = vadd.f32 %v2457, %v2471
      %v2474 = vadd.f32 %v2458, %v2472
      %2475 = vrot.lane.b32.xlu0 %v2450, 16
      %v2476 = vpop.permute.xlu0 %2475
      %2477 = vrot.lane.b32.xlu0 %v2451, 16
      %v2478 = vpop.permute.xlu0 %2477
      %v2479 = vsel %vm1020, %v2476, %v2478
      %v2480 = vsel %vm1020, %v2478, %v2476
      %v2481 = vmul.f32 %v2480, %v1026
      %v2482 = vmul.f32 %v2479, %v1030
      %2483 = vset.pattern.permute.xlu0 1
      %2484 = vperm.xlu0 %2483, %v1998
      %v2485 = vpop.permute.xlu0 %2484
      %v2487 = vmul.f32 %v2481, %v2485
      %v2488 = vmul.f32 %v2482, %v2485
      %v2489 = vadd.f32 %v2473, %v2487
      %v2490 = vadd.f32 %v2474, %v2488
      %2491 = vrot.lane.b32.xlu0 %v2450, 15
      %v2492 = vpop.permute.xlu0 %2491
      %2493 = vrot.lane.b32.xlu0 %v2451, 15
      %v2494 = vpop.permute.xlu0 %2493
      %v2495 = vsel %vm1045, %v2492, %v2494
      %v2496 = vsel %vm1045, %v2494, %v2492
      %v2497 = vmul.f32 %v2496, %v1051
      %v2498 = vmul.f32 %v2495, %v1055
      %2499 = vset.pattern.permute.xlu0 2
      %2500 = vperm.xlu0 %2499, %v1998
      %v2501 = vpop.permute.xlu0 %2500
      %v2503 = vmul.f32 %v2497, %v2501
      %v2504 = vmul.f32 %v2498, %v2501
      %v2505 = vadd.f32 %v2489, %v2503
      %v2506 = vadd.f32 %v2490, %v2504
      %2507 = vrot.lane.b32.xlu0 %v2450, 1
      %v2508 = vpop.permute.xlu0 %2507
      %2509 = vrot.lane.b32.xlu0 %v2451, 1
      %v2510 = vpop.permute.xlu0 %2509
      %v2511 = vsel %vm1070, %v2508, %v2510
      %v2512 = vsel %vm1070, %v2510, %v2508
      %v2513 = vmul.f32 %v2512, %v1076
      %v2514 = vmul.f32 %v2511, %v1080
      %2515 = vset.pattern.permute.xlu0 3
      %2516 = vperm.xlu0 %2515, %v1998
      %v2517 = vpop.permute.xlu0 %2516
      %v2519 = vmul.f32 %v2513, %v2517
      %v2520 = vmul.f32 %v2514, %v2517
      %v2521 = vadd.f32 %v2505, %v2519
      %v2522 = vadd.f32 %v2506, %v2520
      %2523 = vrot.lane.b32.xlu0 %v2450, 127
      %v2524 = vpop.permute.xlu0 %2523
      %2525 = vrot.lane.b32.xlu0 %v2451, 127
      %v2526 = vpop.permute.xlu0 %2525
      %v2527 = vsel %vm1095, %v2524, %v2526
      %v2528 = vsel %vm1095, %v2526, %v2524
      %v2529 = vmul.f32 %v2527, %v1101
      %v2530 = vmul.f32 %v2528, %v1105
      %2531 = vset.pattern.permute.xlu0 5
      %2532 = vperm.xlu0 %2531, %v1998
      %v2533 = vpop.permute.xlu0 %2532
      %v2535 = vmul.f32 %v2529, %v2533
      %v2536 = vmul.f32 %v2530, %v2533
      %v2537 = vadd.f32 %v2521, %v2535
      %v2538 = vadd.f32 %v2522, %v2536
      %2539 = vrot.lane.b32.xlu0 %v2450, 113
      %v2540 = vpop.permute.xlu0 %2539
      %2541 = vrot.lane.b32.xlu0 %v2451, 113
      %v2542 = vpop.permute.xlu0 %2541
      %v2543 = vsel %vm1120, %v2540, %v2542
      %v2544 = vsel %vm1120, %v2542, %v2540
      %v2545 = vmul.f32 %v2543, %v1126
      %v2546 = vmul.f32 %v2544, %v1130
      %2547 = vset.pattern.permute.xlu0 6
      %2548 = vperm.xlu0 %2547, %v1998
      %v2549 = vpop.permute.xlu0 %2548
      %v2551 = vmul.f32 %v2545, %v2549
      %v2552 = vmul.f32 %v2546, %v2549
      %v2553 = vadd.f32 %v2537, %v2551
      %v2554 = vadd.f32 %v2538, %v2552
      %2555 = vrot.lane.b32.xlu0 %v2450, 112
      %v2556 = vpop.permute.xlu0 %2555
      %2557 = vrot.lane.b32.xlu0 %v2451, 112
      %v2558 = vpop.permute.xlu0 %2557
      %v2559 = vsel %vm1145, %v2556, %v2558
      %v2560 = vsel %vm1145, %v2558, %v2556
      %v2561 = vmul.f32 %v2559, %v1151
      %v2562 = vmul.f32 %v2560, %v1155
      %2563 = vset.pattern.permute.xlu0 7
      %2564 = vperm.xlu0 %2563, %v1998
      %v2565 = vpop.permute.xlu0 %2564
      %v2567 = vmul.f32 %v2561, %v2565
      %v2568 = vmul.f32 %v2562, %v2565
      %v2569 = vadd.f32 %v2553, %v2567
      %v2570 = vadd.f32 %v2554, %v2568
      %2571 = vrot.lane.b32.xlu0 %v2450, 111
      %v2572 = vpop.permute.xlu0 %2571
      %2573 = vrot.lane.b32.xlu0 %v2451, 111
      %v2574 = vpop.permute.xlu0 %2573
      %v2575 = vsel %vm1170, %v2572, %v2574
      %v2576 = vsel %vm1170, %v2574, %v2572
      %v2577 = vmul.f32 %v2575, %v1176
      %v2578 = vmul.f32 %v2576, %v1180
      %2579 = vset.pattern.permute.xlu0 8
      %2580 = vperm.xlu0 %2579, %v1998
      %v2581 = vpop.permute.xlu0 %2580
      %v2583 = vmul.f32 %v2577, %v2581
      %v2584 = vmul.f32 %v2578, %v2581
      %v2585 = vadd.f32 %v2569, %v2583
      %v2586 = vadd.f32 %v2570, %v2584
      %2587 = vset.pattern.permute.xlu0 9
      %2588 = vperm.xlu0 %2587, %v1998
      %v2589 = vpop.permute.xlu0 %2588
      %v2591 = vadd.f32 %v2585, %v2589
      %v2592 = vadd.f32 %v2586, %v2589
      %v2593 = vsel %vm963, %v2591, 0.0
      %v2594 = vsel %vm963, %v2592, 0.0
      %v2595 = vadd.f32 %v2593, %v2594
      %2596 = vadd.xlane.f32.xlu0 %v2595
      %v2597 = vpop.xlane.xlu0 %2596
      %v2598 = vrot.slane %v2597, 4
      %v2599 = vadd.f32 %v2597, %v2598
      %v2600 = vrot.slane %v2599, 2
      %v2601 = vadd.f32 %v2599, %v2600
      %v2602 = vrot.slane %v2601, 1
      %v2603 = vadd.f32 %v2601, %v2602
      %s2604 = vtos %v2603
      %v2605 = vrcp.pop 1024.0
      %s2606 = vtos %v2605
      %s2607 = smul.f32 %s2604, %s2606
      %v2608 = vstv %s2607
      %v2609 = vsub.f32 %v2591, %v2608
      %v2610 = vsub.f32 %v2592, %v2608
      %v2611 = vmul.f32 %v2609, %v2609
      %v2612 = vmul.f32 %v2610, %v2610
      %v2613 = vsel %vm963, %v2611, 0.0
      %v2614 = vsel %vm963, %v2612, 0.0
      %v2615 = vadd.f32 %v2613, %v2614
      %2616 = vadd.xlane.f32.xlu0 %v2615
      %v2617 = vpop.xlane.xlu0 %2616
      %v2618 = vrot.slane %v2617, 4
      %v2619 = vadd.f32 %v2617, %v2618
      %v2620 = vrot.slane %v2619, 2
      %v2621 = vadd.f32 %v2619, %v2620
      %v2622 = vrot.slane %v2621, 1
      %v2623 = vadd.f32 %v2621, %v2622
      %s2624 = vtos %v2623
      %v2625 = vrcp.pop 1024.0
      %s2626 = vtos %v2625
      %s2627 = smul.f32 %s2624, %s2626
      %s2628 = sadd.f32 %s2627, 1e-05
      %v2629 = vstv %s2628
      %v2630 = vrsqrt.pop %v2629
      %s2631 = vtos %v2630
      %v2632 = vstv %s2631
      %v2633 = vmul.f32 %v2609, %v2632
      %v2634 = vmul.f32 %v2610, %v2632
      %2635 = vset.pattern.permute.xlu0 10
      %2636 = vperm.xlu0 %2635, %v1998
      %v2637 = vpop.permute.xlu0 %2636
      %v2639 = vmul.f32 %v2633, %v2637
      %v2640 = vmul.f32 %v2634, %v2637
      %2641 = vset.pattern.permute.xlu0 11
      %2642 = vperm.xlu0 %2641, %v1998
      %v2643 = vpop.permute.xlu0 %2642
      %v2645 = vadd.f32 %v2639, %v2643
      %v2646 = vadd.f32 %v2640, %v2643
      %v2647 = vpack.c.bf16 %v2645, %v2645
      %v2648 = vpack.c.bf16 %v2646, %v2646
      %2650 = vset.pattern.permute.xlu0 0
      %2651 = vperm.xlu0 %2650, %v2002
      %v2652 = vpop.permute.xlu0 %2651
      %v2655 = vsel %vm1258, %v2000, 0
      %v2658 = vsel %vm1262, %v2647, 0
      %v2661 = vsel %vm1262, %v2648, 0
      %2663 = vmatprep.subr.bf16.mxu0 %v2661
      %2664 = vmatpush1.bf16.msra.mxu0 %v2658
      %2665 = vmatprep.subr.bf16.mxu0 0
      %2666 = vmatpush1.bf16.msra.mxu0 0
      %2667 = vmatprep.subr.bf16.mxu0 0
      %2668 = vmatpush1.bf16.msra.mxu0 0
      %2669 = vmatprep.subr.bf16.mxu0 0
      %2670 = vmatpush1.bf16.msra.mxu0 0
      %2671 = vmatprep.subr.bf16.mxu0 0
      %2672 = vmatpush1.bf16.msra.mxu0 0
      %2673 = vmatprep.subr.bf16.mxu0 0
      %2674 = vmatpush1.bf16.msra.mxu0 0
      %2675 = vmatprep.subr.bf16.mxu0 0
      %2676 = vmatpush1.bf16.msra.mxu0 0
      %2677 = vmatprep.subr.bf16.mxu0 0
      %2678 = vmatpush1.bf16.msra.mxu0 0
      %2679 = vmatprep.subr.bf16.mxu0 0
      %2680 = vmatpush1.bf16.msra.mxu0 0
      %2681 = vmatprep.subr.bf16.mxu0 0
      %2682 = vmatpush1.bf16.msra.mxu0 0
      %2683 = vmatprep.subr.bf16.mxu0 0
      %2684 = vmatpush1.bf16.msra.mxu0 0
      %2685 = vmatprep.subr.bf16.mxu0 0
      %2686 = vmatpush1.bf16.msra.mxu0 0
      %2687 = vmatprep.subr.bf16.mxu0 0
      %2688 = vmatpush1.bf16.msra.mxu0 0
      %2689 = vmatprep.subr.bf16.mxu0 0
      %2690 = vmatpush1.bf16.msra.mxu0 0
      %2691 = vmatprep.subr.bf16.mxu0 0
      %2692 = vmatpush1.bf16.msra.mxu0 0
      %2693 = vmatprep.subr.bf16.mxu0 0
      %2694 = vmatpush1.bf16.msra.mxu0 0
      %2695 = vmatprep.mubr.bf16.mxu0 0
      %2696 = vmatmul.mubr.bf16.gmra.mrb[0].mxu0 %v2655
      %v2697 = vpop.f32.mrb[0].mxu0
      %v2698 = vadd.f32 %v2652, %v2697
      %v2699 = vpop.f32.mrb[0].mxu0
      %v2700 = vadd.f32 %v2652, %v2699
      %v2701 = vpop.f32.mrb[0].mxu0
      %v2702 = vpop.f32.mrb[0].mxu0
      %2703 = vdwg.mxu0
      %v2704 = vsel %vm963, %v2698, 0.0
      %v2705 = vsel %vm963, %v2700, 0.0
      %v2706 = vadd.f32 %v2704, %v2705
      %2707 = vadd.xlane.f32.xlu0 %v2706
      %v2708 = vpop.xlane.xlu0 %2707
      %v2709 = vrot.slane %v2708, 4
      %v2710 = vadd.f32 %v2708, %v2709
      %v2711 = vrot.slane %v2710, 2
      %v2712 = vadd.f32 %v2710, %v2711
      %v2713 = vrot.slane %v2712, 1
      %v2714 = vadd.f32 %v2712, %v2713
      %s2715 = vtos %v2714
      %v2716 = vrcp.pop 1024.0
      %s2717 = vtos %v2716
      %s2718 = smul.f32 %s2715, %s2717
      %v2719 = vstv %s2718
      %v2720 = vsub.f32 %v2698, %v2719
      %v2721 = vsub.f32 %v2700, %v2719
      %v2722 = vmul.f32 %v2720, %v2720
      %v2723 = vmul.f32 %v2721, %v2721
      %v2724 = vsel %vm963, %v2722, 0.0
      %v2725 = vsel %vm963, %v2723, 0.0
      %v2726 = vadd.f32 %v2724, %v2725
      %2727 = vadd.xlane.f32.xlu0 %v2726
      %v2728 = vpop.xlane.xlu0 %2727
      %v2729 = vrot.slane %v2728, 4
      %v2730 = vadd.f32 %v2728, %v2729
      %v2731 = vrot.slane %v2730, 2
      %v2732 = vadd.f32 %v2730, %v2731
      %v2733 = vrot.slane %v2732, 1
      %v2734 = vadd.f32 %v2732, %v2733
      %s2735 = vtos %v2734
      %v2736 = vrcp.pop 1024.0
      %s2737 = vtos %v2736
      %s2738 = smul.f32 %s2735, %s2737
      %s2739 = sadd.f32 %s2738, 1e-05
      %v2740 = vstv %s2739
      %v2741 = vrsqrt.pop %v2740
      %s2742 = vtos %v2741
      %v2743 = vstv %s2742
      %v2744 = vmul.f32 %v2720, %v2743
      %v2745 = vmul.f32 %v2721, %v2743
      %2746 = vset.pattern.permute.xlu0 1
      %2747 = vperm.xlu0 %2746, %v2002
      %v2748 = vpop.permute.xlu0 %2747
      %v2750 = vmul.f32 %v2744, %v2748
      %v2751 = vmul.f32 %v2745, %v2748
      %2752 = vset.pattern.permute.xlu0 2
      %2753 = vperm.xlu0 %2752, %v2002
      %v2754 = vpop.permute.xlu0 %2753
      %v2756 = vadd.f32 %v2750, %v2754
      %v2757 = vadd.f32 %v2751, %v2754
      %v2758 = vxor.u32 %v2756, 2147483648
      %v2759 = vxor.u32 %v2757, 2147483648
      %v2760 = vmul.f32 %v2758, 1.442695
      %v2761 = vpow.pop %v2760
      %v2762 = vmul.f32 %v2759, 1.442695
      %v2763 = vpow.pop %v2762
      %v2764 = vadd.f32 %v2761, 1.0
      %v2765 = vadd.f32 %v2763, 1.0
      %v2766 = vrcp.pop %v2764
      %v2767 = vmul.f32 1.0, %v2766
      %v2768 = vrcp.pop %v2765
      %v2769 = vmul.f32 1.0, %v2768
      %v2770 = vmul.f32 %v2756, %v2767
      %v2771 = vmul.f32 %v2757, %v2769
      %v2773 = vsel %vm963, %v2770, 0
      %v2776 = vsel %vm963, %v2771, 0
      %2778 = vmatprep.subr.mxu0 %v2776
      %2779 = vmatpush1.msra.mxu0 %v2773
      %2780 = vmatprep.subr.mxu0 0.0
      %2781 = vmatpush1.msra.mxu0 0.0
      %2782 = vmatprep.subr.mxu0 0.0
      %2783 = vmatpush1.msra.mxu0 0.0
      %2784 = vmatprep.subr.mxu0 0.0
      %2785 = vmatpush1.msra.mxu0 0.0
      %2786 = vmatprep.subr.mxu0 0.0
      %2787 = vmatpush1.msra.mxu0 0.0
      %2788 = vmatprep.subr.mxu0 0.0
      %2789 = vmatpush1.msra.mxu0 0.0
      %2790 = vmatprep.subr.mxu0 0.0
      %2791 = vmatpush1.msra.mxu0 0.0
      %2792 = vmatprep.subr.mxu0 0.0
      %2793 = vmatpush1.msra.mxu0 0.0
      %2794 = vmatprep.subr.mxu0 0.0
      %2795 = vmatpush1.msra.mxu0 0.0
      %2796 = vmatprep.subr.mxu0 0.0
      %2797 = vmatpush1.msra.mxu0 0.0
      %2798 = vmatprep.subr.mxu0 0.0
      %2799 = vmatpush1.msra.mxu0 0.0
      %2800 = vmatprep.subr.mxu0 0.0
      %2801 = vmatpush1.msra.mxu0 0.0
      %2802 = vmatprep.subr.mxu0 0.0
      %2803 = vmatpush1.msra.mxu0 0.0
      %2804 = vmatprep.subr.mxu0 0.0
      %2805 = vmatpush1.msra.mxu0 0.0
      %2806 = vmatprep.subr.mxu0 0.0
      %2807 = vmatpush1.msra.mxu0 0.0
      %2808 = vmatprep.subr.mxu0 0.0
      %2809 = vmatpush1.msra.mxu0 0.0
      %2810 = vmatprep.subr.mxu0 0.0
      %2811 = vmatpush1.msra.mxu0 0.0
      %2812 = vmatprep.subr.mxu0 0.0
      %2813 = vmatpush1.msra.mxu0 0.0
      %2814 = vmatprep.subr.mxu0 0.0
      %2815 = vmatpush1.msra.mxu0 0.0
      %2816 = vmatprep.subr.mxu0 0.0
      %2817 = vmatpush1.msra.mxu0 0.0
      %2818 = vmatprep.subr.mxu0 0.0
      %2819 = vmatpush1.msra.mxu0 0.0
      %2820 = vmatprep.subr.mxu0 0.0
      %2821 = vmatpush1.msra.mxu0 0.0
      %2822 = vmatprep.subr.mxu0 0.0
      %2823 = vmatpush1.msra.mxu0 0.0
      %2824 = vmatprep.subr.mxu0 0.0
      %2825 = vmatpush1.msra.mxu0 0.0
      %2826 = vmatprep.subr.mxu0 0.0
      %2827 = vmatpush1.msra.mxu0 0.0
      %2828 = vmatprep.subr.mxu0 0.0
      %2829 = vmatpush1.msra.mxu0 0.0
      %2830 = vmatprep.subr.mxu0 0.0
      %2831 = vmatpush1.msra.mxu0 0.0
      %2832 = vmatprep.subr.mxu0 0.0
      %2833 = vmatpush1.msra.mxu0 0.0
      %2834 = vmatprep.subr.mxu0 0.0
      %2835 = vmatpush1.msra.mxu0 0.0
      %2836 = vmatprep.subr.mxu0 0.0
      %2837 = vmatpush1.msra.mxu0 0.0
      %2838 = vmatprep.subr.mxu0 0.0
      %2839 = vmatpush1.msra.mxu0 0.0
      %2840 = vmatprep.subr.mxu0 0.0
      %2841 = vmatpush1.msra.mxu0 0.0
      %2842 = vmatprep.mubr.f32.mxu0 0.0
      %2843 = vmatmul.mubr.f32.gmra.mrb[0].mxu0 %v1828
      %v2844 = vpop.f32.mrb[0].mxu0
      %v2845 = vadd.f32 0.0, %v2844
      %v2846 = vpop.f32.mrb[0].mxu0
      %v2847 = vadd.f32 0.0, %v2846
      %2848 = vdwg.mxu0
      %v2850 = vsel %vm963, %v2321, 0
      %v2853 = vsel %vm963, %v2322, 0
      %2855 = vmatprep.subr.mxu0 %v2853
      %2856 = vmatpush1.msra.mxu0 %v2850
      %2857 = vmatprep.subr.mxu0 0.0
      %2858 = vmatpush1.msra.mxu0 0.0
      %2859 = vmatprep.subr.mxu0 0.0
      %2860 = vmatpush1.msra.mxu0 0.0
      %2861 = vmatprep.subr.mxu0 0.0
      %2862 = vmatpush1.msra.mxu0 0.0
      %2863 = vmatprep.subr.mxu0 0.0
      %2864 = vmatpush1.msra.mxu0 0.0
      %2865 = vmatprep.subr.mxu0 0.0
      %2866 = vmatpush1.msra.mxu0 0.0
      %2867 = vmatprep.subr.mxu0 0.0
      %2868 = vmatpush1.msra.mxu0 0.0
      %2869 = vmatprep.subr.mxu0 0.0
      %2870 = vmatpush1.msra.mxu0 0.0
      %2871 = vmatprep.subr.mxu0 0.0
      %2872 = vmatpush1.msra.mxu0 0.0
      %2873 = vmatprep.subr.mxu0 0.0
      %2874 = vmatpush1.msra.mxu0 0.0
      %2875 = vmatprep.subr.mxu0 0.0
      %2876 = vmatpush1.msra.mxu0 0.0
      %2877 = vmatprep.subr.mxu0 0.0
      %2878 = vmatpush1.msra.mxu0 0.0
      %2879 = vmatprep.subr.mxu0 0.0
      %2880 = vmatpush1.msra.mxu0 0.0
      %2881 = vmatprep.subr.mxu0 0.0
      %2882 = vmatpush1.msra.mxu0 0.0
      %2883 = vmatprep.subr.mxu0 0.0
      %2884 = vmatpush1.msra.mxu0 0.0
      %2885 = vmatprep.subr.mxu0 0.0
      %2886 = vmatpush1.msra.mxu0 0.0
      %2887 = vmatprep.subr.mxu0 0.0
      %2888 = vmatpush1.msra.mxu0 0.0
      %2889 = vmatprep.subr.mxu0 0.0
      %2890 = vmatpush1.msra.mxu0 0.0
      %2891 = vmatprep.subr.mxu0 0.0
      %2892 = vmatpush1.msra.mxu0 0.0
      %2893 = vmatprep.subr.mxu0 0.0
      %2894 = vmatpush1.msra.mxu0 0.0
      %2895 = vmatprep.subr.mxu0 0.0
      %2896 = vmatpush1.msra.mxu0 0.0
      %2897 = vmatprep.subr.mxu0 0.0
      %2898 = vmatpush1.msra.mxu0 0.0
      %2899 = vmatprep.subr.mxu0 0.0
      %2900 = vmatpush1.msra.mxu0 0.0
      %2901 = vmatprep.subr.mxu0 0.0
      %2902 = vmatpush1.msra.mxu0 0.0
      %2903 = vmatprep.subr.mxu0 0.0
      %2904 = vmatpush1.msra.mxu0 0.0
      %2905 = vmatprep.subr.mxu0 0.0
      %2906 = vmatpush1.msra.mxu0 0.0
      %2907 = vmatprep.subr.mxu0 0.0
      %2908 = vmatpush1.msra.mxu0 0.0
      %2909 = vmatprep.subr.mxu0 0.0
      %2910 = vmatpush1.msra.mxu0 0.0
      %2911 = vmatprep.subr.mxu0 0.0
      %2912 = vmatpush1.msra.mxu0 0.0
      %2913 = vmatprep.subr.mxu0 0.0
      %2914 = vmatpush1.msra.mxu0 0.0
      %2915 = vmatprep.subr.mxu0 0.0
      %2916 = vmatpush1.msra.mxu0 0.0
      %2917 = vmatprep.subr.mxu0 0.0
      %2918 = vmatpush1.msra.mxu0 0.0
      %2919 = vmatprep.mubr.f32.mxu0 0.0
      %2920 = vmatmul.mubr.f32.gmra.mrb[0].mxu0 %v1908
      %v2921 = vpop.f32.mrb[0].mxu0
      %v2922 = vadd.f32 %v2845, %v2921
      %v2923 = vpop.f32.mrb[0].mxu0
      %v2924 = vadd.f32 %v2847, %v2923
      %2925 = vdwg.mxu0
      %s2926 = scalar_lea.vmem %s12, 8
      %v2927 = vld [vmem:[%s2926] sm:$0xf]
      %s2928 = scalar_lea.vmem %s13, 4
      %v2929 = vld [vmem:[%s2928] sm:$0x3]
      %s2930 = scalar_lea.vmem %s14, 8
      %v2931 = vld [vmem:[%s2930] sm:$0xf]
      %s2932 = scalar_lea.vmem %s15, 4
      %v2933 = vld [vmem:[%s2932] sm:$0x3]
      %s2934 = scalar_lea.vmem %s16, 8
      %v2935 = vld [vmem:[%s2934] sm:$0xf]
      %s2936 = scalar_lea.vmem %s17, 8
      %v2937 = vld [vmem:[%s2936] sm:$0xf]
      %s2938 = scalar_lea.vmem %s18, 4
      %v2939 = vld [vmem:[%s2938] sm:$0x3]
      %s2940 = scalar_lea.vmem %s19, 8
      %v2941 = vld [vmem:[%s2940] sm:$0xf]
      %2943 = vset.pattern.permute.xlu0 4
      %2944 = vperm.xlu0 %2943, %v2927
      %v2945 = vpop.permute.xlu0 %2944
      %v2947 = vmul.f32 %v2922, %v2945
      %v2948 = vmul.f32 %v2924, %v2945
      %2949 = vrot.lane.b32.xlu0 %v2922, 17
      %v2950 = vpop.permute.xlu0 %2949
      %2951 = vrot.lane.b32.xlu0 %v2924, 17
      %v2952 = vpop.permute.xlu0 %2951
      %v2953 = vsel %vm995, %v2950, %v2952
      %v2954 = vsel %vm995, %v2952, %v2950
      %v2955 = vmul.f32 %v2954, %v1001
      %v2956 = vmul.f32 %v2953, %v1005
      %2957 = vset.pattern.permute.xlu0 0
      %2958 = vperm.xlu0 %2957, %v2927
      %v2959 = vpop.permute.xlu0 %2958
      %v2961 = vmul.f32 %v2955, %v2959
      %v2962 = vmul.f32 %v2956, %v2959
      %v2963 = vadd.f32 %v2947, %v2961
      %v2964 = vadd.f32 %v2948, %v2962
      %2965 = vrot.lane.b32.xlu0 %v2922, 16
      %v2966 = vpop.permute.xlu0 %2965
      %2967 = vrot.lane.b32.xlu0 %v2924, 16
      %v2968 = vpop.permute.xlu0 %2967
      %v2969 = vsel %vm1020, %v2966, %v2968
      %v2970 = vsel %vm1020, %v2968, %v2966
      %v2971 = vmul.f32 %v2970, %v1026
      %v2972 = vmul.f32 %v2969, %v1030
      %2973 = vset.pattern.permute.xlu0 1
      %2974 = vperm.xlu0 %2973, %v2927
      %v2975 = vpop.permute.xlu0 %2974
      %v2977 = vmul.f32 %v2971, %v2975
      %v2978 = vmul.f32 %v2972, %v2975
      %v2979 = vadd.f32 %v2963, %v2977
      %v2980 = vadd.f32 %v2964, %v2978
      %2981 = vrot.lane.b32.xlu0 %v2922, 15
      %v2982 = vpop.permute.xlu0 %2981
      %2983 = vrot.lane.b32.xlu0 %v2924, 15
      %v2984 = vpop.permute.xlu0 %2983
      %v2985 = vsel %vm1045, %v2982, %v2984
      %v2986 = vsel %vm1045, %v2984, %v2982
      %v2987 = vmul.f32 %v2986, %v1051
      %v2988 = vmul.f32 %v2985, %v1055
      %2989 = vset.pattern.permute.xlu0 2
      %2990 = vperm.xlu0 %2989, %v2927
      %v2991 = vpop.permute.xlu0 %2990
      %v2993 = vmul.f32 %v2987, %v2991
      %v2994 = vmul.f32 %v2988, %v2991
      %v2995 = vadd.f32 %v2979, %v2993
      %v2996 = vadd.f32 %v2980, %v2994
      %2997 = vrot.lane.b32.xlu0 %v2922, 1
      %v2998 = vpop.permute.xlu0 %2997
      %2999 = vrot.lane.b32.xlu0 %v2924, 1
      %v3000 = vpop.permute.xlu0 %2999
      %v3001 = vsel %vm1070, %v2998, %v3000
      %v3002 = vsel %vm1070, %v3000, %v2998
      %v3003 = vmul.f32 %v3002, %v1076
      %v3004 = vmul.f32 %v3001, %v1080
      %3005 = vset.pattern.permute.xlu0 3
      %3006 = vperm.xlu0 %3005, %v2927
      %v3007 = vpop.permute.xlu0 %3006
      %v3009 = vmul.f32 %v3003, %v3007
      %v3010 = vmul.f32 %v3004, %v3007
      %v3011 = vadd.f32 %v2995, %v3009
      %v3012 = vadd.f32 %v2996, %v3010
      %3013 = vrot.lane.b32.xlu0 %v2922, 127
      %v3014 = vpop.permute.xlu0 %3013
      %3015 = vrot.lane.b32.xlu0 %v2924, 127
      %v3016 = vpop.permute.xlu0 %3015
      %v3017 = vsel %vm1095, %v3014, %v3016
      %v3018 = vsel %vm1095, %v3016, %v3014
      %v3019 = vmul.f32 %v3017, %v1101
      %v3020 = vmul.f32 %v3018, %v1105
      %3021 = vset.pattern.permute.xlu0 5
      %3022 = vperm.xlu0 %3021, %v2927
      %v3023 = vpop.permute.xlu0 %3022
      %v3025 = vmul.f32 %v3019, %v3023
      %v3026 = vmul.f32 %v3020, %v3023
      %v3027 = vadd.f32 %v3011, %v3025
      %v3028 = vadd.f32 %v3012, %v3026
      %3029 = vrot.lane.b32.xlu0 %v2922, 113
      %v3030 = vpop.permute.xlu0 %3029
      %3031 = vrot.lane.b32.xlu0 %v2924, 113
      %v3032 = vpop.permute.xlu0 %3031
      %v3033 = vsel %vm1120, %v3030, %v3032
      %v3034 = vsel %vm1120, %v3032, %v3030
      %v3035 = vmul.f32 %v3033, %v1126
      %v3036 = vmul.f32 %v3034, %v1130
      %3037 = vset.pattern.permute.xlu0 6
      %3038 = vperm.xlu0 %3037, %v2927
      %v3039 = vpop.permute.xlu0 %3038
      %v3041 = vmul.f32 %v3035, %v3039
      %v3042 = vmul.f32 %v3036, %v3039
      %v3043 = vadd.f32 %v3027, %v3041
      %v3044 = vadd.f32 %v3028, %v3042
      %3045 = vrot.lane.b32.xlu0 %v2922, 112
      %v3046 = vpop.permute.xlu0 %3045
      %3047 = vrot.lane.b32.xlu0 %v2924, 112
      %v3048 = vpop.permute.xlu0 %3047
      %v3049 = vsel %vm1145, %v3046, %v3048
      %v3050 = vsel %vm1145, %v3048, %v3046
      %v3051 = vmul.f32 %v3049, %v1151
      %v3052 = vmul.f32 %v3050, %v1155
      %3053 = vset.pattern.permute.xlu0 7
      %3054 = vperm.xlu0 %3053, %v2927
      %v3055 = vpop.permute.xlu0 %3054
      %v3057 = vmul.f32 %v3051, %v3055
      %v3058 = vmul.f32 %v3052, %v3055
      %v3059 = vadd.f32 %v3043, %v3057
      %v3060 = vadd.f32 %v3044, %v3058
      %3061 = vrot.lane.b32.xlu0 %v2922, 111
      %v3062 = vpop.permute.xlu0 %3061
      %3063 = vrot.lane.b32.xlu0 %v2924, 111
      %v3064 = vpop.permute.xlu0 %3063
      %v3065 = vsel %vm1170, %v3062, %v3064
      %v3066 = vsel %vm1170, %v3064, %v3062
      %v3067 = vmul.f32 %v3065, %v1176
      %v3068 = vmul.f32 %v3066, %v1180
      %3069 = vset.pattern.permute.xlu0 8
      %3070 = vperm.xlu0 %3069, %v2927
      %v3071 = vpop.permute.xlu0 %3070
      %v3073 = vmul.f32 %v3067, %v3071
      %v3074 = vmul.f32 %v3068, %v3071
      %v3075 = vadd.f32 %v3059, %v3073
      %v3076 = vadd.f32 %v3060, %v3074
      %3077 = vset.pattern.permute.xlu0 9
      %3078 = vperm.xlu0 %3077, %v2927
      %v3079 = vpop.permute.xlu0 %3078
      %v3081 = vadd.f32 %v3075, %v3079
      %v3082 = vadd.f32 %v3076, %v3079
      %v3083 = vsel %vm963, %v3081, 0.0
      %v3084 = vsel %vm963, %v3082, 0.0
      %v3085 = vadd.f32 %v3083, %v3084
      %3086 = vadd.xlane.f32.xlu0 %v3085
      %v3087 = vpop.xlane.xlu0 %3086
      %v3088 = vrot.slane %v3087, 4
      %v3089 = vadd.f32 %v3087, %v3088
      %v3090 = vrot.slane %v3089, 2
      %v3091 = vadd.f32 %v3089, %v3090
      %v3092 = vrot.slane %v3091, 1
      %v3093 = vadd.f32 %v3091, %v3092
      %s3094 = vtos %v3093
      %v3095 = vrcp.pop 1024.0
      %s3096 = vtos %v3095
      %s3097 = smul.f32 %s3094, %s3096
      %v3098 = vstv %s3097
      %v3099 = vsub.f32 %v3081, %v3098
      %v3100 = vsub.f32 %v3082, %v3098
      %v3101 = vmul.f32 %v3099, %v3099
      %v3102 = vmul.f32 %v3100, %v3100
      %v3103 = vsel %vm963, %v3101, 0.0
      %v3104 = vsel %vm963, %v3102, 0.0
      %v3105 = vadd.f32 %v3103, %v3104
      %3106 = vadd.xlane.f32.xlu0 %v3105
      %v3107 = vpop.xlane.xlu0 %3106
      %v3108 = vrot.slane %v3107, 4
      %v3109 = vadd.f32 %v3107, %v3108
      %v3110 = vrot.slane %v3109, 2
      %v3111 = vadd.f32 %v3109, %v3110
      %v3112 = vrot.slane %v3111, 1
      %v3113 = vadd.f32 %v3111, %v3112
      %s3114 = vtos %v3113
      %v3115 = vrcp.pop 1024.0
      %s3116 = vtos %v3115
      %s3117 = smul.f32 %s3114, %s3116
      %s3118 = sadd.f32 %s3117, 1e-05
      %v3119 = vstv %s3118
      %v3120 = vrsqrt.pop %v3119
      %s3121 = vtos %v3120
      %v3122 = vstv %s3121
      %v3123 = vmul.f32 %v3099, %v3122
      %v3124 = vmul.f32 %v3100, %v3122
      %3125 = vset.pattern.permute.xlu0 10
      %3126 = vperm.xlu0 %3125, %v2927
      %v3127 = vpop.permute.xlu0 %3126
      %v3129 = vmul.f32 %v3123, %v3127
      %v3130 = vmul.f32 %v3124, %v3127
      %3131 = vset.pattern.permute.xlu0 11
      %3132 = vperm.xlu0 %3131, %v2927
      %v3133 = vpop.permute.xlu0 %3132
      %v3135 = vadd.f32 %v3129, %v3133
      %v3136 = vadd.f32 %v3130, %v3133
      %v3137 = vpack.c.bf16 %v3135, %v3135
      %v3138 = vpack.c.bf16 %v3136, %v3136
      %3140 = vset.pattern.permute.xlu0 0
      %3141 = vperm.xlu0 %3140, %v2931
      %v3142 = vpop.permute.xlu0 %3141
      %v3145 = vsel %vm1258, %v2929, 0
      %v3148 = vsel %vm1262, %v3137, 0
      %v3151 = vsel %vm1262, %v3138, 0
      %3153 = vmatprep.subr.bf16.mxu0 %v3151
      %3154 = vmatpush1.bf16.msra.mxu0 %v3148
      %3155 = vmatprep.subr.bf16.mxu0 0
      %3156 = vmatpush1.bf16.msra.mxu0 0
      %3157 = vmatprep.subr.bf16.mxu0 0
      %3158 = vmatpush1.bf16.msra.mxu0 0
      %3159 = vmatprep.subr.bf16.mxu0 0
      %3160 = vmatpush1.bf16.msra.mxu0 0
      %3161 = vmatprep.subr.bf16.mxu0 0
      %3162 = vmatpush1.bf16.msra.mxu0 0
      %3163 = vmatprep.subr.bf16.mxu0 0
      %3164 = vmatpush1.bf16.msra.mxu0 0
      %3165 = vmatprep.subr.bf16.mxu0 0
      %3166 = vmatpush1.bf16.msra.mxu0 0
      %3167 = vmatprep.subr.bf16.mxu0 0
      %3168 = vmatpush1.bf16.msra.mxu0 0
      %3169 = vmatprep.subr.bf16.mxu0 0
      %3170 = vmatpush1.bf16.msra.mxu0 0
      %3171 = vmatprep.subr.bf16.mxu0 0
      %3172 = vmatpush1.bf16.msra.mxu0 0
      %3173 = vmatprep.subr.bf16.mxu0 0
      %3174 = vmatpush1.bf16.msra.mxu0 0
      %3175 = vmatprep.subr.bf16.mxu0 0
      %3176 = vmatpush1.bf16.msra.mxu0 0
      %3177 = vmatprep.subr.bf16.mxu0 0
      %3178 = vmatpush1.bf16.msra.mxu0 0
      %3179 = vmatprep.subr.bf16.mxu0 0
      %3180 = vmatpush1.bf16.msra.mxu0 0
      %3181 = vmatprep.subr.bf16.mxu0 0
      %3182 = vmatpush1.bf16.msra.mxu0 0
      %3183 = vmatprep.subr.bf16.mxu0 0
      %3184 = vmatpush1.bf16.msra.mxu0 0
      %3185 = vmatprep.mubr.bf16.mxu0 0
      %3186 = vmatmul.mubr.bf16.gmra.mrb[0].mxu0 %v3145
      %v3187 = vpop.f32.mrb[0].mxu0
      %v3188 = vadd.f32 %v3142, %v3187
      %v3189 = vpop.f32.mrb[0].mxu0
      %v3190 = vadd.f32 %v3142, %v3189
      %v3191 = vpop.f32.mrb[0].mxu0
      %v3192 = vpop.f32.mrb[0].mxu0
      %3193 = vdwg.mxu0
      %v3194 = vsel %vm963, %v3188, 0.0
      %v3195 = vsel %vm963, %v3190, 0.0
      %v3196 = vadd.f32 %v3194, %v3195
      %3197 = vadd.xlane.f32.xlu0 %v3196
      %v3198 = vpop.xlane.xlu0 %3197
      %v3199 = vrot.slane %v3198, 4
      %v3200 = vadd.f32 %v3198, %v3199
      %v3201 = vrot.slane %v3200, 2
      %v3202 = vadd.f32 %v3200, %v3201
      %v3203 = vrot.slane %v3202, 1
      %v3204 = vadd.f32 %v3202, %v3203
      %s3205 = vtos %v3204
      %v3206 = vrcp.pop 1024.0
      %s3207 = vtos %v3206
      %s3208 = smul.f32 %s3205, %s3207
      %v3209 = vstv %s3208
      %v3210 = vsub.f32 %v3188, %v3209
      %v3211 = vsub.f32 %v3190, %v3209
      %v3212 = vmul.f32 %v3210, %v3210
      %v3213 = vmul.f32 %v3211, %v3211
      %v3214 = vsel %vm963, %v3212, 0.0
      %v3215 = vsel %vm963, %v3213, 0.0
      %v3216 = vadd.f32 %v3214, %v3215
      %3217 = vadd.xlane.f32.xlu0 %v3216
      %v3218 = vpop.xlane.xlu0 %3217
      %v3219 = vrot.slane %v3218, 4
      %v3220 = vadd.f32 %v3218, %v3219
      %v3221 = vrot.slane %v3220, 2
      %v3222 = vadd.f32 %v3220, %v3221
      %v3223 = vrot.slane %v3222, 1
      %v3224 = vadd.f32 %v3222, %v3223
      %s3225 = vtos %v3224
      %v3226 = vrcp.pop 1024.0
      %s3227 = vtos %v3226
      %s3228 = smul.f32 %s3225, %s3227
      %s3229 = sadd.f32 %s3228, 1e-05
      %v3230 = vstv %s3229
      %v3231 = vrsqrt.pop %v3230
      %s3232 = vtos %v3231
      %v3233 = vstv %s3232
      %v3234 = vmul.f32 %v3210, %v3233
      %v3235 = vmul.f32 %v3211, %v3233
      %3236 = vset.pattern.permute.xlu0 1
      %3237 = vperm.xlu0 %3236, %v2931
      %v3238 = vpop.permute.xlu0 %3237
      %v3240 = vmul.f32 %v3234, %v3238
      %v3241 = vmul.f32 %v3235, %v3238
      %3242 = vset.pattern.permute.xlu0 2
      %3243 = vperm.xlu0 %3242, %v2931
      %v3244 = vpop.permute.xlu0 %3243
      %v3246 = vadd.f32 %v3240, %v3244
      %v3247 = vadd.f32 %v3241, %v3244
      %v3248 = vxor.u32 %v3246, 2147483648
      %v3249 = vxor.u32 %v3247, 2147483648
      %v3250 = vmul.f32 %v3248, 1.442695
      %v3251 = vpow.pop %v3250
      %v3252 = vmul.f32 %v3249, 1.442695
      %v3253 = vpow.pop %v3252
      %v3254 = vadd.f32 %v3251, 1.0
      %v3255 = vadd.f32 %v3253, 1.0
      %v3256 = vrcp.pop %v3254
      %v3257 = vmul.f32 1.0, %v3256
      %v3258 = vrcp.pop %v3255
      %v3259 = vmul.f32 1.0, %v3258
      %v3260 = vmul.f32 %v3246, %v3257
      %v3261 = vmul.f32 %v3247, %v3259
      %v3262 = vpack.c.bf16 %v2922, %v2922
      %v3263 = vpack.c.bf16 %v2924, %v2924
      %3265 = vset.pattern.permute.xlu0 0
      %3266 = vperm.xlu0 %3265, %v2935
      %v3267 = vpop.permute.xlu0 %3266
      %v3271 = vrot.slane %v3262, 2
      %v3272 = vrot.slane %v3263, 2
      %v3274 = vsel %vm1258, %v2933, 0
      %v3277 = vsel %vm1262, %v3271, 0
      %v3280 = vsel %vm1262, %v3272, 0
      %3282 = vmatprep.subr.bf16.mxu0 %v3280
      %3283 = vmatpush1.bf16.msra.mxu0 %v3277
      %3284 = vmatprep.subr.bf16.mxu0 0
      %3285 = vmatpush1.bf16.msra.mxu0 0
      %3286 = vmatprep.subr.bf16.mxu0 0
      %3287 = vmatpush1.bf16.msra.mxu0 0
      %3288 = vmatprep.subr.bf16.mxu0 0
      %3289 = vmatpush1.bf16.msra.mxu0 0
      %3290 = vmatprep.subr.bf16.mxu0 0
      %3291 = vmatpush1.bf16.msra.mxu0 0
      %3292 = vmatprep.subr.bf16.mxu0 0
      %3293 = vmatpush1.bf16.msra.mxu0 0
      %3294 = vmatprep.subr.bf16.mxu0 0
      %3295 = vmatpush1.bf16.msra.mxu0 0
      %3296 = vmatprep.subr.bf16.mxu0 0
      %3297 = vmatpush1.bf16.msra.mxu0 0
      %3298 = vmatprep.subr.bf16.mxu0 0
      %3299 = vmatpush1.bf16.msra.mxu0 0
      %3300 = vmatprep.subr.bf16.mxu0 0
      %3301 = vmatpush1.bf16.msra.mxu0 0
      %3302 = vmatprep.subr.bf16.mxu0 0
      %3303 = vmatpush1.bf16.msra.mxu0 0
      %3304 = vmatprep.subr.bf16.mxu0 0
      %3305 = vmatpush1.bf16.msra.mxu0 0
      %3306 = vmatprep.subr.bf16.mxu0 0
      %3307 = vmatpush1.bf16.msra.mxu0 0
      %3308 = vmatprep.subr.bf16.mxu0 0
      %3309 = vmatpush1.bf16.msra.mxu0 0
      %3310 = vmatprep.subr.bf16.mxu0 0
      %3311 = vmatpush1.bf16.msra.mxu0 0
      %3312 = vmatprep.subr.bf16.mxu0 0
      %3313 = vmatpush1.bf16.msra.mxu0 0
      %3314 = vmatprep.mubr.bf16.mxu0 0
      %3315 = vmatmul.mubr.bf16.gmra.mrb[0].mxu0 %v3274
      %v3316 = vpop.f32.mrb[0].mxu0
      %v3317 = vadd.f32 %v3267, %v3316
      %v3318 = vpop.f32.mrb[0].mxu0
      %v3319 = vadd.f32 %v3267, %v3318
      %v3320 = vpop.f32.mrb[0].mxu0
      %v3321 = vpop.f32.mrb[0].mxu0
      %3322 = vdwg.mxu0
      %v3323 = vsel %vm963, %v3317, 0.0
      %v3324 = vsel %vm963, %v3319, 0.0
      %v3325 = vadd.f32 %v3323, %v3324
      %3326 = vadd.xlane.f32.xlu0 %v3325
      %v3327 = vpop.xlane.xlu0 %3326
      %v3328 = vrot.slane %v3327, 4
      %v3329 = vadd.f32 %v3327, %v3328
      %v3330 = vrot.slane %v3329, 2
      %v3331 = vadd.f32 %v3329, %v3330
      %v3332 = vrot.slane %v3331, 1
      %v3333 = vadd.f32 %v3331, %v3332
      %s3334 = vtos %v3333
      %v3335 = vrcp.pop 1024.0
      %s3336 = vtos %v3335
      %s3337 = smul.f32 %s3334, %s3336
      %v3338 = vstv %s3337
      %v3339 = vsub.f32 %v3317, %v3338
      %v3340 = vsub.f32 %v3319, %v3338
      %v3341 = vmul.f32 %v3339, %v3339
      %v3342 = vmul.f32 %v3340, %v3340
      %v3343 = vsel %vm963, %v3341, 0.0
      %v3344 = vsel %vm963, %v3342, 0.0
      %v3345 = vadd.f32 %v3343, %v3344
      %3346 = vadd.xlane.f32.xlu0 %v3345
      %v3347 = vpop.xlane.xlu0 %3346
      %v3348 = vrot.slane %v3347, 4
      %v3349 = vadd.f32 %v3347, %v3348
      %v3350 = vrot.slane %v3349, 2
      %v3351 = vadd.f32 %v3349, %v3350
      %v3352 = vrot.slane %v3351, 1
      %v3353 = vadd.f32 %v3351, %v3352
      %s3354 = vtos %v3353
      %v3355 = vrcp.pop 1024.0
      %s3356 = vtos %v3355
      %s3357 = smul.f32 %s3354, %s3356
      %s3358 = sadd.f32 %s3357, 1e-05
      %v3359 = vstv %s3358
      %v3360 = vrsqrt.pop %v3359
      %s3361 = vtos %v3360
      %v3362 = vstv %s3361
      %v3363 = vmul.f32 %v3339, %v3362
      %v3364 = vmul.f32 %v3340, %v3362
      %3365 = vset.pattern.permute.xlu0 1
      %3366 = vperm.xlu0 %3365, %v2935
      %v3367 = vpop.permute.xlu0 %3366
      %v3369 = vmul.f32 %v3363, %v3367
      %v3370 = vmul.f32 %v3364, %v3367
      %3371 = vset.pattern.permute.xlu0 2
      %3372 = vperm.xlu0 %3371, %v2935
      %v3373 = vpop.permute.xlu0 %3372
      %v3375 = vadd.f32 %v3369, %v3373
      %v3376 = vadd.f32 %v3370, %v3373
      %v3377 = vxor.u32 %v3375, 2147483648
      %v3378 = vxor.u32 %v3376, 2147483648
      %v3379 = vmul.f32 %v3377, 1.442695
      %v3380 = vpow.pop %v3379
      %v3381 = vmul.f32 %v3378, 1.442695
      %v3382 = vpow.pop %v3381
      %v3383 = vadd.f32 %v3380, 1.0
      %v3384 = vadd.f32 %v3382, 1.0
      %v3385 = vrcp.pop %v3383
      %v3386 = vmul.f32 1.0, %v3385
      %v3387 = vrcp.pop %v3384
      %v3388 = vmul.f32 1.0, %v3387
      %v3389 = vmul.f32 %v3375, %v3386
      %v3390 = vmul.f32 %v3376, %v3388
      %3392 = vset.pattern.permute.xlu0 4
      %3393 = vperm.xlu0 %3392, %v2937
      %v3394 = vpop.permute.xlu0 %3393
      %v3396 = vmul.f32 %v3389, %v3394
      %v3397 = vmul.f32 %v3390, %v3394
      %3398 = vrot.lane.b32.xlu0 %v3389, 17
      %v3399 = vpop.permute.xlu0 %3398
      %3400 = vrot.lane.b32.xlu0 %v3390, 17
      %v3401 = vpop.permute.xlu0 %3400
      %v3402 = vsel %vm995, %v3399, %v3401
      %v3403 = vsel %vm995, %v3401, %v3399
      %v3404 = vmul.f32 %v3403, %v1001
      %v3405 = vmul.f32 %v3402, %v1005
      %3406 = vset.pattern.permute.xlu0 0
      %3407 = vperm.xlu0 %3406, %v2937
      %v3408 = vpop.permute.xlu0 %3407
      %v3410 = vmul.f32 %v3404, %v3408
      %v3411 = vmul.f32 %v3405, %v3408
      %v3412 = vadd.f32 %v3396, %v3410
      %v3413 = vadd.f32 %v3397, %v3411
      %3414 = vrot.lane.b32.xlu0 %v3389, 16
      %v3415 = vpop.permute.xlu0 %3414
      %3416 = vrot.lane.b32.xlu0 %v3390, 16
      %v3417 = vpop.permute.xlu0 %3416
      %v3418 = vsel %vm1020, %v3415, %v3417
      %v3419 = vsel %vm1020, %v3417, %v3415
      %v3420 = vmul.f32 %v3419, %v1026
      %v3421 = vmul.f32 %v3418, %v1030
      %3422 = vset.pattern.permute.xlu0 1
      %3423 = vperm.xlu0 %3422, %v2937
      %v3424 = vpop.permute.xlu0 %3423
      %v3426 = vmul.f32 %v3420, %v3424
      %v3427 = vmul.f32 %v3421, %v3424
      %v3428 = vadd.f32 %v3412, %v3426
      %v3429 = vadd.f32 %v3413, %v3427
      %3430 = vrot.lane.b32.xlu0 %v3389, 15
      %v3431 = vpop.permute.xlu0 %3430
      %3432 = vrot.lane.b32.xlu0 %v3390, 15
      %v3433 = vpop.permute.xlu0 %3432
      %v3434 = vsel %vm1045, %v3431, %v3433
      %v3435 = vsel %vm1045, %v3433, %v3431
      %v3436 = vmul.f32 %v3435, %v1051
      %v3437 = vmul.f32 %v3434, %v1055
      %3438 = vset.pattern.permute.xlu0 2
      %3439 = vperm.xlu0 %3438, %v2937
      %v3440 = vpop.permute.xlu0 %3439
      %v3442 = vmul.f32 %v3436, %v3440
      %v3443 = vmul.f32 %v3437, %v3440
      %v3444 = vadd.f32 %v3428, %v3442
      %v3445 = vadd.f32 %v3429, %v3443
      %3446 = vrot.lane.b32.xlu0 %v3389, 1
      %v3447 = vpop.permute.xlu0 %3446
      %3448 = vrot.lane.b32.xlu0 %v3390, 1
      %v3449 = vpop.permute.xlu0 %3448
      %v3450 = vsel %vm1070, %v3447, %v3449
      %v3451 = vsel %vm1070, %v3449, %v3447
      %v3452 = vmul.f32 %v3451, %v1076
      %v3453 = vmul.f32 %v3450, %v1080
      %3454 = vset.pattern.permute.xlu0 3
      %3455 = vperm.xlu0 %3454, %v2937
      %v3456 = vpop.permute.xlu0 %3455
      %v3458 = vmul.f32 %v3452, %v3456
      %v3459 = vmul.f32 %v3453, %v3456
      %v3460 = vadd.f32 %v3444, %v3458
      %v3461 = vadd.f32 %v3445, %v3459
      %3462 = vrot.lane.b32.xlu0 %v3389, 127
      %v3463 = vpop.permute.xlu0 %3462
      %3464 = vrot.lane.b32.xlu0 %v3390, 127
      %v3465 = vpop.permute.xlu0 %3464
      %v3466 = vsel %vm1095, %v3463, %v3465
      %v3467 = vsel %vm1095, %v3465, %v3463
      %v3468 = vmul.f32 %v3466, %v1101
      %v3469 = vmul.f32 %v3467, %v1105
      %3470 = vset.pattern.permute.xlu0 5
      %3471 = vperm.xlu0 %3470, %v2937
      %v3472 = vpop.permute.xlu0 %3471
      %v3474 = vmul.f32 %v3468, %v3472
      %v3475 = vmul.f32 %v3469, %v3472
      %v3476 = vadd.f32 %v3460, %v3474
      %v3477 = vadd.f32 %v3461, %v3475
      %3478 = vrot.lane.b32.xlu0 %v3389, 113
      %v3479 = vpop.permute.xlu0 %3478
      %3480 = vrot.lane.b32.xlu0 %v3390, 113
      %v3481 = vpop.permute.xlu0 %3480
      %v3482 = vsel %vm1120, %v3479, %v3481
      %v3483 = vsel %vm1120, %v3481, %v3479
      %v3484 = vmul.f32 %v3482, %v1126
      %v3485 = vmul.f32 %v3483, %v1130
      %3486 = vset.pattern.permute.xlu0 6
      %3487 = vperm.xlu0 %3486, %v2937
      %v3488 = vpop.permute.xlu0 %3487
      %v3490 = vmul.f32 %v3484, %v3488
      %v3491 = vmul.f32 %v3485, %v3488
      %v3492 = vadd.f32 %v3476, %v3490
      %v3493 = vadd.f32 %v3477, %v3491
      %3494 = vrot.lane.b32.xlu0 %v3389, 112
      %v3495 = vpop.permute.xlu0 %3494
      %3496 = vrot.lane.b32.xlu0 %v3390, 112
      %v3497 = vpop.permute.xlu0 %3496
      %v3498 = vsel %vm1145, %v3495, %v3497
      %v3499 = vsel %vm1145, %v3497, %v3495
      %v3500 = vmul.f32 %v3498, %v1151
      %v3501 = vmul.f32 %v3499, %v1155
      %3502 = vset.pattern.permute.xlu0 7
      %3503 = vperm.xlu0 %3502, %v2937
      %v3504 = vpop.permute.xlu0 %3503
      %v3506 = vmul.f32 %v3500, %v3504
      %v3507 = vmul.f32 %v3501, %v3504
      %v3508 = vadd.f32 %v3492, %v3506
      %v3509 = vadd.f32 %v3493, %v3507
      %3510 = vrot.lane.b32.xlu0 %v3389, 111
      %v3511 = vpop.permute.xlu0 %3510
      %3512 = vrot.lane.b32.xlu0 %v3390, 111
      %v3513 = vpop.permute.xlu0 %3512
      %v3514 = vsel %vm1170, %v3511, %v3513
      %v3515 = vsel %vm1170, %v3513, %v3511
      %v3516 = vmul.f32 %v3514, %v1176
      %v3517 = vmul.f32 %v3515, %v1180
      %3518 = vset.pattern.permute.xlu0 8
      %3519 = vperm.xlu0 %3518, %v2937
      %v3520 = vpop.permute.xlu0 %3519
      %v3522 = vmul.f32 %v3516, %v3520
      %v3523 = vmul.f32 %v3517, %v3520
      %v3524 = vadd.f32 %v3508, %v3522
      %v3525 = vadd.f32 %v3509, %v3523
      %3526 = vset.pattern.permute.xlu0 9
      %3527 = vperm.xlu0 %3526, %v2937
      %v3528 = vpop.permute.xlu0 %3527
      %v3530 = vadd.f32 %v3524, %v3528
      %v3531 = vadd.f32 %v3525, %v3528
      %v3532 = vsel %vm963, %v3530, 0.0
      %v3533 = vsel %vm963, %v3531, 0.0
      %v3534 = vadd.f32 %v3532, %v3533
      %3535 = vadd.xlane.f32.xlu0 %v3534
      %v3536 = vpop.xlane.xlu0 %3535
      %v3537 = vrot.slane %v3536, 4
      %v3538 = vadd.f32 %v3536, %v3537
      %v3539 = vrot.slane %v3538, 2
      %v3540 = vadd.f32 %v3538, %v3539
      %v3541 = vrot.slane %v3540, 1
      %v3542 = vadd.f32 %v3540, %v3541
      %s3543 = vtos %v3542
      %v3544 = vrcp.pop 1024.0
      %s3545 = vtos %v3544
      %s3546 = smul.f32 %s3543, %s3545
      %v3547 = vstv %s3546
      %v3548 = vsub.f32 %v3530, %v3547
      %v3549 = vsub.f32 %v3531, %v3547
      %v3550 = vmul.f32 %v3548, %v3548
      %v3551 = vmul.f32 %v3549, %v3549
      %v3552 = vsel %vm963, %v3550, 0.0
      %v3553 = vsel %vm963, %v3551, 0.0
      %v3554 = vadd.f32 %v3552, %v3553
      %3555 = vadd.xlane.f32.xlu0 %v3554
      %v3556 = vpop.xlane.xlu0 %3555
      %v3557 = vrot.slane %v3556, 4
      %v3558 = vadd.f32 %v3556, %v3557
      %v3559 = vrot.slane %v3558, 2
      %v3560 = vadd.f32 %v3558, %v3559
      %v3561 = vrot.slane %v3560, 1
      %v3562 = vadd.f32 %v3560, %v3561
      %s3563 = vtos %v3562
      %v3564 = vrcp.pop 1024.0
      %s3565 = vtos %v3564
      %s3566 = smul.f32 %s3563, %s3565
      %s3567 = sadd.f32 %s3566, 1e-05
      %v3568 = vstv %s3567
      %v3569 = vrsqrt.pop %v3568
      %s3570 = vtos %v3569
      %v3571 = vstv %s3570
      %v3572 = vmul.f32 %v3548, %v3571
      %v3573 = vmul.f32 %v3549, %v3571
      %3574 = vset.pattern.permute.xlu0 10
      %3575 = vperm.xlu0 %3574, %v2937
      %v3576 = vpop.permute.xlu0 %3575
      %v3578 = vmul.f32 %v3572, %v3576
      %v3579 = vmul.f32 %v3573, %v3576
      %3580 = vset.pattern.permute.xlu0 11
      %3581 = vperm.xlu0 %3580, %v2937
      %v3582 = vpop.permute.xlu0 %3581
      %v3584 = vadd.f32 %v3578, %v3582
      %v3585 = vadd.f32 %v3579, %v3582
      %v3586 = vpack.c.bf16 %v3584, %v3584
      %v3587 = vpack.c.bf16 %v3585, %v3585
      %3589 = vset.pattern.permute.xlu0 0
      %3590 = vperm.xlu0 %3589, %v2941
      %v3591 = vpop.permute.xlu0 %3590
      %v3594 = vsel %vm1258, %v2939, 0
      %v3597 = vsel %vm1262, %v3586, 0
      %v3600 = vsel %vm1262, %v3587, 0
      %3602 = vmatprep.subr.bf16.mxu0 %v3600
      %3603 = vmatpush1.bf16.msra.mxu0 %v3597
      %3604 = vmatprep.subr.bf16.mxu0 0
      %3605 = vmatpush1.bf16.msra.mxu0 0
      %3606 = vmatprep.subr.bf16.mxu0 0
      %3607 = vmatpush1.bf16.msra.mxu0 0
      %3608 = vmatprep.subr.bf16.mxu0 0
      %3609 = vmatpush1.bf16.msra.mxu0 0
      %3610 = vmatprep.subr.bf16.mxu0 0
      %3611 = vmatpush1.bf16.msra.mxu0 0
      %3612 = vmatprep.subr.bf16.mxu0 0
      %3613 = vmatpush1.bf16.msra.mxu0 0
      %3614 = vmatprep.subr.bf16.mxu0 0
      %3615 = vmatpush1.bf16.msra.mxu0 0
      %3616 = vmatprep.subr.bf16.mxu0 0
      %3617 = vmatpush1.bf16.msra.mxu0 0
      %3618 = vmatprep.subr.bf16.mxu0 0
      %3619 = vmatpush1.bf16.msra.mxu0 0
      %3620 = vmatprep.subr.bf16.mxu0 0
      %3621 = vmatpush1.bf16.msra.mxu0 0
      %3622 = vmatprep.subr.bf16.mxu0 0
      %3623 = vmatpush1.bf16.msra.mxu0 0
      %3624 = vmatprep.subr.bf16.mxu0 0
      %3625 = vmatpush1.bf16.msra.mxu0 0
      %3626 = vmatprep.subr.bf16.mxu0 0
      %3627 = vmatpush1.bf16.msra.mxu0 0
      %3628 = vmatprep.subr.bf16.mxu0 0
      %3629 = vmatpush1.bf16.msra.mxu0 0
      %3630 = vmatprep.subr.bf16.mxu0 0
      %3631 = vmatpush1.bf16.msra.mxu0 0
      %3632 = vmatprep.subr.bf16.mxu0 0
      %3633 = vmatpush1.bf16.msra.mxu0 0
      %3634 = vmatprep.mubr.bf16.mxu0 0
      %3635 = vmatmul.mubr.bf16.gmra.mrb[0].mxu0 %v3594
      %v3636 = vpop.f32.mrb[0].mxu0
      %v3637 = vadd.f32 %v3591, %v3636
      %v3638 = vpop.f32.mrb[0].mxu0
      %v3639 = vadd.f32 %v3591, %v3638
      %v3640 = vpop.f32.mrb[0].mxu0
      %v3641 = vpop.f32.mrb[0].mxu0
      %3642 = vdwg.mxu0
      %v3643 = vsel %vm963, %v3637, 0.0
      %v3644 = vsel %vm963, %v3639, 0.0
      %v3645 = vadd.f32 %v3643, %v3644
      %3646 = vadd.xlane.f32.xlu0 %v3645
      %v3647 = vpop.xlane.xlu0 %3646
      %v3648 = vrot.slane %v3647, 4
      %v3649 = vadd.f32 %v3647, %v3648
      %v3650 = vrot.slane %v3649, 2
      %v3651 = vadd.f32 %v3649, %v3650
      %v3652 = vrot.slane %v3651, 1
      %v3653 = vadd.f32 %v3651, %v3652
      %s3654 = vtos %v3653
      %v3655 = vrcp.pop 1024.0
      %s3656 = vtos %v3655
      %s3657 = smul.f32 %s3654, %s3656
      %v3658 = vstv %s3657
      %v3659 = vsub.f32 %v3637, %v3658
      %v3660 = vsub.f32 %v3639, %v3658
      %v3661 = vmul.f32 %v3659, %v3659
      %v3662 = vmul.f32 %v3660, %v3660
      %v3663 = vsel %vm963, %v3661, 0.0
      %v3664 = vsel %vm963, %v3662, 0.0
      %v3665 = vadd.f32 %v3663, %v3664
      %3666 = vadd.xlane.f32.xlu0 %v3665
      %v3667 = vpop.xlane.xlu0 %3666
      %v3668 = vrot.slane %v3667, 4
      %v3669 = vadd.f32 %v3667, %v3668
      %v3670 = vrot.slane %v3669, 2
      %v3671 = vadd.f32 %v3669, %v3670
      %v3672 = vrot.slane %v3671, 1
      %v3673 = vadd.f32 %v3671, %v3672
      %s3674 = vtos %v3673
      %v3675 = vrcp.pop 1024.0
      %s3676 = vtos %v3675
      %s3677 = smul.f32 %s3674, %s3676
      %s3678 = sadd.f32 %s3677, 1e-05
      %v3679 = vstv %s3678
      %v3680 = vrsqrt.pop %v3679
      %s3681 = vtos %v3680
      %v3682 = vstv %s3681
      %v3683 = vmul.f32 %v3659, %v3682
      %v3684 = vmul.f32 %v3660, %v3682
      %3685 = vset.pattern.permute.xlu0 1
      %3686 = vperm.xlu0 %3685, %v2941
      %v3687 = vpop.permute.xlu0 %3686
      %v3689 = vmul.f32 %v3683, %v3687
      %v3690 = vmul.f32 %v3684, %v3687
      %3691 = vset.pattern.permute.xlu0 2
      %3692 = vperm.xlu0 %3691, %v2941
      %v3693 = vpop.permute.xlu0 %3692
      %v3695 = vadd.f32 %v3689, %v3693
      %v3696 = vadd.f32 %v3690, %v3693
      %v3697 = vxor.u32 %v3695, 2147483648
      %v3698 = vxor.u32 %v3696, 2147483648
      %v3699 = vmul.f32 %v3697, 1.442695
      %v3700 = vpow.pop %v3699
      %v3701 = vmul.f32 %v3698, 1.442695
      %v3702 = vpow.pop %v3701
      %v3703 = vadd.f32 %v3700, 1.0
      %v3704 = vadd.f32 %v3702, 1.0
      %v3705 = vrcp.pop %v3703
      %v3706 = vmul.f32 1.0, %v3705
      %v3707 = vrcp.pop %v3704
      %v3708 = vmul.f32 1.0, %v3707
      %v3709 = vmul.f32 %v3695, %v3706
      %v3710 = vmul.f32 %v3696, %v3708
      %v3712 = vsel %vm963, %v3709, 0
      %v3715 = vsel %vm963, %v3710, 0
      %3717 = vmatprep.subr.mxu0 %v3715
      %3718 = vmatpush1.msra.mxu0 %v3712
      %3719 = vmatprep.subr.mxu0 0.0
      %3720 = vmatpush1.msra.mxu0 0.0
      %3721 = vmatprep.subr.mxu0 0.0
      %3722 = vmatpush1.msra.mxu0 0.0
      %3723 = vmatprep.subr.mxu0 0.0
      %3724 = vmatpush1.msra.mxu0 0.0
      %3725 = vmatprep.subr.mxu0 0.0
      %3726 = vmatpush1.msra.mxu0 0.0
      %3727 = vmatprep.subr.mxu0 0.0
      %3728 = vmatpush1.msra.mxu0 0.0
      %3729 = vmatprep.subr.mxu0 0.0
      %3730 = vmatpush1.msra.mxu0 0.0
      %3731 = vmatprep.subr.mxu0 0.0
      %3732 = vmatpush1.msra.mxu0 0.0
      %3733 = vmatprep.subr.mxu0 0.0
      %3734 = vmatpush1.msra.mxu0 0.0
      %3735 = vmatprep.subr.mxu0 0.0
      %3736 = vmatpush1.msra.mxu0 0.0
      %3737 = vmatprep.subr.mxu0 0.0
      %3738 = vmatpush1.msra.mxu0 0.0
      %3739 = vmatprep.subr.mxu0 0.0
      %3740 = vmatpush1.msra.mxu0 0.0
      %3741 = vmatprep.subr.mxu0 0.0
      %3742 = vmatpush1.msra.mxu0 0.0
      %3743 = vmatprep.subr.mxu0 0.0
      %3744 = vmatpush1.msra.mxu0 0.0
      %3745 = vmatprep.subr.mxu0 0.0
      %3746 = vmatpush1.msra.mxu0 0.0
      %3747 = vmatprep.subr.mxu0 0.0
      %3748 = vmatpush1.msra.mxu0 0.0
      %3749 = vmatprep.subr.mxu0 0.0
      %3750 = vmatpush1.msra.mxu0 0.0
      %3751 = vmatprep.subr.mxu0 0.0
      %3752 = vmatpush1.msra.mxu0 0.0
      %3753 = vmatprep.subr.mxu0 0.0
      %3754 = vmatpush1.msra.mxu0 0.0
      %3755 = vmatprep.subr.mxu0 0.0
      %3756 = vmatpush1.msra.mxu0 0.0
      %3757 = vmatprep.subr.mxu0 0.0
      %3758 = vmatpush1.msra.mxu0 0.0
      %3759 = vmatprep.subr.mxu0 0.0
      %3760 = vmatpush1.msra.mxu0 0.0
      %3761 = vmatprep.subr.mxu0 0.0
      %3762 = vmatpush1.msra.mxu0 0.0
      %3763 = vmatprep.subr.mxu0 0.0
      %3764 = vmatpush1.msra.mxu0 0.0
      %3765 = vmatprep.subr.mxu0 0.0
      %3766 = vmatpush1.msra.mxu0 0.0
      %3767 = vmatprep.subr.mxu0 0.0
      %3768 = vmatpush1.msra.mxu0 0.0
      %3769 = vmatprep.subr.mxu0 0.0
      %3770 = vmatpush1.msra.mxu0 0.0
      %3771 = vmatprep.subr.mxu0 0.0
      %3772 = vmatpush1.msra.mxu0 0.0
      %3773 = vmatprep.subr.mxu0 0.0
      %3774 = vmatpush1.msra.mxu0 0.0
      %3775 = vmatprep.subr.mxu0 0.0
      %3776 = vmatpush1.msra.mxu0 0.0
      %3777 = vmatprep.subr.mxu0 0.0
      %3778 = vmatpush1.msra.mxu0 0.0
      %3779 = vmatprep.subr.mxu0 0.0
      %3780 = vmatpush1.msra.mxu0 0.0
      %3781 = vmatprep.mubr.f32.mxu0 0.0
      %3782 = vmatmul.mubr.f32.gmra.mrb[0].mxu0 %v1828
      %v3783 = vpop.f32.mrb[0].mxu0
      %v3784 = vadd.f32 0.0, %v3783
      %v3785 = vpop.f32.mrb[0].mxu0
      %v3786 = vadd.f32 0.0, %v3785
      %3787 = vdwg.mxu0
      %v3789 = vsel %vm963, %v3260, 0
      %v3792 = vsel %vm963, %v3261, 0
      %3794 = vmatprep.subr.mxu0 %v3792
      %3795 = vmatpush1.msra.mxu0 %v3789
      %3796 = vmatprep.subr.mxu0 0.0
      %3797 = vmatpush1.msra.mxu0 0.0
      %3798 = vmatprep.subr.mxu0 0.0
      %3799 = vmatpush1.msra.mxu0 0.0
      %3800 = vmatprep.subr.mxu0 0.0
      %3801 = vmatpush1.msra.mxu0 0.0
      %3802 = vmatprep.subr.mxu0 0.0
      %3803 = vmatpush1.msra.mxu0 0.0
      %3804 = vmatprep.subr.mxu0 0.0
      %3805 = vmatpush1.msra.mxu0 0.0
      %3806 = vmatprep.subr.mxu0 0.0
      %3807 = vmatpush1.msra.mxu0 0.0
      %3808 = vmatprep.subr.mxu0 0.0
      %3809 = vmatpush1.msra.mxu0 0.0
      %3810 = vmatprep.subr.mxu0 0.0
      %3811 = vmatpush1.msra.mxu0 0.0
      %3812 = vmatprep.subr.mxu0 0.0
      %3813 = vmatpush1.msra.mxu0 0.0
      %3814 = vmatprep.subr.mxu0 0.0
      %3815 = vmatpush1.msra.mxu0 0.0
      %3816 = vmatprep.subr.mxu0 0.0
      %3817 = vmatpush1.msra.mxu0 0.0
      %3818 = vmatprep.subr.mxu0 0.0
      %3819 = vmatpush1.msra.mxu0 0.0
      %3820 = vmatprep.subr.mxu0 0.0
      %3821 = vmatpush1.msra.mxu0 0.0
      %3822 = vmatprep.subr.mxu0 0.0
      %3823 = vmatpush1.msra.mxu0 0.0
      %3824 = vmatprep.subr.mxu0 0.0
      %3825 = vmatpush1.msra.mxu0 0.0
      %3826 = vmatprep.subr.mxu0 0.0
      %3827 = vmatpush1.msra.mxu0 0.0
      %3828 = vmatprep.subr.mxu0 0.0
      %3829 = vmatpush1.msra.mxu0 0.0
      %3830 = vmatprep.subr.mxu0 0.0
      %3831 = vmatpush1.msra.mxu0 0.0
      %3832 = vmatprep.subr.mxu0 0.0
      %3833 = vmatpush1.msra.mxu0 0.0
      %3834 = vmatprep.subr.mxu0 0.0
      %3835 = vmatpush1.msra.mxu0 0.0
      %3836 = vmatprep.subr.mxu0 0.0
      %3837 = vmatpush1.msra.mxu0 0.0
      %3838 = vmatprep.subr.mxu0 0.0
      %3839 = vmatpush1.msra.mxu0 0.0
      %3840 = vmatprep.subr.mxu0 0.0
      %3841 = vmatpush1.msra.mxu0 0.0
      %3842 = vmatprep.subr.mxu0 0.0
      %3843 = vmatpush1.msra.mxu0 0.0
      %3844 = vmatprep.subr.mxu0 0.0
      %3845 = vmatpush1.msra.mxu0 0.0
      %3846 = vmatprep.subr.mxu0 0.0
      %3847 = vmatpush1.msra.mxu0 0.0
      %3848 = vmatprep.subr.mxu0 0.0
      %3849 = vmatpush1.msra.mxu0 0.0
      %3850 = vmatprep.subr.mxu0 0.0
      %3851 = vmatpush1.msra.mxu0 0.0
      %3852 = vmatprep.subr.mxu0 0.0
      %3853 = vmatpush1.msra.mxu0 0.0
      %3854 = vmatprep.subr.mxu0 0.0
      %3855 = vmatpush1.msra.mxu0 0.0
      %3856 = vmatprep.subr.mxu0 0.0
      %3857 = vmatpush1.msra.mxu0 0.0
      %3858 = vmatprep.mubr.f32.mxu0 0.0
      %3859 = vmatmul.mubr.f32.gmra.mrb[0].mxu0 %v1908
      %v3860 = vpop.f32.mrb[0].mxu0
      %v3861 = vadd.f32 %v3784, %v3860
      %v3862 = vpop.f32.mrb[0].mxu0
      %v3863 = vadd.f32 %v3786, %v3862
      %3864 = vdwg.mxu0
      %v3865 = vld [vmem:[%s20] sm:$0xf]
      %v3866 = vld [vmem:[%s21] sm:$0x1]
      %v3867 = vld [vmem:[%s22] sm:$0x3]
      %v3868 = vld [vmem:[%s23] sm:$0x3]
      %v3869 = vld [vmem:[%s24] sm:$0xf]
      %v3870 = vld [vmem:[%s25] sm:$0xf]
      %v3871 = vld [vmem:[%s26] sm:$0x1]
      %v3872 = vld [vmem:[%s27] sm:$0x3]
      %3874 = vset.pattern.permute.xlu0 4
      %3875 = vperm.xlu0 %3874, %v3865
      %v3876 = vpop.permute.xlu0 %3875
      %v3878 = vmul.f32 %v3861, %v3876
      %v3879 = vmul.f32 %v3863, %v3876
      %3880 = vrot.lane.b32.xlu0 %v3861, 17
      %v3881 = vpop.permute.xlu0 %3880
      %3882 = vrot.lane.b32.xlu0 %v3863, 17
      %v3883 = vpop.permute.xlu0 %3882
      %v3884 = vsel %vm995, %v3881, %v3883
      %v3885 = vsel %vm995, %v3883, %v3881
      %v3886 = vmul.f32 %v3885, %v1001
      %v3887 = vmul.f32 %v3884, %v1005
      %3888 = vset.pattern.permute.xlu0 0
      %3889 = vperm.xlu0 %3888, %v3865
      %v3890 = vpop.permute.xlu0 %3889
      %v3892 = vmul.f32 %v3886, %v3890
      %v3893 = vmul.f32 %v3887, %v3890
      %v3894 = vadd.f32 %v3878, %v3892
      %v3895 = vadd.f32 %v3879, %v3893
      %3896 = vrot.lane.b32.xlu0 %v3861, 16
      %v3897 = vpop.permute.xlu0 %3896
      %3898 = vrot.lane.b32.xlu0 %v3863, 16
      %v3899 = vpop.permute.xlu0 %3898
      %v3900 = vsel %vm1020, %v3897, %v3899
      %v3901 = vsel %vm1020, %v3899, %v3897
      %v3902 = vmul.f32 %v3901, %v1026
      %v3903 = vmul.f32 %v3900, %v1030
      %3904 = vset.pattern.permute.xlu0 1
      %3905 = vperm.xlu0 %3904, %v3865
      %v3906 = vpop.permute.xlu0 %3905
      %v3908 = vmul.f32 %v3902, %v3906
      %v3909 = vmul.f32 %v3903, %v3906
      %v3910 = vadd.f32 %v3894, %v3908
      %v3911 = vadd.f32 %v3895, %v3909
      %3912 = vrot.lane.b32.xlu0 %v3861, 15
      %v3913 = vpop.permute.xlu0 %3912
      %3914 = vrot.lane.b32.xlu0 %v3863, 15
      %v3915 = vpop.permute.xlu0 %3914
      %v3916 = vsel %vm1045, %v3913, %v3915
      %v3917 = vsel %vm1045, %v3915, %v3913
      %v3918 = vmul.f32 %v3917, %v1051
      %v3919 = vmul.f32 %v3916, %v1055
      %3920 = vset.pattern.permute.xlu0 2
      %3921 = vperm.xlu0 %3920, %v3865
      %v3922 = vpop.permute.xlu0 %3921
      %v3924 = vmul.f32 %v3918, %v3922
      %v3925 = vmul.f32 %v3919, %v3922
      %v3926 = vadd.f32 %v3910, %v3924
      %v3927 = vadd.f32 %v3911, %v3925
      %3928 = vrot.lane.b32.xlu0 %v3861, 1
      %v3929 = vpop.permute.xlu0 %3928
      %3930 = vrot.lane.b32.xlu0 %v3863, 1
      %v3931 = vpop.permute.xlu0 %3930
      %v3932 = vsel %vm1070, %v3929, %v3931
      %v3933 = vsel %vm1070, %v3931, %v3929
      %v3934 = vmul.f32 %v3933, %v1076
      %v3935 = vmul.f32 %v3932, %v1080
      %3936 = vset.pattern.permute.xlu0 3
      %3937 = vperm.xlu0 %3936, %v3865
      %v3938 = vpop.permute.xlu0 %3937
      %v3940 = vmul.f32 %v3934, %v3938
      %v3941 = vmul.f32 %v3935, %v3938
      %v3942 = vadd.f32 %v3926, %v3940
      %v3943 = vadd.f32 %v3927, %v3941
      %3944 = vrot.lane.b32.xlu0 %v3861, 127
      %v3945 = vpop.permute.xlu0 %3944
      %3946 = vrot.lane.b32.xlu0 %v3863, 127
      %v3947 = vpop.permute.xlu0 %3946
      %v3948 = vsel %vm1095, %v3945, %v3947
      %v3949 = vsel %vm1095, %v3947, %v3945
      %v3950 = vmul.f32 %v3948, %v1101
      %v3951 = vmul.f32 %v3949, %v1105
      %3952 = vset.pattern.permute.xlu0 5
      %3953 = vperm.xlu0 %3952, %v3865
      %v3954 = vpop.permute.xlu0 %3953
      %v3956 = vmul.f32 %v3950, %v3954
      %v3957 = vmul.f32 %v3951, %v3954
      %v3958 = vadd.f32 %v3942, %v3956
      %v3959 = vadd.f32 %v3943, %v3957
      %3960 = vrot.lane.b32.xlu0 %v3861, 113
      %v3961 = vpop.permute.xlu0 %3960
      %3962 = vrot.lane.b32.xlu0 %v3863, 113
      %v3963 = vpop.permute.xlu0 %3962
      %v3964 = vsel %vm1120, %v3961, %v3963
      %v3965 = vsel %vm1120, %v3963, %v3961
      %v3966 = vmul.f32 %v3964, %v1126
      %v3967 = vmul.f32 %v3965, %v1130
      %3968 = vset.pattern.permute.xlu0 6
      %3969 = vperm.xlu0 %3968, %v3865
      %v3970 = vpop.permute.xlu0 %3969
      %v3972 = vmul.f32 %v3966, %v3970
      %v3973 = vmul.f32 %v3967, %v3970
      %v3974 = vadd.f32 %v3958, %v3972
      %v3975 = vadd.f32 %v3959, %v3973
      %3976 = vrot.lane.b32.xlu0 %v3861, 112
      %v3977 = vpop.permute.xlu0 %3976
      %3978 = vrot.lane.b32.xlu0 %v3863, 112
      %v3979 = vpop.permute.xlu0 %3978
      %v3980 = vsel %vm1145, %v3977, %v3979
      %v3981 = vsel %vm1145, %v3979, %v3977
      %v3982 = vmul.f32 %v3980, %v1151
      %v3983 = vmul.f32 %v3981, %v1155
      %3984 = vset.pattern.permute.xlu0 7
      %3985 = vperm.xlu0 %3984, %v3865
      %v3986 = vpop.permute.xlu0 %3985
      %v3988 = vmul.f32 %v3982, %v3986
      %v3989 = vmul.f32 %v3983, %v3986
      %v3990 = vadd.f32 %v3974, %v3988
      %v3991 = vadd.f32 %v3975, %v3989
      %3992 = vrot.lane.b32.xlu0 %v3861, 111
      %v3993 = vpop.permute.xlu0 %3992
      %3994 = vrot.lane.b32.xlu0 %v3863, 111
      %v3995 = vpop.permute.xlu0 %3994
      %v3996 = vsel %vm1170, %v3993, %v3995
      %v3997 = vsel %vm1170, %v3995, %v3993
      %v3998 = vmul.f32 %v3996, %v1176
      %v3999 = vmul.f32 %v3997, %v1180
      %4000 = vset.pattern.permute.xlu0 8
      %4001 = vperm.xlu0 %4000, %v3865
      %v4002 = vpop.permute.xlu0 %4001
      %v4004 = vmul.f32 %v3998, %v4002
      %v4005 = vmul.f32 %v3999, %v4002
      %v4006 = vadd.f32 %v3990, %v4004
      %v4007 = vadd.f32 %v3991, %v4005
      %4008 = vset.pattern.permute.xlu0 9
      %4009 = vperm.xlu0 %4008, %v3865
      %v4010 = vpop.permute.xlu0 %4009
      %v4012 = vadd.f32 %v4006, %v4010
      %v4013 = vadd.f32 %v4007, %v4010
      %v4014 = vsel %vm963, %v4012, 0.0
      %v4015 = vsel %vm963, %v4013, 0.0
      %v4016 = vadd.f32 %v4014, %v4015
      %4017 = vadd.xlane.f32.xlu0 %v4016
      %v4018 = vpop.xlane.xlu0 %4017
      %v4019 = vrot.slane %v4018, 4
      %v4020 = vadd.f32 %v4018, %v4019
      %v4021 = vrot.slane %v4020, 2
      %v4022 = vadd.f32 %v4020, %v4021
      %v4023 = vrot.slane %v4022, 1
      %v4024 = vadd.f32 %v4022, %v4023
      %s4025 = vtos %v4024
      %v4026 = vrcp.pop 1024.0
      %s4027 = vtos %v4026
      %s4028 = smul.f32 %s4025, %s4027
      %v4029 = vstv %s4028
      %v4030 = vsub.f32 %v4012, %v4029
      %v4031 = vsub.f32 %v4013, %v4029
      %v4032 = vmul.f32 %v4030, %v4030
      %v4033 = vmul.f32 %v4031, %v4031
      %v4034 = vsel %vm963, %v4032, 0.0
      %v4035 = vsel %vm963, %v4033, 0.0
      %v4036 = vadd.f32 %v4034, %v4035
      %4037 = vadd.xlane.f32.xlu0 %v4036
      %v4038 = vpop.xlane.xlu0 %4037
      %v4039 = vrot.slane %v4038, 4
      %v4040 = vadd.f32 %v4038, %v4039
      %v4041 = vrot.slane %v4040, 2
      %v4042 = vadd.f32 %v4040, %v4041
      %v4043 = vrot.slane %v4042, 1
      %v4044 = vadd.f32 %v4042, %v4043
      %s4045 = vtos %v4044
      %v4046 = vrcp.pop 1024.0
      %s4047 = vtos %v4046
      %s4048 = smul.f32 %s4045, %s4047
      %s4049 = sadd.f32 %s4048, 1e-05
      %v4050 = vstv %s4049
      %v4051 = vrsqrt.pop %v4050
      %s4052 = vtos %v4051
      %v4053 = vstv %s4052
      %v4054 = vmul.f32 %v4030, %v4053
      %v4055 = vmul.f32 %v4031, %v4053
      %4056 = vset.pattern.permute.xlu0 10
      %4057 = vperm.xlu0 %4056, %v3865
      %v4058 = vpop.permute.xlu0 %4057
      %v4060 = vmul.f32 %v4054, %v4058
      %v4061 = vmul.f32 %v4055, %v4058
      %4062 = vset.pattern.permute.xlu0 11
      %4063 = vperm.xlu0 %4062, %v3865
      %v4064 = vpop.permute.xlu0 %4063
      %v4066 = vadd.f32 %v4060, %v4064
      %v4067 = vadd.f32 %v4061, %v4064
      %v4068 = vpack.c.bf16 %v4066, %v4066
      %v4069 = vpack.c.bf16 %v4067, %v4067
      %4071 = vset.pattern.permute.xlu0 0
      %4072 = vperm.xlu0 %4071, %v3867
      %v4073 = vpop.permute.xlu0 %4072
      %v4076 = vsel %vm1258, %v3866, 0
      %v4079 = vsel %vm1262, %v4068, 0
      %v4082 = vsel %vm1262, %v4069, 0
      %4084 = vmatprep.subr.bf16.mxu0 %v4082
      %4085 = vmatpush1.bf16.msra.mxu0 %v4079
      %4086 = vmatprep.subr.bf16.mxu0 0
      %4087 = vmatpush1.bf16.msra.mxu0 0
      %4088 = vmatprep.subr.bf16.mxu0 0
      %4089 = vmatpush1.bf16.msra.mxu0 0
      %4090 = vmatprep.subr.bf16.mxu0 0
      %4091 = vmatpush1.bf16.msra.mxu0 0
      %4092 = vmatprep.subr.bf16.mxu0 0
      %4093 = vmatpush1.bf16.msra.mxu0 0
      %4094 = vmatprep.subr.bf16.mxu0 0
      %4095 = vmatpush1.bf16.msra.mxu0 0
      %4096 = vmatprep.subr.bf16.mxu0 0
      %4097 = vmatpush1.bf16.msra.mxu0 0
      %4098 = vmatprep.subr.bf16.mxu0 0
      %4099 = vmatpush1.bf16.msra.mxu0 0
      %4100 = vmatprep.subr.bf16.mxu0 0
      %4101 = vmatpush1.bf16.msra.mxu0 0
      %4102 = vmatprep.subr.bf16.mxu0 0
      %4103 = vmatpush1.bf16.msra.mxu0 0
      %4104 = vmatprep.subr.bf16.mxu0 0
      %4105 = vmatpush1.bf16.msra.mxu0 0
      %4106 = vmatprep.subr.bf16.mxu0 0
      %4107 = vmatpush1.bf16.msra.mxu0 0
      %4108 = vmatprep.subr.bf16.mxu0 0
      %4109 = vmatpush1.bf16.msra.mxu0 0
      %4110 = vmatprep.subr.bf16.mxu0 0
      %4111 = vmatpush1.bf16.msra.mxu0 0
      %4112 = vmatprep.subr.bf16.mxu0 0
      %4113 = vmatpush1.bf16.msra.mxu0 0
      %4114 = vmatprep.subr.bf16.mxu0 0
      %4115 = vmatpush1.bf16.msra.mxu0 0
      %4116 = vmatprep.mubr.bf16.mxu0 0
      %4117 = vmatmul.mubr.bf16.gmra.mrb[0].mxu0 %v4076
      %v4118 = vpop.f32.mrb[0].mxu0
      %v4119 = vadd.f32 %v4073, %v4118
      %v4120 = vpop.f32.mrb[0].mxu0
      %v4121 = vadd.f32 %v4073, %v4120
      %v4122 = vpop.f32.mrb[0].mxu0
      %v4123 = vpop.f32.mrb[0].mxu0
      %4124 = vdwg.mxu0
      %v4125 = vsel %vm1262, %v4119, 0.0
      %v4126 = vsel %vm1262, %v4121, 0.0
      %v4127 = vadd.f32 %v4125, %v4126
      %4128 = vadd.xlane.f32.xlu0 %v4127
      %v4129 = vpop.xlane.xlu0 %4128
      %v4130 = vrot.slane %v4129, 4
      %v4131 = vadd.f32 %v4129, %v4130
      %v4132 = vrot.slane %v4131, 2
      %v4133 = vadd.f32 %v4131, %v4132
      %v4134 = vrot.slane %v4133, 1
      %v4135 = vadd.f32 %v4133, %v4134
      %s4136 = vtos %v4135
      %v4137 = vrcp.pop 512.0
      %s4138 = vtos %v4137
      %s4139 = smul.f32 %s4136, %s4138
      %v4140 = vstv %s4139
      %v4141 = vsub.f32 %v4119, %v4140
      %v4142 = vsub.f32 %v4121, %v4140
      %v4143 = vmul.f32 %v4141, %v4141
      %v4144 = vmul.f32 %v4142, %v4142
      %v4145 = vsel %vm1262, %v4143, 0.0
      %v4146 = vsel %vm1262, %v4144, 0.0
      %v4147 = vadd.f32 %v4145, %v4146
      %4148 = vadd.xlane.f32.xlu0 %v4147
      %v4149 = vpop.xlane.xlu0 %4148
      %v4150 = vrot.slane %v4149, 4
      %v4151 = vadd.f32 %v4149, %v4150
      %v4152 = vrot.slane %v4151, 2
      %v4153 = vadd.f32 %v4151, %v4152
      %v4154 = vrot.slane %v4153, 1
      %v4155 = vadd.f32 %v4153, %v4154
      %s4156 = vtos %v4155
      %v4157 = vrcp.pop 512.0
      %s4158 = vtos %v4157
      %s4159 = smul.f32 %s4156, %s4158
      %s4160 = sadd.f32 %s4159, 1e-05
      %v4161 = vstv %s4160
      %v4162 = vrsqrt.pop %v4161
      %s4163 = vtos %v4162
      %v4164 = vstv %s4163
      %v4165 = vmul.f32 %v4141, %v4164
      %v4166 = vmul.f32 %v4142, %v4164
      %4167 = vset.pattern.permute.xlu0 1
      %4168 = vperm.xlu0 %4167, %v3867
      %v4169 = vpop.permute.xlu0 %4168
      %v4171 = vmul.f32 %v4165, %v4169
      %v4172 = vmul.f32 %v4166, %v4169
      %4173 = vset.pattern.permute.xlu0 2
      %4174 = vperm.xlu0 %4173, %v3867
      %v4175 = vpop.permute.xlu0 %4174
      %v4177 = vadd.f32 %v4171, %v4175
      %v4178 = vadd.f32 %v4172, %v4175
      %v4179 = vxor.u32 %v4177, 2147483648
      %v4180 = vxor.u32 %v4178, 2147483648
      %v4181 = vmul.f32 %v4179, 1.442695
      %v4182 = vpow.pop %v4181
      %v4183 = vmul.f32 %v4180, 1.442695
      %v4184 = vpow.pop %v4183
      %v4185 = vadd.f32 %v4182, 1.0
      %v4186 = vadd.f32 %v4184, 1.0
      %v4187 = vrcp.pop %v4185
      %v4188 = vmul.f32 1.0, %v4187
      %v4189 = vrcp.pop %v4186
      %v4190 = vmul.f32 1.0, %v4189
      %v4191 = vmul.f32 %v4177, %v4188
      %v4192 = vmul.f32 %v4178, %v4190
      %v4193 = vpack.c.bf16 %v3861, %v3861
      %v4194 = vpack.c.bf16 %v3863, %v3863
      %4196 = vset.pattern.permute.xlu0 0
      %4197 = vperm.xlu0 %4196, %v3869
      %v4198 = vpop.permute.xlu0 %4197
      %v4202 = vrot.slane %v4193, 2
      %v4203 = vrot.slane %v4194, 2
      %v4205 = vsel %vm1258, %v3868, 0
      %v4208 = vsel %vm1262, %v4202, 0
      %v4211 = vsel %vm1262, %v4203, 0
      %4213 = vmatprep.subr.bf16.mxu0 %v4211
      %4214 = vmatpush1.bf16.msra.mxu0 %v4208
      %4215 = vmatprep.subr.bf16.mxu0 0
      %4216 = vmatpush1.bf16.msra.mxu0 0
      %4217 = vmatprep.subr.bf16.mxu0 0
      %4218 = vmatpush1.bf16.msra.mxu0 0
      %4219 = vmatprep.subr.bf16.mxu0 0
      %4220 = vmatpush1.bf16.msra.mxu0 0
      %4221 = vmatprep.subr.bf16.mxu0 0
      %4222 = vmatpush1.bf16.msra.mxu0 0
      %4223 = vmatprep.subr.bf16.mxu0 0
      %4224 = vmatpush1.bf16.msra.mxu0 0
      %4225 = vmatprep.subr.bf16.mxu0 0
      %4226 = vmatpush1.bf16.msra.mxu0 0
      %4227 = vmatprep.subr.bf16.mxu0 0
      %4228 = vmatpush1.bf16.msra.mxu0 0
      %4229 = vmatprep.subr.bf16.mxu0 0
      %4230 = vmatpush1.bf16.msra.mxu0 0
      %4231 = vmatprep.subr.bf16.mxu0 0
      %4232 = vmatpush1.bf16.msra.mxu0 0
      %4233 = vmatprep.subr.bf16.mxu0 0
      %4234 = vmatpush1.bf16.msra.mxu0 0
      %4235 = vmatprep.subr.bf16.mxu0 0
      %4236 = vmatpush1.bf16.msra.mxu0 0
      %4237 = vmatprep.subr.bf16.mxu0 0
      %4238 = vmatpush1.bf16.msra.mxu0 0
      %4239 = vmatprep.subr.bf16.mxu0 0
      %4240 = vmatpush1.bf16.msra.mxu0 0
      %4241 = vmatprep.subr.bf16.mxu0 0
      %4242 = vmatpush1.bf16.msra.mxu0 0
      %4243 = vmatprep.subr.bf16.mxu0 0
      %4244 = vmatpush1.bf16.msra.mxu0 0
      %4245 = vmatprep.mubr.bf16.mxu0 0
      %4246 = vmatmul.mubr.bf16.gmra.mrb[0].mxu0 %v4205
      %v4247 = vpop.f32.mrb[0].mxu0
      %v4248 = vadd.f32 %v4198, %v4247
      %v4249 = vpop.f32.mrb[0].mxu0
      %v4250 = vadd.f32 %v4198, %v4249
      %v4251 = vpop.f32.mrb[0].mxu0
      %v4252 = vpop.f32.mrb[0].mxu0
      %4253 = vdwg.mxu0
      %v4254 = vsel %vm963, %v4248, 0.0
      %v4255 = vsel %vm963, %v4250, 0.0
      %v4256 = vadd.f32 %v4254, %v4255
      %4257 = vadd.xlane.f32.xlu0 %v4256
      %v4258 = vpop.xlane.xlu0 %4257
      %v4259 = vrot.slane %v4258, 4
      %v4260 = vadd.f32 %v4258, %v4259
      %v4261 = vrot.slane %v4260, 2
      %v4262 = vadd.f32 %v4260, %v4261
      %v4263 = vrot.slane %v4262, 1
      %v4264 = vadd.f32 %v4262, %v4263
      %s4265 = vtos %v4264
      %v4266 = vrcp.pop 1024.0
      %s4267 = vtos %v4266
      %s4268 = smul.f32 %s4265, %s4267
      %v4269 = vstv %s4268
      %v4270 = vsub.f32 %v4248, %v4269
      %v4271 = vsub.f32 %v4250, %v4269
      %v4272 = vmul.f32 %v4270, %v4270
      %v4273 = vmul.f32 %v4271, %v4271
      %v4274 = vsel %vm963, %v4272, 0.0
      %v4275 = vsel %vm963, %v4273, 0.0
      %v4276 = vadd.f32 %v4274, %v4275
      %4277 = vadd.xlane.f32.xlu0 %v4276
      %v4278 = vpop.xlane.xlu0 %4277
      %v4279 = vrot.slane %v4278, 4
      %v4280 = vadd.f32 %v4278, %v4279
      %v4281 = vrot.slane %v4280, 2
      %v4282 = vadd.f32 %v4280, %v4281
      %v4283 = vrot.slane %v4282, 1
      %v4284 = vadd.f32 %v4282, %v4283
      %s4285 = vtos %v4284
      %v4286 = vrcp.pop 1024.0
      %s4287 = vtos %v4286
      %s4288 = smul.f32 %s4285, %s4287
      %s4289 = sadd.f32 %s4288, 1e-05
      %v4290 = vstv %s4289
      %v4291 = vrsqrt.pop %v4290
      %s4292 = vtos %v4291
      %v4293 = vstv %s4292
      %v4294 = vmul.f32 %v4270, %v4293
      %v4295 = vmul.f32 %v4271, %v4293
      %4296 = vset.pattern.permute.xlu0 1
      %4297 = vperm.xlu0 %4296, %v3869
      %v4298 = vpop.permute.xlu0 %4297
      %v4300 = vmul.f32 %v4294, %v4298
      %v4301 = vmul.f32 %v4295, %v4298
      %4302 = vset.pattern.permute.xlu0 2
      %4303 = vperm.xlu0 %4302, %v3869
      %v4304 = vpop.permute.xlu0 %4303
      %v4306 = vadd.f32 %v4300, %v4304
      %v4307 = vadd.f32 %v4301, %v4304
      %v4308 = vxor.u32 %v4306, 2147483648
      %v4309 = vxor.u32 %v4307, 2147483648
      %v4310 = vmul.f32 %v4308, 1.442695
      %v4311 = vpow.pop %v4310
      %v4312 = vmul.f32 %v4309, 1.442695
      %v4313 = vpow.pop %v4312
      %v4314 = vadd.f32 %v4311, 1.0
      %v4315 = vadd.f32 %v4313, 1.0
      %v4316 = vrcp.pop %v4314
      %v4317 = vmul.f32 1.0, %v4316
      %v4318 = vrcp.pop %v4315
      %v4319 = vmul.f32 1.0, %v4318
      %v4320 = vmul.f32 %v4306, %v4317
      %v4321 = vmul.f32 %v4307, %v4319
      %4323 = vset.pattern.permute.xlu0 4
      %4324 = vperm.xlu0 %4323, %v3870
      %v4325 = vpop.permute.xlu0 %4324
      %v4327 = vmul.f32 %v4320, %v4325
      %v4328 = vmul.f32 %v4321, %v4325
      %4329 = vrot.lane.b32.xlu0 %v4320, 17
      %v4330 = vpop.permute.xlu0 %4329
      %4331 = vrot.lane.b32.xlu0 %v4321, 17
      %v4332 = vpop.permute.xlu0 %4331
      %v4333 = vsel %vm995, %v4330, %v4332
      %v4334 = vsel %vm995, %v4332, %v4330
      %v4335 = vmul.f32 %v4334, %v1001
      %v4336 = vmul.f32 %v4333, %v1005
      %4337 = vset.pattern.permute.xlu0 0
      %4338 = vperm.xlu0 %4337, %v3870
      %v4339 = vpop.permute.xlu0 %4338
      %v4341 = vmul.f32 %v4335, %v4339
      %v4342 = vmul.f32 %v4336, %v4339
      %v4343 = vadd.f32 %v4327, %v4341
      %v4344 = vadd.f32 %v4328, %v4342
      %4345 = vrot.lane.b32.xlu0 %v4320, 16
      %v4346 = vpop.permute.xlu0 %4345
      %4347 = vrot.lane.b32.xlu0 %v4321, 16
      %v4348 = vpop.permute.xlu0 %4347
      %v4349 = vsel %vm1020, %v4346, %v4348
      %v4350 = vsel %vm1020, %v4348, %v4346
      %v4351 = vmul.f32 %v4350, %v1026
      %v4352 = vmul.f32 %v4349, %v1030
      %4353 = vset.pattern.permute.xlu0 1
      %4354 = vperm.xlu0 %4353, %v3870
      %v4355 = vpop.permute.xlu0 %4354
      %v4357 = vmul.f32 %v4351, %v4355
      %v4358 = vmul.f32 %v4352, %v4355
      %v4359 = vadd.f32 %v4343, %v4357
      %v4360 = vadd.f32 %v4344, %v4358
      %4361 = vrot.lane.b32.xlu0 %v4320, 15
      %v4362 = vpop.permute.xlu0 %4361
      %4363 = vrot.lane.b32.xlu0 %v4321, 15
      %v4364 = vpop.permute.xlu0 %4363
      %v4365 = vsel %vm1045, %v4362, %v4364
      %v4366 = vsel %vm1045, %v4364, %v4362
      %v4367 = vmul.f32 %v4366, %v1051
      %v4368 = vmul.f32 %v4365, %v1055
      %4369 = vset.pattern.permute.xlu0 2
      %4370 = vperm.xlu0 %4369, %v3870
      %v4371 = vpop.permute.xlu0 %4370
      %v4373 = vmul.f32 %v4367, %v4371
      %v4374 = vmul.f32 %v4368, %v4371
      %v4375 = vadd.f32 %v4359, %v4373
      %v4376 = vadd.f32 %v4360, %v4374
      %4377 = vrot.lane.b32.xlu0 %v4320, 1
      %v4378 = vpop.permute.xlu0 %4377
      %4379 = vrot.lane.b32.xlu0 %v4321, 1
      %v4380 = vpop.permute.xlu0 %4379
      %v4381 = vsel %vm1070, %v4378, %v4380
      %v4382 = vsel %vm1070, %v4380, %v4378
      %v4383 = vmul.f32 %v4382, %v1076
      %v4384 = vmul.f32 %v4381, %v1080
      %4385 = vset.pattern.permute.xlu0 3
      %4386 = vperm.xlu0 %4385, %v3870
      %v4387 = vpop.permute.xlu0 %4386
      %v4389 = vmul.f32 %v4383, %v4387
      %v4390 = vmul.f32 %v4384, %v4387
      %v4391 = vadd.f32 %v4375, %v4389
      %v4392 = vadd.f32 %v4376, %v4390
      %4393 = vrot.lane.b32.xlu0 %v4320, 127
      %v4394 = vpop.permute.xlu0 %4393
      %4395 = vrot.lane.b32.xlu0 %v4321, 127
      %v4396 = vpop.permute.xlu0 %4395
      %v4397 = vsel %vm1095, %v4394, %v4396
      %v4398 = vsel %vm1095, %v4396, %v4394
      %v4399 = vmul.f32 %v4397, %v1101
      %v4400 = vmul.f32 %v4398, %v1105
      %4401 = vset.pattern.permute.xlu0 5
      %4402 = vperm.xlu0 %4401, %v3870
      %v4403 = vpop.permute.xlu0 %4402
      %v4405 = vmul.f32 %v4399, %v4403
      %v4406 = vmul.f32 %v4400, %v4403
      %v4407 = vadd.f32 %v4391, %v4405
      %v4408 = vadd.f32 %v4392, %v4406
      %4409 = vrot.lane.b32.xlu0 %v4320, 113
      %v4410 = vpop.permute.xlu0 %4409
      %4411 = vrot.lane.b32.xlu0 %v4321, 113
      %v4412 = vpop.permute.xlu0 %4411
      %v4413 = vsel %vm1120, %v4410, %v4412
      %v4414 = vsel %vm1120, %v4412, %v4410
      %v4415 = vmul.f32 %v4413, %v1126
      %v4416 = vmul.f32 %v4414, %v1130
      %4417 = vset.pattern.permute.xlu0 6
      %4418 = vperm.xlu0 %4417, %v3870
      %v4419 = vpop.permute.xlu0 %4418
      %v4421 = vmul.f32 %v4415, %v4419
      %v4422 = vmul.f32 %v4416, %v4419
      %v4423 = vadd.f32 %v4407, %v4421
      %v4424 = vadd.f32 %v4408, %v4422
      %4425 = vrot.lane.b32.xlu0 %v4320, 112
      %v4426 = vpop.permute.xlu0 %4425
      %4427 = vrot.lane.b32.xlu0 %v4321, 112
      %v4428 = vpop.permute.xlu0 %4427
      %v4429 = vsel %vm1145, %v4426, %v4428
      %v4430 = vsel %vm1145, %v4428, %v4426
      %v4431 = vmul.f32 %v4429, %v1151
      %v4432 = vmul.f32 %v4430, %v1155
      %4433 = vset.pattern.permute.xlu0 7
      %4434 = vperm.xlu0 %4433, %v3870
      %v4435 = vpop.permute.xlu0 %4434
      %v4437 = vmul.f32 %v4431, %v4435
      %v4438 = vmul.f32 %v4432, %v4435
      %v4439 = vadd.f32 %v4423, %v4437
      %v4440 = vadd.f32 %v4424, %v4438
      %4441 = vrot.lane.b32.xlu0 %v4320, 111
      %v4442 = vpop.permute.xlu0 %4441
      %4443 = vrot.lane.b32.xlu0 %v4321, 111
      %v4444 = vpop.permute.xlu0 %4443
      %v4445 = vsel %vm1170, %v4442, %v4444
      %v4446 = vsel %vm1170, %v4444, %v4442
      %v4447 = vmul.f32 %v4445, %v1176
      %v4448 = vmul.f32 %v4446, %v1180
      %4449 = vset.pattern.permute.xlu0 8
      %4450 = vperm.xlu0 %4449, %v3870
      %v4451 = vpop.permute.xlu0 %4450
      %v4453 = vmul.f32 %v4447, %v4451
      %v4454 = vmul.f32 %v4448, %v4451
      %v4455 = vadd.f32 %v4439, %v4453
      %v4456 = vadd.f32 %v4440, %v4454
      %4457 = vset.pattern.permute.xlu0 9
      %4458 = vperm.xlu0 %4457, %v3870
      %v4459 = vpop.permute.xlu0 %4458
      %v4461 = vadd.f32 %v4455, %v4459
      %v4462 = vadd.f32 %v4456, %v4459
      %v4463 = vsel %vm963, %v4461, 0.0
      %v4464 = vsel %vm963, %v4462, 0.0
      %v4465 = vadd.f32 %v4463, %v4464
      %4466 = vadd.xlane.f32.xlu0 %v4465
      %v4467 = vpop.xlane.xlu0 %4466
      %v4468 = vrot.slane %v4467, 4
      %v4469 = vadd.f32 %v4467, %v4468
      %v4470 = vrot.slane %v4469, 2
      %v4471 = vadd.f32 %v4469, %v4470
      %v4472 = vrot.slane %v4471, 1
      %v4473 = vadd.f32 %v4471, %v4472
      %s4474 = vtos %v4473
      %v4475 = vrcp.pop 1024.0
      %s4476 = vtos %v4475
      %s4477 = smul.f32 %s4474, %s4476
      %v4478 = vstv %s4477
      %v4479 = vsub.f32 %v4461, %v4478
      %v4480 = vsub.f32 %v4462, %v4478
      %v4481 = vmul.f32 %v4479, %v4479
      %v4482 = vmul.f32 %v4480, %v4480
      %v4483 = vsel %vm963, %v4481, 0.0
      %v4484 = vsel %vm963, %v4482, 0.0
      %v4485 = vadd.f32 %v4483, %v4484
      %4486 = vadd.xlane.f32.xlu0 %v4485
      %v4487 = vpop.xlane.xlu0 %4486
      %v4488 = vrot.slane %v4487, 4
      %v4489 = vadd.f32 %v4487, %v4488
      %v4490 = vrot.slane %v4489, 2
      %v4491 = vadd.f32 %v4489, %v4490
      %v4492 = vrot.slane %v4491, 1
      %v4493 = vadd.f32 %v4491, %v4492
      %s4494 = vtos %v4493
      %v4495 = vrcp.pop 1024.0
      %s4496 = vtos %v4495
      %s4497 = smul.f32 %s4494, %s4496
      %s4498 = sadd.f32 %s4497, 1e-05
      %v4499 = vstv %s4498
      %v4500 = vrsqrt.pop %v4499
      %s4501 = vtos %v4500
      %v4502 = vstv %s4501
      %v4503 = vmul.f32 %v4479, %v4502
      %v4504 = vmul.f32 %v4480, %v4502
      %4505 = vset.pattern.permute.xlu0 10
      %4506 = vperm.xlu0 %4505, %v3870
      %v4507 = vpop.permute.xlu0 %4506
      %v4509 = vmul.f32 %v4503, %v4507
      %v4510 = vmul.f32 %v4504, %v4507
      %4511 = vset.pattern.permute.xlu0 11
      %4512 = vperm.xlu0 %4511, %v3870
      %v4513 = vpop.permute.xlu0 %4512
      %v4515 = vadd.f32 %v4509, %v4513
      %v4516 = vadd.f32 %v4510, %v4513
      %v4517 = vpack.c.bf16 %v4515, %v4515
      %v4518 = vpack.c.bf16 %v4516, %v4516
      %4520 = vset.pattern.permute.xlu0 0
      %4521 = vperm.xlu0 %4520, %v3872
      %v4522 = vpop.permute.xlu0 %4521
      %v4525 = vsel %vm1258, %v3871, 0
      %v4528 = vsel %vm1262, %v4517, 0
      %v4531 = vsel %vm1262, %v4518, 0
      %4533 = vmatprep.subr.bf16.mxu0 %v4531
      %4534 = vmatpush1.bf16.msra.mxu0 %v4528
      %4535 = vmatprep.subr.bf16.mxu0 0
      %4536 = vmatpush1.bf16.msra.mxu0 0
      %4537 = vmatprep.subr.bf16.mxu0 0
      %4538 = vmatpush1.bf16.msra.mxu0 0
      %4539 = vmatprep.subr.bf16.mxu0 0
      %4540 = vmatpush1.bf16.msra.mxu0 0
      %4541 = vmatprep.subr.bf16.mxu0 0
      %4542 = vmatpush1.bf16.msra.mxu0 0
      %4543 = vmatprep.subr.bf16.mxu0 0
      %4544 = vmatpush1.bf16.msra.mxu0 0
      %4545 = vmatprep.subr.bf16.mxu0 0
      %4546 = vmatpush1.bf16.msra.mxu0 0
      %4547 = vmatprep.subr.bf16.mxu0 0
      %4548 = vmatpush1.bf16.msra.mxu0 0
      %4549 = vmatprep.subr.bf16.mxu0 0
      %4550 = vmatpush1.bf16.msra.mxu0 0
      %4551 = vmatprep.subr.bf16.mxu0 0
      %4552 = vmatpush1.bf16.msra.mxu0 0
      %4553 = vmatprep.subr.bf16.mxu0 0
      %4554 = vmatpush1.bf16.msra.mxu0 0
      %4555 = vmatprep.subr.bf16.mxu0 0
      %4556 = vmatpush1.bf16.msra.mxu0 0
      %4557 = vmatprep.subr.bf16.mxu0 0
      %4558 = vmatpush1.bf16.msra.mxu0 0
      %4559 = vmatprep.subr.bf16.mxu0 0
      %4560 = vmatpush1.bf16.msra.mxu0 0
      %4561 = vmatprep.subr.bf16.mxu0 0
      %4562 = vmatpush1.bf16.msra.mxu0 0
      %4563 = vmatprep.subr.bf16.mxu0 0
      %4564 = vmatpush1.bf16.msra.mxu0 0
      %4565 = vmatprep.mubr.bf16.mxu0 0
      %4566 = vmatmul.mubr.bf16.gmra.mrb[0].mxu0 %v4525
      %v4567 = vpop.f32.mrb[0].mxu0
      %v4568 = vadd.f32 %v4522, %v4567
      %v4569 = vpop.f32.mrb[0].mxu0
      %v4570 = vadd.f32 %v4522, %v4569
      %v4571 = vpop.f32.mrb[0].mxu0
      %v4572 = vpop.f32.mrb[0].mxu0
      %4573 = vdwg.mxu0
      %v4574 = vsel %vm1262, %v4568, 0.0
      %v4575 = vsel %vm1262, %v4570, 0.0
      %v4576 = vadd.f32 %v4574, %v4575
      %4577 = vadd.xlane.f32.xlu0 %v4576
      %v4578 = vpop.xlane.xlu0 %4577
      %v4579 = vrot.slane %v4578, 4
      %v4580 = vadd.f32 %v4578, %v4579
      %v4581 = vrot.slane %v4580, 2
      %v4582 = vadd.f32 %v4580, %v4581
      %v4583 = vrot.slane %v4582, 1
      %v4584 = vadd.f32 %v4582, %v4583
      %s4585 = vtos %v4584
      %v4586 = vrcp.pop 512.0
      %s4587 = vtos %v4586
      %s4588 = smul.f32 %s4585, %s4587
      %v4589 = vstv %s4588
      %v4590 = vsub.f32 %v4568, %v4589
      %v4591 = vsub.f32 %v4570, %v4589
      %v4592 = vmul.f32 %v4590, %v4590
      %v4593 = vmul.f32 %v4591, %v4591
      %v4594 = vsel %vm1262, %v4592, 0.0
      %v4595 = vsel %vm1262, %v4593, 0.0
      %v4596 = vadd.f32 %v4594, %v4595
      %4597 = vadd.xlane.f32.xlu0 %v4596
      %v4598 = vpop.xlane.xlu0 %4597
      %v4599 = vrot.slane %v4598, 4
      %v4600 = vadd.f32 %v4598, %v4599
      %v4601 = vrot.slane %v4600, 2
      %v4602 = vadd.f32 %v4600, %v4601
      %v4603 = vrot.slane %v4602, 1
      %v4604 = vadd.f32 %v4602, %v4603
      %s4605 = vtos %v4604
      %v4606 = vrcp.pop 512.0
      %s4607 = vtos %v4606
      %s4608 = smul.f32 %s4605, %s4607
      %s4609 = sadd.f32 %s4608, 1e-05
      %v4610 = vstv %s4609
      %v4611 = vrsqrt.pop %v4610
      %s4612 = vtos %v4611
      %v4613 = vstv %s4612
      %v4614 = vmul.f32 %v4590, %v4613
      %v4615 = vmul.f32 %v4591, %v4613
      %4616 = vset.pattern.permute.xlu0 1
      %4617 = vperm.xlu0 %4616, %v3872
      %v4618 = vpop.permute.xlu0 %4617
      %v4620 = vmul.f32 %v4614, %v4618
      %v4621 = vmul.f32 %v4615, %v4618
      %4622 = vset.pattern.permute.xlu0 2
      %4623 = vperm.xlu0 %4622, %v3872
      %v4624 = vpop.permute.xlu0 %4623
      %v4626 = vadd.f32 %v4620, %v4624
      %v4627 = vadd.f32 %v4621, %v4624
      %v4628 = vxor.u32 %v4626, 2147483648
      %v4629 = vxor.u32 %v4627, 2147483648
      %v4630 = vmul.f32 %v4628, 1.442695
      %v4631 = vpow.pop %v4630
      %v4632 = vmul.f32 %v4629, 1.442695
      %v4633 = vpow.pop %v4632
      %v4634 = vadd.f32 %v4631, 1.0
      %v4635 = vadd.f32 %v4633, 1.0
      %v4636 = vrcp.pop %v4634
      %v4637 = vmul.f32 1.0, %v4636
      %v4638 = vrcp.pop %v4635
      %v4639 = vmul.f32 1.0, %v4638
      %v4640 = vmul.f32 %v4626, %v4637
      %v4641 = vmul.f32 %v4627, %v4639
      %vm4642 = vcmask 15360
      %v4644 = vsel %vm4642, %v973, 0
      %v4647 = vsel %vm1262, %v4640, 0
      %v4650 = vsel %vm1262, %v4641, 0
      %4652 = vmatprep.subr.mxu0 %v4650
      %4653 = vmatpush1.msra.mxu0 %v4647
      %4654 = vmatprep.subr.mxu0 0.0
      %4655 = vmatpush1.msra.mxu0 0.0
      %4656 = vmatprep.subr.mxu0 0.0
      %4657 = vmatpush1.msra.mxu0 0.0
      %4658 = vmatprep.subr.mxu0 0.0
      %4659 = vmatpush1.msra.mxu0 0.0
      %4660 = vmatprep.subr.mxu0 0.0
      %4661 = vmatpush1.msra.mxu0 0.0
      %4662 = vmatprep.subr.mxu0 0.0
      %4663 = vmatpush1.msra.mxu0 0.0
      %4664 = vmatprep.subr.mxu0 0.0
      %4665 = vmatpush1.msra.mxu0 0.0
      %4666 = vmatprep.subr.mxu0 0.0
      %4667 = vmatpush1.msra.mxu0 0.0
      %4668 = vmatprep.subr.mxu0 0.0
      %4669 = vmatpush1.msra.mxu0 0.0
      %4670 = vmatprep.subr.mxu0 0.0
      %4671 = vmatpush1.msra.mxu0 0.0
      %4672 = vmatprep.subr.mxu0 0.0
      %4673 = vmatpush1.msra.mxu0 0.0
      %4674 = vmatprep.subr.mxu0 0.0
      %4675 = vmatpush1.msra.mxu0 0.0
      %4676 = vmatprep.subr.mxu0 0.0
      %4677 = vmatpush1.msra.mxu0 0.0
      %4678 = vmatprep.subr.mxu0 0.0
      %4679 = vmatpush1.msra.mxu0 0.0
      %4680 = vmatprep.subr.mxu0 0.0
      %4681 = vmatpush1.msra.mxu0 0.0
      %4682 = vmatprep.subr.mxu0 0.0
      %4683 = vmatpush1.msra.mxu0 0.0
      %4684 = vmatprep.subr.mxu0 0.0
      %4685 = vmatpush1.msra.mxu0 0.0
      %4686 = vmatprep.subr.mxu0 0.0
      %4687 = vmatpush1.msra.mxu0 0.0
      %4688 = vmatprep.subr.mxu0 0.0
      %4689 = vmatpush1.msra.mxu0 0.0
      %4690 = vmatprep.subr.mxu0 0.0
      %4691 = vmatpush1.msra.mxu0 0.0
      %4692 = vmatprep.subr.mxu0 0.0
      %4693 = vmatpush1.msra.mxu0 0.0
      %4694 = vmatprep.subr.mxu0 0.0
      %4695 = vmatpush1.msra.mxu0 0.0
      %4696 = vmatprep.subr.mxu0 0.0
      %4697 = vmatpush1.msra.mxu0 0.0
      %4698 = vmatprep.subr.mxu0 0.0
      %4699 = vmatpush1.msra.mxu0 0.0
      %4700 = vmatprep.subr.mxu0 0.0
      %4701 = vmatpush1.msra.mxu0 0.0
      %4702 = vmatprep.subr.mxu0 0.0
      %4703 = vmatpush1.msra.mxu0 0.0
      %4704 = vmatprep.subr.mxu0 0.0
      %4705 = vmatpush1.msra.mxu0 0.0
      %4706 = vmatprep.subr.mxu0 0.0
      %4707 = vmatpush1.msra.mxu0 0.0
      %4708 = vmatprep.subr.mxu0 0.0
      %4709 = vmatpush1.msra.mxu0 0.0
      %4710 = vmatprep.subr.mxu0 0.0
      %4711 = vmatpush1.msra.mxu0 0.0
      %4712 = vmatprep.subr.mxu0 0.0
      %4713 = vmatpush1.msra.mxu0 0.0
      %4714 = vmatprep.subr.mxu0 0.0
      %4715 = vmatpush1.msra.mxu0 0.0
      %4716 = vmatprep.mubr.f32.mxu0 0.0
      %4717 = vmatmul.mubr.f32.gmra.mrb[0].mxu0 %v4644
      %v4718 = vpop.f32.mrb[0].mxu0
      %v4719 = vadd.f32 0.0, %v4718
      %v4720 = vpop.f32.mrb[0].mxu0
      %v4721 = vadd.f32 0.0, %v4720
      %4722 = vdwg.mxu0
      %v4724 = vsel %vm4642, %v972, 0
      %v4727 = vsel %vm1262, %v4191, 0
      %v4730 = vsel %vm1262, %v4192, 0
      %4732 = vmatprep.subr.mxu0 %v4730
      %4733 = vmatpush1.msra.mxu0 %v4727
      %4734 = vmatprep.subr.mxu0 0.0
      %4735 = vmatpush1.msra.mxu0 0.0
      %4736 = vmatprep.subr.mxu0 0.0
      %4737 = vmatpush1.msra.mxu0 0.0
      %4738 = vmatprep.subr.mxu0 0.0
      %4739 = vmatpush1.msra.mxu0 0.0
      %4740 = vmatprep.subr.mxu0 0.0
      %4741 = vmatpush1.msra.mxu0 0.0
      %4742 = vmatprep.subr.mxu0 0.0
      %4743 = vmatpush1.msra.mxu0 0.0
      %4744 = vmatprep.subr.mxu0 0.0
      %4745 = vmatpush1.msra.mxu0 0.0
      %4746 = vmatprep.subr.mxu0 0.0
      %4747 = vmatpush1.msra.mxu0 0.0
      %4748 = vmatprep.subr.mxu0 0.0
      %4749 = vmatpush1.msra.mxu0 0.0
      %4750 = vmatprep.subr.mxu0 0.0
      %4751 = vmatpush1.msra.mxu0 0.0
      %4752 = vmatprep.subr.mxu0 0.0
      %4753 = vmatpush1.msra.mxu0 0.0
      %4754 = vmatprep.subr.mxu0 0.0
      %4755 = vmatpush1.msra.mxu0 0.0
      %4756 = vmatprep.subr.mxu0 0.0
      %4757 = vmatpush1.msra.mxu0 0.0
      %4758 = vmatprep.subr.mxu0 0.0
      %4759 = vmatpush1.msra.mxu0 0.0
      %4760 = vmatprep.subr.mxu0 0.0
      %4761 = vmatpush1.msra.mxu0 0.0
      %4762 = vmatprep.subr.mxu0 0.0
      %4763 = vmatpush1.msra.mxu0 0.0
      %4764 = vmatprep.subr.mxu0 0.0
      %4765 = vmatpush1.msra.mxu0 0.0
      %4766 = vmatprep.subr.mxu0 0.0
      %4767 = vmatpush1.msra.mxu0 0.0
      %4768 = vmatprep.subr.mxu0 0.0
      %4769 = vmatpush1.msra.mxu0 0.0
      %4770 = vmatprep.subr.mxu0 0.0
      %4771 = vmatpush1.msra.mxu0 0.0
      %4772 = vmatprep.subr.mxu0 0.0
      %4773 = vmatpush1.msra.mxu0 0.0
      %4774 = vmatprep.subr.mxu0 0.0
      %4775 = vmatpush1.msra.mxu0 0.0
      %4776 = vmatprep.subr.mxu0 0.0
      %4777 = vmatpush1.msra.mxu0 0.0
      %4778 = vmatprep.subr.mxu0 0.0
      %4779 = vmatpush1.msra.mxu0 0.0
      %4780 = vmatprep.subr.mxu0 0.0
      %4781 = vmatpush1.msra.mxu0 0.0
      %4782 = vmatprep.subr.mxu0 0.0
      %4783 = vmatpush1.msra.mxu0 0.0
      %4784 = vmatprep.subr.mxu0 0.0
      %4785 = vmatpush1.msra.mxu0 0.0
      %4786 = vmatprep.subr.mxu0 0.0
      %4787 = vmatpush1.msra.mxu0 0.0
      %4788 = vmatprep.subr.mxu0 0.0
      %4789 = vmatpush1.msra.mxu0 0.0
      %4790 = vmatprep.subr.mxu0 0.0
      %4791 = vmatpush1.msra.mxu0 0.0
      %4792 = vmatprep.subr.mxu0 0.0
      %4793 = vmatpush1.msra.mxu0 0.0
      %4794 = vmatprep.subr.mxu0 0.0
      %4795 = vmatpush1.msra.mxu0 0.0
      %4796 = vmatprep.mubr.f32.mxu0 0.0
      %4797 = vmatmul.mubr.f32.gmra.mrb[0].mxu0 %v4724
      %v4798 = vpop.f32.mrb[0].mxu0
      %v4799 = vadd.f32 %v4719, %v4798
      %v4800 = vpop.f32.mrb[0].mxu0
      %v4801 = vadd.f32 %v4721, %v4800
      %4802 = vdwg.mxu0
      %v4805 = vcombine.low %v4799, %v4801
      %4807 = vst [vmem:[%s862] sm:$0xff] %v4805
      %p4808 = scmp.lt.s32.totalorder %s39, 1
      %s4809 = scalar_select %p4808, %s39, 1
      %s4810 = smul.addr %s4809, 2
      %s4811 = smul.addr %s4810, 4
      %s4812 = scalar_lea.vmem %s28, %s4811
      // Predicated region
      $region133: #{decoder_block_forward.2} parent=131 // pred_check
        %p4813 = pneg %p655
      $region134: #{decoder_block_forward.2} parent=131 // pred_check_branch
        %4815 = sbr.rel (%p4813) target = $region136
      $region135: #{decoder_block_forward.2} parent=131 // pred_region
        _
      $region136: #{decoder_block_forward.2} parent=131 // pred_fallthru
        _
    $region132: #{decoder_block_forward.2} parent=5 // pred_fallthru
      _
    %p4816 = scmp.le.s32.totalorder 2, %s34
    // Predicated region
    $region137: #{decoder_block_forward.2} parent=5 // pred_check
      %p4817 = pneg %p4816
    $region138: #{decoder_block_forward.2} parent=5 // pred_check_branch
      %4819 = sbr.rel (%p4817) target = $region140
    $region139: #{decoder_block_forward.2} parent=5 // pred_region
      %s4820 = ssub.s32 %s34, 2
      // Predicated region
      $region141: #{decoder_block_forward.2} parent=139 // pred_check
        %p4821 = pneg %p661
      $region142: #{decoder_block_forward.2} parent=139 // pred_check_branch
        %4823 = sbr.rel (%p4821) target = $region144
      $region143: #{decoder_block_forward.2} parent=139 // pred_region
        %p4824 = scmp.lt.s32.totalorder %s40, 1
        %s4825 = scalar_select %p4824, %s40, 1
        %s4826 = smul.addr %s4825, 2
        %s4827 = smul.addr %s4826, 4
        %s4828 = scalar_lea.vmem %s28, %s4827
      $region144: #{decoder_block_forward.2} parent=139 // pred_fallthru
        _
    $region140: #{decoder_block_forward.2} parent=5 // pred_fallthru
      _
  $region6: #{decoder_block_forward.2} parent=0 // loop_footer
    %s38 = sadd.s32 1, %s34
  $region7: #{decoder_block_forward.2} parent=0 // loop_footer_branch
    %33 = sbr.rel target = $region3
  $region8: #{decoder_block_forward.2} parent=0 // loop_exit
    _

</llo_original>
